<compile_context>
chip_gen: v6e
topology: v6e:2x2x1
jax: 0.10.0
libtpu: 0.0.40
codegen_flags: <defaults>
</compile_context>

<pallas_src>
import functools
import math

import jax
import jax.numpy as jnp
import numpy as np
from jax.experimental import pallas as pl
from jax.experimental.pallas import tpu as pltpu

BN_EPS = 1e-3                 # BatchNorm3d(..., eps=0.001)
NEG_SLOPE = 0.01              # nn.LeakyReLU() default
STORE_DTYPE = jnp.bfloat16    # intermediate activations / matmul operands
_LANES = 128

# channel widths of the concat pieces, in torch-cat order:
# [x11 (conv1 out, raw), a = leaky(bn1(x11)), x2, x3, x4]
_PIECE_CH = (24, 24, 12, 12, 12)


# ------------------------------------------------------------------ in-kernel helpers
def _make_mask(tm, masked, real_m):
    """(1, tm) f32 mask of real (non-padded) pixel columns, or None when M was not padded."""
    if not masked:
        return None
    col = jax.lax.broadcasted_iota(jnp.int32, (1, tm), 1) + pl.program_id(0) * tm
    return (col < real_m).astype(jnp.float32)


def _fold128(z):
    """(rows, tm) -> (rows, 128) by summing 128-lane-aligned slices (VALU only, no XLU)."""
    acc = z[:, 0:_LANES]
    for g in range(1, z.shape[1] // _LANES):
        acc = acc + z[:, g * _LANES:(g + 1) * _LANES]
    return acc


def _partial_stats(vals_f32, mask):
    """Lane-dense per-tile partial (sum, sum-of-squares); mask is 0/1 so sq masking is free."""
    if mask is not None:
        vals_f32 = vals_f32 * mask
    return _fold128(vals_f32), _fold128(vals_f32 * vals_f32)


# --------------------------------------------------------------------------- kernels
def _conv1_kernel(x_ref, w_ref, b_ref, y_ref, sum_ref, sq_ref, *, masked, real_m):
    """x11 = conv1(x).  x arrives pixel-major (tm, band); the band axis is contracted
    directly (A @ B^T) so the lane-dense (C*W1, M) relayout happens inside the kernel."""
    x = x_ref[...]                                              # (tm, band) f32
    y = jax.lax.dot_general(w_ref[...], x, (((1,), (1,)), ((), ())),
                            preferred_element_type=jnp.float32) + b_ref[...]
    y_st = y.astype(y_ref.dtype)
    y_ref[...] = y_st

    mask = _make_mask(x_ref.shape[0], masked, real_m)
    s, q = _partial_stats(y_st.astype(jnp.float32), mask)       # BN1 batch-stat partials
    sum_ref[...] = s
    sq_ref[...] = q


def _dense_pass_kernel(*refs, n_act, full_bn, include_a_stats, emit_stats,
                       masked, real_m, piece_rows):
    """Generic pass: rebuild the channel concat, optionally BN+leaky it (bf16), run the
    next conv as a sum of per-piece MXU matmuls, store the conv output, and emit
    lane-dense per-tile BN-stat partials."""
    n_pieces = n_act + 1
    i = 0
    acts = refs[i:i + n_act]; i += n_act                  # x11 (+ x2, x3, x4)
    s1_ref, t1_ref = refs[i], refs[i + 1]; i += 2         # bn1 scale/shift (for `a`)
    if full_bn:
        sf_ref, tf_ref = refs[i], refs[i + 1]; i += 2     # consolidated bn_k scale/shift
    w_refs = refs[i:i + n_pieces]; i += n_pieces
    b_ref = refs[i]; i += 1
    y_ref = refs[i]; i += 1
    stats_refs = refs[i:]

    bf16 = jnp.bfloat16
    tm = acts[0].shape[1]

    # piece 0: raw x11, piece 1: a = leaky(bn1(x11)) recomputed (never stored in HBM),
    # pieces 2..: previously stored conv outputs x2/x3/x4.  All bf16.
    x11 = acts[0][...]
    a = x11 * s1_ref[...].astype(bf16) + t1_ref[...].astype(bf16)
    a = jnp.maximum(a, NEG_SLOPE * a)
    pieces = [x11, a] + [r[...] for r in acts[1:]]

    if full_bn:
        sf_all = sf_ref[...]                              # (total_rows, 1) f32
        tf_all = tf_ref[...]

    acc = None
    off = 0
    for j, p in enumerate(pieces):
        u = p
        if full_bn:                                       # BN_k + leaky of the whole concat
            r = piece_rows[j]
            sfj = sf_all[off:off + r].astype(bf16)
            tfj = tf_all[off:off + r].astype(bf16)
            off += r
            u = p * sfj + tfj
            u = jnp.maximum(u, NEG_SLOPE * u)
        d = jnp.dot(w_refs[j][...], u, preferred_element_type=jnp.float32)
        acc = d if acc is None else acc + d
    y = acc + b_ref[...]
    y_st = y.astype(y_ref.dtype)
    y_ref[...] = y_st

    if emit_stats:
        mask = _make_mask(tm, masked, real_m)
        k = 0
        if include_a_stats:                               # `a` feeds BN2's batch stats
            sa, qa = _partial_stats(a.astype(jnp.float32), mask)
            stats_refs[0][...] = sa
            stats_refs[1][...] = qa
            k = 2
        sy, qy = _partial_stats(y_st.astype(jnp.float32), mask)
        stats_refs[k][...] = sy
        stats_refs[k + 1][...] = qy


# ----------------------------------------------------------------- pallas_call plumbing
def _run_pass(kernel, inputs, in_specs, *, y_rows, y_dtype, stats_rows, tm, n_tiles,
              vmem_limit):
    m_pad = n_tiles * tm
    out_specs = [pl.BlockSpec((y_rows, tm), lambda i: (0, i))]
    out_shape = [jax.ShapeDtypeStruct((y_rows, m_pad), y_dtype)]
    for r in stats_rows:                 # lane-dense per-tile partial stats (no accumulator)
        out_specs.append(pl.BlockSpec((r, _LANES), lambda i: (0, i)))
        out_shape.append(jax.ShapeDtypeStruct((r, n_tiles * _LANES), jnp.float32))
    outs = pl.pallas_call(
        kernel,
        grid=(n_tiles,),
        in_specs=in_specs,
        out_specs=out_specs,
        out_shape=out_shape,
        compiler_params=pltpu.CompilerParams(
            dimension_semantics=("parallel",),        # no cross-tile state -> megacore OK
            vmem_limit_bytes=vmem_limit),
    )(*inputs)
    return list(outs) if isinstance(outs, (list, tuple)) else [outs]


def _pass_vmem_limit(tiled, consts, stats_rows, tm):
    """Rough per-pass VMEM working set: double-buffered tiles + lane-padded consts."""
    by = 0
    for rows, itemsize in tiled:                      # tiled inputs & outputs
        by += 2 * rows * tm * itemsize
    for a in consts:                                  # (rows, 1/cols) consts pad lanes to 128
        sub = int(np.prod(a.shape[:-1]))
        lanes = ((int(a.shape[-1]) + _LANES - 1) // _LANES) * _LANES
        by += 2 * ((sub + 7) // 8) * 8 * lanes * a.dtype.itemsize
    by += 4 * sum(r * _LANES * 4 for r in stats_rows)
    return int(min(max(by + (4 << 20), 32 << 20), 112 << 20))


def _pick_tile(m):
    """Pad M to a multiple of 512 and pick the largest dividing tile (no tiny fallback)."""
    m_pad = ((m + 511) // 512) * 512
    for cand in (8192, 4096, 2048, 1024, 512):
        if m_pad % cand == 0:
            return cand, m_pad
    return 512, m_pad


def _bn_affine_rows(sum_rows, sq_rows, gamma, beta, count, w1):
    """Fold training-mode batch stats + affine params into per-row scale/shift vectors."""
    c = gamma.shape[0]
    s = jnp.sum(sum_rows.reshape(c, w1), axis=1)
    ss = jnp.sum(sq_rows.reshape(c, w1), axis=1)
    mean = s / count
    var = jnp.maximum(ss / count - mean * mean, 0.0)   # clamp: E[x^2]-E[x]^2 cancellation
    scale = gamma * jax.lax.rsqrt(var + BN_EPS)
    shift = beta - mean * scale
    return (jnp.repeat(scale, w1)[:, None].astype(jnp.float32),
            jnp.repeat(shift, w1)[:, None].astype(jnp.float32))


# ------------------------------------------------------------- host-side param prepping
def _dense_conv1d_matrix(kernel, stride, pad, w_in, w_out):
    """(Cout, Cin, kw) conv along W -> dense banded matrix (Cout*Wout, Cin*Win)."""
    k = np.asarray(kernel, np.float32)
    cout, cin, kw = k.shape
    m = np.zeros((cout, w_out, cin, w_in), np.float32)
    for wo in range(w_out):
        for t in range(kw):
            wi = wo * stride - pad + t
            if 0 <= wi < w_in:
                m[:, wo, :, wi] = k[:, :, t]
    return m.reshape(cout * w_out, cin * w_in)


def _split_cols_by_channel(mat, ch_groups, w1):
    pieces, o = [], 0
    for c in ch_groups:
        pieces.append(jnp.asarray(mat[:, o:o + c * w1], dtype=STORE_DTYPE))
        o += c * w1
    return pieces


def prepare_params(raw, band):
    """One-off host preprocessing of torch-layout parameters into dense banded matrices
    (split per concat piece) and per-row bias vectors consumed by the kernels."""
    w1 = (band - 7) // 2 + 1
    k5 = math.ceil((band - 6) / 2)
    assert w1 - k5 + 1 == 1, "conv5 must collapse the spectral axis to width 1"

    def brows(bias, wout):
        return jnp.asarray(np.repeat(np.asarray(bias, np.float32), wout)[:, None])

    prep = {}
    prep["w1"] = jnp.asarray(
        _dense_conv1d_matrix(np.asarray(raw["conv1_w"]).reshape(24, 1, 7), 2, 0, band, w1),
        dtype=jnp.float32)                      # f32: pass-1 contraction stays in f32
    prep["b1"] = brows(raw["conv1_b"], w1)

    d2 = _dense_conv1d_matrix(np.asarray(raw["conv2_w"]).reshape(12, 48, 7), 1, 3, w1, w1)
    prep["w2"] = _split_cols_by_channel(d2, _PIECE_CH[:2], w1)
    prep["b2"] = brows(raw["conv2_b"], w1)

    d3 = _dense_conv1d_matrix(np.asarray(raw["conv3_w"]).reshape(12, 60, 7), 1, 3, w1, w1)
    prep["w3"] = _split_cols_by_channel(d3, _PIECE_CH[:3], w1)
    prep["b3"] = brows(raw["conv3_b"], w1)

    d4 = _dense_conv1d_matrix(np.asarray(raw["conv4_w"]).reshape(12, 72, 7), 1, 3, w1, w1)
    prep["w4"] = _split_cols_by_channel(d4, _PIECE_CH[:4], w1)
    prep["b4"] = brows(raw["conv4_b"], w1)

    d5 = _dense_conv1d_matrix(np.asarray(raw["conv5_w"]).reshape(band, 84, k5), 1, 0, w1, 1)
    prep["w5"] = _split_cols_by_channel(d5, _PIECE_CH, w1)
    prep["b5"] = brows(raw["conv5_b"], 1)

    for i in (1, 2, 3, 4):
        prep[f"bn{i}_g"] = jnp.asarray(raw[f"bn{i}_g"], jnp.float32)
        prep[f"bn{i}_b"] = jnp.asarray(raw[f"bn{i}_b"], jnp.float32)
    return prep


# ----------------------------------------------------------------------------- forward
def m_resblock1_forward(x, prep):
    """x: (N, 1, D, H, W=band) f32 -> (N, band, D, H, 1) f32 (training-mode BN)."""
    n, cin, d, h, band = x.shape
    assert cin == 1
    w1 = (band - 7) // 2 + 1
    m = n * d * h
    tm, m_pad = _pick_tile(m)
    n_tiles = m_pad // tm
    masked = m_pad != m                      # pad columns must be excluded from BN stats
    count = float(m * w1)                    # elements per channel for BN batch stats
    f32 = jnp.float32
    pw = [c * w1 for c in _PIECE_CH]         # row widths of the concat pieces

    # NOTE: the leading `x1 = conv1(x); x2 = batch_norm1(x1)` lines of the torch forward
    # are dead for the returned value (x2 is overwritten) and are skipped.
    # TODO(synk): BatchNorm3d running_mean/running_var buffer updates are not materialized;
    # only the training-mode forward activation is produced.

    x_pm = x.reshape(m, band).astype(f32)    # pixel-major; relayout happens inside pass 1
    if masked:
        x_pm = jnp.pad(x_pm, ((0, m_pad - m), (0, 0)))

    def cm(rows):                            # channel-major (rows, M) tiled spec
        return pl.BlockSpec((rows, tm), lambda i: (0, i))

    def cs(a):                               # small const spec (weights / bias / scale)
        return pl.BlockSpec(a.shape, lambda i: (0, 0))

    # ---- pass 1: x11 = conv1(x); per-tile BN1 stat partials -----------------------------
    consts1 = [prep["w1"], prep["b1"]]
    lim1 = _pass_vmem_limit([(band, 4), (pw[0], 2)], consts1, [pw[0]] * 2, tm)
    k1 = functools.partial(_conv1_kernel, masked=masked, real_m=m)
    x11, p_s1, p_q1 = _run_pass(
        k1, [x_pm] + consts1,
        [pl.BlockSpec((tm, band), lambda i: (i, 0))] + [cs(a) for a in consts1],
        y_rows=pw[0], y_dtype=STORE_DTYPE, stats_rows=[pw[0]] * 2,
        tm=tm, n_tiles=n_tiles, vmem_limit=lim1)
    sum1, sq1 = jnp.sum(p_s1, axis=1), jnp.sum(p_q1, axis=1)
    s1, t1 = _bn_affine_rows(sum1, sq1, prep["bn1_g"], prep["bn1_b"], count, w1)

    # ---- pass 2: x2 = conv2([x11, a]); stat partials of a and x2 (BN2 over 60 ch) --------
    consts2 = [s1, t1] + prep["w2"] + [prep["b2"]]
    lim2 = _pass_vmem_limit([(pw[0], 2), (pw[2], 2)], consts2,
                            [pw[1]] * 2 + [pw[2]] * 2, tm)
    k2 = functools.partial(_dense_pass_kernel, n_act=1, full_bn=False,
                           include_a_stats=True, emit_stats=True,
                           masked=masked, real_m=m, piece_rows=tuple(pw[:2]))
    x2, p_sa, p_qa, p_s2, p_q2 = _run_pass(
        k2, [x11] + consts2, [cm(pw[0])] + [cs(a) for a in consts2],
        y_rows=pw[2], y_dtype=STORE_DTYPE, stats_rows=[pw[1]] * 2 + [pw[2]] * 2,
        tm=tm, n_tiles=n_tiles, vmem_limit=lim2)
    row_sums = [sum1, jnp.sum(p_sa, axis=1), jnp.sum(p_s2, axis=1)]
    row_sqs = [sq1, jnp.sum(p_qa, axis=1), jnp.sum(p_q2, axis=1)]
    s2, t2 = _bn_affine_rows(jnp.concatenate(row_sums), jnp.concatenate(row_sqs),
                             prep["bn2_g"], prep["bn2_b"], count, w1)

    # ---- pass 3: x3 = conv3(leaky(bn2([x11, a, x2]))); stat partials of x3 ---------------
    consts3 = [s1, t1, s2, t2] + prep["w3"] + [prep["b3"]]
    lim3 = _pass_vmem_limit([(pw[0], 2), (pw[2], 2), (pw[3], 2)], consts3, [pw[3]] * 2, tm)
    k3 = functools.partial(_dense_pass_kernel, n_act=2, full_bn=True,
                           include_a_stats=False, emit_stats=True,
                           masked=masked, real_m=m, piece_rows=tuple(pw[:3]))
    x3, p_s3, p_q3 = _run_pass(
        k3, [x11, x2] + consts3, [cm(pw[0]), cm(pw[2])] + [cs(a) for a in consts3],
        y_rows=pw[3], y_dtype=STORE_DTYPE, stats_rows=[pw[3]] * 2,
        tm=tm, n_tiles=n_tiles, vmem_limit=lim3)
    row_sums.append(jnp.sum(p_s3, axis=1)); row_sqs.append(jnp.sum(p_q3, axis=1))
    s3, t3 = _bn_affine_rows(jnp.concatenate(row_sums), jnp.concatenate(row_sqs),
                             prep["bn3_g"], prep["bn3_b"], count, w1)

    # ---- pass 4: x4 = conv4(leaky(bn3([x11, a, x2, x3]))); stat partials of x4 -----------
    consts4 = [s1, t1, s3, t3] + prep["w4"] + [prep["b4"]]
    lim4 = _pass_vmem_limit([(pw[0], 2), (pw[2], 2), (pw[3], 2), (pw[4], 2)],
                            consts4, [pw[4]] * 2, tm)
    k4 = functools.partial(_dense_pass_kernel, n_act=3, full_bn=True,
                           include_a_stats=False, emit_stats=True,
                           masked=masked, real_m=m, piece_rows=tuple(pw[:4]))
    x4, p_s4, p_q4 = _run_pass(
        k4, [x11, x2, x3] + consts4,
        [cm(pw[0]), cm(pw[2]), cm(pw[3])] + [cs(a) for a in consts4],
        y_rows=pw[4], y_dtype=STORE_DTYPE, stats_rows=[pw[4]] * 2,
        tm=tm, n_tiles=n_tiles, vmem_limit=lim4)
    row_sums.append(jnp.sum(p_s4, axis=1)); row_sqs.append(jnp.sum(p_q4, axis=1))
    s4, t4 = _bn_affine_rows(jnp.concatenate(row_sums), jnp.concatenate(row_sqs),
                             prep["bn4_g"], prep["bn4_b"], count, w1)

    # ---- pass 5: out = conv5(leaky(bn4([x11, a, x2, x3, x4]))) ---------------------------
    consts5 = [s1, t1, s4, t4] + prep["w5"] + [prep["b5"]]
    lim5 = _pass_vmem_limit([(pw[0], 2), (pw[2], 2), (pw[3], 2), (pw[4], 2), (band, 4)],
                            consts5, [], tm)
    k5 = functools.partial(_dense_pass_kernel, n_act=4, full_bn=True,
                           include_a_stats=False, emit_stats=False,
                           masked=masked, real_m=m, piece_rows=tuple(pw))
    (out_cm,) = _run_pass(
        k5, [x11, x2, x3, x4] + consts5,
        [cm(pw[0]), cm(pw[2]), cm(pw[3]), cm(pw[4])] + [cs(a) for a in consts5],
        y_rows=band, y_dtype=jnp.float32, stats_rows=[],
        tm=tm, n_tiles=n_tiles, vmem_limit=lim5)

    # (band, M_pad) -> (N, band, D, H, 1) to match conv5's NCDHW output
    out_cm = out_cm[:, :m]
    return jnp.transpose(out_cm.reshape(band, n, d, h), (1, 0, 2, 3))[..., None]


# -------------------------------------------------------------------------------- main
if __name__ == "__main__":
    band = 16                  # spectral bands (W); W1 = 5, conv5 kernel_3d = 5
    N, D, H = 2, 16, 16        # batch and spatial patch (M = N*D*H = 512 pixels)
    key = jax.random.PRNGKey(0)
    keys = jax.random.split(key, 6)

    def init_conv(k, cout, cin, kw):
        kw_key, kb_key = jax.random.split(k)
        bound = 1.0 / math.sqrt(cin * kw)
        w = jax.random.uniform(kw_key, (cout, cin, 1, 1, kw), jnp.float32, -bound, bound)
        b = jax.random.uniform(kb_key, (cout,), jnp.float32, -bound, bound)
        return w, b

    k5w = math.ceil((band - 6) / 2)
    raw = {}
    raw["conv1_w"], raw["conv1_b"] = init_conv(keys[0], 24, 1, 7)
    raw["conv2_w"], raw["conv2_b"] = init_conv(keys[1], 12, 48, 7)
    raw["conv3_w"], raw["conv3_b"] = init_conv(keys[2], 12, 60, 7)
    raw["conv4_w"], raw["conv4_b"] = init_conv(keys[3], 12, 72, 7)
    raw["conv5_w"], raw["conv5_b"] = init_conv(keys[4], band, 84, k5w)
    for i, c in ((1, 24), (2, 60), (3, 72), (4, 84)):   # BatchNorm3d default affine init
        raw[f"bn{i}_g"] = jnp.ones((c,), jnp.float32)
        raw[f"bn{i}_b"] = jnp.zeros((c,), jnp.float32)

    x = jax.random.normal(keys[5], (N, 1, D, H, band), dtype=jnp.float32)

    prep = prepare_params(raw, band)
    fwd = jax.jit(m_resblock1_forward)
    out = fwd(x, prep)
    jax.block_until_ready(out)
    assert out.shape == (N, band, D, H, 1), out.shape
    assert bool(jnp.all(jnp.isfinite(out)))
    print("KERNEL_OK")
</pallas_src>

<mosaic_0001>
module attributes {stable_mosaic.version = 11 : i64} {
  func.func @_conv1_kernel(%arg0: i32, %arg1: memref<512x16xf32, #tpu.memory_space<vmem>>, %arg2: memref<120x16xf32, #tpu.memory_space<vmem>>, %arg3: memref<120x1xf32, #tpu.memory_space<vmem>>, %arg4: memref<120x512xbf16, #tpu.memory_space<vmem>>, %arg5: memref<120x128xf32, #tpu.memory_space<vmem>>, %arg6: memref<120x128xf32, #tpu.memory_space<vmem>>) attributes {dimension_semantics = [#tpu.dimension_semantics<parallel>], iteration_bounds = array<i64: 1>, scalar_prefetch = 0 : i64, scratch_operands = 0 : i64, tpu.core_type = #tpu.core_type<tc>, window_params = [{transform_indices = @transform_0, window_bounds = array<i64: 512, 16>}, {pipeline_mode = #tpu.pipeline_mode<synchronous>, transform_indices = @transform_1, window_bounds = array<i64: 120, 16>}, {pipeline_mode = #tpu.pipeline_mode<synchronous>, transform_indices = @transform_2, window_bounds = array<i64: 120, 1>}, {transform_indices = @transform_3, window_bounds = array<i64: 120, 512>}, {transform_indices = @transform_4, window_bounds = array<i64: 120, 128>}, {transform_indices = @transform_5, window_bounds = array<i64: 120, 128>}]} {
    %c0 = arith.constant 0 : index
    %c0_0 = arith.constant 0 : index
    %0 = vector.load %arg1[%c0, %c0_0] : memref<512x16xf32, #tpu.memory_space<vmem>>, vector<512x16xf32>
    %c0_1 = arith.constant 0 : index
    %c0_2 = arith.constant 0 : index
    %1 = vector.load %arg2[%c0_1, %c0_2] : memref<120x16xf32, #tpu.memory_space<vmem>>, vector<120x16xf32>
    %cst = arith.constant dense<0.000000e+00> : vector<120x512xf32>
    %2 = tpu.matmul %1, %0, %cst {dimension_numbers = #tpu.dot_dimension_numbers<[1], [1], [0], [0], [0, 0, 1, 0], [], []>} : vector<120x16xf32>, vector<512x16xf32>, vector<120x512xf32> -> vector<120x512xf32>
    %c0_3 = arith.constant 0 : index
    %c0_4 = arith.constant 0 : index
    %3 = vector.load %arg3[%c0_3, %c0_4] : memref<120x1xf32, #tpu.memory_space<vmem>>, vector<120x1xf32>
    %4 = vector.broadcast %3 : vector<120x1xf32> to vector<120x512xf32>
    %5 = arith.addf %2, %4 : vector<120x512xf32>
    %6 = arith.truncf %5 : vector<120x512xf32> to vector<120x512xbf16>
    %c0_5 = arith.constant 0 : index
    %c0_6 = arith.constant 0 : index
    %7 = vector.load %arg4[%c0_5, %c0_6] : memref<120x512xbf16, #tpu.memory_space<vmem>>, vector<120x512xbf16>
    tpu.vector_store %arg4[%c0_5, %c0_6], %6 {strides = array<i32>} : memref<120x512xbf16, #tpu.memory_space<vmem>>, vector<120x512xbf16>,
    %8 = arith.extf %6 : vector<120x512xbf16> to vector<120x512xf32>
    %9 = vector.extract_strided_slice %8 {offsets = [0, 0], sizes = [120, 128], strides = [1, 1]} : vector<120x512xf32> to vector<120x128xf32>
    %10 = vector.extract_strided_slice %8 {offsets = [0, 128], sizes = [120, 128], strides = [1, 1]} : vector<120x512xf32> to vector<120x128xf32>
    %11 = arith.addf %9, %10 : vector<120x128xf32>
    %12 = vector.extract_strided_slice %8 {offsets = [0, 256], sizes = [120, 128], strides = [1, 1]} : vector<120x512xf32> to vector<120x128xf32>
    %13 = arith.addf %11, %12 : vector<120x128xf32>
    %14 = vector.extract_strided_slice %8 {offsets = [0, 384], sizes = [120, 128], strides = [1, 1]} : vector<120x512xf32> to vector<120x128xf32>
    %15 = arith.addf %13, %14 : vector<120x128xf32>
    %16 = arith.mulf %8, %8 : vector<120x512xf32>
    %17 = vector.extract_strided_slice %16 {offsets = [0, 0], sizes = [120, 128], strides = [1, 1]} : vector<120x512xf32> to vector<120x128xf32>
    %18 = vector.extract_strided_slice %16 {offsets = [0, 128], sizes = [120, 128], strides = [1, 1]} : vector<120x512xf32> to vector<120x128xf32>
    %19 = arith.addf %17, %18 : vector<120x128xf32>
    %20 = vector.extract_strided_slice %16 {offsets = [0, 256], sizes = [120, 128], strides = [1, 1]} : vector<120x512xf32> to vector<120x128xf32>
    %21 = arith.addf %19, %20 : vector<120x128xf32>
    %22 = vector.extract_strided_slice %16 {offsets = [0, 384], sizes = [120, 128], strides = [1, 1]} : vector<120x512xf32> to vector<120x128xf32>
    %23 = arith.addf %21, %22 : vector<120x128xf32>
    %c0_7 = arith.constant 0 : index
    %c0_8 = arith.constant 0 : index
    %24 = vector.load %arg5[%c0_7, %c0_8] : memref<120x128xf32, #tpu.memory_space<vmem>>, vector<120x128xf32>
    tpu.vector_store %arg5[%c0_7, %c0_8], %15 {strides = array<i32>} : memref<120x128xf32, #tpu.memory_space<vmem>>, vector<120x128xf32>,
    %c0_9 = arith.constant 0 : index
    %c0_10 = arith.constant 0 : index
    %25 = vector.load %arg6[%c0_9, %c0_10] : memref<120x128xf32, #tpu.memory_space<vmem>>, vector<120x128xf32>
    tpu.vector_store %arg6[%c0_9, %c0_10], %23 {strides = array<i32>} : memref<120x128xf32, #tpu.memory_space<vmem>>, vector<120x128xf32>,
    return
  }
  func.func @transform_0(%arg0: i32) -> (i32, i32) {
    %c0_i32 = arith.constant 0 : i32
    %c0_i32_0 = arith.constant 0 : i32
    return %arg0, %c0_i32 : i32, i32
  }
  func.func @transform_1(%arg0: i32) -> (i32, i32) {
    %c0_i32 = arith.constant 0 : i32
    %c0_i32_0 = arith.constant 0 : i32
    %c0_i32_1 = arith.constant 0 : i32
    return %c0_i32, %c0_i32_0 : i32, i32
  }
  func.func @transform_2(%arg0: i32) -> (i32, i32) {
    %c0_i32 = arith.constant 0 : i32
    %c0_i32_0 = arith.constant 0 : i32
    %c0_i32_1 = arith.constant 0 : i32
    return %c0_i32, %c0_i32_0 : i32, i32
  }
  func.func @transform_3(%arg0: i32) -> (i32, i32) {
    %c0_i32 = arith.constant 0 : i32
    %c0_i32_0 = arith.constant 0 : i32
    return %c0_i32, %arg0 : i32, i32
  }
  func.func @transform_4(%arg0: i32) -> (i32, i32) {
    %c0_i32 = arith.constant 0 : i32
    %c0_i32_0 = arith.constant 0 : i32
    return %c0_i32, %arg0 : i32, i32
  }
  func.func @transform_5(%arg0: i32) -> (i32, i32) {
    %c0_i32 = arith.constant 0 : i32
    %c0_i32_0 = arith.constant 0 : i32
    return %c0_i32, %arg0 : i32, i32
  }
}

module attributes {stable_mosaic.version = 11 : i64} {
  func.func @_dense_pass_kernel(%arg0: i32, %arg1: memref<120x512xbf16, #tpu.memory_space<vmem>>, %arg2: memref<120x1xf32, #tpu.memory_space<vmem>>, %arg3: memref<120x1xf32, #tpu.memory_space<vmem>>, %arg4: memref<60x120xbf16, #tpu.memory_space<vmem>>, %arg5: memref<60x120xbf16, #tpu.memory_space<vmem>>, %arg6: memref<60x1xf32, #tpu.memory_space<vmem>>, %arg7: memref<60x512xbf16, #tpu.memory_space<vmem>>, %arg8: memref<120x128xf32, #tpu.memory_space<vmem>>, %arg9: memref<120x128xf32, #tpu.memory_space<vmem>>, %arg10: memref<60x128xf32, #tpu.memory_space<vmem>>, %arg11: memref<60x128xf32, #tpu.memory_space<vmem>>) attributes {dimension_semantics = [#tpu.dimension_semantics<parallel>], iteration_bounds = array<i64: 1>, scalar_prefetch = 0 : i64, scratch_operands = 0 : i64, tpu.core_type = #tpu.core_type<tc>, window_params = [{transform_indices = @transform_0, window_bounds = array<i64: 120, 512>}, {pipeline_mode = #tpu.pipeline_mode<synchronous>, transform_indices = @transform_1, window_bounds = array<i64: 120, 1>}, {pipeline_mode = #tpu.pipeline_mode<synchronous>, transform_indices = @transform_2, window_bounds = array<i64: 120, 1>}, {pipeline_mode = #tpu.pipeline_mode<synchronous>, transform_indices = @transform_3, window_bounds = array<i64: 60, 120>}, {pipeline_mode = #tpu.pipeline_mode<synchronous>, transform_indices = @transform_4, window_bounds = array<i64: 60, 120>}, {pipeline_mode = #tpu.pipeline_mode<synchronous>, transform_indices = @transform_5, window_bounds = array<i64: 60, 1>}, {transform_indices = @transform_6, window_bounds = array<i64: 60, 512>}, {transform_indices = @transform_7, window_bounds = array<i64: 120, 128>}, {transform_indices = @transform_8, window_bounds = array<i64: 120, 128>}, {transform_indices = @transform_9, window_bounds = array<i64: 60, 128>}, {transform_indices = @transform_10, window_bounds = array<i64: 60, 128>}]} {
    %c0 = arith.constant 0 : index
    %c0_0 = arith.constant 0 : index
    %0 = vector.load %arg1[%c0, %c0_0] : memref<120x512xbf16, #tpu.memory_space<vmem>>, vector<120x512xbf16>
    %c0_1 = arith.constant 0 : index
    %c0_2 = arith.constant 0 : index
    %1 = vector.load %arg2[%c0_1, %c0_2] : memref<120x1xf32, #tpu.memory_space<vmem>>, vector<120x1xf32>
    %2 = arith.truncf %1 : vector<120x1xf32> to vector<120x1xbf16>
    %3 = vector.broadcast %2 : vector<120x1xbf16> to vector<120x512xbf16>
    %4 = arith.mulf %0, %3 : vector<120x512xbf16>
    %c0_3 = arith.constant 0 : index
    %c0_4 = arith.constant 0 : index
    %5 = vector.load %arg3[%c0_3, %c0_4] : memref<120x1xf32, #tpu.memory_space<vmem>>, vector<120x1xf32>
    %6 = arith.truncf %5 : vector<120x1xf32> to vector<120x1xbf16>
    %7 = vector.broadcast %6 : vector<120x1xbf16> to vector<120x512xbf16>
    %8 = arith.addf %4, %7 : vector<120x512xbf16>
    %cst = arith.constant 1.000980e-02 : bf16
    %9 = vector.broadcast %cst : bf16 to vector<120x512xbf16>
    %10 = arith.mulf %9, %8 : vector<120x512xbf16>
    %11 = arith.maximumf %8, %10 : vector<120x512xbf16>
    %c0_5 = arith.constant 0 : index
    %c0_6 = arith.constant 0 : index
    %12 = vector.load %arg4[%c0_5, %c0_6] : memref<60x120xbf16, #tpu.memory_space<vmem>>, vector<60x120xbf16>
    %cst_7 = arith.constant dense<0.000000e+00> : vector<60x512xf32>
    %13 = tpu.matmul %12, %0, %cst_7 {dimension_numbers = #tpu.dot_dimension_numbers<[1], [0], [0], [1], [0, 0, 1, 1], [], []>} : vector<60x120xbf16>, vector<120x512xbf16>, vector<60x512xf32> -> vector<60x512xf32>
    %c0_8 = arith.constant 0 : index
    %c0_9 = arith.constant 0 : index
    %14 = vector.load %arg5[%c0_8, %c0_9] : memref<60x120xbf16, #tpu.memory_space<vmem>>, vector<60x120xbf16>
    %cst_10 = arith.constant dense<0.000000e+00> : vector<60x512xf32>
    %15 = tpu.matmul %14, %11, %cst_10 {dimension_numbers = #tpu.dot_dimension_numbers<[1], [0], [0], [1], [0, 0, 1, 1], [], []>} : vector<60x120xbf16>, vector<120x512xbf16>, vector<60x512xf32> -> vector<60x512xf32>
    %16 = arith.addf %13, %15 : vector<60x512xf32>
    %c0_11 = arith.constant 0 : index
    %c0_12 = arith.constant 0 : index
    %17 = vector.load %arg6[%c0_11, %c0_12] : memref<60x1xf32, #tpu.memory_space<vmem>>, vector<60x1xf32>
    %18 = vector.broadcast %17 : vector<60x1xf32> to vector<60x512xf32>
    %19 = arith.addf %16, %18 : vector<60x512xf32>
    %20 = arith.truncf %19 : vector<60x512xf32> to vector<60x512xbf16>
    %c0_13 = arith.constant 0 : index
    %c0_14 = arith.constant 0 : index
    %21 = vector.load %arg7[%c0_13, %c0_14] : memref<60x512xbf16, #tpu.memory_space<vmem>>, vector<60x512xbf16>
    tpu.vector_store %arg7[%c0_13, %c0_14], %20 {strides = array<i32>} : memref<60x512xbf16, #tpu.memory_space<vmem>>, vector<60x512xbf16>,
    %22 = arith.extf %11 : vector<120x512xbf16> to vector<120x512xf32>
    %23 = vector.extract_strided_slice %22 {offsets = [0, 0], sizes = [120, 128], strides = [1, 1]} : vector<120x512xf32> to vector<120x128xf32>
    %24 = vector.extract_strided_slice %22 {offsets = [0, 128], sizes = [120, 128], strides = [1, 1]} : vector<120x512xf32> to vector<120x128xf32>
    %25 = arith.addf %23, %24 : vector<120x128xf32>
    %26 = vector.extract_strided_slice %22 {offsets = [0, 256], sizes = [120, 128], strides = [1, 1]} : vector<120x512xf32> to vector<120x128xf32>
    %27 = arith.addf %25, %26 : vector<120x128xf32>
    %28 = vector.extract_strided_slice %22 {offsets = [0, 384], sizes = [120, 128], strides = [1, 1]} : vector<120x512xf32> to vector<120x128xf32>
    %29 = arith.addf %27, %28 : vector<120x128xf32>
    %30 = arith.mulf %22, %22 : vector<120x512xf32>
    %31 = vector.extract_strided_slice %30 {offsets = [0, 0], sizes = [120, 128], strides = [1, 1]} : vector<120x512xf32> to vector<120x128xf32>
    %32 = vector.extract_strided_slice %30 {offsets = [0, 128], sizes = [120, 128], strides = [1, 1]} : vector<120x512xf32> to vector<120x128xf32>
    %33 = arith.addf %31, %32 : vector<120x128xf32>
    %34 = vector.extract_strided_slice %30 {offsets = [0, 256], sizes = [120, 128], strides = [1, 1]} : vector<120x512xf32> to vector<120x128xf32>
    %35 = arith.addf %33, %34 : vector<120x128xf32>
    %36 = vector.extract_strided_slice %30 {offsets = [0, 384], sizes = [120, 128], strides = [1, 1]} : vector<120x512xf32> to vector<120x128xf32>
    %37 = arith.addf %35, %36 : vector<120x128xf32>
    %c0_15 = arith.constant 0 : index
    %c0_16 = arith.constant 0 : index
    %38 = vector.load %arg8[%c0_15, %c0_16] : memref<120x128xf32, #tpu.memory_space<vmem>>, vector<120x128xf32>
    tpu.vector_store %arg8[%c0_15, %c0_16], %29 {strides = array<i32>} : memref<120x128xf32, #tpu.memory_space<vmem>>, vector<120x128xf32>,
    %c0_17 = arith.constant 0 : index
    %c0_18 = arith.constant 0 : index
    %39 = vector.load %arg9[%c0_17, %c0_18] : memref<120x128xf32, #tpu.memory_space<vmem>>, vector<120x128xf32>
    tpu.vector_store %arg9[%c0_17, %c0_18], %37 {strides = array<i32>} : memref<120x128xf32, #tpu.memory_space<vmem>>, vector<120x128xf32>,
    %40 = arith.extf %20 : vector<60x512xbf16> to vector<60x512xf32>
    %41 = vector.extract_strided_slice %40 {offsets = [0, 0], sizes = [60, 128], strides = [1, 1]} : vector<60x512xf32> to vector<60x128xf32>
    %42 = vector.extract_strided_slice %40 {offsets = [0, 128], sizes = [60, 128], strides = [1, 1]} : vector<60x512xf32> to vector<60x128xf32>
    %43 = arith.addf %41, %42 : vector<60x128xf32>
    %44 = vector.extract_strided_slice %40 {offsets = [0, 256], sizes = [60, 128], strides = [1, 1]} : vector<60x512xf32> to vector<60x128xf32>
    %45 = arith.addf %43, %44 : vector<60x128xf32>
    %46 = vector.extract_strided_slice %40 {offsets = [0, 384], sizes = [60, 128], strides = [1, 1]} : vector<60x512xf32> to vector<60x128xf32>
    %47 = arith.addf %45, %46 : vector<60x128xf32>
    %48 = arith.mulf %40, %40 : vector<60x512xf32>
    %49 = vector.extract_strided_slice %48 {offsets = [0, 0], sizes = [60, 128], strides = [1, 1]} : vector<60x512xf32> to vector<60x128xf32>
    %50 = vector.extract_strided_slice %48 {offsets = [0, 128], sizes = [60, 128], strides = [1, 1]} : vector<60x512xf32> to vector<60x128xf32>
    %51 = arith.addf %49, %50 : vector<60x128xf32>
    %52 = vector.extract_strided_slice %48 {offsets = [0, 256], sizes = [60, 128], strides = [1, 1]} : vector<60x512xf32> to vector<60x128xf32>
    %53 = arith.addf %51, %52 : vector<60x128xf32>
    %54 = vector.extract_strided_slice %48 {offsets = [0, 384], sizes = [60, 128], strides = [1, 1]} : vector<60x512xf32> to vector<60x128xf32>
    %55 = arith.addf %53, %54 : vector<60x128xf32>
    %c0_19 = arith.constant 0 : index
    %c0_20 = arith.constant 0 : index
    %56 = vector.load %arg10[%c0_19, %c0_20] : memref<60x128xf32, #tpu.memory_space<vmem>>, vector<60x128xf32>
    tpu.vector_store %arg10[%c0_19, %c0_20], %47 {strides = array<i32>} : memref<60x128xf32, #tpu.memory_space<vmem>>, vector<60x128xf32>,
    %c0_21 = arith.constant 0 : index
    %c0_22 = arith.constant 0 : index
    %57 = vector.load %arg11[%c0_21, %c0_22] : memref<60x128xf32, #tpu.memory_space<vmem>>, vector<60x128xf32>
    tpu.vector_store %arg11[%c0_21, %c0_22], %55 {strides = array<i32>} : memref<60x128xf32, #tpu.memory_space<vmem>>, vector<60x128xf32>,
    return
  }
  func.func @transform_0(%arg0: i32) -> (i32, i32) {
    %c0_i32 = arith.constant 0 : i32
    %c0_i32_0 = arith.constant 0 : i32
    return %c0_i32, %arg0 : i32, i32
  }
  func.func @transform_1(%arg0: i32) -> (i32, i32) {
    %c0_i32 = arith.constant 0 : i32
    %c0_i32_0 = arith.constant 0 : i32
    %c0_i32_1 = arith.constant 0 : i32
    return %c0_i32, %c0_i32_0 : i32, i32
  }
  func.func @transform_2(%arg0: i32) -> (i32, i32) {
    %c0_i32 = arith.constant 0 : i32
    %c0_i32_0 = arith.constant 0 : i32
    %c0_i32_1 = arith.constant 0 : i32
    return %c0_i32, %c0_i32_0 : i32, i32
  }
  func.func @transform_3(%arg0: i32) -> (i32, i32) {
    %c0_i32 = arith.constant 0 : i32
    %c0_i32_0 = arith.constant 0 : i32
    %c0_i32_1 = arith.constant 0 : i32
    return %c0_i32, %c0_i32_0 : i32, i32
  }
  func.func @transform_4(%arg0: i32) -> (i32, i32) {
    %c0_i32 = arith.constant 0 : i32
    %c0_i32_0 = arith.constant 0 : i32
    %c0_i32_1 = arith.constant 0 : i32
    return %c0_i32, %c0_i32_0 : i32, i32
  }
  func.func @transform_5(%arg0: i32) -> (i32, i32) {
    %c0_i32 = arith.constant 0 : i32
    %c0_i32_0 = arith.constant 0 : i32
    %c0_i32_1 = arith.constant 0 : i32
    return %c0_i32, %c0_i32_0 : i32, i32
  }
  func.func @transform_6(%arg0: i32) -> (i32, i32) {
    %c0_i32 = arith.constant 0 : i32
    %c0_i32_0 = arith.constant 0 : i32
    return %c0_i32, %arg0 : i32, i32
  }
  func.func @transform_7(%arg0: i32) -> (i32, i32) {
    %c0_i32 = arith.constant 0 : i32
    %c0_i32_0 = arith.constant 0 : i32
    return %c0_i32, %arg0 : i32, i32
  }
  func.func @transform_8(%arg0: i32) -> (i32, i32) {
    %c0_i32 = arith.constant 0 : i32
    %c0_i32_0 = arith.constant 0 : i32
    return %c0_i32, %arg0 : i32, i32
  }
  func.func @transform_9(%arg0: i32) -> (i32, i32) {
    %c0_i32 = arith.constant 0 : i32
    %c0_i32_0 = arith.constant 0 : i32
    return %c0_i32, %arg0 : i32, i32
  }
  func.func @transform_10(%arg0: i32) -> (i32, i32) {
    %c0_i32 = arith.constant 0 : i32
    %c0_i32_0 = arith.constant 0 : i32
    return %c0_i32, %arg0 : i32, i32
  }
}

module attributes {stable_mosaic.version = 11 : i64} {
  func.func @_dense_pass_kernel(%arg0: i32, %arg1: memref<120x512xbf16, #tpu.memory_space<vmem>>, %arg2: memref<60x512xbf16, #tpu.memory_space<vmem>>, %arg3: memref<120x1xf32, #tpu.memory_space<vmem>>, %arg4: memref<120x1xf32, #tpu.memory_space<vmem>>, %arg5: memref<300x1xf32, #tpu.memory_space<vmem>>, %arg6: memref<300x1xf32, #tpu.memory_space<vmem>>, %arg7: memref<60x120xbf16, #tpu.memory_space<vmem>>, %arg8: memref<60x120xbf16, #tpu.memory_space<vmem>>, %arg9: memref<60x60xbf16, #tpu.memory_space<vmem>>, %arg10: memref<60x1xf32, #tpu.memory_space<vmem>>, %arg11: memref<60x512xbf16, #tpu.memory_space<vmem>>, %arg12: memref<60x128xf32, #tpu.memory_space<vmem>>, %arg13: memref<60x128xf32, #tpu.memory_space<vmem>>) attributes {dimension_semantics = [#tpu.dimension_semantics<parallel>], iteration_bounds = array<i64: 1>, scalar_prefetch = 0 : i64, scratch_operands = 0 : i64, tpu.core_type = #tpu.core_type<tc>, window_params = [{transform_indices = @transform_0, window_bounds = array<i64: 120, 512>}, {transform_indices = @transform_1, window_bounds = array<i64: 60, 512>}, {pipeline_mode = #tpu.pipeline_mode<synchronous>, transform_indices = @transform_2, window_bounds = array<i64: 120, 1>}, {pipeline_mode = #tpu.pipeline_mode<synchronous>, transform_indices = @transform_3, window_bounds = array<i64: 120, 1>}, {pipeline_mode = #tpu.pipeline_mode<synchronous>, transform_indices = @transform_4, window_bounds = array<i64: 300, 1>}, {pipeline_mode = #tpu.pipeline_mode<synchronous>, transform_indices = @transform_5, window_bounds = array<i64: 300, 1>}, {pipeline_mode = #tpu.pipeline_mode<synchronous>, transform_indices = @transform_6, window_bounds = array<i64: 60, 120>}, {pipeline_mode = #tpu.pipeline_mode<synchronous>, transform_indices = @transform_7, window_bounds = array<i64: 60, 120>}, {pipeline_mode = #tpu.pipeline_mode<synchronous>, transform_indices = @transform_8, window_bounds = array<i64: 60, 60>}, {pipeline_mode = #tpu.pipeline_mode<synchronous>, transform_indices = @transform_9, window_bounds = array<i64: 60, 1>}, {transform_indices = @transform_10, window_bounds = array<i64: 60, 512>}, {transform_indices = @transform_11, window_bounds = array<i64: 60, 128>}, {transform_indices = @transform_12, window_bounds = array<i64: 60, 128>}]} {
    %c0 = arith.constant 0 : index
    %c0_0 = arith.constant 0 : index
    %0 = vector.load %arg1[%c0, %c0_0] : memref<120x512xbf16, #tpu.memory_space<vmem>>, vector<120x512xbf16>
    %c0_1 = arith.constant 0 : index
    %c0_2 = arith.constant 0 : index
    %1 = vector.load %arg3[%c0_1, %c0_2] : memref<120x1xf32, #tpu.memory_space<vmem>>, vector<120x1xf32>
    %2 = arith.truncf %1 : vector<120x1xf32> to vector<120x1xbf16>
    %3 = vector.broadcast %2 : vector<120x1xbf16> to vector<120x512xbf16>
    %4 = arith.mulf %0, %3 : vector<120x512xbf16>
    %c0_3 = arith.constant 0 : index
    %c0_4 = arith.constant 0 : index
    %5 = vector.load %arg4[%c0_3, %c0_4] : memref<120x1xf32, #tpu.memory_space<vmem>>, vector<120x1xf32>
    %6 = arith.truncf %5 : vector<120x1xf32> to vector<120x1xbf16>
    %7 = vector.broadcast %6 : vector<120x1xbf16> to vector<120x512xbf16>
    %8 = arith.addf %4, %7 : vector<120x512xbf16>
    %cst = arith.constant 1.000980e-02 : bf16
    %9 = vector.broadcast %cst : bf16 to vector<120x512xbf16>
    %10 = arith.mulf %9, %8 : vector<120x512xbf16>
    %11 = arith.maximumf %8, %10 : vector<120x512xbf16>
    %c0_5 = arith.constant 0 : index
    %c0_6 = arith.constant 0 : index
    %12 = vector.load %arg2[%c0_5, %c0_6] : memref<60x512xbf16, #tpu.memory_space<vmem>>, vector<60x512xbf16>
    %c0_7 = arith.constant 0 : index
    %c0_8 = arith.constant 0 : index
    %13 = vector.load %arg5[%c0_7, %c0_8] : memref<300x1xf32, #tpu.memory_space<vmem>>, vector<300x1xf32>
    %c0_9 = arith.constant 0 : index
    %c0_10 = arith.constant 0 : index
    %14 = vector.load %arg6[%c0_9, %c0_10] : memref<300x1xf32, #tpu.memory_space<vmem>>, vector<300x1xf32>
    %15 = vector.extract_strided_slice %13 {offsets = [0, 0], sizes = [120, 1], strides = [1, 1]} : vector<300x1xf32> to vector<120x1xf32>
    %16 = arith.truncf %15 : vector<120x1xf32> to vector<120x1xbf16>
    %17 = vector.extract_strided_slice %14 {offsets = [0, 0], sizes = [120, 1], strides = [1, 1]} : vector<300x1xf32> to vector<120x1xf32>
    %18 = arith.truncf %17 : vector<120x1xf32> to vector<120x1xbf16>
    %19 = vector.broadcast %16 : vector<120x1xbf16> to vector<120x512xbf16>
    %20 = arith.mulf %0, %19 : vector<120x512xbf16>
    %21 = vector.broadcast %18 : vector<120x1xbf16> to vector<120x512xbf16>
    %22 = arith.addf %20, %21 : vector<120x512xbf16>
    %cst_11 = arith.constant 1.000980e-02 : bf16
    %23 = vector.broadcast %cst_11 : bf16 to vector<120x512xbf16>
    %24 = arith.mulf %23, %22 : vector<120x512xbf16>
    %25 = arith.maximumf %22, %24 : vector<120x512xbf16>
    %c0_12 = arith.constant 0 : index
    %c0_13 = arith.constant 0 : index
    %26 = vector.load %arg7[%c0_12, %c0_13] : memref<60x120xbf16, #tpu.memory_space<vmem>>, vector<60x120xbf16>
    %cst_14 = arith.constant dense<0.000000e+00> : vector<60x512xf32>
    %27 = tpu.matmul %26, %25, %cst_14 {dimension_numbers = #tpu.dot_dimension_numbers<[1], [0], [0], [1], [0, 0, 1, 1], [], []>} : vector<60x120xbf16>, vector<120x512xbf16>, vector<60x512xf32> -> vector<60x512xf32>
    %28 = vector.extract_strided_slice %13 {offsets = [120, 0], sizes = [120, 1], strides = [1, 1]} : vector<300x1xf32> to vector<120x1xf32>
    %29 = arith.truncf %28 : vector<120x1xf32> to vector<120x1xbf16>
    %30 = vector.extract_strided_slice %14 {offsets = [120, 0], sizes = [120, 1], strides = [1, 1]} : vector<300x1xf32> to vector<120x1xf32>
    %31 = arith.truncf %30 : vector<120x1xf32> to vector<120x1xbf16>
    %32 = vector.broadcast %29 : vector<120x1xbf16> to vector<120x512xbf16>
    %33 = arith.mulf %11, %32 : vector<120x512xbf16>
    %34 = vector.broadcast %31 : vector<120x1xbf16> to vector<120x512xbf16>
    %35 = arith.addf %33, %34 : vector<120x512xbf16>
    %cst_15 = arith.constant 1.000980e-02 : bf16
    %36 = vector.broadcast %cst_15 : bf16 to vector<120x512xbf16>
    %37 = arith.mulf %36, %35 : vector<120x512xbf16>
    %38 = arith.maximumf %35, %37 : vector<120x512xbf16>
    %c0_16 = arith.constant 0 : index
    %c0_17 = arith.constant 0 : index
    %39 = vector.load %arg8[%c0_16, %c0_17] : memref<60x120xbf16, #tpu.memory_space<vmem>>, vector<60x120xbf16>
    %cst_18 = arith.constant dense<0.000000e+00> : vector<60x512xf32>
    %40 = tpu.matmul %39, %38, %cst_18 {dimension_numbers = #tpu.dot_dimension_numbers<[1], [0], [0], [1], [0, 0, 1, 1], [], []>} : vector<60x120xbf16>, vector<120x512xbf16>, vector<60x512xf32> -> vector<60x512xf32>
    %41 = arith.addf %27, %40 : vector<60x512xf32>
    %42 = vector.extract_strided_slice %13 {offsets = [240, 0], sizes = [60, 1], strides = [1, 1]} : vector<300x1xf32> to vector<60x1xf32>
    %43 = arith.truncf %42 : vector<60x1xf32> to vector<60x1xbf16>
    %44 = vector.extract_strided_slice %14 {offsets = [240, 0], sizes = [60, 1], strides = [1, 1]} : vector<300x1xf32> to vector<60x1xf32>
    %45 = arith.truncf %44 : vector<60x1xf32> to vector<60x1xbf16>
    %46 = vector.broadcast %43 : vector<60x1xbf16> to vector<60x512xbf16>
    %47 = arith.mulf %12, %46 : vector<60x512xbf16>
    %48 = vector.broadcast %45 : vector<60x1xbf16> to vector<60x512xbf16>
    %49 = arith.addf %47, %48 : vector<60x512xbf16>
    %cst_19 = arith.constant 1.000980e-02 : bf16
    %50 = vector.broadcast %cst_19 : bf16 to vector<60x512xbf16>
    %51 = arith.mulf %50, %49 : vector<60x512xbf16>
    %52 = arith.maximumf %49, %51 : vector<60x512xbf16>
    %c0_20 = arith.constant 0 : index
    %c0_21 = arith.constant 0 : index
    %53 = vector.load %arg9[%c0_20, %c0_21] : memref<60x60xbf16, #tpu.memory_space<vmem>>, vector<60x60xbf16>
    %cst_22 = arith.constant dense<0.000000e+00> : vector<60x512xf32>
    %54 = tpu.matmul %53, %52, %cst_22 {dimension_numbers = #tpu.dot_dimension_numbers<[1], [0], [0], [1], [0, 0, 1, 1], [], []>} : vector<60x60xbf16>, vector<60x512xbf16>, vector<60x512xf32> -> vector<60x512xf32>
    %55 = arith.addf %41, %54 : vector<60x512xf32>
    %c0_23 = arith.constant 0 : index
    %c0_24 = arith.constant 0 : index
    %56 = vector.load %arg10[%c0_23, %c0_24] : memref<60x1xf32, #tpu.memory_space<vmem>>, vector<60x1xf32>
    %57 = vector.broadcast %56 : vector<60x1xf32> to vector<60x512xf32>
    %58 = arith.addf %55, %57 : vector<60x512xf32>
    %59 = arith.truncf %58 : vector<60x512xf32> to vector<60x512xbf16>
    %c0_25 = arith.constant 0 : index
    %c0_26 = arith.constant 0 : index
    %60 = vector.load %arg11[%c0_25, %c0_26] : memref<60x512xbf16, #tpu.memory_space<vmem>>, vector<60x512xbf16>
    tpu.vector_store %arg11[%c0_25, %c0_26], %59 {strides = array<i32>} : memref<60x512xbf16, #tpu.memory_space<vmem>>, vector<60x512xbf16>,
    %61 = arith.extf %59 : vector<60x512xbf16> to vector<60x512xf32>
    %62 = vector.extract_strided_slice %61 {offsets = [0, 0], sizes = [60, 128], strides = [1, 1]} : vector<60x512xf32> to vector<60x128xf32>
    %63 = vector.extract_strided_slice %61 {offsets = [0, 128], sizes = [60, 128], strides = [1, 1]} : vector<60x512xf32> to vector<60x128xf32>
    %64 = arith.addf %62, %63 : vector<60x128xf32>
    %65 = vector.extract_strided_slice %61 {offsets = [0, 256], sizes = [60, 128], strides = [1, 1]} : vector<60x512xf32> to vector<60x128xf32>
    %66 = arith.addf %64, %65 : vector<60x128xf32>
    %67 = vector.extract_strided_slice %61 {offsets = [0, 384], sizes = [60, 128], strides = [1, 1]} : vector<60x512xf32> to vector<60x128xf32>
    %68 = arith.addf %66, %67 : vector<60x128xf32>
    %69 = arith.mulf %61, %61 : vector<60x512xf32>
    %70 = vector.extract_strided_slice %69 {offsets = [0, 0], sizes = [60, 128], strides = [1, 1]} : vector<60x512xf32> to vector<60x128xf32>
    %71 = vector.extract_strided_slice %69 {offsets = [0, 128], sizes = [60, 128], strides = [1, 1]} : vector<60x512xf32> to vector<60x128xf32>
    %72 = arith.addf %70, %71 : vector<60x128xf32>
    %73 = vector.extract_strided_slice %69 {offsets = [0, 256], sizes = [60, 128], strides = [1, 1]} : vector<60x512xf32> to vector<60x128xf32>
    %74 = arith.addf %72, %73 : vector<60x128xf32>
    %75 = vector.extract_strided_slice %69 {offsets = [0, 384], sizes = [60, 128], strides = [1, 1]} : vector<60x512xf32> to vector<60x128xf32>
    %76 = arith.addf %74, %75 : vector<60x128xf32>
    %c0_27 = arith.constant 0 : index
    %c0_28 = arith.constant 0 : index
    %77 = vector.load %arg12[%c0_27, %c0_28] : memref<60x128xf32, #tpu.memory_space<vmem>>, vector<60x128xf32>
    tpu.vector_store %arg12[%c0_27, %c0_28], %68 {strides = array<i32>} : memref<60x128xf32, #tpu.memory_space<vmem>>, vector<60x128xf32>,
    %c0_29 = arith.constant 0 : index
    %c0_30 = arith.constant 0 : index
    %78 = vector.load %arg13[%c0_29, %c0_30] : memref<60x128xf32, #tpu.memory_space<vmem>>, vector<60x128xf32>
    tpu.vector_store %arg13[%c0_29, %c0_30], %76 {strides = array<i32>} : memref<60x128xf32, #tpu.memory_space<vmem>>, vector<60x128xf32>,
    return
  }
  func.func @transform_0(%arg0: i32) -> (i32, i32) {
    %c0_i32 = arith.constant 0 : i32
    %c0_i32_0 = arith.constant 0 : i32
    return %c0_i32, %arg0 : i32, i32
  }
  func.func @transform_1(%arg0: i32) -> (i32, i32) {
    %c0_i32 = arith.constant 0 : i32
    %c0_i32_0 = arith.constant 0 : i32
    return %c0_i32, %arg0 : i32, i32
  }
  func.func @transform_2(%arg0: i32) -> (i32, i32) {
    %c0_i32 = arith.constant 0 : i32
    %c0_i32_0 = arith.constant 0 : i32
    %c0_i32_1 = arith.constant 0 : i32
    return %c0_i32, %c0_i32_0 : i32, i32
  }
  func.func @transform_3(%arg0: i32) -> (i32, i32) {
    %c0_i32 = arith.constant 0 : i32
    %c0_i32_0 = arith.constant 0 : i32
    %c0_i32_1 = arith.constant 0 : i32
    return %c0_i32, %c0_i32_0 : i32, i32
  }
  func.func @transform_4(%arg0: i32) -> (i32, i32) {
    %c0_i32 = arith.constant 0 : i32
    %c0_i32_0 = arith.constant 0 : i32
    %c0_i32_1 = arith.constant 0 : i32
    return %c0_i32, %c0_i32_0 : i32, i32
  }
  func.func @transform_5(%arg0: i32) -> (i32, i32) {
    %c0_i32 = arith.constant 0 : i32
    %c0_i32_0 = arith.constant 0 : i32
    %c0_i32_1 = arith.constant 0 : i32
    return %c0_i32, %c0_i32_0 : i32, i32
  }
  func.func @transform_6(%arg0: i32) -> (i32, i32) {
    %c0_i32 = arith.constant 0 : i32
    %c0_i32_0 = arith.constant 0 : i32
    %c0_i32_1 = arith.constant 0 : i32
    return %c0_i32, %c0_i32_0 : i32, i32
  }
  func.func @transform_7(%arg0: i32) -> (i32, i32) {
    %c0_i32 = arith.constant 0 : i32
    %c0_i32_0 = arith.constant 0 : i32
    %c0_i32_1 = arith.constant 0 : i32
    return %c0_i32, %c0_i32_0 : i32, i32
  }
  func.func @transform_8(%arg0: i32) -> (i32, i32) {
    %c0_i32 = arith.constant 0 : i32
    %c0_i32_0 = arith.constant 0 : i32
    %c0_i32_1 = arith.constant 0 : i32
    return %c0_i32, %c0_i32_0 : i32, i32
  }
  func.func @transform_9(%arg0: i32) -> (i32, i32) {
    %c0_i32 = arith.constant 0 : i32
    %c0_i32_0 = arith.constant 0 : i32
    %c0_i32_1 = arith.constant 0 : i32
    return %c0_i32, %c0_i32_0 : i32, i32
  }
  func.func @transform_10(%arg0: i32) -> (i32, i32) {
    %c0_i32 = arith.constant 0 : i32
    %c0_i32_0 = arith.constant 0 : i32
    return %c0_i32, %arg0 : i32, i32
  }
  func.func @transform_11(%arg0: i32) -> (i32, i32) {
    %c0_i32 = arith.constant 0 : i32
    %c0_i32_0 = arith.constant 0 : i32
    return %c0_i32, %arg0 : i32, i32
  }
  func.func @transform_12(%arg0: i32) -> (i32, i32) {
    %c0_i32 = arith.constant 0 : i32
    %c0_i32_0 = arith.constant 0 : i32
    return %c0_i32, %arg0 : i32, i32
  }
}

module attributes {stable_mosaic.version = 11 : i64} {
  func.func @_dense_pass_kernel(%arg0: i32, %arg1: memref<120x512xbf16, #tpu.memory_space<vmem>>, %arg2: memref<60x512xbf16, #tpu.memory_space<vmem>>, %arg3: memref<60x512xbf16, #tpu.memory_space<vmem>>, %arg4: memref<120x1xf32, #tpu.memory_space<vmem>>, %arg5: memref<120x1xf32, #tpu.memory_space<vmem>>, %arg6: memref<360x1xf32, #tpu.memory_space<vmem>>, %arg7: memref<360x1xf32, #tpu.memory_space<vmem>>, %arg8: memref<60x120xbf16, #tpu.memory_space<vmem>>, %arg9: memref<60x120xbf16, #tpu.memory_space<vmem>>, %arg10: memref<60x60xbf16, #tpu.memory_space<vmem>>, %arg11: memref<60x60xbf16, #tpu.memory_space<vmem>>, %arg12: memref<60x1xf32, #tpu.memory_space<vmem>>, %arg13: memref<60x512xbf16, #tpu.memory_space<vmem>>, %arg14: memref<60x128xf32, #tpu.memory_space<vmem>>, %arg15: memref<60x128xf32, #tpu.memory_space<vmem>>) attributes {dimension_semantics = [#tpu.dimension_semantics<parallel>], iteration_bounds = array<i64: 1>, scalar_prefetch = 0 : i64, scratch_operands = 0 : i64, tpu.core_type = #tpu.core_type<tc>, window_params = [{transform_indices = @transform_0, window_bounds = array<i64: 120, 512>}, {transform_indices = @transform_1, window_bounds = array<i64: 60, 512>}, {transform_indices = @transform_2, window_bounds = array<i64: 60, 512>}, {pipeline_mode = #tpu.pipeline_mode<synchronous>, transform_indices = @transform_3, window_bounds = array<i64: 120, 1>}, {pipeline_mode = #tpu.pipeline_mode<synchronous>, transform_indices = @transform_4, window_bounds = array<i64: 120, 1>}, {pipeline_mode = #tpu.pipeline_mode<synchronous>, transform_indices = @transform_5, window_bounds = array<i64: 360, 1>}, {pipeline_mode = #tpu.pipeline_mode<synchronous>, transform_indices = @transform_6, window_bounds = array<i64: 360, 1>}, {pipeline_mode = #tpu.pipeline_mode<synchronous>, transform_indices = @transform_7, window_bounds = array<i64: 60, 120>}, {pipeline_mode = #tpu.pipeline_mode<synchronous>, transform_indices = @transform_8, window_bounds = array<i64: 60, 120>}, {pipeline_mode = #tpu.pipeline_mode<synchronous>, transform_indices = @transform_9, window_bounds = array<i64: 60, 60>}, {pipeline_mode = #tpu.pipeline_mode<synchronous>, transform_indices = @transform_10, window_bounds = array<i64: 60, 60>}, {pipeline_mode = #tpu.pipeline_mode<synchronous>, transform_indices = @transform_11, window_bounds = array<i64: 60, 1>}, {transform_indices = @transform_12, window_bounds = array<i64: 60, 512>}, {transform_indices = @transform_13, window_bounds = array<i64: 60, 128>}, {transform_indices = @transform_14, window_bounds = array<i64: 60, 128>}]} {
    %c0 = arith.constant 0 : index
    %c0_0 = arith.constant 0 : index
    %0 = vector.load %arg1[%c0, %c0_0] : memref<120x512xbf16, #tpu.memory_space<vmem>>, vector<120x512xbf16>
    %c0_1 = arith.constant 0 : index
    %c0_2 = arith.constant 0 : index
    %1 = vector.load %arg4[%c0_1, %c0_2] : memref<120x1xf32, #tpu.memory_space<vmem>>, vector<120x1xf32>
    %2 = arith.truncf %1 : vector<120x1xf32> to vector<120x1xbf16>
    %3 = vector.broadcast %2 : vector<120x1xbf16> to vector<120x512xbf16>
    %4 = arith.mulf %0, %3 : vector<120x512xbf16>
    %c0_3 = arith.constant 0 : index
    %c0_4 = arith.constant 0 : index
    %5 = vector.load %arg5[%c0_3, %c0_4] : memref<120x1xf32, #tpu.memory_space<vmem>>, vector<120x1xf32>
    %6 = arith.truncf %5 : vector<120x1xf32> to vector<120x1xbf16>
    %7 = vector.broadcast %6 : vector<120x1xbf16> to vector<120x512xbf16>
    %8 = arith.addf %4, %7 : vector<120x512xbf16>
    %cst = arith.constant 1.000980e-02 : bf16
    %9 = vector.broadcast %cst : bf16 to vector<120x512xbf16>
    %10 = arith.mulf %9, %8 : vector<120x512xbf16>
    %11 = arith.maximumf %8, %10 : vector<120x512xbf16>
    %c0_5 = arith.constant 0 : index
    %c0_6 = arith.constant 0 : index
    %12 = vector.load %arg2[%c0_5, %c0_6] : memref<60x512xbf16, #tpu.memory_space<vmem>>, vector<60x512xbf16>
    %c0_7 = arith.constant 0 : index
    %c0_8 = arith.constant 0 : index
    %13 = vector.load %arg3[%c0_7, %c0_8] : memref<60x512xbf16, #tpu.memory_space<vmem>>, vector<60x512xbf16>
    %c0_9 = arith.constant 0 : index
    %c0_10 = arith.constant 0 : index
    %14 = vector.load %arg6[%c0_9, %c0_10] : memref<360x1xf32, #tpu.memory_space<vmem>>, vector<360x1xf32>
    %c0_11 = arith.constant 0 : index
    %c0_12 = arith.constant 0 : index
    %15 = vector.load %arg7[%c0_11, %c0_12] : memref<360x1xf32, #tpu.memory_space<vmem>>, vector<360x1xf32>
    %16 = vector.extract_strided_slice %14 {offsets = [0, 0], sizes = [120, 1], strides = [1, 1]} : vector<360x1xf32> to vector<120x1xf32>
    %17 = arith.truncf %16 : vector<120x1xf32> to vector<120x1xbf16>
    %18 = vector.extract_strided_slice %15 {offsets = [0, 0], sizes = [120, 1], strides = [1, 1]} : vector<360x1xf32> to vector<120x1xf32>
    %19 = arith.truncf %18 : vector<120x1xf32> to vector<120x1xbf16>
    %20 = vector.broadcast %17 : vector<120x1xbf16> to vector<120x512xbf16>
    %21 = arith.mulf %0, %20 : vector<120x512xbf16>
    %22 = vector.broadcast %19 : vector<120x1xbf16> to vector<120x512xbf16>
    %23 = arith.addf %21, %22 : vector<120x512xbf16>
    %cst_13 = arith.constant 1.000980e-02 : bf16
    %24 = vector.broadcast %cst_13 : bf16 to vector<120x512xbf16>
    %25 = arith.mulf %24, %23 : vector<120x512xbf16>
    %26 = arith.maximumf %23, %25 : vector<120x512xbf16>
    %c0_14 = arith.constant 0 : index
    %c0_15 = arith.constant 0 : index
    %27 = vector.load %arg8[%c0_14, %c0_15] : memref<60x120xbf16, #tpu.memory_space<vmem>>, vector<60x120xbf16>
    %cst_16 = arith.constant dense<0.000000e+00> : vector<60x512xf32>
    %28 = tpu.matmul %27, %26, %cst_16 {dimension_numbers = #tpu.dot_dimension_numbers<[1], [0], [0], [1], [0, 0, 1, 1], [], []>} : vector<60x120xbf16>, vector<120x512xbf16>, vector<60x512xf32> -> vector<60x512xf32>
    %29 = vector.extract_strided_slice %14 {offsets = [120, 0], sizes = [120, 1], strides = [1, 1]} : vector<360x1xf32> to vector<120x1xf32>
    %30 = arith.truncf %29 : vector<120x1xf32> to vector<120x1xbf16>
    %31 = vector.extract_strided_slice %15 {offsets = [120, 0], sizes = [120, 1], strides = [1, 1]} : vector<360x1xf32> to vector<120x1xf32>
    %32 = arith.truncf %31 : vector<120x1xf32> to vector<120x1xbf16>
    %33 = vector.broadcast %30 : vector<120x1xbf16> to vector<120x512xbf16>
    %34 = arith.mulf %11, %33 : vector<120x512xbf16>
    %35 = vector.broadcast %32 : vector<120x1xbf16> to vector<120x512xbf16>
    %36 = arith.addf %34, %35 : vector<120x512xbf16>
    %cst_17 = arith.constant 1.000980e-02 : bf16
    %37 = vector.broadcast %cst_17 : bf16 to vector<120x512xbf16>
    %38 = arith.mulf %37, %36 : vector<120x512xbf16>
    %39 = arith.maximumf %36, %38 : vector<120x512xbf16>
    %c0_18 = arith.constant 0 : index
    %c0_19 = arith.constant 0 : index
    %40 = vector.load %arg9[%c0_18, %c0_19] : memref<60x120xbf16, #tpu.memory_space<vmem>>, vector<60x120xbf16>
    %cst_20 = arith.constant dense<0.000000e+00> : vector<60x512xf32>
    %41 = tpu.matmul %40, %39, %cst_20 {dimension_numbers = #tpu.dot_dimension_numbers<[1], [0], [0], [1], [0, 0, 1, 1], [], []>} : vector<60x120xbf16>, vector<120x512xbf16>, vector<60x512xf32> -> vector<60x512xf32>
    %42 = arith.addf %28, %41 : vector<60x512xf32>
    %43 = vector.extract_strided_slice %14 {offsets = [240, 0], sizes = [60, 1], strides = [1, 1]} : vector<360x1xf32> to vector<60x1xf32>
    %44 = arith.truncf %43 : vector<60x1xf32> to vector<60x1xbf16>
    %45 = vector.extract_strided_slice %15 {offsets = [240, 0], sizes = [60, 1], strides = [1, 1]} : vector<360x1xf32> to vector<60x1xf32>
    %46 = arith.truncf %45 : vector<60x1xf32> to vector<60x1xbf16>
    %47 = vector.broadcast %44 : vector<60x1xbf16> to vector<60x512xbf16>
    %48 = arith.mulf %12, %47 : vector<60x512xbf16>
    %49 = vector.broadcast %46 : vector<60x1xbf16> to vector<60x512xbf16>
    %50 = arith.addf %48, %49 : vector<60x512xbf16>
    %cst_21 = arith.constant 1.000980e-02 : bf16
    %51 = vector.broadcast %cst_21 : bf16 to vector<60x512xbf16>
    %52 = arith.mulf %51, %50 : vector<60x512xbf16>
    %53 = arith.maximumf %50, %52 : vector<60x512xbf16>
    %c0_22 = arith.constant 0 : index
    %c0_23 = arith.constant 0 : index
    %54 = vector.load %arg10[%c0_22, %c0_23] : memref<60x60xbf16, #tpu.memory_space<vmem>>, vector<60x60xbf16>
    %cst_24 = arith.constant dense<0.000000e+00> : vector<60x512xf32>
    %55 = tpu.matmul %54, %53, %cst_24 {dimension_numbers = #tpu.dot_dimension_numbers<[1], [0], [0], [1], [0, 0, 1, 1], [], []>} : vector<60x60xbf16>, vector<60x512xbf16>, vector<60x512xf32> -> vector<60x512xf32>
    %56 = arith.addf %42, %55 : vector<60x512xf32>
    %57 = vector.extract_strided_slice %14 {offsets = [300, 0], sizes = [60, 1], strides = [1, 1]} : vector<360x1xf32> to vector<60x1xf32>
    %58 = arith.truncf %57 : vector<60x1xf32> to vector<60x1xbf16>
    %59 = vector.extract_strided_slice %15 {offsets = [300, 0], sizes = [60, 1], strides = [1, 1]} : vector<360x1xf32> to vector<60x1xf32>
    %60 = arith.truncf %59 : vector<60x1xf32> to vector<60x1xbf16>
    %61 = vector.broadcast %58 : vector<60x1xbf16> to vector<60x512xbf16>
    %62 = arith.mulf %13, %61 : vector<60x512xbf16>
    %63 = vector.broadcast %60 : vector<60x1xbf16> to vector<60x512xbf16>
    %64 = arith.addf %62, %63 : vector<60x512xbf16>
    %cst_25 = arith.constant 1.000980e-02 : bf16
    %65 = vector.broadcast %cst_25 : bf16 to vector<60x512xbf16>
    %66 = arith.mulf %65, %64 : vector<60x512xbf16>
    %67 = arith.maximumf %64, %66 : vector<60x512xbf16>
    %c0_26 = arith.constant 0 : index
    %c0_27 = arith.constant 0 : index
    %68 = vector.load %arg11[%c0_26, %c0_27] : memref<60x60xbf16, #tpu.memory_space<vmem>>, vector<60x60xbf16>
    %cst_28 = arith.constant dense<0.000000e+00> : vector<60x512xf32>
    %69 = tpu.matmul %68, %67, %cst_28 {dimension_numbers = #tpu.dot_dimension_numbers<[1], [0], [0], [1], [0, 0, 1, 1], [], []>} : vector<60x60xbf16>, vector<60x512xbf16>, vector<60x512xf32> -> vector<60x512xf32>
    %70 = arith.addf %56, %69 : vector<60x512xf32>
    %c0_29 = arith.constant 0 : index
    %c0_30 = arith.constant 0 : index
    %71 = vector.load %arg12[%c0_29, %c0_30] : memref<60x1xf32, #tpu.memory_space<vmem>>, vector<60x1xf32>
    %72 = vector.broadcast %71 : vector<60x1xf32> to vector<60x512xf32>
    %73 = arith.addf %70, %72 : vector<60x512xf32>
    %74 = arith.truncf %73 : vector<60x512xf32> to vector<60x512xbf16>
    %c0_31 = arith.constant 0 : index
    %c0_32 = arith.constant 0 : index
    %75 = vector.load %arg13[%c0_31, %c0_32] : memref<60x512xbf16, #tpu.memory_space<vmem>>, vector<60x512xbf16>
    tpu.vector_store %arg13[%c0_31, %c0_32], %74 {strides = array<i32>} : memref<60x512xbf16, #tpu.memory_space<vmem>>, vector<60x512xbf16>,
    %76 = arith.extf %74 : vector<60x512xbf16> to vector<60x512xf32>
    %77 = vector.extract_strided_slice %76 {offsets = [0, 0], sizes = [60, 128], strides = [1, 1]} : vector<60x512xf32> to vector<60x128xf32>
    %78 = vector.extract_strided_slice %76 {offsets = [0, 128], sizes = [60, 128], strides = [1, 1]} : vector<60x512xf32> to vector<60x128xf32>
    %79 = arith.addf %77, %78 : vector<60x128xf32>
    %80 = vector.extract_strided_slice %76 {offsets = [0, 256], sizes = [60, 128], strides = [1, 1]} : vector<60x512xf32> to vector<60x128xf32>
    %81 = arith.addf %79, %80 : vector<60x128xf32>
    %82 = vector.extract_strided_slice %76 {offsets = [0, 384], sizes = [60, 128], strides = [1, 1]} : vector<60x512xf32> to vector<60x128xf32>
    %83 = arith.addf %81, %82 : vector<60x128xf32>
    %84 = arith.mulf %76, %76 : vector<60x512xf32>
    %85 = vector.extract_strided_slice %84 {offsets = [0, 0], sizes = [60, 128], strides = [1, 1]} : vector<60x512xf32> to vector<60x128xf32>
    %86 = vector.extract_strided_slice %84 {offsets = [0, 128], sizes = [60, 128], strides = [1, 1]} : vector<60x512xf32> to vector<60x128xf32>
    %87 = arith.addf %85, %86 : vector<60x128xf32>
    %88 = vector.extract_strided_slice %84 {offsets = [0, 256], sizes = [60, 128], strides = [1, 1]} : vector<60x512xf32> to vector<60x128xf32>
    %89 = arith.addf %87, %88 : vector<60x128xf32>
    %90 = vector.extract_strided_slice %84 {offsets = [0, 384], sizes = [60, 128], strides = [1, 1]} : vector<60x512xf32> to vector<60x128xf32>
    %91 = arith.addf %89, %90 : vector<60x128xf32>
    %c0_33 = arith.constant 0 : index
    %c0_34 = arith.constant 0 : index
    %92 = vector.load %arg14[%c0_33, %c0_34] : memref<60x128xf32, #tpu.memory_space<vmem>>, vector<60x128xf32>
    tpu.vector_store %arg14[%c0_33, %c0_34], %83 {strides = array<i32>} : memref<60x128xf32, #tpu.memory_space<vmem>>, vector<60x128xf32>,
    %c0_35 = arith.constant 0 : index
    %c0_36 = arith.constant 0 : index
    %93 = vector.load %arg15[%c0_35, %c0_36] : memref<60x128xf32, #tpu.memory_space<vmem>>, vector<60x128xf32>
    tpu.vector_store %arg15[%c0_35, %c0_36], %91 {strides = array<i32>} : memref<60x128xf32, #tpu.memory_space<vmem>>, vector<60x128xf32>,
    return
  }
  func.func @transform_0(%arg0: i32) -> (i32, i32) {
    %c0_i32 = arith.constant 0 : i32
    %c0_i32_0 = arith.constant 0 : i32
    return %c0_i32, %arg0 : i32, i32
  }
  func.func @transform_1(%arg0: i32) -> (i32, i32) {
    %c0_i32 = arith.constant 0 : i32
    %c0_i32_0 = arith.constant 0 : i32
    return %c0_i32, %arg0 : i32, i32
  }
  func.func @transform_2(%arg0: i32) -> (i32, i32) {
    %c0_i32 = arith.constant 0 : i32
    %c0_i32_0 = arith.constant 0 : i32
    return %c0_i32, %arg0 : i32, i32
  }
  func.func @transform_3(%arg0: i32) -> (i32, i32) {
    %c0_i32 = arith.constant 0 : i32
    %c0_i32_0 = arith.constant 0 : i32
    %c0_i32_1 = arith.constant 0 : i32
    return %c0_i32, %c0_i32_0 : i32, i32
  }
  func.func @transform_4(%arg0: i32) -> (i32, i32) {
    %c0_i32 = arith.constant 0 : i32
    %c0_i32_0 = arith.constant 0 : i32
    %c0_i32_1 = arith.constant 0 : i32
    return %c0_i32, %c0_i32_0 : i32, i32
  }
  func.func @transform_5(%arg0: i32) -> (i32, i32) {
    %c0_i32 = arith.constant 0 : i32
    %c0_i32_0 = arith.constant 0 : i32
    %c0_i32_1 = arith.constant 0 : i32
    return %c0_i32, %c0_i32_0 : i32, i32
  }
  func.func @transform_6(%arg0: i32) -> (i32, i32) {
    %c0_i32 = arith.constant 0 : i32
    %c0_i32_0 = arith.constant 0 : i32
    %c0_i32_1 = arith.constant 0 : i32
    return %c0_i32, %c0_i32_0 : i32, i32
  }
  func.func @transform_7(%arg0: i32) -> (i32, i32) {
    %c0_i32 = arith.constant 0 : i32
    %c0_i32_0 = arith.constant 0 : i32
    %c0_i32_1 = arith.constant 0 : i32
    return %c0_i32, %c0_i32_0 : i32, i32
  }
  func.func @transform_8(%arg0: i32) -> (i32, i32) {
    %c0_i32 = arith.constant 0 : i32
    %c0_i32_0 = arith.constant 0 : i32
    %c0_i32_1 = arith.constant 0 : i32
    return %c0_i32, %c0_i32_0 : i32, i32
  }
  func.func @transform_9(%arg0: i32) -> (i32, i32) {
    %c0_i32 = arith.constant 0 : i32
    %c0_i32_0 = arith.constant 0 : i32
    %c0_i32_1 = arith.constant 0 : i32
    return %c0_i32, %c0_i32_0 : i32, i32
  }
  func.func @transform_10(%arg0: i32) -> (i32, i32) {
    %c0_i32 = arith.constant 0 : i32
    %c0_i32_0 = arith.constant 0 : i32
    %c0_i32_1 = arith.constant 0 : i32
    return %c0_i32, %c0_i32_0 : i32, i32
  }
  func.func @transform_11(%arg0: i32) -> (i32, i32) {
    %c0_i32 = arith.constant 0 : i32
    %c0_i32_0 = arith.constant 0 : i32
    %c0_i32_1 = arith.constant 0 : i32
    return %c0_i32, %c0_i32_0 : i32, i32
  }
  func.func @transform_12(%arg0: i32) -> (i32, i32) {
    %c0_i32 = arith.constant 0 : i32
    %c0_i32_0 = arith.constant 0 : i32
    return %c0_i32, %arg0 : i32, i32
  }
  func.func @transform_13(%arg0: i32) -> (i32, i32) {
    %c0_i32 = arith.constant 0 : i32
    %c0_i32_0 = arith.constant 0 : i32
    return %c0_i32, %arg0 : i32, i32
  }
  func.func @transform_14(%arg0: i32) -> (i32, i32) {
    %c0_i32 = arith.constant 0 : i32
    %c0_i32_0 = arith.constant 0 : i32
    return %c0_i32, %arg0 : i32, i32
  }
}

module attributes {stable_mosaic.version = 11 : i64} {
  func.func @_dense_pass_kernel(%arg0: i32, %arg1: memref<120x512xbf16, #tpu.memory_space<vmem>>, %arg2: memref<60x512xbf16, #tpu.memory_space<vmem>>, %arg3: memref<60x512xbf16, #tpu.memory_space<vmem>>, %arg4: memref<60x512xbf16, #tpu.memory_space<vmem>>, %arg5: memref<120x1xf32, #tpu.memory_space<vmem>>, %arg6: memref<120x1xf32, #tpu.memory_space<vmem>>, %arg7: memref<420x1xf32, #tpu.memory_space<vmem>>, %arg8: memref<420x1xf32, #tpu.memory_space<vmem>>, %arg9: memref<16x120xbf16, #tpu.memory_space<vmem>>, %arg10: memref<16x120xbf16, #tpu.memory_space<vmem>>, %arg11: memref<16x60xbf16, #tpu.memory_space<vmem>>, %arg12: memref<16x60xbf16, #tpu.memory_space<vmem>>, %arg13: memref<16x60xbf16, #tpu.memory_space<vmem>>, %arg14: memref<16x1xf32, #tpu.memory_space<vmem>>, %arg15: memref<16x512xf32, #tpu.memory_space<vmem>>) attributes {dimension_semantics = [#tpu.dimension_semantics<parallel>], iteration_bounds = array<i64: 1>, scalar_prefetch = 0 : i64, scratch_operands = 0 : i64, tpu.core_type = #tpu.core_type<tc>, window_params = [{transform_indices = @transform_0, window_bounds = array<i64: 120, 512>}, {transform_indices = @transform_1, window_bounds = array<i64: 60, 512>}, {transform_indices = @transform_2, window_bounds = array<i64: 60, 512>}, {transform_indices = @transform_3, window_bounds = array<i64: 60, 512>}, {pipeline_mode = #tpu.pipeline_mode<synchronous>, transform_indices = @transform_4, window_bounds = array<i64: 120, 1>}, {pipeline_mode = #tpu.pipeline_mode<synchronous>, transform_indices = @transform_5, window_bounds = array<i64: 120, 1>}, {pipeline_mode = #tpu.pipeline_mode<synchronous>, transform_indices = @transform_6, window_bounds = array<i64: 420, 1>}, {pipeline_mode = #tpu.pipeline_mode<synchronous>, transform_indices = @transform_7, window_bounds = array<i64: 420, 1>}, {pipeline_mode = #tpu.pipeline_mode<synchronous>, transform_indices = @transform_8, window_bounds = array<i64: 16, 120>}, {pipeline_mode = #tpu.pipeline_mode<synchronous>, transform_indices = @transform_9, window_bounds = array<i64: 16, 120>}, {pipeline_mode = #tpu.pipeline_mode<synchronous>, transform_indices = @transform_10, window_bounds = array<i64: 16, 60>}, {pipeline_mode = #tpu.pipeline_mode<synchronous>, transform_indices = @transform_11, window_bounds = array<i64: 16, 60>}, {pipeline_mode = #tpu.pipeline_mode<synchronous>, transform_indices = @transform_12, window_bounds = array<i64: 16, 60>}, {pipeline_mode = #tpu.pipeline_mode<synchronous>, transform_indices = @transform_13, window_bounds = array<i64: 16, 1>}, {transform_indices = @transform_14, window_bounds = array<i64: 16, 512>}]} {
    %c0 = arith.constant 0 : index
    %c0_0 = arith.constant 0 : index
    %0 = vector.load %arg1[%c0, %c0_0] : memref<120x512xbf16, #tpu.memory_space<vmem>>, vector<120x512xbf16>
    %c0_1 = arith.constant 0 : index
    %c0_2 = arith.constant 0 : index
    %1 = vector.load %arg5[%c0_1, %c0_2] : memref<120x1xf32, #tpu.memory_space<vmem>>, vector<120x1xf32>
    %2 = arith.truncf %1 : vector<120x1xf32> to vector<120x1xbf16>
    %3 = vector.broadcast %2 : vector<120x1xbf16> to vector<120x512xbf16>
    %4 = arith.mulf %0, %3 : vector<120x512xbf16>
    %c0_3 = arith.constant 0 : index
    %c0_4 = arith.constant 0 : index
    %5 = vector.load %arg6[%c0_3, %c0_4] : memref<120x1xf32, #tpu.memory_space<vmem>>, vector<120x1xf32>
    %6 = arith.truncf %5 : vector<120x1xf32> to vector<120x1xbf16>
    %7 = vector.broadcast %6 : vector<120x1xbf16> to vector<120x512xbf16>
    %8 = arith.addf %4, %7 : vector<120x512xbf16>
    %cst = arith.constant 1.000980e-02 : bf16
    %9 = vector.broadcast %cst : bf16 to vector<120x512xbf16>
    %10 = arith.mulf %9, %8 : vector<120x512xbf16>
    %11 = arith.maximumf %8, %10 : vector<120x512xbf16>
    %c0_5 = arith.constant 0 : index
    %c0_6 = arith.constant 0 : index
    %12 = vector.load %arg2[%c0_5, %c0_6] : memref<60x512xbf16, #tpu.memory_space<vmem>>, vector<60x512xbf16>
    %c0_7 = arith.constant 0 : index
    %c0_8 = arith.constant 0 : index
    %13 = vector.load %arg3[%c0_7, %c0_8] : memref<60x512xbf16, #tpu.memory_space<vmem>>, vector<60x512xbf16>
    %c0_9 = arith.constant 0 : index
    %c0_10 = arith.constant 0 : index
    %14 = vector.load %arg4[%c0_9, %c0_10] : memref<60x512xbf16, #tpu.memory_space<vmem>>, vector<60x512xbf16>
    %c0_11 = arith.constant 0 : index
    %c0_12 = arith.constant 0 : index
    %15 = vector.load %arg7[%c0_11, %c0_12] : memref<420x1xf32, #tpu.memory_space<vmem>>, vector<420x1xf32>
    %c0_13 = arith.constant 0 : index
    %c0_14 = arith.constant 0 : index
    %16 = vector.load %arg8[%c0_13, %c0_14] : memref<420x1xf32, #tpu.memory_space<vmem>>, vector<420x1xf32>
    %17 = vector.extract_strided_slice %15 {offsets = [0, 0], sizes = [120, 1], strides = [1, 1]} : vector<420x1xf32> to vector<120x1xf32>
    %18 = arith.truncf %17 : vector<120x1xf32> to vector<120x1xbf16>
    %19 = vector.extract_strided_slice %16 {offsets = [0, 0], sizes = [120, 1], strides = [1, 1]} : vector<420x1xf32> to vector<120x1xf32>
    %20 = arith.truncf %19 : vector<120x1xf32> to vector<120x1xbf16>
    %21 = vector.broadcast %18 : vector<120x1xbf16> to vector<120x512xbf16>
    %22 = arith.mulf %0, %21 : vector<120x512xbf16>
    %23 = vector.broadcast %20 : vector<120x1xbf16> to vector<120x512xbf16>
    %24 = arith.addf %22, %23 : vector<120x512xbf16>
    %cst_15 = arith.constant 1.000980e-02 : bf16
    %25 = vector.broadcast %cst_15 : bf16 to vector<120x512xbf16>
    %26 = arith.mulf %25, %24 : vector<120x512xbf16>
    %27 = arith.maximumf %24, %26 : vector<120x512xbf16>
    %c0_16 = arith.constant 0 : index
    %c0_17 = arith.constant 0 : index
    %28 = vector.load %arg9[%c0_16, %c0_17] : memref<16x120xbf16, #tpu.memory_space<vmem>>, vector<16x120xbf16>
    %cst_18 = arith.constant dense<0.000000e+00> : vector<16x512xf32>
    %29 = tpu.matmul %28, %27, %cst_18 {dimension_numbers = #tpu.dot_dimension_numbers<[1], [0], [0], [1], [0, 0, 1, 1], [], []>} : vector<16x120xbf16>, vector<120x512xbf16>, vector<16x512xf32> -> vector<16x512xf32>
    %30 = vector.extract_strided_slice %15 {offsets = [120, 0], sizes = [120, 1], strides = [1, 1]} : vector<420x1xf32> to vector<120x1xf32>
    %31 = arith.truncf %30 : vector<120x1xf32> to vector<120x1xbf16>
    %32 = vector.extract_strided_slice %16 {offsets = [120, 0], sizes = [120, 1], strides = [1, 1]} : vector<420x1xf32> to vector<120x1xf32>
    %33 = arith.truncf %32 : vector<120x1xf32> to vector<120x1xbf16>
    %34 = vector.broadcast %31 : vector<120x1xbf16> to vector<120x512xbf16>
    %35 = arith.mulf %11, %34 : vector<120x512xbf16>
    %36 = vector.broadcast %33 : vector<120x1xbf16> to vector<120x512xbf16>
    %37 = arith.addf %35, %36 : vector<120x512xbf16>
    %cst_19 = arith.constant 1.000980e-02 : bf16
    %38 = vector.broadcast %cst_19 : bf16 to vector<120x512xbf16>
    %39 = arith.mulf %38, %37 : vector<120x512xbf16>
    %40 = arith.maximumf %37, %39 : vector<120x512xbf16>
    %c0_20 = arith.constant 0 : index
    %c0_21 = arith.constant 0 : index
    %41 = vector.load %arg10[%c0_20, %c0_21] : memref<16x120xbf16, #tpu.memory_space<vmem>>, vector<16x120xbf16>
    %cst_22 = arith.constant dense<0.000000e+00> : vector<16x512xf32>
    %42 = tpu.matmul %41, %40, %cst_22 {dimension_numbers = #tpu.dot_dimension_numbers<[1], [0], [0], [1], [0, 0, 1, 1], [], []>} : vector<16x120xbf16>, vector<120x512xbf16>, vector<16x512xf32> -> vector<16x512xf32>
    %43 = arith.addf %29, %42 : vector<16x512xf32>
    %44 = vector.extract_strided_slice %15 {offsets = [240, 0], sizes = [60, 1], strides = [1, 1]} : vector<420x1xf32> to vector<60x1xf32>
    %45 = arith.truncf %44 : vector<60x1xf32> to vector<60x1xbf16>
    %46 = vector.extract_strided_slice %16 {offsets = [240, 0], sizes = [60, 1], strides = [1, 1]} : vector<420x1xf32> to vector<60x1xf32>
    %47 = arith.truncf %46 : vector<60x1xf32> to vector<60x1xbf16>
    %48 = vector.broadcast %45 : vector<60x1xbf16> to vector<60x512xbf16>
    %49 = arith.mulf %12, %48 : vector<60x512xbf16>
    %50 = vector.broadcast %47 : vector<60x1xbf16> to vector<60x512xbf16>
    %51 = arith.addf %49, %50 : vector<60x512xbf16>
    %cst_23 = arith.constant 1.000980e-02 : bf16
    %52 = vector.broadcast %cst_23 : bf16 to vector<60x512xbf16>
    %53 = arith.mulf %52, %51 : vector<60x512xbf16>
    %54 = arith.maximumf %51, %53 : vector<60x512xbf16>
    %c0_24 = arith.constant 0 : index
    %c0_25 = arith.constant 0 : index
    %55 = vector.load %arg11[%c0_24, %c0_25] : memref<16x60xbf16, #tpu.memory_space<vmem>>, vector<16x60xbf16>
    %cst_26 = arith.constant dense<0.000000e+00> : vector<16x512xf32>
    %56 = tpu.matmul %55, %54, %cst_26 {dimension_numbers = #tpu.dot_dimension_numbers<[1], [0], [0], [1], [0, 0, 1, 1], [], []>} : vector<16x60xbf16>, vector<60x512xbf16>, vector<16x512xf32> -> vector<16x512xf32>
    %57 = arith.addf %43, %56 : vector<16x512xf32>
    %58 = vector.extract_strided_slice %15 {offsets = [300, 0], sizes = [60, 1], strides = [1, 1]} : vector<420x1xf32> to vector<60x1xf32>
    %59 = arith.truncf %58 : vector<60x1xf32> to vector<60x1xbf16>
    %60 = vector.extract_strided_slice %16 {offsets = [300, 0], sizes = [60, 1], strides = [1, 1]} : vector<420x1xf32> to vector<60x1xf32>
    %61 = arith.truncf %60 : vector<60x1xf32> to vector<60x1xbf16>
    %62 = vector.broadcast %59 : vector<60x1xbf16> to vector<60x512xbf16>
    %63 = arith.mulf %13, %62 : vector<60x512xbf16>
    %64 = vector.broadcast %61 : vector<60x1xbf16> to vector<60x512xbf16>
    %65 = arith.addf %63, %64 : vector<60x512xbf16>
    %cst_27 = arith.constant 1.000980e-02 : bf16
    %66 = vector.broadcast %cst_27 : bf16 to vector<60x512xbf16>
    %67 = arith.mulf %66, %65 : vector<60x512xbf16>
    %68 = arith.maximumf %65, %67 : vector<60x512xbf16>
    %c0_28 = arith.constant 0 : index
    %c0_29 = arith.constant 0 : index
    %69 = vector.load %arg12[%c0_28, %c0_29] : memref<16x60xbf16, #tpu.memory_space<vmem>>, vector<16x60xbf16>
    %cst_30 = arith.constant dense<0.000000e+00> : vector<16x512xf32>
    %70 = tpu.matmul %69, %68, %cst_30 {dimension_numbers = #tpu.dot_dimension_numbers<[1], [0], [0], [1], [0, 0, 1, 1], [], []>} : vector<16x60xbf16>, vector<60x512xbf16>, vector<16x512xf32> -> vector<16x512xf32>
    %71 = arith.addf %57, %70 : vector<16x512xf32>
    %72 = vector.extract_strided_slice %15 {offsets = [360, 0], sizes = [60, 1], strides = [1, 1]} : vector<420x1xf32> to vector<60x1xf32>
    %73 = arith.truncf %72 : vector<60x1xf32> to vector<60x1xbf16>
    %74 = vector.extract_strided_slice %16 {offsets = [360, 0], sizes = [60, 1], strides = [1, 1]} : vector<420x1xf32> to vector<60x1xf32>
    %75 = arith.truncf %74 : vector<60x1xf32> to vector<60x1xbf16>
    %76 = vector.broadcast %73 : vector<60x1xbf16> to vector<60x512xbf16>
    %77 = arith.mulf %14, %76 : vector<60x512xbf16>
    %78 = vector.broadcast %75 : vector<60x1xbf16> to vector<60x512xbf16>
    %79 = arith.addf %77, %78 : vector<60x512xbf16>
    %cst_31 = arith.constant 1.000980e-02 : bf16
    %80 = vector.broadcast %cst_31 : bf16 to vector<60x512xbf16>
    %81 = arith.mulf %80, %79 : vector<60x512xbf16>
    %82 = arith.maximumf %79, %81 : vector<60x512xbf16>
    %c0_32 = arith.constant 0 : index
    %c0_33 = arith.constant 0 : index
    %83 = vector.load %arg13[%c0_32, %c0_33] : memref<16x60xbf16, #tpu.memory_space<vmem>>, vector<16x60xbf16>
    %cst_34 = arith.constant dense<0.000000e+00> : vector<16x512xf32>
    %84 = tpu.matmul %83, %82, %cst_34 {dimension_numbers = #tpu.dot_dimension_numbers<[1], [0], [0], [1], [0, 0, 1, 1], [], []>} : vector<16x60xbf16>, vector<60x512xbf16>, vector<16x512xf32> -> vector<16x512xf32>
    %85 = arith.addf %71, %84 : vector<16x512xf32>
    %c0_35 = arith.constant 0 : index
    %c0_36 = arith.constant 0 : index
    %86 = vector.load %arg14[%c0_35, %c0_36] : memref<16x1xf32, #tpu.memory_space<vmem>>, vector<16x1xf32>
    %87 = vector.broadcast %86 : vector<16x1xf32> to vector<16x512xf32>
    %88 = arith.addf %85, %87 : vector<16x512xf32>
    %c0_37 = arith.constant 0 : index
    %c0_38 = arith.constant 0 : index
    %89 = vector.load %arg15[%c0_37, %c0_38] : memref<16x512xf32, #tpu.memory_space<vmem>>, vector<16x512xf32>
    tpu.vector_store %arg15[%c0_37, %c0_38], %88 {strides = array<i32>} : memref<16x512xf32, #tpu.memory_space<vmem>>, vector<16x512xf32>,
    return
  }
  func.func @transform_0(%arg0: i32) -> (i32, i32) {
    %c0_i32 = arith.constant 0 : i32
    %c0_i32_0 = arith.constant 0 : i32
    return %c0_i32, %arg0 : i32, i32
  }
  func.func @transform_1(%arg0: i32) -> (i32, i32) {
    %c0_i32 = arith.constant 0 : i32
    %c0_i32_0 = arith.constant 0 : i32
    return %c0_i32, %arg0 : i32, i32
  }
  func.func @transform_2(%arg0: i32) -> (i32, i32) {
    %c0_i32 = arith.constant 0 : i32
    %c0_i32_0 = arith.constant 0 : i32
    return %c0_i32, %arg0 : i32, i32
  }
  func.func @transform_3(%arg0: i32) -> (i32, i32) {
    %c0_i32 = arith.constant 0 : i32
    %c0_i32_0 = arith.constant 0 : i32
    return %c0_i32, %arg0 : i32, i32
  }
  func.func @transform_4(%arg0: i32) -> (i32, i32) {
    %c0_i32 = arith.constant 0 : i32
    %c0_i32_0 = arith.constant 0 : i32
    %c0_i32_1 = arith.constant 0 : i32
    return %c0_i32, %c0_i32_0 : i32, i32
  }
  func.func @transform_5(%arg0: i32) -> (i32, i32) {
    %c0_i32 = arith.constant 0 : i32
    %c0_i32_0 = arith.constant 0 : i32
    %c0_i32_1 = arith.constant 0 : i32
    return %c0_i32, %c0_i32_0 : i32, i32
  }
  func.func @transform_6(%arg0: i32) -> (i32, i32) {
    %c0_i32 = arith.constant 0 : i32
    %c0_i32_0 = arith.constant 0 : i32
    %c0_i32_1 = arith.constant 0 : i32
    return %c0_i32, %c0_i32_0 : i32, i32
  }
  func.func @transform_7(%arg0: i32) -> (i32, i32) {
    %c0_i32 = arith.constant 0 : i32
    %c0_i32_0 = arith.constant 0 : i32
    %c0_i32_1 = arith.constant 0 : i32
    return %c0_i32, %c0_i32_0 : i32, i32
  }
  func.func @transform_8(%arg0: i32) -> (i32, i32) {
    %c0_i32 = arith.constant 0 : i32
    %c0_i32_0 = arith.constant 0 : i32
    %c0_i32_1 = arith.constant 0 : i32
    return %c0_i32, %c0_i32_0 : i32, i32
  }
  func.func @transform_9(%arg0: i32) -> (i32, i32) {
    %c0_i32 = arith.constant 0 : i32
    %c0_i32_0 = arith.constant 0 : i32
    %c0_i32_1 = arith.constant 0 : i32
    return %c0_i32, %c0_i32_0 : i32, i32
  }
  func.func @transform_10(%arg0: i32) -> (i32, i32) {
    %c0_i32 = arith.constant 0 : i32
    %c0_i32_0 = arith.constant 0 : i32
    %c0_i32_1 = arith.constant 0 : i32
    return %c0_i32, %c0_i32_0 : i32, i32
  }
  func.func @transform_11(%arg0: i32) -> (i32, i32) {
    %c0_i32 = arith.constant 0 : i32
    %c0_i32_0 = arith.constant 0 : i32
    %c0_i32_1 = arith.constant 0 : i32
    return %c0_i32, %c0_i32_0 : i32, i32
  }
  func.func @transform_12(%arg0: i32) -> (i32, i32) {
    %c0_i32 = arith.constant 0 : i32
    %c0_i32_0 = arith.constant 0 : i32
    %c0_i32_1 = arith.constant 0 : i32
    return %c0_i32, %c0_i32_0 : i32, i32
  }
  func.func @transform_13(%arg0: i32) -> (i32, i32) {
    %c0_i32 = arith.constant 0 : i32
    %c0_i32_0 = arith.constant 0 : i32
    %c0_i32_1 = arith.constant 0 : i32
    return %c0_i32, %c0_i32_0 : i32, i32
  }
  func.func @transform_14(%arg0: i32) -> (i32, i32) {
    %c0_i32 = arith.constant 0 : i32
    %c0_i32_0 = arith.constant 0 : i32
    return %c0_i32, %arg0 : i32, i32
  }
}

</mosaic_0001>

<llo_original>
// kernel: m_resblock1_forward.5
$region0: #{m_resblock1_forward.5}
  #allocation0 [shape = 'u32[]', space=smem, size = 0x4, offset = 0x4, fixed_abs, tag = 'smem constant byte address 0x4 - core index']
  #allocation1 [shape = 'u32[144,128]{1,0:T(1,128)}', space=vmem, size = 0x12000, scoped, tag = 'internal scratch']
  %s0 = inlined_call_operand.hbm [shape: f32[512,16], index: 0, kind: input, shape index: {}]
  %s1 = inlined_call_operand.vmem [shape: f32[120,16], index: 1, kind: input, shape index: {}]
  %s2 = inlined_call_operand.vmem [shape: f32[120,1], index: 2, kind: input, shape index: {}]
  %s3 = inlined_call_operand.vmem [shape: bf16[120,512], index: 3, kind: output, shape index: {0}]
  %s4 = inlined_call_operand.vmem [shape: f32[120,128], index: 4, kind: output, shape index: {1}]
  %s5 = inlined_call_operand.vmem [shape: f32[120,128], index: 5, kind: output, shape index: {2}]
  %6 = xla_tuple %s3, %s4, %s5
  %s7 = sld [smem:[#allocation0]]
  $region42: #{m_resblock1_forward.5} parent=0
    _
  %s9 = ssub.s32 1, %s7
  %s10 = scalar_select 0, %s9, %s7
  $region1: #{m_resblock1_forward.5} parent=0
    #allocation2 [shape = 'u8[262144]{0}', space=vmem, size = 0x40000, scoped, tag = 'input window, operand 0, single buffered']
    #allocation3 [shape = 's32[1]{0}', space=sflag, size = 0x4, scoped, tag = 'scoped memory for m_resblock1_forward.5']
    %11 = vsyncpa [#allocation3], 0
    // Predicated region
    $region2: #{m_resblock1_forward.5} parent=1 // pred_check
      _
    $region3: #{m_resblock1_forward.5} parent=1 // pred_check_branch
      %13 = sbr.rel (0) target = $region5
    $region4: #{m_resblock1_forward.5} parent=1 // pred_region
      %s15 = ssub.s32 8192, 8192
      %16 = vsyncadd [#allocation3], %s15
      %s17 = sshll.u32 [#allocation2], 4
      %s18 = int_to_ptr.vmem [resolvable:$true] %s17
      %23 = dma.hbm_to_vmem [thread:$0]  %s0, 8192, %s18, [#allocation3], 128, 128, 8
    $region5: #{m_resblock1_forward.5} parent=1 // pred_fallthru
      _
    // Predicated region
    $region6: #{m_resblock1_forward.5} parent=1 // pred_check
      _
    $region7: #{m_resblock1_forward.5} parent=1 // pred_check_branch
      %25 = sbr.rel (0) target = $region9
    $region8: #{m_resblock1_forward.5} parent=1 // pred_region
      _
    $region9: #{m_resblock1_forward.5} parent=1 // pred_fallthru
      _
    // Predicated region
    $region10: #{m_resblock1_forward.5} parent=1 // pred_check
      _
    $region11: #{m_resblock1_forward.5} parent=1 // pred_check_branch
      %27 = sbr.rel (0) target = $region13
    $region12: #{m_resblock1_forward.5} parent=1 // pred_region
      _
    $region13: #{m_resblock1_forward.5} parent=1 // pred_fallthru
      _
    // Predicated region
    $region14: #{m_resblock1_forward.5} parent=1 // pred_check
      _
    $region15: #{m_resblock1_forward.5} parent=1 // pred_check_branch
      %29 = sbr.rel (0) target = $region17
    $region16: #{m_resblock1_forward.5} parent=1 // pred_region
      %30 = dma.done [#allocation3], 8192
    $region17: #{m_resblock1_forward.5} parent=1 // pred_fallthru
      _
    %v31 = vld [vmem:[#allocation2] sm:$0xff]
    %v32 = vld [vmem:[#allocation2 + $0x8] sm:$0xff]
    %v33 = vld [vmem:[#allocation2 + $0x10] sm:$0xff]
    %v34 = vld [vmem:[#allocation2 + $0x18] sm:$0xff]
    %v35 = vld [vmem:[#allocation2 + $0x20] sm:$0xff]
    %v36 = vld [vmem:[#allocation2 + $0x28] sm:$0xff]
    %v37 = vld [vmem:[#allocation2 + $0x30] sm:$0xff]
    %v38 = vld [vmem:[#allocation2 + $0x38] sm:$0xff]
    %v39 = vld [vmem:[#allocation2 + $0x40] sm:$0xff]
    %v40 = vld [vmem:[#allocation2 + $0x48] sm:$0xff]
    %v41 = vld [vmem:[#allocation2 + $0x50] sm:$0xff]
    %v42 = vld [vmem:[#allocation2 + $0x58] sm:$0xff]
    %v43 = vld [vmem:[#allocation2 + $0x60] sm:$0xff]
    %v44 = vld [vmem:[#allocation2 + $0x68] sm:$0xff]
    %v45 = vld [vmem:[#allocation2 + $0x70] sm:$0xff]
    %v46 = vld [vmem:[#allocation2 + $0x78] sm:$0xff]
    %v47 = vld [vmem:[#allocation2 + $0x80] sm:$0xff]
    %v48 = vld [vmem:[#allocation2 + $0x88] sm:$0xff]
    %v49 = vld [vmem:[#allocation2 + $0x90] sm:$0xff]
    %v50 = vld [vmem:[#allocation2 + $0x98] sm:$0xff]
    %v51 = vld [vmem:[#allocation2 + $0xa0] sm:$0xff]
    %v52 = vld [vmem:[#allocation2 + $0xa8] sm:$0xff]
    %v53 = vld [vmem:[#allocation2 + $0xb0] sm:$0xff]
    %v54 = vld [vmem:[#allocation2 + $0xb8] sm:$0xff]
    %v55 = vld [vmem:[#allocation2 + $0xc0] sm:$0xff]
    %v56 = vld [vmem:[#allocation2 + $0xc8] sm:$0xff]
    %v57 = vld [vmem:[#allocation2 + $0xd0] sm:$0xff]
    %v58 = vld [vmem:[#allocation2 + $0xd8] sm:$0xff]
    %v59 = vld [vmem:[#allocation2 + $0xe0] sm:$0xff]
    %v60 = vld [vmem:[#allocation2 + $0xe8] sm:$0xff]
    %v61 = vld [vmem:[#allocation2 + $0xf0] sm:$0xff]
    %v62 = vld [vmem:[#allocation2 + $0xf8] sm:$0xff]
    %v63 = vld [vmem:[#allocation2 + $0x100] sm:$0xff]
    %v64 = vld [vmem:[#allocation2 + $0x108] sm:$0xff]
    %v65 = vld [vmem:[#allocation2 + $0x110] sm:$0xff]
    %v66 = vld [vmem:[#allocation2 + $0x118] sm:$0xff]
    %v67 = vld [vmem:[#allocation2 + $0x120] sm:$0xff]
    %v68 = vld [vmem:[#allocation2 + $0x128] sm:$0xff]
    %v69 = vld [vmem:[#allocation2 + $0x130] sm:$0xff]
    %v70 = vld [vmem:[#allocation2 + $0x138] sm:$0xff]
    %v71 = vld [vmem:[#allocation2 + $0x140] sm:$0xff]
    %v72 = vld [vmem:[#allocation2 + $0x148] sm:$0xff]
    %v73 = vld [vmem:[#allocation2 + $0x150] sm:$0xff]
    %v74 = vld [vmem:[#allocation2 + $0x158] sm:$0xff]
    %v75 = vld [vmem:[#allocation2 + $0x160] sm:$0xff]
    %v76 = vld [vmem:[#allocation2 + $0x168] sm:$0xff]
    %v77 = vld [vmem:[#allocation2 + $0x170] sm:$0xff]
    %v78 = vld [vmem:[#allocation2 + $0x178] sm:$0xff]
    %v79 = vld [vmem:[#allocation2 + $0x180] sm:$0xff]
    %v80 = vld [vmem:[#allocation2 + $0x188] sm:$0xff]
    %v81 = vld [vmem:[#allocation2 + $0x190] sm:$0xff]
    %v82 = vld [vmem:[#allocation2 + $0x198] sm:$0xff]
    %v83 = vld [vmem:[#allocation2 + $0x1a0] sm:$0xff]
    %v84 = vld [vmem:[#allocation2 + $0x1a8] sm:$0xff]
    %v85 = vld [vmem:[#allocation2 + $0x1b0] sm:$0xff]
    %v86 = vld [vmem:[#allocation2 + $0x1b8] sm:$0xff]
    %v87 = vld [vmem:[#allocation2 + $0x1c0] sm:$0xff]
    %v88 = vld [vmem:[#allocation2 + $0x1c8] sm:$0xff]
    %v89 = vld [vmem:[#allocation2 + $0x1d0] sm:$0xff]
    %v90 = vld [vmem:[#allocation2 + $0x1d8] sm:$0xff]
    %v91 = vld [vmem:[#allocation2 + $0x1e0] sm:$0xff]
    %v92 = vld [vmem:[#allocation2 + $0x1e8] sm:$0xff]
    %v93 = vld [vmem:[#allocation2 + $0x1f0] sm:$0xff]
    %v94 = vld [vmem:[#allocation2 + $0x1f8] sm:$0xff]
    %v95 = vld [vmem:[%s1] sm:$0xff]
    %v96 = vld [vmem:[%s1 + $0x8] sm:$0xff]
    %v97 = vld [vmem:[%s1 + $0x10] sm:$0xff]
    %v98 = vld [vmem:[%s1 + $0x18] sm:$0xff]
    %v99 = vld [vmem:[%s1 + $0x20] sm:$0xff]
    %v100 = vld [vmem:[%s1 + $0x28] sm:$0xff]
    %v101 = vld [vmem:[%s1 + $0x30] sm:$0xff]
    %v102 = vld [vmem:[%s1 + $0x38] sm:$0xff]
    %v103 = vld [vmem:[%s1 + $0x40] sm:$0xff]
    %v104 = vld [vmem:[%s1 + $0x48] sm:$0xff]
    %v105 = vld [vmem:[%s1 + $0x50] sm:$0xff]
    %v106 = vld [vmem:[%s1 + $0x58] sm:$0xff]
    %v107 = vld [vmem:[%s1 + $0x60] sm:$0xff]
    %v108 = vld [vmem:[%s1 + $0x68] sm:$0xff]
    %v109 = vld [vmem:[%s1 + $0x70] sm:$0xff]
    %v110 = vld [vmem:[%s2] sm:$0xff]
    %v111 = vld [vmem:[%s2 + $0x8] sm:$0xff]
    %v112 = vld [vmem:[%s2 + $0x10] sm:$0xff]
    %v113 = vld [vmem:[%s2 + $0x18] sm:$0xff]
    %v114 = vld [vmem:[%s2 + $0x20] sm:$0xff]
    %v115 = vld [vmem:[%s2 + $0x28] sm:$0xff]
    %v116 = vld [vmem:[%s2 + $0x30] sm:$0xff]
    %v117 = vld [vmem:[%s2 + $0x38] sm:$0xff]
    %v118 = vld [vmem:[%s2 + $0x40] sm:$0xff]
    %v119 = vld [vmem:[%s2 + $0x48] sm:$0xff]
    %v120 = vld [vmem:[%s2 + $0x50] sm:$0xff]
    %v121 = vld [vmem:[%s2 + $0x58] sm:$0xff]
    %v122 = vld [vmem:[%s2 + $0x60] sm:$0xff]
    %v123 = vld [vmem:[%s2 + $0x68] sm:$0xff]
    %v124 = vld [vmem:[%s2 + $0x70] sm:$0xff]
    %126 = vset.pattern.permute.xlu0 0
    %127 = vperm.xlu0 %126, %v110
    %v128 = vpop.permute.xlu0 %127
    %131 = vset.pattern.permute.xlu0 0
    %132 = vperm.xlu0 %131, %v111
    %v133 = vpop.permute.xlu0 %132
    %136 = vset.pattern.permute.xlu0 0
    %137 = vperm.xlu0 %136, %v112
    %v138 = vpop.permute.xlu0 %137
    %141 = vset.pattern.permute.xlu0 0
    %142 = vperm.xlu0 %141, %v113
    %v143 = vpop.permute.xlu0 %142
    %146 = vset.pattern.permute.xlu0 0
    %147 = vperm.xlu0 %146, %v114
    %v148 = vpop.permute.xlu0 %147
    %151 = vset.pattern.permute.xlu0 0
    %152 = vperm.xlu0 %151, %v115
    %v153 = vpop.permute.xlu0 %152
    %156 = vset.pattern.permute.xlu0 0
    %157 = vperm.xlu0 %156, %v116
    %v158 = vpop.permute.xlu0 %157
    %161 = vset.pattern.permute.xlu0 0
    %162 = vperm.xlu0 %161, %v117
    %v163 = vpop.permute.xlu0 %162
    %166 = vset.pattern.permute.xlu0 0
    %167 = vperm.xlu0 %166, %v118
    %v168 = vpop.permute.xlu0 %167
    %171 = vset.pattern.permute.xlu0 0
    %172 = vperm.xlu0 %171, %v119
    %v173 = vpop.permute.xlu0 %172
    %176 = vset.pattern.permute.xlu0 0
    %177 = vperm.xlu0 %176, %v120
    %v178 = vpop.permute.xlu0 %177
    %181 = vset.pattern.permute.xlu0 0
    %182 = vperm.xlu0 %181, %v121
    %v183 = vpop.permute.xlu0 %182
    %186 = vset.pattern.permute.xlu0 0
    %187 = vperm.xlu0 %186, %v122
    %v188 = vpop.permute.xlu0 %187
    %191 = vset.pattern.permute.xlu0 0
    %192 = vperm.xlu0 %191, %v123
    %v193 = vpop.permute.xlu0 %192
    %196 = vset.pattern.permute.xlu0 0
    %197 = vperm.xlu0 %196, %v124
    %v198 = vpop.permute.xlu0 %197
    %vm200 = vcmask 130048
    %v202 = vsel %vm200, %v95, 0
    %v205 = vsel %vm200, %v96, 0
    %v208 = vsel %vm200, %v97, 0
    %v211 = vsel %vm200, %v98, 0
    %v214 = vsel %vm200, %v99, 0
    %v217 = vsel %vm200, %v100, 0
    %v220 = vsel %vm200, %v101, 0
    %v223 = vsel %vm200, %v102, 0
    %v226 = vsel %vm200, %v103, 0
    %v229 = vsel %vm200, %v104, 0
    %v232 = vsel %vm200, %v105, 0
    %v235 = vsel %vm200, %v106, 0
    %v238 = vsel %vm200, %v107, 0
    %v241 = vsel %vm200, %v108, 0
    %v244 = vsel %vm200, %v109, 0
    %v247 = vsel %vm200, %v31, 0
    %v250 = vsel %vm200, %v32, 0
    %v253 = vsel %vm200, %v33, 0
    %v256 = vsel %vm200, %v34, 0
    %v259 = vsel %vm200, %v35, 0
    %v262 = vsel %vm200, %v36, 0
    %v265 = vsel %vm200, %v37, 0
    %v268 = vsel %vm200, %v38, 0
    %v271 = vsel %vm200, %v39, 0
    %v274 = vsel %vm200, %v40, 0
    %v277 = vsel %vm200, %v41, 0
    %v280 = vsel %vm200, %v42, 0
    %v283 = vsel %vm200, %v43, 0
    %v286 = vsel %vm200, %v44, 0
    %v289 = vsel %vm200, %v45, 0
    %v292 = vsel %vm200, %v46, 0
    %v295 = vsel %vm200, %v47, 0
    %v298 = vsel %vm200, %v48, 0
    %v301 = vsel %vm200, %v49, 0
    %v304 = vsel %vm200, %v50, 0
    %v307 = vsel %vm200, %v51, 0
    %v310 = vsel %vm200, %v52, 0
    %v313 = vsel %vm200, %v53, 0
    %v316 = vsel %vm200, %v54, 0
    %v319 = vsel %vm200, %v55, 0
    %v322 = vsel %vm200, %v56, 0
    %v325 = vsel %vm200, %v57, 0
    %v328 = vsel %vm200, %v58, 0
    %v331 = vsel %vm200, %v59, 0
    %v334 = vsel %vm200, %v60, 0
    %v337 = vsel %vm200, %v61, 0
    %v340 = vsel %vm200, %v62, 0
    %v343 = vsel %vm200, %v63, 0
    %v346 = vsel %vm200, %v64, 0
    %v349 = vsel %vm200, %v65, 0
    %v352 = vsel %vm200, %v66, 0
    %v355 = vsel %vm200, %v67, 0
    %v358 = vsel %vm200, %v68, 0
    %v361 = vsel %vm200, %v69, 0
    %v364 = vsel %vm200, %v70, 0
    %v367 = vsel %vm200, %v71, 0
    %v370 = vsel %vm200, %v72, 0
    %v373 = vsel %vm200, %v73, 0
    %v376 = vsel %vm200, %v74, 0
    %v379 = vsel %vm200, %v75, 0
    %v382 = vsel %vm200, %v76, 0
    %v385 = vsel %vm200, %v77, 0
    %v388 = vsel %vm200, %v78, 0
    %v391 = vsel %vm200, %v79, 0
    %v394 = vsel %vm200, %v80, 0
    %v397 = vsel %vm200, %v81, 0
    %v400 = vsel %vm200, %v82, 0
    %v403 = vsel %vm200, %v83, 0
    %v406 = vsel %vm200, %v84, 0
    %v409 = vsel %vm200, %v85, 0
    %v412 = vsel %vm200, %v86, 0
    %v415 = vsel %vm200, %v87, 0
    %v418 = vsel %vm200, %v88, 0
    %v421 = vsel %vm200, %v89, 0
    %v424 = vsel %vm200, %v90, 0
    %v427 = vsel %vm200, %v91, 0
    %v430 = vsel %vm200, %v92, 0
    %v433 = vsel %vm200, %v93, 0
    %v436 = vsel %vm200, %v94, 0
    %438 = vmatprep.subr.mxu0 0.0
    %439 = vmatpush1.xpose.msra.mxu0 %v292
    %440 = vmatprep.subr.mxu0 0.0
    %441 = vmatpush1.xpose.msra.mxu0 %v289
    %442 = vmatprep.subr.mxu0 0.0
    %443 = vmatpush1.xpose.msra.mxu0 %v286
    %444 = vmatprep.subr.mxu0 0.0
    %445 = vmatpush1.xpose.msra.mxu0 %v283
    %446 = vmatprep.subr.mxu0 0.0
    %447 = vmatpush1.xpose.msra.mxu0 %v280
    %448 = vmatprep.subr.mxu0 0.0
    %449 = vmatpush1.xpose.msra.mxu0 %v277
    %450 = vmatprep.subr.mxu0 0.0
    %451 = vmatpush1.xpose.msra.mxu0 %v274
    %452 = vmatprep.subr.mxu0 0.0
    %453 = vmatpush1.xpose.msra.mxu0 %v271
    %454 = vmatprep.subr.mxu0 0.0
    %455 = vmatpush1.xpose.msra.mxu0 %v268
    %456 = vmatprep.subr.mxu0 0.0
    %457 = vmatpush1.xpose.msra.mxu0 %v265
    %458 = vmatprep.subr.mxu0 0.0
    %459 = vmatpush1.xpose.msra.mxu0 %v262
    %460 = vmatprep.subr.mxu0 0.0
    %461 = vmatpush1.xpose.msra.mxu0 %v259
    %462 = vmatprep.subr.mxu0 0.0
    %463 = vmatpush1.xpose.msra.mxu0 %v256
    %464 = vmatprep.subr.mxu0 0.0
    %465 = vmatpush1.xpose.msra.mxu0 %v253
    %466 = vmatprep.subr.mxu0 0.0
    %467 = vmatpush1.xpose.msra.mxu0 %v250
    %468 = vmatprep.subr.mxu0 0.0
    %469 = vmatpush1.xpose.msra.mxu0 %v247
    %470 = vmatprep.subr.mxu0 0.0
    %471 = vmatpush2.xpose.msra.mxu0 %v340
    %472 = vmatprep.subr.mxu0 0.0
    %473 = vmatpush2.xpose.msra.mxu0 %v337
    %474 = vmatprep.subr.mxu0 0.0
    %475 = vmatpush2.xpose.msra.mxu0 %v334
    %476 = vmatprep.subr.mxu0 0.0
    %477 = vmatpush2.xpose.msra.mxu0 %v331
    %478 = vmatprep.subr.mxu0 0.0
    %479 = vmatpush2.xpose.msra.mxu0 %v328
    %480 = vmatprep.subr.mxu0 0.0
    %481 = vmatpush2.xpose.msra.mxu0 %v325
    %482 = vmatprep.subr.mxu0 0.0
    %483 = vmatpush2.xpose.msra.mxu0 %v322
    %484 = vmatprep.subr.mxu0 0.0
    %485 = vmatpush2.xpose.msra.mxu0 %v319
    %486 = vmatprep.subr.mxu0 0.0
    %487 = vmatpush2.xpose.msra.mxu0 %v316
    %488 = vmatprep.subr.mxu0 0.0
    %489 = vmatpush2.xpose.msra.mxu0 %v313
    %490 = vmatprep.subr.mxu0 0.0
    %491 = vmatpush2.xpose.msra.mxu0 %v310
    %492 = vmatprep.subr.mxu0 0.0
    %493 = vmatpush2.xpose.msra.mxu0 %v307
    %494 = vmatprep.subr.mxu0 0.0
    %495 = vmatpush2.xpose.msra.mxu0 %v304
    %496 = vmatprep.subr.mxu0 0.0
    %497 = vmatpush2.xpose.msra.mxu0 %v301
    %498 = vmatprep.subr.mxu0 0.0
    %499 = vmatpush2.xpose.msra.mxu0 %v298
    %500 = vmatprep.subr.mxu0 0.0
    %501 = vmatpush2.xpose.msra.mxu0 %v295
    %502 = vmatprep.mubr.f32.mxu0 0.0
    %503 = vmatmul.mubr.f32.gmra.mxu0 %v202
    %v504 = vpop.f32.mrf.mxu0
    %v505 = vadd.f32 %v128, %v504
    %v506 = vpop.f32.mrf.mxu0
    %v507 = vadd.f32 %v128, %v506
    %508 = vmatprep.mubr.f32.mxu0 0.0
    %509 = vmatmul.mubr.f32.gmra.mxu0 %v205
    %v510 = vpop.f32.mrf.mxu0
    %v511 = vadd.f32 %v133, %v510
    %v512 = vpop.f32.mrf.mxu0
    %v513 = vadd.f32 %v133, %v512
    %514 = vmatprep.mubr.f32.mxu0 0.0
    %515 = vmatmul.mubr.f32.gmra.mxu0 %v208
    %v516 = vpop.f32.mrf.mxu0
    %v517 = vadd.f32 %v138, %v516
    %v518 = vpop.f32.mrf.mxu0
    %v519 = vadd.f32 %v138, %v518
    %520 = vmatprep.mubr.f32.mxu0 0.0
    %521 = vmatmul.mubr.f32.gmra.mxu0 %v211
    %v522 = vpop.f32.mrf.mxu0
    %v523 = vadd.f32 %v143, %v522
    %v524 = vpop.f32.mrf.mxu0
    %v525 = vadd.f32 %v143, %v524
    %526 = vmatprep.mubr.f32.mxu0 0.0
    %527 = vmatmul.mubr.f32.gmra.mxu0 %v214
    %v528 = vpop.f32.mrf.mxu0
    %v529 = vadd.f32 %v148, %v528
    %v530 = vpop.f32.mrf.mxu0
    %v531 = vadd.f32 %v148, %v530
    %532 = vmatprep.mubr.f32.mxu0 0.0
    %533 = vmatmul.mubr.f32.gmra.mxu0 %v217
    %v534 = vpop.f32.mrf.mxu0
    %v535 = vadd.f32 %v153, %v534
    %v536 = vpop.f32.mrf.mxu0
    %v537 = vadd.f32 %v153, %v536
    %538 = vmatprep.mubr.f32.mxu0 0.0
    %539 = vmatmul.mubr.f32.gmra.mxu0 %v220
    %v540 = vpop.f32.mrf.mxu0
    %v541 = vadd.f32 %v158, %v540
    %v542 = vpop.f32.mrf.mxu0
    %v543 = vadd.f32 %v158, %v542
    %544 = vmatprep.mubr.f32.mxu0 0.0
    %545 = vmatmul.mubr.f32.gmra.mxu0 %v223
    %v546 = vpop.f32.mrf.mxu0
    %v547 = vadd.f32 %v163, %v546
    %v548 = vpop.f32.mrf.mxu0
    %v549 = vadd.f32 %v163, %v548
    %550 = vmatprep.mubr.f32.mxu0 0.0
    %551 = vmatmul.mubr.f32.gmra.mxu0 %v226
    %v552 = vpop.f32.mrf.mxu0
    %v553 = vadd.f32 %v168, %v552
    %v554 = vpop.f32.mrf.mxu0
    %v555 = vadd.f32 %v168, %v554
    %556 = vmatprep.mubr.f32.mxu0 0.0
    %557 = vmatmul.mubr.f32.gmra.mxu0 %v229
    %v558 = vpop.f32.mrf.mxu0
    %v559 = vadd.f32 %v173, %v558
    %v560 = vpop.f32.mrf.mxu0
    %v561 = vadd.f32 %v173, %v560
    %562 = vmatprep.mubr.f32.mxu0 0.0
    %563 = vmatmul.mubr.f32.gmra.mxu0 %v232
    %v564 = vpop.f32.mrf.mxu0
    %v565 = vadd.f32 %v178, %v564
    %v566 = vpop.f32.mrf.mxu0
    %v567 = vadd.f32 %v178, %v566
    %568 = vmatprep.mubr.f32.mxu0 0.0
    %569 = vmatmul.mubr.f32.gmra.mxu0 %v235
    %v570 = vpop.f32.mrf.mxu0
    %v571 = vadd.f32 %v183, %v570
    %v572 = vpop.f32.mrf.mxu0
    %v573 = vadd.f32 %v183, %v572
    %574 = vmatprep.mubr.f32.mxu0 0.0
    %575 = vmatmul.mubr.f32.gmra.mxu0 %v238
    %v576 = vpop.f32.mrf.mxu0
    %v577 = vadd.f32 %v188, %v576
    %v578 = vpop.f32.mrf.mxu0
    %v579 = vadd.f32 %v188, %v578
    %580 = vmatprep.mubr.f32.mxu0 0.0
    %581 = vmatmul.mubr.f32.gmra.mxu0 %v241
    %v582 = vpop.f32.mrf.mxu0
    %v583 = vadd.f32 %v193, %v582
    %v584 = vpop.f32.mrf.mxu0
    %v585 = vadd.f32 %v193, %v584
    %586 = vmatprep.mubr.f32.mxu0 0.0
    %587 = vmatmul.mubr.f32.gmra.mxu0 %v244
    %v588 = vpop.f32.mrf.mxu0
    %v589 = vadd.f32 %v198, %v588
    %v590 = vpop.f32.mrf.mxu0
    %v591 = vadd.f32 %v198, %v590
    %592 = vdwg.mxu0
    %593 = vmatprep.subr.mxu0 0.0
    %594 = vmatpush1.xpose.msra.mxu0 %v388
    %595 = vmatprep.subr.mxu0 0.0
    %596 = vmatpush1.xpose.msra.mxu0 %v385
    %597 = vmatprep.subr.mxu0 0.0
    %598 = vmatpush1.xpose.msra.mxu0 %v382
    %599 = vmatprep.subr.mxu0 0.0
    %600 = vmatpush1.xpose.msra.mxu0 %v379
    %601 = vmatprep.subr.mxu0 0.0
    %602 = vmatpush1.xpose.msra.mxu0 %v376
    %603 = vmatprep.subr.mxu0 0.0
    %604 = vmatpush1.xpose.msra.mxu0 %v373
    %605 = vmatprep.subr.mxu0 0.0
    %606 = vmatpush1.xpose.msra.mxu0 %v370
    %607 = vmatprep.subr.mxu0 0.0
    %608 = vmatpush1.xpose.msra.mxu0 %v367
    %609 = vmatprep.subr.mxu0 0.0
    %610 = vmatpush1.xpose.msra.mxu0 %v364
    %611 = vmatprep.subr.mxu0 0.0
    %612 = vmatpush1.xpose.msra.mxu0 %v361
    %613 = vmatprep.subr.mxu0 0.0
    %614 = vmatpush1.xpose.msra.mxu0 %v358
    %615 = vmatprep.subr.mxu0 0.0
    %616 = vmatpush1.xpose.msra.mxu0 %v355
    %617 = vmatprep.subr.mxu0 0.0
    %618 = vmatpush1.xpose.msra.mxu0 %v352
    %619 = vmatprep.subr.mxu0 0.0
    %620 = vmatpush1.xpose.msra.mxu0 %v349
    %621 = vmatprep.subr.mxu0 0.0
    %622 = vmatpush1.xpose.msra.mxu0 %v346
    %623 = vmatprep.subr.mxu0 0.0
    %624 = vmatpush1.xpose.msra.mxu0 %v343
    %625 = vmatprep.subr.mxu0 0.0
    %626 = vmatpush2.xpose.msra.mxu0 %v436
    %627 = vmatprep.subr.mxu0 0.0
    %628 = vmatpush2.xpose.msra.mxu0 %v433
    %629 = vmatprep.subr.mxu0 0.0
    %630 = vmatpush2.xpose.msra.mxu0 %v430
    %631 = vmatprep.subr.mxu0 0.0
    %632 = vmatpush2.xpose.msra.mxu0 %v427
    %633 = vmatprep.subr.mxu0 0.0
    %634 = vmatpush2.xpose.msra.mxu0 %v424
    %635 = vmatprep.subr.mxu0 0.0
    %636 = vmatpush2.xpose.msra.mxu0 %v421
    %637 = vmatprep.subr.mxu0 0.0
    %638 = vmatpush2.xpose.msra.mxu0 %v418
    %639 = vmatprep.subr.mxu0 0.0
    %640 = vmatpush2.xpose.msra.mxu0 %v415
    %641 = vmatprep.subr.mxu0 0.0
    %642 = vmatpush2.xpose.msra.mxu0 %v412
    %643 = vmatprep.subr.mxu0 0.0
    %644 = vmatpush2.xpose.msra.mxu0 %v409
    %645 = vmatprep.subr.mxu0 0.0
    %646 = vmatpush2.xpose.msra.mxu0 %v406
    %647 = vmatprep.subr.mxu0 0.0
    %648 = vmatpush2.xpose.msra.mxu0 %v403
    %649 = vmatprep.subr.mxu0 0.0
    %650 = vmatpush2.xpose.msra.mxu0 %v400
    %651 = vmatprep.subr.mxu0 0.0
    %652 = vmatpush2.xpose.msra.mxu0 %v397
    %653 = vmatprep.subr.mxu0 0.0
    %654 = vmatpush2.xpose.msra.mxu0 %v394
    %655 = vmatprep.subr.mxu0 0.0
    %656 = vmatpush2.xpose.msra.mxu0 %v391
    %657 = vmatprep.mubr.f32.mxu0 0.0
    %658 = vmatmul.mubr.f32.gmra.mxu0 %v202
    %v659 = vpop.f32.mrf.mxu0
    %v660 = vadd.f32 %v128, %v659
    %v661 = vpop.f32.mrf.mxu0
    %v662 = vadd.f32 %v128, %v661
    %663 = vmatprep.mubr.f32.mxu0 0.0
    %664 = vmatmul.mubr.f32.gmra.mxu0 %v205
    %v665 = vpop.f32.mrf.mxu0
    %v666 = vadd.f32 %v133, %v665
    %v667 = vpop.f32.mrf.mxu0
    %v668 = vadd.f32 %v133, %v667
    %669 = vmatprep.mubr.f32.mxu0 0.0
    %670 = vmatmul.mubr.f32.gmra.mxu0 %v208
    %v671 = vpop.f32.mrf.mxu0
    %v672 = vadd.f32 %v138, %v671
    %v673 = vpop.f32.mrf.mxu0
    %v674 = vadd.f32 %v138, %v673
    %675 = vmatprep.mubr.f32.mxu0 0.0
    %676 = vmatmul.mubr.f32.gmra.mxu0 %v211
    %v677 = vpop.f32.mrf.mxu0
    %v678 = vadd.f32 %v143, %v677
    %v679 = vpop.f32.mrf.mxu0
    %v680 = vadd.f32 %v143, %v679
    %681 = vmatprep.mubr.f32.mxu0 0.0
    %682 = vmatmul.mubr.f32.gmra.mxu0 %v214
    %v683 = vpop.f32.mrf.mxu0
    %v684 = vadd.f32 %v148, %v683
    %v685 = vpop.f32.mrf.mxu0
    %v686 = vadd.f32 %v148, %v685
    %687 = vmatprep.mubr.f32.mxu0 0.0
    %688 = vmatmul.mubr.f32.gmra.mxu0 %v217
    %v689 = vpop.f32.mrf.mxu0
    %v690 = vadd.f32 %v153, %v689
    %v691 = vpop.f32.mrf.mxu0
    %v692 = vadd.f32 %v153, %v691
    %693 = vmatprep.mubr.f32.mxu0 0.0
    %694 = vmatmul.mubr.f32.gmra.mxu0 %v220
    %v695 = vpop.f32.mrf.mxu0
    %v696 = vadd.f32 %v158, %v695
    %v697 = vpop.f32.mrf.mxu0
    %v698 = vadd.f32 %v158, %v697
    %699 = vmatprep.mubr.f32.mxu0 0.0
    %700 = vmatmul.mubr.f32.gmra.mxu0 %v223
    %v701 = vpop.f32.mrf.mxu0
    %v702 = vadd.f32 %v163, %v701
    %v703 = vpop.f32.mrf.mxu0
    %v704 = vadd.f32 %v163, %v703
    %705 = vmatprep.mubr.f32.mxu0 0.0
    %706 = vmatmul.mubr.f32.gmra.mxu0 %v226
    %v707 = vpop.f32.mrf.mxu0
    %v708 = vadd.f32 %v168, %v707
    %v709 = vpop.f32.mrf.mxu0
    %v710 = vadd.f32 %v168, %v709
    %711 = vmatprep.mubr.f32.mxu0 0.0
    %712 = vmatmul.mubr.f32.gmra.mxu0 %v229
    %v713 = vpop.f32.mrf.mxu0
    %v714 = vadd.f32 %v173, %v713
    %v715 = vpop.f32.mrf.mxu0
    %v716 = vadd.f32 %v173, %v715
    %717 = vmatprep.mubr.f32.mxu0 0.0
    %718 = vmatmul.mubr.f32.gmra.mxu0 %v232
    %v719 = vpop.f32.mrf.mxu0
    %v720 = vadd.f32 %v178, %v719
    %v721 = vpop.f32.mrf.mxu0
    %v722 = vadd.f32 %v178, %v721
    %723 = vmatprep.mubr.f32.mxu0 0.0
    %724 = vmatmul.mubr.f32.gmra.mxu0 %v235
    %v725 = vpop.f32.mrf.mxu0
    %v726 = vadd.f32 %v183, %v725
    %v727 = vpop.f32.mrf.mxu0
    %v728 = vadd.f32 %v183, %v727
    %729 = vmatprep.mubr.f32.mxu0 0.0
    %730 = vmatmul.mubr.f32.gmra.mxu0 %v238
    %v731 = vpop.f32.mrf.mxu0
    %v732 = vadd.f32 %v188, %v731
    %v733 = vpop.f32.mrf.mxu0
    %v734 = vadd.f32 %v188, %v733
    %735 = vmatprep.mubr.f32.mxu0 0.0
    %736 = vmatmul.mubr.f32.gmra.mxu0 %v241
    %v737 = vpop.f32.mrf.mxu0
    %v738 = vadd.f32 %v193, %v737
    %v739 = vpop.f32.mrf.mxu0
    %v740 = vadd.f32 %v193, %v739
    %741 = vmatprep.mubr.f32.mxu0 0.0
    %742 = vmatmul.mubr.f32.gmra.mxu0 %v244
    %v743 = vpop.f32.mrf.mxu0
    %v744 = vadd.f32 %v198, %v743
    %v745 = vpop.f32.mrf.mxu0
    %v746 = vadd.f32 %v198, %v745
    %747 = vdwg.mxu0
    %v748 = vpack.c.bf16 %v511, %v505
    %v749 = vpack.c.bf16 %v513, %v507
    %v750 = vpack.c.bf16 %v666, %v660
    %v751 = vpack.c.bf16 %v668, %v662
    %v752 = vpack.c.bf16 %v523, %v517
    %v753 = vpack.c.bf16 %v525, %v519
    %v754 = vpack.c.bf16 %v678, %v672
    %v755 = vpack.c.bf16 %v680, %v674
    %v756 = vpack.c.bf16 %v535, %v529
    %v757 = vpack.c.bf16 %v537, %v531
    %v758 = vpack.c.bf16 %v690, %v684
    %v759 = vpack.c.bf16 %v692, %v686
    %v760 = vpack.c.bf16 %v547, %v541
    %v761 = vpack.c.bf16 %v549, %v543
    %v762 = vpack.c.bf16 %v702, %v696
    %v763 = vpack.c.bf16 %v704, %v698
    %v764 = vpack.c.bf16 %v559, %v553
    %v765 = vpack.c.bf16 %v561, %v555
    %v766 = vpack.c.bf16 %v714, %v708
    %v767 = vpack.c.bf16 %v716, %v710
    %v768 = vpack.c.bf16 %v571, %v565
    %v769 = vpack.c.bf16 %v573, %v567
    %v770 = vpack.c.bf16 %v726, %v720
    %v771 = vpack.c.bf16 %v728, %v722
    %v772 = vpack.c.bf16 %v583, %v577
    %v773 = vpack.c.bf16 %v585, %v579
    %v774 = vpack.c.bf16 %v738, %v732
    %v775 = vpack.c.bf16 %v740, %v734
    %v776 = vpack.c.bf16 %v589, %v589
    %v777 = vpack.c.bf16 %v591, %v591
    %v778 = vpack.c.bf16 %v744, %v744
    %v779 = vpack.c.bf16 %v746, %v746
    %v812 = vunpack.c.l.b16 %v748
    %v813 = vunpack.c.l.b16 %v749
    %v814 = vunpack.c.l.b16 %v750
    %v815 = vunpack.c.l.b16 %v751
    %v816 = vunpack.c.h.b16 %v748
    %v817 = vunpack.c.h.b16 %v749
    %v818 = vunpack.c.h.b16 %v750
    %v819 = vunpack.c.h.b16 %v751
    %v820 = vunpack.c.l.b16 %v752
    %v821 = vunpack.c.l.b16 %v753
    %v822 = vunpack.c.l.b16 %v754
    %v823 = vunpack.c.l.b16 %v755
    %v824 = vunpack.c.h.b16 %v752
    %v825 = vunpack.c.h.b16 %v753
    %v826 = vunpack.c.h.b16 %v754
    %v827 = vunpack.c.h.b16 %v755
    %v828 = vunpack.c.l.b16 %v756
    %v829 = vunpack.c.l.b16 %v757
    %v830 = vunpack.c.l.b16 %v758
    %v831 = vunpack.c.l.b16 %v759
    %v832 = vunpack.c.h.b16 %v756
    %v833 = vunpack.c.h.b16 %v757
    %v834 = vunpack.c.h.b16 %v758
    %v835 = vunpack.c.h.b16 %v759
    %v836 = vunpack.c.l.b16 %v760
    %v837 = vunpack.c.l.b16 %v761
    %v838 = vunpack.c.l.b16 %v762
    %v839 = vunpack.c.l.b16 %v763
    %v840 = vunpack.c.h.b16 %v760
    %v841 = vunpack.c.h.b16 %v761
    %v842 = vunpack.c.h.b16 %v762
    %v843 = vunpack.c.h.b16 %v763
    %v844 = vunpack.c.l.b16 %v764
    %v845 = vunpack.c.l.b16 %v765
    %v846 = vunpack.c.l.b16 %v766
    %v847 = vunpack.c.l.b16 %v767
    %v848 = vunpack.c.h.b16 %v764
    %v849 = vunpack.c.h.b16 %v765
    %v850 = vunpack.c.h.b16 %v766
    %v851 = vunpack.c.h.b16 %v767
    %v852 = vunpack.c.l.b16 %v768
    %v853 = vunpack.c.l.b16 %v769
    %v854 = vunpack.c.l.b16 %v770
    %v855 = vunpack.c.l.b16 %v771
    %v856 = vunpack.c.h.b16 %v768
    %v857 = vunpack.c.h.b16 %v769
    %v858 = vunpack.c.h.b16 %v770
    %v859 = vunpack.c.h.b16 %v771
    %v860 = vunpack.c.l.b16 %v772
    %v861 = vunpack.c.l.b16 %v773
    %v862 = vunpack.c.l.b16 %v774
    %v863 = vunpack.c.l.b16 %v775
    %v864 = vunpack.c.h.b16 %v772
    %v865 = vunpack.c.h.b16 %v773
    %v866 = vunpack.c.h.b16 %v774
    %v867 = vunpack.c.h.b16 %v775
    %v868 = vunpack.c.l.b16 %v776
    %v869 = vunpack.c.l.b16 %v777
    %v870 = vunpack.c.l.b16 %v778
    %v871 = vunpack.c.l.b16 %v779
    %v872 = vpack.c.b16 %v813, %v812
    %v873 = vpack.c.b16 %v815, %v814
    %v874 = vpack.c.b16 %v817, %v816
    %v875 = vpack.c.b16 %v819, %v818
    %v876 = vpack.c.b16 %v821, %v820
    %v877 = vpack.c.b16 %v823, %v822
    %v878 = vpack.c.b16 %v825, %v824
    %v879 = vpack.c.b16 %v827, %v826
    %v880 = vpack.c.b16 %v829, %v828
    %v881 = vpack.c.b16 %v831, %v830
    %v882 = vpack.c.b16 %v833, %v832
    %v883 = vpack.c.b16 %v835, %v834
    %v884 = vpack.c.b16 %v837, %v836
    %v885 = vpack.c.b16 %v839, %v838
    %v886 = vpack.c.b16 %v841, %v840
    %v887 = vpack.c.b16 %v843, %v842
    %v888 = vpack.c.b16 %v845, %v844
    %v889 = vpack.c.b16 %v847, %v846
    %v890 = vpack.c.b16 %v849, %v848
    %v891 = vpack.c.b16 %v851, %v850
    %v892 = vpack.c.b16 %v853, %v852
    %v893 = vpack.c.b16 %v855, %v854
    %v894 = vpack.c.b16 %v857, %v856
    %v895 = vpack.c.b16 %v859, %v858
    %v896 = vpack.c.b16 %v861, %v860
    %v897 = vpack.c.b16 %v863, %v862
    %v898 = vpack.c.b16 %v865, %v864
    %v899 = vpack.c.b16 %v867, %v866
    %v900 = vpack.c.b16 %v869, %v868
    %v901 = vpack.c.b16 %v871, %v870
    %932 = vst [vmem:[%s3] sm:$0xff] %v872
    %933 = vst [vmem:[%s3 + $0x8] sm:$0xff] %v873
    %934 = vst [vmem:[%s3 + $0x10] sm:$0xff] %v874
    %935 = vst [vmem:[%s3 + $0x18] sm:$0xff] %v875
    %936 = vst [vmem:[%s3 + $0x20] sm:$0xff] %v876
    %937 = vst [vmem:[%s3 + $0x28] sm:$0xff] %v877
    %938 = vst [vmem:[%s3 + $0x30] sm:$0xff] %v878
    %939 = vst [vmem:[%s3 + $0x38] sm:$0xff] %v879
    %940 = vst [vmem:[%s3 + $0x40] sm:$0xff] %v880
    %941 = vst [vmem:[%s3 + $0x48] sm:$0xff] %v881
    %942 = vst [vmem:[%s3 + $0x50] sm:$0xff] %v882
    %943 = vst [vmem:[%s3 + $0x58] sm:$0xff] %v883
    %944 = vst [vmem:[%s3 + $0x60] sm:$0xff] %v884
    %945 = vst [vmem:[%s3 + $0x68] sm:$0xff] %v885
    %946 = vst [vmem:[%s3 + $0x70] sm:$0xff] %v886
    %947 = vst [vmem:[%s3 + $0x78] sm:$0xff] %v887
    %948 = vst [vmem:[%s3 + $0x80] sm:$0xff] %v888
    %949 = vst [vmem:[%s3 + $0x88] sm:$0xff] %v889
    %950 = vst [vmem:[%s3 + $0x90] sm:$0xff] %v890
    %951 = vst [vmem:[%s3 + $0x98] sm:$0xff] %v891
    %952 = vst [vmem:[%s3 + $0xa0] sm:$0xff] %v892
    %953 = vst [vmem:[%s3 + $0xa8] sm:$0xff] %v893
    %954 = vst [vmem:[%s3 + $0xb0] sm:$0xff] %v894
    %955 = vst [vmem:[%s3 + $0xb8] sm:$0xff] %v895
    %956 = vst [vmem:[%s3 + $0xc0] sm:$0xff] %v896
    %957 = vst [vmem:[%s3 + $0xc8] sm:$0xff] %v897
    %958 = vst [vmem:[%s3 + $0xd0] sm:$0xff] %v898
    %959 = vst [vmem:[%s3 + $0xd8] sm:$0xff] %v899
    %960 = vst [vmem:[%s3 + $0xe0] sm:$0xff] %v900
    %961 = vst [vmem:[%s3 + $0xe8] sm:$0xff] %v901
    %v962 = vunpack.c.l.bf16 %v748
    %v963 = vunpack.c.l.bf16 %v749
    %v964 = vunpack.c.l.bf16 %v750
    %v965 = vunpack.c.l.bf16 %v751
    %v966 = vunpack.c.h.bf16 %v748
    %v967 = vunpack.c.h.bf16 %v749
    %v968 = vunpack.c.h.bf16 %v750
    %v969 = vunpack.c.h.bf16 %v751
    %v970 = vunpack.c.l.bf16 %v752
    %v971 = vunpack.c.l.bf16 %v753
    %v972 = vunpack.c.l.bf16 %v754
    %v973 = vunpack.c.l.bf16 %v755
    %v974 = vunpack.c.h.bf16 %v752
    %v975 = vunpack.c.h.bf16 %v753
    %v976 = vunpack.c.h.bf16 %v754
    %v977 = vunpack.c.h.bf16 %v755
    %v978 = vunpack.c.l.bf16 %v756
    %v979 = vunpack.c.l.bf16 %v757
    %v980 = vunpack.c.l.bf16 %v758
    %v981 = vunpack.c.l.bf16 %v759
    %v982 = vunpack.c.h.bf16 %v756
    %v983 = vunpack.c.h.bf16 %v757
    %v984 = vunpack.c.h.bf16 %v758
    %v985 = vunpack.c.h.bf16 %v759
    %v986 = vunpack.c.l.bf16 %v760
    %v987 = vunpack.c.l.bf16 %v761
    %v988 = vunpack.c.l.bf16 %v762
    %v989 = vunpack.c.l.bf16 %v763
    %v990 = vunpack.c.h.bf16 %v760
    %v991 = vunpack.c.h.bf16 %v761
    %v992 = vunpack.c.h.bf16 %v762
    %v993 = vunpack.c.h.bf16 %v763
    %v994 = vunpack.c.l.bf16 %v764
    %v995 = vunpack.c.l.bf16 %v765
    %v996 = vunpack.c.l.bf16 %v766
    %v997 = vunpack.c.l.bf16 %v767
    %v998 = vunpack.c.h.bf16 %v764
    %v999 = vunpack.c.h.bf16 %v765
    %v1000 = vunpack.c.h.bf16 %v766
    %v1001 = vunpack.c.h.bf16 %v767
    %v1002 = vunpack.c.l.bf16 %v768
    %v1003 = vunpack.c.l.bf16 %v769
    %v1004 = vunpack.c.l.bf16 %v770
    %v1005 = vunpack.c.l.bf16 %v771
    %v1006 = vunpack.c.h.bf16 %v768
    %v1007 = vunpack.c.h.bf16 %v769
    %v1008 = vunpack.c.h.bf16 %v770
    %v1009 = vunpack.c.h.bf16 %v771
    %v1010 = vunpack.c.l.bf16 %v772
    %v1011 = vunpack.c.l.bf16 %v773
    %v1012 = vunpack.c.l.bf16 %v774
    %v1013 = vunpack.c.l.bf16 %v775
    %v1014 = vunpack.c.h.bf16 %v772
    %v1015 = vunpack.c.h.bf16 %v773
    %v1016 = vunpack.c.h.bf16 %v774
    %v1017 = vunpack.c.h.bf16 %v775
    %v1018 = vunpack.c.l.bf16 %v776
    %v1019 = vunpack.c.l.bf16 %v777
    %v1020 = vunpack.c.l.bf16 %v778
    %v1021 = vunpack.c.l.bf16 %v779
    %v1022 = vadd.f32 %v962, %v963
    %v1023 = vadd.f32 %v966, %v967
    %v1024 = vadd.f32 %v970, %v971
    %v1025 = vadd.f32 %v974, %v975
    %v1026 = vadd.f32 %v978, %v979
    %v1027 = vadd.f32 %v982, %v983
    %v1028 = vadd.f32 %v986, %v987
    %v1029 = vadd.f32 %v990, %v991
    %v1030 = vadd.f32 %v994, %v995
    %v1031 = vadd.f32 %v998, %v999
    %v1032 = vadd.f32 %v1002, %v1003
    %v1033 = vadd.f32 %v1006, %v1007
    %v1034 = vadd.f32 %v1010, %v1011
    %v1035 = vadd.f32 %v1014, %v1015
    %v1036 = vadd.f32 %v1018, %v1019
    %v1037 = vadd.f32 %v1022, %v964
    %v1038 = vadd.f32 %v1023, %v968
    %v1039 = vadd.f32 %v1024, %v972
    %v1040 = vadd.f32 %v1025, %v976
    %v1041 = vadd.f32 %v1026, %v980
    %v1042 = vadd.f32 %v1027, %v984
    %v1043 = vadd.f32 %v1028, %v988
    %v1044 = vadd.f32 %v1029, %v992
    %v1045 = vadd.f32 %v1030, %v996
    %v1046 = vadd.f32 %v1031, %v1000
    %v1047 = vadd.f32 %v1032, %v1004
    %v1048 = vadd.f32 %v1033, %v1008
    %v1049 = vadd.f32 %v1034, %v1012
    %v1050 = vadd.f32 %v1035, %v1016
    %v1051 = vadd.f32 %v1036, %v1020
    %v1052 = vadd.f32 %v1037, %v965
    %v1053 = vadd.f32 %v1038, %v969
    %v1054 = vadd.f32 %v1039, %v973
    %v1055 = vadd.f32 %v1040, %v977
    %v1056 = vadd.f32 %v1041, %v981
    %v1057 = vadd.f32 %v1042, %v985
    %v1058 = vadd.f32 %v1043, %v989
    %v1059 = vadd.f32 %v1044, %v993
    %v1060 = vadd.f32 %v1045, %v997
    %v1061 = vadd.f32 %v1046, %v1001
    %v1062 = vadd.f32 %v1047, %v1005
    %v1063 = vadd.f32 %v1048, %v1009
    %v1064 = vadd.f32 %v1049, %v1013
    %v1065 = vadd.f32 %v1050, %v1017
    %v1066 = vadd.f32 %v1051, %v1021
    %v1067 = vmul.f32 %v962, %v962
    %v1068 = vmul.f32 %v963, %v963
    %v1069 = vmul.f32 %v964, %v964
    %v1070 = vmul.f32 %v965, %v965
    %v1071 = vmul.f32 %v966, %v966
    %v1072 = vmul.f32 %v967, %v967
    %v1073 = vmul.f32 %v968, %v968
    %v1074 = vmul.f32 %v969, %v969
    %v1075 = vmul.f32 %v970, %v970
    %v1076 = vmul.f32 %v971, %v971
    %v1077 = vmul.f32 %v972, %v972
    %v1078 = vmul.f32 %v973, %v973
    %v1079 = vmul.f32 %v974, %v974
    %v1080 = vmul.f32 %v975, %v975
    %v1081 = vmul.f32 %v976, %v976
    %v1082 = vmul.f32 %v977, %v977
    %v1083 = vmul.f32 %v978, %v978
    %v1084 = vmul.f32 %v979, %v979
    %v1085 = vmul.f32 %v980, %v980
    %v1086 = vmul.f32 %v981, %v981
    %v1087 = vmul.f32 %v982, %v982
    %v1088 = vmul.f32 %v983, %v983
    %v1089 = vmul.f32 %v984, %v984
    %v1090 = vmul.f32 %v985, %v985
    %v1091 = vmul.f32 %v986, %v986
    %v1092 = vmul.f32 %v987, %v987
    %v1093 = vmul.f32 %v988, %v988
    %v1094 = vmul.f32 %v989, %v989
    %v1095 = vmul.f32 %v990, %v990
    %v1096 = vmul.f32 %v991, %v991
    %v1097 = vmul.f32 %v992, %v992
    %v1098 = vmul.f32 %v993, %v993
    %v1099 = vmul.f32 %v994, %v994
    %v1100 = vmul.f32 %v995, %v995
    %v1101 = vmul.f32 %v996, %v996
    %v1102 = vmul.f32 %v997, %v997
    %v1103 = vmul.f32 %v998, %v998
    %v1104 = vmul.f32 %v999, %v999
    %v1105 = vmul.f32 %v1000, %v1000
    %v1106 = vmul.f32 %v1001, %v1001
    %v1107 = vmul.f32 %v1002, %v1002
    %v1108 = vmul.f32 %v1003, %v1003
    %v1109 = vmul.f32 %v1004, %v1004
    %v1110 = vmul.f32 %v1005, %v1005
    %v1111 = vmul.f32 %v1006, %v1006
    %v1112 = vmul.f32 %v1007, %v1007
    %v1113 = vmul.f32 %v1008, %v1008
    %v1114 = vmul.f32 %v1009, %v1009
    %v1115 = vmul.f32 %v1010, %v1010
    %v1116 = vmul.f32 %v1011, %v1011
    %v1117 = vmul.f32 %v1012, %v1012
    %v1118 = vmul.f32 %v1013, %v1013
    %v1119 = vmul.f32 %v1014, %v1014
    %v1120 = vmul.f32 %v1015, %v1015
    %v1121 = vmul.f32 %v1016, %v1016
    %v1122 = vmul.f32 %v1017, %v1017
    %v1123 = vmul.f32 %v1018, %v1018
    %v1124 = vmul.f32 %v1019, %v1019
    %v1125 = vmul.f32 %v1020, %v1020
    %v1126 = vmul.f32 %v1021, %v1021
    %v1127 = vadd.f32 %v1067, %v1068
    %v1128 = vadd.f32 %v1071, %v1072
    %v1129 = vadd.f32 %v1075, %v1076
    %v1130 = vadd.f32 %v1079, %v1080
    %v1131 = vadd.f32 %v1083, %v1084
    %v1132 = vadd.f32 %v1087, %v1088
    %v1133 = vadd.f32 %v1091, %v1092
    %v1134 = vadd.f32 %v1095, %v1096
    %v1135 = vadd.f32 %v1099, %v1100
    %v1136 = vadd.f32 %v1103, %v1104
    %v1137 = vadd.f32 %v1107, %v1108
    %v1138 = vadd.f32 %v1111, %v1112
    %v1139 = vadd.f32 %v1115, %v1116
    %v1140 = vadd.f32 %v1119, %v1120
    %v1141 = vadd.f32 %v1123, %v1124
    %v1142 = vadd.f32 %v1127, %v1069
    %v1143 = vadd.f32 %v1128, %v1073
    %v1144 = vadd.f32 %v1129, %v1077
    %v1145 = vadd.f32 %v1130, %v1081
    %v1146 = vadd.f32 %v1131, %v1085
    %v1147 = vadd.f32 %v1132, %v1089
    %v1148 = vadd.f32 %v1133, %v1093
    %v1149 = vadd.f32 %v1134, %v1097
    %v1150 = vadd.f32 %v1135, %v1101
    %v1151 = vadd.f32 %v1136, %v1105
    %v1152 = vadd.f32 %v1137, %v1109
    %v1153 = vadd.f32 %v1138, %v1113
    %v1154 = vadd.f32 %v1139, %v1117
    %v1155 = vadd.f32 %v1140, %v1121
    %v1156 = vadd.f32 %v1141, %v1125
    %v1157 = vadd.f32 %v1142, %v1070
    %v1158 = vadd.f32 %v1143, %v1074
    %v1159 = vadd.f32 %v1144, %v1078
    %v1160 = vadd.f32 %v1145, %v1082
    %v1161 = vadd.f32 %v1146, %v1086
    %v1162 = vadd.f32 %v1147, %v1090
    %v1163 = vadd.f32 %v1148, %v1094
    %v1164 = vadd.f32 %v1149, %v1098
    %v1165 = vadd.f32 %v1150, %v1102
    %v1166 = vadd.f32 %v1151, %v1106
    %v1167 = vadd.f32 %v1152, %v1110
    %v1168 = vadd.f32 %v1153, %v1114
    %v1169 = vadd.f32 %v1154, %v1118
    %v1170 = vadd.f32 %v1155, %v1122
    %v1171 = vadd.f32 %v1156, %v1126
    %1172 = vst [vmem:[%s4] sm:$0xff] %v1052
    %1173 = vst [vmem:[%s4 + $0x8] sm:$0xff] %v1053
    %1174 = vst [vmem:[%s4 + $0x10] sm:$0xff] %v1054
    %1175 = vst [vmem:[%s4 + $0x18] sm:$0xff] %v1055
    %1176 = vst [vmem:[%s4 + $0x20] sm:$0xff] %v1056
    %1177 = vst [vmem:[%s4 + $0x28] sm:$0xff] %v1057
    %1178 = vst [vmem:[%s4 + $0x30] sm:$0xff] %v1058
    %1179 = vst [vmem:[%s4 + $0x38] sm:$0xff] %v1059
    %1180 = vst [vmem:[%s4 + $0x40] sm:$0xff] %v1060
    %1181 = vst [vmem:[%s4 + $0x48] sm:$0xff] %v1061
    %1182 = vst [vmem:[%s4 + $0x50] sm:$0xff] %v1062
    %1183 = vst [vmem:[%s4 + $0x58] sm:$0xff] %v1063
    %1184 = vst [vmem:[%s4 + $0x60] sm:$0xff] %v1064
    %1185 = vst [vmem:[%s4 + $0x68] sm:$0xff] %v1065
    %1186 = vst [vmem:[%s4 + $0x70] sm:$0xff] %v1066
    %1187 = vst [vmem:[%s5] sm:$0xff] %v1157
    %1188 = vst [vmem:[%s5 + $0x8] sm:$0xff] %v1158
    %1189 = vst [vmem:[%s5 + $0x10] sm:$0xff] %v1159
    %1190 = vst [vmem:[%s5 + $0x18] sm:$0xff] %v1160
    %1191 = vst [vmem:[%s5 + $0x20] sm:$0xff] %v1161
    %1192 = vst [vmem:[%s5 + $0x28] sm:$0xff] %v1162
    %1193 = vst [vmem:[%s5 + $0x30] sm:$0xff] %v1163
    %1194 = vst [vmem:[%s5 + $0x38] sm:$0xff] %v1164
    %1195 = vst [vmem:[%s5 + $0x40] sm:$0xff] %v1165
    %1196 = vst [vmem:[%s5 + $0x48] sm:$0xff] %v1166
    %1197 = vst [vmem:[%s5 + $0x50] sm:$0xff] %v1167
    %1198 = vst [vmem:[%s5 + $0x58] sm:$0xff] %v1168
    %1199 = vst [vmem:[%s5 + $0x60] sm:$0xff] %v1169
    %1200 = vst [vmem:[%s5 + $0x68] sm:$0xff] %v1170
    %1201 = vst [vmem:[%s5 + $0x70] sm:$0xff] %v1171
    // Predicated region
    $region18: #{m_resblock1_forward.5} parent=1 // pred_check
      _
    $region19: #{m_resblock1_forward.5} parent=1 // pred_check_branch
      %1203 = sbr.rel (0) target = $region21
    $region20: #{m_resblock1_forward.5} parent=1 // pred_region
      _
    $region21: #{m_resblock1_forward.5} parent=1 // pred_fallthru
      _
    // Predicated region
    $region22: #{m_resblock1_forward.5} parent=1 // pred_check
      _
    $region23: #{m_resblock1_forward.5} parent=1 // pred_check_branch
      %1205 = sbr.rel (0) target = $region25
    $region24: #{m_resblock1_forward.5} parent=1 // pred_region
      _
    $region25: #{m_resblock1_forward.5} parent=1 // pred_fallthru
      _
    // Predicated region
    $region26: #{m_resblock1_forward.5} parent=1 // pred_check
      _
    $region27: #{m_resblock1_forward.5} parent=1 // pred_check_branch
      %1207 = sbr.rel (0) target = $region29
    $region28: #{m_resblock1_forward.5} parent=1 // pred_region
      _
    $region29: #{m_resblock1_forward.5} parent=1 // pred_fallthru
      _
    // Predicated region
    $region30: #{m_resblock1_forward.5} parent=1 // pred_check
      _
    $region31: #{m_resblock1_forward.5} parent=1 // pred_check_branch
      %1209 = sbr.rel (0) target = $region33
    $region32: #{m_resblock1_forward.5} parent=1 // pred_region
      _
    $region33: #{m_resblock1_forward.5} parent=1 // pred_fallthru
      _
    // Predicated region
    $region34: #{m_resblock1_forward.5} parent=1 // pred_check
      _
    $region35: #{m_resblock1_forward.5} parent=1 // pred_check_branch
      %1211 = sbr.rel (0) target = $region37
    $region36: #{m_resblock1_forward.5} parent=1 // pred_region
      _
    $region37: #{m_resblock1_forward.5} parent=1 // pred_fallthru
      _
    // Predicated region
    $region38: #{m_resblock1_forward.5} parent=1 // pred_check
      _
    $region39: #{m_resblock1_forward.5} parent=1 // pred_check_branch
      %1213 = sbr.rel (0) target = $region41
    $region40: #{m_resblock1_forward.5} parent=1 // pred_region
      _
    $region41: #{m_resblock1_forward.5} parent=1 // pred_fallthru
      _
    %1214 = vsyncpa [#allocation3], 1

// kernel: m_resblock1_forward.6
$region0: #{m_resblock1_forward.6}
  #allocation0 [shape = 'u32[]', space=smem, size = 0x4, offset = 0x4, fixed_abs, tag = 'smem constant byte address 0x4 - core index']
  #allocation1 [shape = 'u32[144,128]{1,0:T(1,128)}', space=vmem, size = 0x12000, scoped, tag = 'internal scratch']
  %s0 = inlined_call_operand.vmem [shape: bf16[120,512], index: 0, kind: input, shape index: {}]
  %s1 = inlined_call_operand.vmem [shape: f32[120,1], index: 1, kind: input, shape index: {}]
  %s2 = inlined_call_operand.vmem [shape: f32[120,1], index: 2, kind: input, shape index: {}]
  %s3 = inlined_call_operand.vmem [shape: bf16[60,120], index: 3, kind: input, shape index: {}]
  %s4 = inlined_call_operand.vmem [shape: bf16[60,120], index: 4, kind: input, shape index: {}]
  %s5 = inlined_call_operand.vmem [shape: f32[60,1], index: 5, kind: input, shape index: {}]
  %s6 = inlined_call_operand.vmem [shape: bf16[60,512], index: 6, kind: output, shape index: {0}]
  %s7 = inlined_call_operand.vmem [shape: f32[120,128], index: 7, kind: output, shape index: {1}]
  %s8 = inlined_call_operand.vmem [shape: f32[120,128], index: 8, kind: output, shape index: {2}]
  %s9 = inlined_call_operand.vmem [shape: f32[60,128], index: 9, kind: output, shape index: {3}]
  %s10 = inlined_call_operand.vmem [shape: f32[60,128], index: 10, kind: output, shape index: {4}]
  %11 = xla_tuple %s6, %s7, %s8, %s9, %s10
  %s12 = sld [smem:[#allocation0]]
  $region66: #{m_resblock1_forward.6} parent=0
    _
  %s14 = ssub.s32 1, %s12
  %s15 = scalar_select 0, %s14, %s12
  // Predicated region
  $region2: #{m_resblock1_forward.6} parent=0 // pred_check
    _
  $region3: #{m_resblock1_forward.6} parent=0 // pred_check_branch
    %17 = sbr.rel (0) target = $region5
  $region4: #{m_resblock1_forward.6} parent=0 // pred_region
    _
  $region5: #{m_resblock1_forward.6} parent=0 // pred_fallthru
    _
  // Predicated region
  $region6: #{m_resblock1_forward.6} parent=0 // pred_check
    _
  $region7: #{m_resblock1_forward.6} parent=0 // pred_check_branch
    %19 = sbr.rel (0) target = $region9
  $region8: #{m_resblock1_forward.6} parent=0 // pred_region
    _
  $region9: #{m_resblock1_forward.6} parent=0 // pred_fallthru
    _
  // Predicated region
  $region10: #{m_resblock1_forward.6} parent=0 // pred_check
    _
  $region11: #{m_resblock1_forward.6} parent=0 // pred_check_branch
    %21 = sbr.rel (0) target = $region13
  $region12: #{m_resblock1_forward.6} parent=0 // pred_region
    _
  $region13: #{m_resblock1_forward.6} parent=0 // pred_fallthru
    _
  // Predicated region
  $region14: #{m_resblock1_forward.6} parent=0 // pred_check
    _
  $region15: #{m_resblock1_forward.6} parent=0 // pred_check_branch
    %23 = sbr.rel (0) target = $region17
  $region16: #{m_resblock1_forward.6} parent=0 // pred_region
    _
  $region17: #{m_resblock1_forward.6} parent=0 // pred_fallthru
    _
  // Predicated region
  $region18: #{m_resblock1_forward.6} parent=0 // pred_check
    _
  $region19: #{m_resblock1_forward.6} parent=0 // pred_check_branch
    %25 = sbr.rel (0) target = $region21
  $region20: #{m_resblock1_forward.6} parent=0 // pred_region
    _
  $region21: #{m_resblock1_forward.6} parent=0 // pred_fallthru
    _
  // Predicated region
  $region22: #{m_resblock1_forward.6} parent=0 // pred_check
    _
  $region23: #{m_resblock1_forward.6} parent=0 // pred_check_branch
    %27 = sbr.rel (0) target = $region25
  $region24: #{m_resblock1_forward.6} parent=0 // pred_region
    _
  $region25: #{m_resblock1_forward.6} parent=0 // pred_fallthru
    _
  %v30 = vld [vmem:[%s0] sm:$0xff]
  %v31 = vld [vmem:[%s0 + $0x8] sm:$0xff]
  %v32 = vld [vmem:[%s0 + $0x10] sm:$0xff]
  %v33 = vld [vmem:[%s0 + $0x18] sm:$0xff]
  %v34 = vld [vmem:[%s0 + $0x20] sm:$0xff]
  %v35 = vld [vmem:[%s0 + $0x28] sm:$0xff]
  %v36 = vld [vmem:[%s0 + $0x30] sm:$0xff]
  %v37 = vld [vmem:[%s0 + $0x38] sm:$0xff]
  %v38 = vld [vmem:[%s0 + $0x40] sm:$0xff]
  %v39 = vld [vmem:[%s0 + $0x48] sm:$0xff]
  %v40 = vld [vmem:[%s0 + $0x50] sm:$0xff]
  %v41 = vld [vmem:[%s0 + $0x58] sm:$0xff]
  %v42 = vld [vmem:[%s0 + $0x60] sm:$0xff]
  %v43 = vld [vmem:[%s0 + $0x68] sm:$0xff]
  %v44 = vld [vmem:[%s0 + $0x70] sm:$0xff]
  %v45 = vld [vmem:[%s0 + $0x78] sm:$0xff]
  %v46 = vld [vmem:[%s0 + $0x80] sm:$0xff]
  %v47 = vld [vmem:[%s0 + $0x88] sm:$0xff]
  %v48 = vld [vmem:[%s0 + $0x90] sm:$0xff]
  %v49 = vld [vmem:[%s0 + $0x98] sm:$0xff]
  %v50 = vld [vmem:[%s0 + $0xa0] sm:$0xff]
  %v51 = vld [vmem:[%s0 + $0xa8] sm:$0xff]
  %v52 = vld [vmem:[%s0 + $0xb0] sm:$0xff]
  %v53 = vld [vmem:[%s0 + $0xb8] sm:$0xff]
  %v54 = vld [vmem:[%s0 + $0xc0] sm:$0xff]
  %v55 = vld [vmem:[%s0 + $0xc8] sm:$0xff]
  %v56 = vld [vmem:[%s0 + $0xd0] sm:$0xff]
  %v57 = vld [vmem:[%s0 + $0xd8] sm:$0xff]
  %v58 = vld [vmem:[%s0 + $0xe0] sm:$0xff]
  %v59 = vld [vmem:[%s0 + $0xe8] sm:$0xff]
  %v60 = vld [vmem:[%s1] sm:$0xff]
  %v61 = vld [vmem:[%s1 + $0x8] sm:$0xff]
  %v62 = vld [vmem:[%s1 + $0x10] sm:$0xff]
  %v63 = vld [vmem:[%s1 + $0x18] sm:$0xff]
  %v64 = vld [vmem:[%s1 + $0x20] sm:$0xff]
  %v65 = vld [vmem:[%s1 + $0x28] sm:$0xff]
  %v66 = vld [vmem:[%s1 + $0x30] sm:$0xff]
  %v67 = vld [vmem:[%s1 + $0x38] sm:$0xff]
  %v68 = vld [vmem:[%s1 + $0x40] sm:$0xff]
  %v69 = vld [vmem:[%s1 + $0x48] sm:$0xff]
  %v70 = vld [vmem:[%s1 + $0x50] sm:$0xff]
  %v71 = vld [vmem:[%s1 + $0x58] sm:$0xff]
  %v72 = vld [vmem:[%s1 + $0x60] sm:$0xff]
  %v73 = vld [vmem:[%s1 + $0x68] sm:$0xff]
  %v74 = vld [vmem:[%s1 + $0x70] sm:$0xff]
  %v75 = vpack.c.bf16 %v61, %v60
  %v76 = vpack.c.bf16 %v63, %v62
  %v77 = vpack.c.bf16 %v65, %v64
  %v78 = vpack.c.bf16 %v67, %v66
  %v79 = vpack.c.bf16 %v69, %v68
  %v80 = vpack.c.bf16 %v71, %v70
  %v81 = vpack.c.bf16 %v73, %v72
  %v82 = vpack.c.bf16 %v74, %v74
  %84 = vset.pattern.permute.xlu0 0
  %85 = vperm.xlu0 %84, %v75
  %v86 = vpop.permute.xlu0 %85
  %88 = vset.pattern.permute.xlu0 0
  %89 = vperm.xlu0 %88, %v76
  %v90 = vpop.permute.xlu0 %89
  %92 = vset.pattern.permute.xlu0 0
  %93 = vperm.xlu0 %92, %v77
  %v94 = vpop.permute.xlu0 %93
  %96 = vset.pattern.permute.xlu0 0
  %97 = vperm.xlu0 %96, %v78
  %v98 = vpop.permute.xlu0 %97
  %100 = vset.pattern.permute.xlu0 0
  %101 = vperm.xlu0 %100, %v79
  %v102 = vpop.permute.xlu0 %101
  %104 = vset.pattern.permute.xlu0 0
  %105 = vperm.xlu0 %104, %v80
  %v106 = vpop.permute.xlu0 %105
  %108 = vset.pattern.permute.xlu0 0
  %109 = vperm.xlu0 %108, %v81
  %v110 = vpop.permute.xlu0 %109
  %112 = vset.pattern.permute.xlu0 0
  %113 = vperm.xlu0 %112, %v82
  %v114 = vpop.permute.xlu0 %113
  %v124 = vunpack.c.l.s4 839922192
  %v125 = vunpack.c.0.s8 %v124
  %v126 = vlaneseq
  %v127 = vshrl.u32 %v126, 7
  %v128 = vsub.s32 %v125, %v127
  %v129 = vrot.slane %v86, %v128
  %v131 = vunpack.c.l.s4 1985246804
  %v132 = vunpack.c.0.s8 %v131
  %v133 = vlaneseq
  %v134 = vshrl.u32 %v133, 7
  %v135 = vsub.s32 %v132, %v134
  %v136 = vrot.slane %v86, %v135
  %v138 = vunpack.c.l.s4 839922192
  %v139 = vunpack.c.0.s8 %v138
  %v140 = vlaneseq
  %v141 = vshrl.u32 %v140, 7
  %v142 = vsub.s32 %v139, %v141
  %v143 = vrot.slane %v90, %v142
  %v145 = vunpack.c.l.s4 1985246804
  %v146 = vunpack.c.0.s8 %v145
  %v147 = vlaneseq
  %v148 = vshrl.u32 %v147, 7
  %v149 = vsub.s32 %v146, %v148
  %v150 = vrot.slane %v90, %v149
  %v152 = vunpack.c.l.s4 839922192
  %v153 = vunpack.c.0.s8 %v152
  %v154 = vlaneseq
  %v155 = vshrl.u32 %v154, 7
  %v156 = vsub.s32 %v153, %v155
  %v157 = vrot.slane %v94, %v156
  %v159 = vunpack.c.l.s4 1985246804
  %v160 = vunpack.c.0.s8 %v159
  %v161 = vlaneseq
  %v162 = vshrl.u32 %v161, 7
  %v163 = vsub.s32 %v160, %v162
  %v164 = vrot.slane %v94, %v163
  %v166 = vunpack.c.l.s4 839922192
  %v167 = vunpack.c.0.s8 %v166
  %v168 = vlaneseq
  %v169 = vshrl.u32 %v168, 7
  %v170 = vsub.s32 %v167, %v169
  %v171 = vrot.slane %v98, %v170
  %v173 = vunpack.c.l.s4 1985246804
  %v174 = vunpack.c.0.s8 %v173
  %v175 = vlaneseq
  %v176 = vshrl.u32 %v175, 7
  %v177 = vsub.s32 %v174, %v176
  %v178 = vrot.slane %v98, %v177
  %v180 = vunpack.c.l.s4 839922192
  %v181 = vunpack.c.0.s8 %v180
  %v182 = vlaneseq
  %v183 = vshrl.u32 %v182, 7
  %v184 = vsub.s32 %v181, %v183
  %v185 = vrot.slane %v102, %v184
  %v187 = vunpack.c.l.s4 1985246804
  %v188 = vunpack.c.0.s8 %v187
  %v189 = vlaneseq
  %v190 = vshrl.u32 %v189, 7
  %v191 = vsub.s32 %v188, %v190
  %v192 = vrot.slane %v102, %v191
  %v194 = vunpack.c.l.s4 839922192
  %v195 = vunpack.c.0.s8 %v194
  %v196 = vlaneseq
  %v197 = vshrl.u32 %v196, 7
  %v198 = vsub.s32 %v195, %v197
  %v199 = vrot.slane %v106, %v198
  %v201 = vunpack.c.l.s4 1985246804
  %v202 = vunpack.c.0.s8 %v201
  %v203 = vlaneseq
  %v204 = vshrl.u32 %v203, 7
  %v205 = vsub.s32 %v202, %v204
  %v206 = vrot.slane %v106, %v205
  %v208 = vunpack.c.l.s4 839922192
  %v209 = vunpack.c.0.s8 %v208
  %v210 = vlaneseq
  %v211 = vshrl.u32 %v210, 7
  %v212 = vsub.s32 %v209, %v211
  %v213 = vrot.slane %v110, %v212
  %v215 = vunpack.c.l.s4 1985246804
  %v216 = vunpack.c.0.s8 %v215
  %v217 = vlaneseq
  %v218 = vshrl.u32 %v217, 7
  %v219 = vsub.s32 %v216, %v218
  %v220 = vrot.slane %v110, %v219
  %v222 = vunpack.c.l.s4 839922192
  %v223 = vunpack.c.0.s8 %v222
  %v224 = vlaneseq
  %v225 = vshrl.u32 %v224, 7
  %v226 = vsub.s32 %v223, %v225
  %v227 = vrot.slane %v114, %v226
  %v243 = vmul.bf16 %v30, %v129
  %v244 = vmul.bf16 %v31, %v129
  %v245 = vmul.bf16 %v32, %v136
  %v246 = vmul.bf16 %v33, %v136
  %v247 = vmul.bf16 %v34, %v143
  %v248 = vmul.bf16 %v35, %v143
  %v249 = vmul.bf16 %v36, %v150
  %v250 = vmul.bf16 %v37, %v150
  %v251 = vmul.bf16 %v38, %v157
  %v252 = vmul.bf16 %v39, %v157
  %v253 = vmul.bf16 %v40, %v164
  %v254 = vmul.bf16 %v41, %v164
  %v255 = vmul.bf16 %v42, %v171
  %v256 = vmul.bf16 %v43, %v171
  %v257 = vmul.bf16 %v44, %v178
  %v258 = vmul.bf16 %v45, %v178
  %v259 = vmul.bf16 %v46, %v185
  %v260 = vmul.bf16 %v47, %v185
  %v261 = vmul.bf16 %v48, %v192
  %v262 = vmul.bf16 %v49, %v192
  %v263 = vmul.bf16 %v50, %v199
  %v264 = vmul.bf16 %v51, %v199
  %v265 = vmul.bf16 %v52, %v206
  %v266 = vmul.bf16 %v53, %v206
  %v267 = vmul.bf16 %v54, %v213
  %v268 = vmul.bf16 %v55, %v213
  %v269 = vmul.bf16 %v56, %v220
  %v270 = vmul.bf16 %v57, %v220
  %v271 = vmul.bf16 %v58, %v227
  %v272 = vmul.bf16 %v59, %v227
  %v273 = vld [vmem:[%s2] sm:$0xff]
  %v274 = vld [vmem:[%s2 + $0x8] sm:$0xff]
  %v275 = vld [vmem:[%s2 + $0x10] sm:$0xff]
  %v276 = vld [vmem:[%s2 + $0x18] sm:$0xff]
  %v277 = vld [vmem:[%s2 + $0x20] sm:$0xff]
  %v278 = vld [vmem:[%s2 + $0x28] sm:$0xff]
  %v279 = vld [vmem:[%s2 + $0x30] sm:$0xff]
  %v280 = vld [vmem:[%s2 + $0x38] sm:$0xff]
  %v281 = vld [vmem:[%s2 + $0x40] sm:$0xff]
  %v282 = vld [vmem:[%s2 + $0x48] sm:$0xff]
  %v283 = vld [vmem:[%s2 + $0x50] sm:$0xff]
  %v284 = vld [vmem:[%s2 + $0x58] sm:$0xff]
  %v285 = vld [vmem:[%s2 + $0x60] sm:$0xff]
  %v286 = vld [vmem:[%s2 + $0x68] sm:$0xff]
  %v287 = vld [vmem:[%s2 + $0x70] sm:$0xff]
  %v288 = vpack.c.bf16 %v274, %v273
  %v289 = vpack.c.bf16 %v276, %v275
  %v290 = vpack.c.bf16 %v278, %v277
  %v291 = vpack.c.bf16 %v280, %v279
  %v292 = vpack.c.bf16 %v282, %v281
  %v293 = vpack.c.bf16 %v284, %v283
  %v294 = vpack.c.bf16 %v286, %v285
  %v295 = vpack.c.bf16 %v287, %v287
  %297 = vset.pattern.permute.xlu0 0
  %298 = vperm.xlu0 %297, %v288
  %v299 = vpop.permute.xlu0 %298
  %301 = vset.pattern.permute.xlu0 0
  %302 = vperm.xlu0 %301, %v289
  %v303 = vpop.permute.xlu0 %302
  %305 = vset.pattern.permute.xlu0 0
  %306 = vperm.xlu0 %305, %v290
  %v307 = vpop.permute.xlu0 %306
  %309 = vset.pattern.permute.xlu0 0
  %310 = vperm.xlu0 %309, %v291
  %v311 = vpop.permute.xlu0 %310
  %313 = vset.pattern.permute.xlu0 0
  %314 = vperm.xlu0 %313, %v292
  %v315 = vpop.permute.xlu0 %314
  %317 = vset.pattern.permute.xlu0 0
  %318 = vperm.xlu0 %317, %v293
  %v319 = vpop.permute.xlu0 %318
  %321 = vset.pattern.permute.xlu0 0
  %322 = vperm.xlu0 %321, %v294
  %v323 = vpop.permute.xlu0 %322
  %325 = vset.pattern.permute.xlu0 0
  %326 = vperm.xlu0 %325, %v295
  %v327 = vpop.permute.xlu0 %326
  %v337 = vunpack.c.l.s4 839922192
  %v338 = vunpack.c.0.s8 %v337
  %v339 = vlaneseq
  %v340 = vshrl.u32 %v339, 7
  %v341 = vsub.s32 %v338, %v340
  %v342 = vrot.slane %v299, %v341
  %v344 = vunpack.c.l.s4 1985246804
  %v345 = vunpack.c.0.s8 %v344
  %v346 = vlaneseq
  %v347 = vshrl.u32 %v346, 7
  %v348 = vsub.s32 %v345, %v347
  %v349 = vrot.slane %v299, %v348
  %v351 = vunpack.c.l.s4 839922192
  %v352 = vunpack.c.0.s8 %v351
  %v353 = vlaneseq
  %v354 = vshrl.u32 %v353, 7
  %v355 = vsub.s32 %v352, %v354
  %v356 = vrot.slane %v303, %v355
  %v358 = vunpack.c.l.s4 1985246804
  %v359 = vunpack.c.0.s8 %v358
  %v360 = vlaneseq
  %v361 = vshrl.u32 %v360, 7
  %v362 = vsub.s32 %v359, %v361
  %v363 = vrot.slane %v303, %v362
  %v365 = vunpack.c.l.s4 839922192
  %v366 = vunpack.c.0.s8 %v365
  %v367 = vlaneseq
  %v368 = vshrl.u32 %v367, 7
  %v369 = vsub.s32 %v366, %v368
  %v370 = vrot.slane %v307, %v369
  %v372 = vunpack.c.l.s4 1985246804
  %v373 = vunpack.c.0.s8 %v372
  %v374 = vlaneseq
  %v375 = vshrl.u32 %v374, 7
  %v376 = vsub.s32 %v373, %v375
  %v377 = vrot.slane %v307, %v376
  %v379 = vunpack.c.l.s4 839922192
  %v380 = vunpack.c.0.s8 %v379
  %v381 = vlaneseq
  %v382 = vshrl.u32 %v381, 7
  %v383 = vsub.s32 %v380, %v382
  %v384 = vrot.slane %v311, %v383
  %v386 = vunpack.c.l.s4 1985246804
  %v387 = vunpack.c.0.s8 %v386
  %v388 = vlaneseq
  %v389 = vshrl.u32 %v388, 7
  %v390 = vsub.s32 %v387, %v389
  %v391 = vrot.slane %v311, %v390
  %v393 = vunpack.c.l.s4 839922192
  %v394 = vunpack.c.0.s8 %v393
  %v395 = vlaneseq
  %v396 = vshrl.u32 %v395, 7
  %v397 = vsub.s32 %v394, %v396
  %v398 = vrot.slane %v315, %v397
  %v400 = vunpack.c.l.s4 1985246804
  %v401 = vunpack.c.0.s8 %v400
  %v402 = vlaneseq
  %v403 = vshrl.u32 %v402, 7
  %v404 = vsub.s32 %v401, %v403
  %v405 = vrot.slane %v315, %v404
  %v407 = vunpack.c.l.s4 839922192
  %v408 = vunpack.c.0.s8 %v407
  %v409 = vlaneseq
  %v410 = vshrl.u32 %v409, 7
  %v411 = vsub.s32 %v408, %v410
  %v412 = vrot.slane %v319, %v411
  %v414 = vunpack.c.l.s4 1985246804
  %v415 = vunpack.c.0.s8 %v414
  %v416 = vlaneseq
  %v417 = vshrl.u32 %v416, 7
  %v418 = vsub.s32 %v415, %v417
  %v419 = vrot.slane %v319, %v418
  %v421 = vunpack.c.l.s4 839922192
  %v422 = vunpack.c.0.s8 %v421
  %v423 = vlaneseq
  %v424 = vshrl.u32 %v423, 7
  %v425 = vsub.s32 %v422, %v424
  %v426 = vrot.slane %v323, %v425
  %v428 = vunpack.c.l.s4 1985246804
  %v429 = vunpack.c.0.s8 %v428
  %v430 = vlaneseq
  %v431 = vshrl.u32 %v430, 7
  %v432 = vsub.s32 %v429, %v431
  %v433 = vrot.slane %v323, %v432
  %v435 = vunpack.c.l.s4 839922192
  %v436 = vunpack.c.0.s8 %v435
  %v437 = vlaneseq
  %v438 = vshrl.u32 %v437, 7
  %v439 = vsub.s32 %v436, %v438
  %v440 = vrot.slane %v327, %v439
  %v456 = vadd.bf16 %v243, %v342
  %v457 = vadd.bf16 %v244, %v342
  %v458 = vadd.bf16 %v245, %v349
  %v459 = vadd.bf16 %v246, %v349
  %v460 = vadd.bf16 %v247, %v356
  %v461 = vadd.bf16 %v248, %v356
  %v462 = vadd.bf16 %v249, %v363
  %v463 = vadd.bf16 %v250, %v363
  %v464 = vadd.bf16 %v251, %v370
  %v465 = vadd.bf16 %v252, %v370
  %v466 = vadd.bf16 %v253, %v377
  %v467 = vadd.bf16 %v254, %v377
  %v468 = vadd.bf16 %v255, %v384
  %v469 = vadd.bf16 %v256, %v384
  %v470 = vadd.bf16 %v257, %v391
  %v471 = vadd.bf16 %v258, %v391
  %v472 = vadd.bf16 %v259, %v398
  %v473 = vadd.bf16 %v260, %v398
  %v474 = vadd.bf16 %v261, %v405
  %v475 = vadd.bf16 %v262, %v405
  %v476 = vadd.bf16 %v263, %v412
  %v477 = vadd.bf16 %v264, %v412
  %v478 = vadd.bf16 %v265, %v419
  %v479 = vadd.bf16 %v266, %v419
  %v480 = vadd.bf16 %v267, %v426
  %v481 = vadd.bf16 %v268, %v426
  %v482 = vadd.bf16 %v269, %v433
  %v483 = vadd.bf16 %v270, %v433
  %v484 = vadd.bf16 %v271, %v440
  %v485 = vadd.bf16 %v272, %v440
  %v486 = vmul.bf16 %v456, 1009007652
  %v487 = vmul.bf16 %v457, 1009007652
  %v488 = vmul.bf16 %v458, 1009007652
  %v489 = vmul.bf16 %v459, 1009007652
  %v490 = vmul.bf16 %v460, 1009007652
  %v491 = vmul.bf16 %v461, 1009007652
  %v492 = vmul.bf16 %v462, 1009007652
  %v493 = vmul.bf16 %v463, 1009007652
  %v494 = vmul.bf16 %v464, 1009007652
  %v495 = vmul.bf16 %v465, 1009007652
  %v496 = vmul.bf16 %v466, 1009007652
  %v497 = vmul.bf16 %v467, 1009007652
  %v498 = vmul.bf16 %v468, 1009007652
  %v499 = vmul.bf16 %v469, 1009007652
  %v500 = vmul.bf16 %v470, 1009007652
  %v501 = vmul.bf16 %v471, 1009007652
  %v502 = vmul.bf16 %v472, 1009007652
  %v503 = vmul.bf16 %v473, 1009007652
  %v504 = vmul.bf16 %v474, 1009007652
  %v505 = vmul.bf16 %v475, 1009007652
  %v506 = vmul.bf16 %v476, 1009007652
  %v507 = vmul.bf16 %v477, 1009007652
  %v508 = vmul.bf16 %v478, 1009007652
  %v509 = vmul.bf16 %v479, 1009007652
  %v510 = vmul.bf16 %v480, 1009007652
  %v511 = vmul.bf16 %v481, 1009007652
  %v512 = vmul.bf16 %v482, 1009007652
  %v513 = vmul.bf16 %v483, 1009007652
  %v514 = vmul.bf16 %v484, 1009007652
  %v515 = vmul.bf16 %v485, 1009007652
  %v516 = vmax.bf16 %v456, %v486
  %v517 = vmax.bf16 %v457, %v487
  %v518 = vmax.bf16 %v458, %v488
  %v519 = vmax.bf16 %v459, %v489
  %v520 = vmax.bf16 %v460, %v490
  %v521 = vmax.bf16 %v461, %v491
  %v522 = vmax.bf16 %v462, %v492
  %v523 = vmax.bf16 %v463, %v493
  %v524 = vmax.bf16 %v464, %v494
  %v525 = vmax.bf16 %v465, %v495
  %v526 = vmax.bf16 %v466, %v496
  %v527 = vmax.bf16 %v467, %v497
  %v528 = vmax.bf16 %v468, %v498
  %v529 = vmax.bf16 %v469, %v499
  %v530 = vmax.bf16 %v470, %v500
  %v531 = vmax.bf16 %v471, %v501
  %v532 = vmax.bf16 %v472, %v502
  %v533 = vmax.bf16 %v473, %v503
  %v534 = vmax.bf16 %v474, %v504
  %v535 = vmax.bf16 %v475, %v505
  %v536 = vmax.bf16 %v476, %v506
  %v537 = vmax.bf16 %v477, %v507
  %v538 = vmax.bf16 %v478, %v508
  %v539 = vmax.bf16 %v479, %v509
  %v540 = vmax.bf16 %v480, %v510
  %v541 = vmax.bf16 %v481, %v511
  %v542 = vmax.bf16 %v482, %v512
  %v543 = vmax.bf16 %v483, %v513
  %v544 = vmax.bf16 %v484, %v514
  %v545 = vmax.bf16 %v485, %v515
  %v546 = vld [vmem:[%s3] sm:$0xf]
  %v547 = vld [vmem:[%s3 + $0x4] sm:$0xf]
  %v548 = vld [vmem:[%s3 + $0x8] sm:$0xf]
  %v549 = vld [vmem:[%s3 + $0xc] sm:$0xf]
  %v550 = vld [vmem:[%s3 + $0x10] sm:$0xf]
  %v551 = vld [vmem:[%s3 + $0x14] sm:$0xf]
  %v552 = vld [vmem:[%s3 + $0x18] sm:$0xf]
  %v553 = vld [vmem:[%s3 + $0x1c] sm:$0x3]
  %v554 = vld [vmem:[%s4] sm:$0xf]
  %v555 = vld [vmem:[%s4 + $0x4] sm:$0xf]
  %v556 = vld [vmem:[%s4 + $0x8] sm:$0xf]
  %v557 = vld [vmem:[%s4 + $0xc] sm:$0xf]
  %v558 = vld [vmem:[%s4 + $0x10] sm:$0xf]
  %v559 = vld [vmem:[%s4 + $0x14] sm:$0xf]
  %v560 = vld [vmem:[%s4 + $0x18] sm:$0xf]
  %v561 = vld [vmem:[%s4 + $0x1c] sm:$0x3]
  %v570 = vunpack.c.l.b16 %v554
  %v571 = vunpack.c.l.b16 %v555
  %v572 = vunpack.c.l.b16 %v556
  %v573 = vunpack.c.l.b16 %v557
  %v574 = vunpack.c.l.b16 %v558
  %v575 = vunpack.c.l.b16 %v559
  %v576 = vunpack.c.l.b16 %v560
  %v577 = vunpack.c.l.b16 %v561
  %v578 = vpack.c.b16 %v571, %v570
  %v579 = vpack.c.b16 %v573, %v572
  %v580 = vpack.c.b16 %v575, %v574
  %v581 = vpack.c.b16 %v577, %v576
  %v612 = vunpack.c.l.b16 %v516
  %v613 = vunpack.c.h.b16 %v516
  %v614 = vunpack.c.l.b16 %v517
  %v615 = vunpack.c.h.b16 %v517
  %v616 = vunpack.c.l.b16 %v518
  %v617 = vunpack.c.h.b16 %v518
  %v618 = vunpack.c.l.b16 %v519
  %v619 = vunpack.c.h.b16 %v519
  %v620 = vunpack.c.l.b16 %v520
  %v621 = vunpack.c.h.b16 %v520
  %v622 = vunpack.c.l.b16 %v521
  %v623 = vunpack.c.h.b16 %v521
  %v624 = vunpack.c.l.b16 %v522
  %v625 = vunpack.c.h.b16 %v522
  %v626 = vunpack.c.l.b16 %v523
  %v627 = vunpack.c.h.b16 %v523
  %v628 = vunpack.c.l.b16 %v524
  %v629 = vunpack.c.h.b16 %v524
  %v630 = vunpack.c.l.b16 %v525
  %v631 = vunpack.c.h.b16 %v525
  %v632 = vunpack.c.l.b16 %v526
  %v633 = vunpack.c.h.b16 %v526
  %v634 = vunpack.c.l.b16 %v527
  %v635 = vunpack.c.h.b16 %v527
  %v636 = vunpack.c.l.b16 %v528
  %v637 = vunpack.c.h.b16 %v528
  %v638 = vunpack.c.l.b16 %v529
  %v639 = vunpack.c.h.b16 %v529
  %v640 = vunpack.c.l.b16 %v530
  %v641 = vunpack.c.h.b16 %v530
  %v642 = vunpack.c.l.b16 %v531
  %v643 = vunpack.c.h.b16 %v531
  %v644 = vunpack.c.l.b16 %v532
  %v645 = vunpack.c.h.b16 %v532
  %v646 = vunpack.c.l.b16 %v533
  %v647 = vunpack.c.h.b16 %v533
  %v648 = vunpack.c.l.b16 %v534
  %v649 = vunpack.c.h.b16 %v534
  %v650 = vunpack.c.l.b16 %v535
  %v651 = vunpack.c.h.b16 %v535
  %v652 = vunpack.c.l.b16 %v536
  %v653 = vunpack.c.h.b16 %v536
  %v654 = vunpack.c.l.b16 %v537
  %v655 = vunpack.c.h.b16 %v537
  %v656 = vunpack.c.l.b16 %v538
  %v657 = vunpack.c.h.b16 %v538
  %v658 = vunpack.c.l.b16 %v539
  %v659 = vunpack.c.h.b16 %v539
  %v660 = vunpack.c.l.b16 %v540
  %v661 = vunpack.c.h.b16 %v540
  %v662 = vunpack.c.l.b16 %v541
  %v663 = vunpack.c.h.b16 %v541
  %v664 = vunpack.c.l.b16 %v542
  %v665 = vunpack.c.h.b16 %v542
  %v666 = vunpack.c.l.b16 %v543
  %v667 = vunpack.c.h.b16 %v543
  %v668 = vunpack.c.l.b16 %v544
  %v669 = vunpack.c.h.b16 %v544
  %v670 = vunpack.c.l.b16 %v545
  %v671 = vunpack.c.h.b16 %v545
  %v672 = vpack.c.b16 %v616, %v612
  %v673 = vpack.c.b16 %v617, %v613
  %v674 = vpack.c.b16 %v618, %v614
  %v675 = vpack.c.b16 %v619, %v615
  %v676 = vpack.c.b16 %v624, %v620
  %v677 = vpack.c.b16 %v625, %v621
  %v678 = vpack.c.b16 %v626, %v622
  %v679 = vpack.c.b16 %v627, %v623
  %v680 = vpack.c.b16 %v632, %v628
  %v681 = vpack.c.b16 %v633, %v629
  %v682 = vpack.c.b16 %v634, %v630
  %v683 = vpack.c.b16 %v635, %v631
  %v684 = vpack.c.b16 %v640, %v636
  %v685 = vpack.c.b16 %v641, %v637
  %v686 = vpack.c.b16 %v642, %v638
  %v687 = vpack.c.b16 %v643, %v639
  %v688 = vpack.c.b16 %v648, %v644
  %v689 = vpack.c.b16 %v649, %v645
  %v690 = vpack.c.b16 %v650, %v646
  %v691 = vpack.c.b16 %v651, %v647
  %v692 = vpack.c.b16 %v656, %v652
  %v693 = vpack.c.b16 %v657, %v653
  %v694 = vpack.c.b16 %v658, %v654
  %v695 = vpack.c.b16 %v659, %v655
  %v696 = vpack.c.b16 %v664, %v660
  %v697 = vpack.c.b16 %v665, %v661
  %v698 = vpack.c.b16 %v666, %v662
  %v699 = vpack.c.b16 %v667, %v663
  %v700 = vpack.c.b16 %v668, %v668
  %v701 = vpack.c.b16 %v669, %v669
  %v702 = vpack.c.b16 %v670, %v670
  %v703 = vpack.c.b16 %v671, %v671
  %vm732 = vcmask 982016
  %v734 = vsel %vm732, %v578, 0
  %v737 = vsel %vm732, %v579, 0
  %v740 = vsel %vm732, %v580, 0
  %v743 = vsel %vm732, %v581, 0
  %vm745 = vcmask 1043456
  %v747 = vsel %vm745, %v700, 0
  %v750 = vsel %vm745, %v701, 0
  %v753 = vsel %vm745, %v702, 0
  %v756 = vsel %vm745, %v703, 0
  %758 = vmatprep.subr.bf16.mxu0 %v750
  %759 = vmatpush1.bf16.msra.mxu0 %v747
  %760 = vmatprep.subr.bf16.mxu0 %v697
  %761 = vmatpush1.bf16.msra.mxu0 %v696
  %762 = vmatprep.subr.bf16.mxu0 %v693
  %763 = vmatpush1.bf16.msra.mxu0 %v692
  %764 = vmatprep.subr.bf16.mxu0 %v689
  %765 = vmatpush1.bf16.msra.mxu0 %v688
  %766 = vmatprep.subr.bf16.mxu0 %v685
  %767 = vmatpush1.bf16.msra.mxu0 %v684
  %768 = vmatprep.subr.bf16.mxu0 %v681
  %769 = vmatpush1.bf16.msra.mxu0 %v680
  %770 = vmatprep.subr.bf16.mxu0 %v677
  %771 = vmatpush1.bf16.msra.mxu0 %v676
  %772 = vmatprep.subr.bf16.mxu0 %v673
  %773 = vmatpush1.bf16.msra.mxu0 %v672
  %774 = vmatprep.subr.bf16.mxu0 0
  %775 = vmatpush2.bf16.msra.mxu0 0
  %776 = vmatprep.subr.bf16.mxu0 0
  %777 = vmatpush2.bf16.msra.mxu0 0
  %778 = vmatprep.subr.bf16.mxu0 0
  %779 = vmatpush2.bf16.msra.mxu0 0
  %780 = vmatprep.subr.bf16.mxu0 0
  %781 = vmatpush2.bf16.msra.mxu0 0
  %782 = vmatprep.subr.bf16.mxu0 0
  %783 = vmatpush2.bf16.msra.mxu0 0
  %784 = vmatprep.subr.bf16.mxu0 0
  %785 = vmatpush2.bf16.msra.mxu0 0
  %786 = vmatprep.subr.bf16.mxu0 0
  %787 = vmatpush2.bf16.msra.mxu0 0
  %788 = vmatprep.subr.bf16.mxu0 0
  %789 = vmatpush2.bf16.msra.mxu0 0
  %790 = vmatprep.mubr.bf16.mxu0 0
  %791 = vmatmul.mubr.bf16.gmra.mxu0 %v734
  %v792 = vpop.f32.mrf.mxu0
  %v793 = vadd.f32 0.0, %v792
  %v794 = vpop.f32.mrf.mxu0
  %v795 = vadd.f32 0.0, %v794
  %v796 = vpop.f32.mrf.mxu0
  %v797 = vadd.f32 0.0, %v796
  %v798 = vpop.f32.mrf.mxu0
  %v799 = vadd.f32 0.0, %v798
  %800 = vmatprep.mubr.bf16.mxu0 0
  %801 = vmatmul.mubr.bf16.gmra.mxu0 %v737
  %v802 = vpop.f32.mrf.mxu0
  %v803 = vadd.f32 0.0, %v802
  %v804 = vpop.f32.mrf.mxu0
  %v805 = vadd.f32 0.0, %v804
  %v806 = vpop.f32.mrf.mxu0
  %v807 = vadd.f32 0.0, %v806
  %v808 = vpop.f32.mrf.mxu0
  %v809 = vadd.f32 0.0, %v808
  %810 = vmatprep.mubr.bf16.mxu0 0
  %811 = vmatmul.mubr.bf16.gmra.mxu0 %v740
  %v812 = vpop.f32.mrf.mxu0
  %v813 = vadd.f32 0.0, %v812
  %v814 = vpop.f32.mrf.mxu0
  %v815 = vadd.f32 0.0, %v814
  %v816 = vpop.f32.mrf.mxu0
  %v817 = vadd.f32 0.0, %v816
  %v818 = vpop.f32.mrf.mxu0
  %v819 = vadd.f32 0.0, %v818
  %820 = vmatprep.mubr.bf16.mxu0 0
  %821 = vmatmul.mubr.bf16.gmra.mxu0 %v743
  %v822 = vpop.f32.mrf.mxu0
  %v823 = vadd.f32 0.0, %v822
  %v824 = vpop.f32.mrf.mxu0
  %v825 = vadd.f32 0.0, %v824
  %v826 = vpop.f32.mrf.mxu0
  %v827 = vadd.f32 0.0, %v826
  %v828 = vpop.f32.mrf.mxu0
  %v829 = vadd.f32 0.0, %v828
  %830 = vdwg.mxu0
  %831 = vmatprep.subr.bf16.mxu0 %v756
  %832 = vmatpush1.bf16.msra.mxu0 %v753
  %833 = vmatprep.subr.bf16.mxu0 %v699
  %834 = vmatpush1.bf16.msra.mxu0 %v698
  %835 = vmatprep.subr.bf16.mxu0 %v695
  %836 = vmatpush1.bf16.msra.mxu0 %v694
  %837 = vmatprep.subr.bf16.mxu0 %v691
  %838 = vmatpush1.bf16.msra.mxu0 %v690
  %839 = vmatprep.subr.bf16.mxu0 %v687
  %840 = vmatpush1.bf16.msra.mxu0 %v686
  %841 = vmatprep.subr.bf16.mxu0 %v683
  %842 = vmatpush1.bf16.msra.mxu0 %v682
  %843 = vmatprep.subr.bf16.mxu0 %v679
  %844 = vmatpush1.bf16.msra.mxu0 %v678
  %845 = vmatprep.subr.bf16.mxu0 %v675
  %846 = vmatpush1.bf16.msra.mxu0 %v674
  %847 = vmatprep.subr.bf16.mxu0 0
  %848 = vmatpush2.bf16.msra.mxu0 0
  %849 = vmatprep.subr.bf16.mxu0 0
  %850 = vmatpush2.bf16.msra.mxu0 0
  %851 = vmatprep.subr.bf16.mxu0 0
  %852 = vmatpush2.bf16.msra.mxu0 0
  %853 = vmatprep.subr.bf16.mxu0 0
  %854 = vmatpush2.bf16.msra.mxu0 0
  %855 = vmatprep.subr.bf16.mxu0 0
  %856 = vmatpush2.bf16.msra.mxu0 0
  %857 = vmatprep.subr.bf16.mxu0 0
  %858 = vmatpush2.bf16.msra.mxu0 0
  %859 = vmatprep.subr.bf16.mxu0 0
  %860 = vmatpush2.bf16.msra.mxu0 0
  %861 = vmatprep.subr.bf16.mxu0 0
  %862 = vmatpush2.bf16.msra.mxu0 0
  %863 = vmatprep.mubr.bf16.mxu0 0
  %864 = vmatmul.mubr.bf16.gmra.mxu0 %v734
  %v865 = vpop.f32.mrf.mxu0
  %v866 = vadd.f32 0.0, %v865
  %v867 = vpop.f32.mrf.mxu0
  %v868 = vadd.f32 0.0, %v867
  %v869 = vpop.f32.mrf.mxu0
  %v870 = vadd.f32 0.0, %v869
  %v871 = vpop.f32.mrf.mxu0
  %v872 = vadd.f32 0.0, %v871
  %873 = vmatprep.mubr.bf16.mxu0 0
  %874 = vmatmul.mubr.bf16.gmra.mxu0 %v737
  %v875 = vpop.f32.mrf.mxu0
  %v876 = vadd.f32 0.0, %v875
  %v877 = vpop.f32.mrf.mxu0
  %v878 = vadd.f32 0.0, %v877
  %v879 = vpop.f32.mrf.mxu0
  %v880 = vadd.f32 0.0, %v879
  %v881 = vpop.f32.mrf.mxu0
  %v882 = vadd.f32 0.0, %v881
  %883 = vmatprep.mubr.bf16.mxu0 0
  %884 = vmatmul.mubr.bf16.gmra.mxu0 %v740
  %v885 = vpop.f32.mrf.mxu0
  %v886 = vadd.f32 0.0, %v885
  %v887 = vpop.f32.mrf.mxu0
  %v888 = vadd.f32 0.0, %v887
  %v889 = vpop.f32.mrf.mxu0
  %v890 = vadd.f32 0.0, %v889
  %v891 = vpop.f32.mrf.mxu0
  %v892 = vadd.f32 0.0, %v891
  %893 = vmatprep.mubr.bf16.mxu0 0
  %894 = vmatmul.mubr.bf16.gmra.mxu0 %v743
  %v895 = vpop.f32.mrf.mxu0
  %v896 = vadd.f32 0.0, %v895
  %v897 = vpop.f32.mrf.mxu0
  %v898 = vadd.f32 0.0, %v897
  %v899 = vpop.f32.mrf.mxu0
  %v900 = vadd.f32 0.0, %v899
  %v901 = vpop.f32.mrf.mxu0
  %v902 = vadd.f32 0.0, %v901
  %903 = vdwg.mxu0
  %v912 = vunpack.c.l.b16 %v546
  %v913 = vunpack.c.l.b16 %v547
  %v914 = vunpack.c.l.b16 %v548
  %v915 = vunpack.c.l.b16 %v549
  %v916 = vunpack.c.l.b16 %v550
  %v917 = vunpack.c.l.b16 %v551
  %v918 = vunpack.c.l.b16 %v552
  %v919 = vunpack.c.l.b16 %v553
  %v920 = vpack.c.b16 %v913, %v912
  %v921 = vpack.c.b16 %v915, %v914
  %v922 = vpack.c.b16 %v917, %v916
  %v923 = vpack.c.b16 %v919, %v918
  %v954 = vunpack.c.l.b16 %v30
  %v955 = vunpack.c.h.b16 %v30
  %v956 = vunpack.c.l.b16 %v31
  %v957 = vunpack.c.h.b16 %v31
  %v958 = vunpack.c.l.b16 %v32
  %v959 = vunpack.c.h.b16 %v32
  %v960 = vunpack.c.l.b16 %v33
  %v961 = vunpack.c.h.b16 %v33
  %v962 = vunpack.c.l.b16 %v34
  %v963 = vunpack.c.h.b16 %v34
  %v964 = vunpack.c.l.b16 %v35
  %v965 = vunpack.c.h.b16 %v35
  %v966 = vunpack.c.l.b16 %v36
  %v967 = vunpack.c.h.b16 %v36
  %v968 = vunpack.c.l.b16 %v37
  %v969 = vunpack.c.h.b16 %v37
  %v970 = vunpack.c.l.b16 %v38
  %v971 = vunpack.c.h.b16 %v38
  %v972 = vunpack.c.l.b16 %v39
  %v973 = vunpack.c.h.b16 %v39
  %v974 = vunpack.c.l.b16 %v40
  %v975 = vunpack.c.h.b16 %v40
  %v976 = vunpack.c.l.b16 %v41
  %v977 = vunpack.c.h.b16 %v41
  %v978 = vunpack.c.l.b16 %v42
  %v979 = vunpack.c.h.b16 %v42
  %v980 = vunpack.c.l.b16 %v43
  %v981 = vunpack.c.h.b16 %v43
  %v982 = vunpack.c.l.b16 %v44
  %v983 = vunpack.c.h.b16 %v44
  %v984 = vunpack.c.l.b16 %v45
  %v985 = vunpack.c.h.b16 %v45
  %v986 = vunpack.c.l.b16 %v46
  %v987 = vunpack.c.h.b16 %v46
  %v988 = vunpack.c.l.b16 %v47
  %v989 = vunpack.c.h.b16 %v47
  %v990 = vunpack.c.l.b16 %v48
  %v991 = vunpack.c.h.b16 %v48
  %v992 = vunpack.c.l.b16 %v49
  %v993 = vunpack.c.h.b16 %v49
  %v994 = vunpack.c.l.b16 %v50
  %v995 = vunpack.c.h.b16 %v50
  %v996 = vunpack.c.l.b16 %v51
  %v997 = vunpack.c.h.b16 %v51
  %v998 = vunpack.c.l.b16 %v52
  %v999 = vunpack.c.h.b16 %v52
  %v1000 = vunpack.c.l.b16 %v53
  %v1001 = vunpack.c.h.b16 %v53
  %v1002 = vunpack.c.l.b16 %v54
  %v1003 = vunpack.c.h.b16 %v54
  %v1004 = vunpack.c.l.b16 %v55
  %v1005 = vunpack.c.h.b16 %v55
  %v1006 = vunpack.c.l.b16 %v56
  %v1007 = vunpack.c.h.b16 %v56
  %v1008 = vunpack.c.l.b16 %v57
  %v1009 = vunpack.c.h.b16 %v57
  %v1010 = vunpack.c.l.b16 %v58
  %v1011 = vunpack.c.h.b16 %v58
  %v1012 = vunpack.c.l.b16 %v59
  %v1013 = vunpack.c.h.b16 %v59
  %v1014 = vpack.c.b16 %v958, %v954
  %v1015 = vpack.c.b16 %v959, %v955
  %v1016 = vpack.c.b16 %v960, %v956
  %v1017 = vpack.c.b16 %v961, %v957
  %v1018 = vpack.c.b16 %v966, %v962
  %v1019 = vpack.c.b16 %v967, %v963
  %v1020 = vpack.c.b16 %v968, %v964
  %v1021 = vpack.c.b16 %v969, %v965
  %v1022 = vpack.c.b16 %v974, %v970
  %v1023 = vpack.c.b16 %v975, %v971
  %v1024 = vpack.c.b16 %v976, %v972
  %v1025 = vpack.c.b16 %v977, %v973
  %v1026 = vpack.c.b16 %v982, %v978
  %v1027 = vpack.c.b16 %v983, %v979
  %v1028 = vpack.c.b16 %v984, %v980
  %v1029 = vpack.c.b16 %v985, %v981
  %v1030 = vpack.c.b16 %v990, %v986
  %v1031 = vpack.c.b16 %v991, %v987
  %v1032 = vpack.c.b16 %v992, %v988
  %v1033 = vpack.c.b16 %v993, %v989
  %v1034 = vpack.c.b16 %v998, %v994
  %v1035 = vpack.c.b16 %v999, %v995
  %v1036 = vpack.c.b16 %v1000, %v996
  %v1037 = vpack.c.b16 %v1001, %v997
  %v1038 = vpack.c.b16 %v1006, %v1002
  %v1039 = vpack.c.b16 %v1007, %v1003
  %v1040 = vpack.c.b16 %v1008, %v1004
  %v1041 = vpack.c.b16 %v1009, %v1005
  %v1042 = vpack.c.b16 %v1010, %v1010
  %v1043 = vpack.c.b16 %v1011, %v1011
  %v1044 = vpack.c.b16 %v1012, %v1012
  %v1045 = vpack.c.b16 %v1013, %v1013
  %v1075 = vsel %vm732, %v920, 0
  %v1078 = vsel %vm732, %v921, 0
  %v1081 = vsel %vm732, %v922, 0
  %v1084 = vsel %vm732, %v923, 0
  %v1087 = vsel %vm745, %v1042, 0
  %v1090 = vsel %vm745, %v1043, 0
  %v1093 = vsel %vm745, %v1044, 0
  %v1096 = vsel %vm745, %v1045, 0
  %1098 = vmatprep.subr.bf16.mxu0 %v1090
  %1099 = vmatpush1.bf16.msra.mxu0 %v1087
  %1100 = vmatprep.subr.bf16.mxu0 %v1039
  %1101 = vmatpush1.bf16.msra.mxu0 %v1038
  %1102 = vmatprep.subr.bf16.mxu0 %v1035
  %1103 = vmatpush1.bf16.msra.mxu0 %v1034
  %1104 = vmatprep.subr.bf16.mxu0 %v1031
  %1105 = vmatpush1.bf16.msra.mxu0 %v1030
  %1106 = vmatprep.subr.bf16.mxu0 %v1027
  %1107 = vmatpush1.bf16.msra.mxu0 %v1026
  %1108 = vmatprep.subr.bf16.mxu0 %v1023
  %1109 = vmatpush1.bf16.msra.mxu0 %v1022
  %1110 = vmatprep.subr.bf16.mxu0 %v1019
  %1111 = vmatpush1.bf16.msra.mxu0 %v1018
  %1112 = vmatprep.subr.bf16.mxu0 %v1015
  %1113 = vmatpush1.bf16.msra.mxu0 %v1014
  %1114 = vmatprep.subr.bf16.mxu0 0
  %1115 = vmatpush2.bf16.msra.mxu0 0
  %1116 = vmatprep.subr.bf16.mxu0 0
  %1117 = vmatpush2.bf16.msra.mxu0 0
  %1118 = vmatprep.subr.bf16.mxu0 0
  %1119 = vmatpush2.bf16.msra.mxu0 0
  %1120 = vmatprep.subr.bf16.mxu0 0
  %1121 = vmatpush2.bf16.msra.mxu0 0
  %1122 = vmatprep.subr.bf16.mxu0 0
  %1123 = vmatpush2.bf16.msra.mxu0 0
  %1124 = vmatprep.subr.bf16.mxu0 0
  %1125 = vmatpush2.bf16.msra.mxu0 0
  %1126 = vmatprep.subr.bf16.mxu0 0
  %1127 = vmatpush2.bf16.msra.mxu0 0
  %1128 = vmatprep.subr.bf16.mxu0 0
  %1129 = vmatpush2.bf16.msra.mxu0 0
  %1130 = vmatprep.mubr.bf16.mxu0 0
  %1131 = vmatmul.mubr.bf16.gmra.mxu0 %v1075
  %v1132 = vpop.f32.mrf.mxu0
  %v1133 = vadd.f32 %v793, %v1132
  %v1134 = vpop.f32.mrf.mxu0
  %v1135 = vadd.f32 %v795, %v1134
  %v1136 = vpop.f32.mrf.mxu0
  %v1137 = vadd.f32 %v797, %v1136
  %v1138 = vpop.f32.mrf.mxu0
  %v1139 = vadd.f32 %v799, %v1138
  %1140 = vmatprep.mubr.bf16.mxu0 0
  %1141 = vmatmul.mubr.bf16.gmra.mxu0 %v1078
  %v1142 = vpop.f32.mrf.mxu0
  %v1143 = vadd.f32 %v803, %v1142
  %v1144 = vpop.f32.mrf.mxu0
  %v1145 = vadd.f32 %v805, %v1144
  %v1146 = vpop.f32.mrf.mxu0
  %v1147 = vadd.f32 %v807, %v1146
  %v1148 = vpop.f32.mrf.mxu0
  %v1149 = vadd.f32 %v809, %v1148
  %1150 = vmatprep.mubr.bf16.mxu0 0
  %1151 = vmatmul.mubr.bf16.gmra.mxu0 %v1081
  %v1152 = vpop.f32.mrf.mxu0
  %v1153 = vadd.f32 %v813, %v1152
  %v1154 = vpop.f32.mrf.mxu0
  %v1155 = vadd.f32 %v815, %v1154
  %v1156 = vpop.f32.mrf.mxu0
  %v1157 = vadd.f32 %v817, %v1156
  %v1158 = vpop.f32.mrf.mxu0
  %v1159 = vadd.f32 %v819, %v1158
  %1160 = vmatprep.mubr.bf16.mxu0 0
  %1161 = vmatmul.mubr.bf16.gmra.mxu0 %v1084
  %v1162 = vpop.f32.mrf.mxu0
  %v1163 = vadd.f32 %v823, %v1162
  %v1164 = vpop.f32.mrf.mxu0
  %v1165 = vadd.f32 %v825, %v1164
  %v1166 = vpop.f32.mrf.mxu0
  %v1167 = vadd.f32 %v827, %v1166
  %v1168 = vpop.f32.mrf.mxu0
  %v1169 = vadd.f32 %v829, %v1168
  %1170 = vdwg.mxu0
  %1171 = vmatprep.subr.bf16.mxu0 %v1096
  %1172 = vmatpush1.bf16.msra.mxu0 %v1093
  %1173 = vmatprep.subr.bf16.mxu0 %v1041
  %1174 = vmatpush1.bf16.msra.mxu0 %v1040
  %1175 = vmatprep.subr.bf16.mxu0 %v1037
  %1176 = vmatpush1.bf16.msra.mxu0 %v1036
  %1177 = vmatprep.subr.bf16.mxu0 %v1033
  %1178 = vmatpush1.bf16.msra.mxu0 %v1032
  %1179 = vmatprep.subr.bf16.mxu0 %v1029
  %1180 = vmatpush1.bf16.msra.mxu0 %v1028
  %1181 = vmatprep.subr.bf16.mxu0 %v1025
  %1182 = vmatpush1.bf16.msra.mxu0 %v1024
  %1183 = vmatprep.subr.bf16.mxu0 %v1021
  %1184 = vmatpush1.bf16.msra.mxu0 %v1020
  %1185 = vmatprep.subr.bf16.mxu0 %v1017
  %1186 = vmatpush1.bf16.msra.mxu0 %v1016
  %1187 = vmatprep.subr.bf16.mxu0 0
  %1188 = vmatpush2.bf16.msra.mxu0 0
  %1189 = vmatprep.subr.bf16.mxu0 0
  %1190 = vmatpush2.bf16.msra.mxu0 0
  %1191 = vmatprep.subr.bf16.mxu0 0
  %1192 = vmatpush2.bf16.msra.mxu0 0
  %1193 = vmatprep.subr.bf16.mxu0 0
  %1194 = vmatpush2.bf16.msra.mxu0 0
  %1195 = vmatprep.subr.bf16.mxu0 0
  %1196 = vmatpush2.bf16.msra.mxu0 0
  %1197 = vmatprep.subr.bf16.mxu0 0
  %1198 = vmatpush2.bf16.msra.mxu0 0
  %1199 = vmatprep.subr.bf16.mxu0 0
  %1200 = vmatpush2.bf16.msra.mxu0 0
  %1201 = vmatprep.subr.bf16.mxu0 0
  %1202 = vmatpush2.bf16.msra.mxu0 0
  %1203 = vmatprep.mubr.bf16.mxu0 0
  %1204 = vmatmul.mubr.bf16.gmra.mxu0 %v1075
  %v1205 = vpop.f32.mrf.mxu0
  %v1206 = vadd.f32 %v866, %v1205
  %v1207 = vpop.f32.mrf.mxu0
  %v1208 = vadd.f32 %v868, %v1207
  %v1209 = vpop.f32.mrf.mxu0
  %v1210 = vadd.f32 %v870, %v1209
  %v1211 = vpop.f32.mrf.mxu0
  %v1212 = vadd.f32 %v872, %v1211
  %1213 = vmatprep.mubr.bf16.mxu0 0
  %1214 = vmatmul.mubr.bf16.gmra.mxu0 %v1078
  %v1215 = vpop.f32.mrf.mxu0
  %v1216 = vadd.f32 %v876, %v1215
  %v1217 = vpop.f32.mrf.mxu0
  %v1218 = vadd.f32 %v878, %v1217
  %v1219 = vpop.f32.mrf.mxu0
  %v1220 = vadd.f32 %v880, %v1219
  %v1221 = vpop.f32.mrf.mxu0
  %v1222 = vadd.f32 %v882, %v1221
  %1223 = vmatprep.mubr.bf16.mxu0 0
  %1224 = vmatmul.mubr.bf16.gmra.mxu0 %v1081
  %v1225 = vpop.f32.mrf.mxu0
  %v1226 = vadd.f32 %v886, %v1225
  %v1227 = vpop.f32.mrf.mxu0
  %v1228 = vadd.f32 %v888, %v1227
  %v1229 = vpop.f32.mrf.mxu0
  %v1230 = vadd.f32 %v890, %v1229
  %v1231 = vpop.f32.mrf.mxu0
  %v1232 = vadd.f32 %v892, %v1231
  %1233 = vmatprep.mubr.bf16.mxu0 0
  %1234 = vmatmul.mubr.bf16.gmra.mxu0 %v1084
  %v1235 = vpop.f32.mrf.mxu0
  %v1236 = vadd.f32 %v896, %v1235
  %v1237 = vpop.f32.mrf.mxu0
  %v1238 = vadd.f32 %v898, %v1237
  %v1239 = vpop.f32.mrf.mxu0
  %v1240 = vadd.f32 %v900, %v1239
  %v1241 = vpop.f32.mrf.mxu0
  %v1242 = vadd.f32 %v902, %v1241
  %1243 = vdwg.mxu0
  %v1244 = vld [vmem:[%s5] sm:$0xff]
  %v1245 = vld [vmem:[%s5 + $0x8] sm:$0xff]
  %v1246 = vld [vmem:[%s5 + $0x10] sm:$0xff]
  %v1247 = vld [vmem:[%s5 + $0x18] sm:$0xff]
  %v1248 = vld [vmem:[%s5 + $0x20] sm:$0xff]
  %v1249 = vld [vmem:[%s5 + $0x28] sm:$0xff]
  %v1250 = vld [vmem:[%s5 + $0x30] sm:$0xff]
  %v1251 = vld [vmem:[%s5 + $0x38] sm:$0xf]
  %1253 = vset.pattern.permute.xlu0 0
  %1254 = vperm.xlu0 %1253, %v1244
  %v1255 = vpop.permute.xlu0 %1254
  %1258 = vset.pattern.permute.xlu0 0
  %1259 = vperm.xlu0 %1258, %v1245
  %v1260 = vpop.permute.xlu0 %1259
  %1263 = vset.pattern.permute.xlu0 0
  %1264 = vperm.xlu0 %1263, %v1246
  %v1265 = vpop.permute.xlu0 %1264
  %1268 = vset.pattern.permute.xlu0 0
  %1269 = vperm.xlu0 %1268, %v1247
  %v1270 = vpop.permute.xlu0 %1269
  %1273 = vset.pattern.permute.xlu0 0
  %1274 = vperm.xlu0 %1273, %v1248
  %v1275 = vpop.permute.xlu0 %1274
  %1278 = vset.pattern.permute.xlu0 0
  %1279 = vperm.xlu0 %1278, %v1249
  %v1280 = vpop.permute.xlu0 %1279
  %1283 = vset.pattern.permute.xlu0 0
  %1284 = vperm.xlu0 %1283, %v1250
  %v1285 = vpop.permute.xlu0 %1284
  %1288 = vset.pattern.permute.xlu0 0
  %1289 = vperm.xlu0 %1288, %v1251
  %v1290 = vpop.permute.xlu0 %1289
  %v1292 = vadd.f32 %v1133, %v1255
  %v1293 = vadd.f32 %v1135, %v1255
  %v1294 = vadd.f32 %v1206, %v1255
  %v1295 = vadd.f32 %v1208, %v1255
  %v1296 = vadd.f32 %v1137, %v1260
  %v1297 = vadd.f32 %v1139, %v1260
  %v1298 = vadd.f32 %v1210, %v1260
  %v1299 = vadd.f32 %v1212, %v1260
  %v1300 = vadd.f32 %v1143, %v1265
  %v1301 = vadd.f32 %v1145, %v1265
  %v1302 = vadd.f32 %v1216, %v1265
  %v1303 = vadd.f32 %v1218, %v1265
  %v1304 = vadd.f32 %v1147, %v1270
  %v1305 = vadd.f32 %v1149, %v1270
  %v1306 = vadd.f32 %v1220, %v1270
  %v1307 = vadd.f32 %v1222, %v1270
  %v1308 = vadd.f32 %v1153, %v1275
  %v1309 = vadd.f32 %v1155, %v1275
  %v1310 = vadd.f32 %v1226, %v1275
  %v1311 = vadd.f32 %v1228, %v1275
  %v1312 = vadd.f32 %v1157, %v1280
  %v1313 = vadd.f32 %v1159, %v1280
  %v1314 = vadd.f32 %v1230, %v1280
  %v1315 = vadd.f32 %v1232, %v1280
  %v1316 = vadd.f32 %v1163, %v1285
  %v1317 = vadd.f32 %v1165, %v1285
  %v1318 = vadd.f32 %v1236, %v1285
  %v1319 = vadd.f32 %v1238, %v1285
  %v1320 = vadd.f32 %v1167, %v1290
  %v1321 = vadd.f32 %v1169, %v1290
  %v1322 = vadd.f32 %v1240, %v1290
  %v1323 = vadd.f32 %v1242, %v1290
  %v1324 = vpack.c.bf16 %v1296, %v1292
  %v1325 = vpack.c.bf16 %v1297, %v1293
  %v1326 = vpack.c.bf16 %v1298, %v1294
  %v1327 = vpack.c.bf16 %v1299, %v1295
  %v1328 = vpack.c.bf16 %v1304, %v1300
  %v1329 = vpack.c.bf16 %v1305, %v1301
  %v1330 = vpack.c.bf16 %v1306, %v1302
  %v1331 = vpack.c.bf16 %v1307, %v1303
  %v1332 = vpack.c.bf16 %v1312, %v1308
  %v1333 = vpack.c.bf16 %v1313, %v1309
  %v1334 = vpack.c.bf16 %v1314, %v1310
  %v1335 = vpack.c.bf16 %v1315, %v1311
  %v1336 = vpack.c.bf16 %v1320, %v1316
  %v1337 = vpack.c.bf16 %v1321, %v1317
  %v1338 = vpack.c.bf16 %v1322, %v1318
  %v1339 = vpack.c.bf16 %v1323, %v1319
  %v1356 = vunpack.c.l.b16 %v1324
  %v1357 = vunpack.c.l.b16 %v1325
  %v1358 = vunpack.c.l.b16 %v1326
  %v1359 = vunpack.c.l.b16 %v1327
  %v1360 = vunpack.c.h.b16 %v1324
  %v1361 = vunpack.c.h.b16 %v1325
  %v1362 = vunpack.c.h.b16 %v1326
  %v1363 = vunpack.c.h.b16 %v1327
  %v1364 = vunpack.c.l.b16 %v1328
  %v1365 = vunpack.c.l.b16 %v1329
  %v1366 = vunpack.c.l.b16 %v1330
  %v1367 = vunpack.c.l.b16 %v1331
  %v1368 = vunpack.c.h.b16 %v1328
  %v1369 = vunpack.c.h.b16 %v1329
  %v1370 = vunpack.c.h.b16 %v1330
  %v1371 = vunpack.c.h.b16 %v1331
  %v1372 = vunpack.c.l.b16 %v1332
  %v1373 = vunpack.c.l.b16 %v1333
  %v1374 = vunpack.c.l.b16 %v1334
  %v1375 = vunpack.c.l.b16 %v1335
  %v1376 = vunpack.c.h.b16 %v1332
  %v1377 = vunpack.c.h.b16 %v1333
  %v1378 = vunpack.c.h.b16 %v1334
  %v1379 = vunpack.c.h.b16 %v1335
  %v1380 = vunpack.c.l.b16 %v1336
  %v1381 = vunpack.c.l.b16 %v1337
  %v1382 = vunpack.c.l.b16 %v1338
  %v1383 = vunpack.c.l.b16 %v1339
  %v1384 = vunpack.c.h.b16 %v1336
  %v1385 = vunpack.c.h.b16 %v1337
  %v1386 = vunpack.c.h.b16 %v1338
  %v1387 = vunpack.c.h.b16 %v1339
  %v1388 = vpack.c.b16 %v1357, %v1356
  %v1389 = vpack.c.b16 %v1359, %v1358
  %v1390 = vpack.c.b16 %v1361, %v1360
  %v1391 = vpack.c.b16 %v1363, %v1362
  %v1392 = vpack.c.b16 %v1365, %v1364
  %v1393 = vpack.c.b16 %v1367, %v1366
  %v1394 = vpack.c.b16 %v1369, %v1368
  %v1395 = vpack.c.b16 %v1371, %v1370
  %v1396 = vpack.c.b16 %v1373, %v1372
  %v1397 = vpack.c.b16 %v1375, %v1374
  %v1398 = vpack.c.b16 %v1377, %v1376
  %v1399 = vpack.c.b16 %v1379, %v1378
  %v1400 = vpack.c.b16 %v1381, %v1380
  %v1401 = vpack.c.b16 %v1383, %v1382
  %v1402 = vpack.c.b16 %v1385, %v1384
  %v1403 = vpack.c.b16 %v1387, %v1386
  %1420 = vst [vmem:[%s6] sm:$0xff] %v1388
  %1421 = vst [vmem:[%s6 + $0x8] sm:$0xff] %v1389
  %1422 = vst [vmem:[%s6 + $0x10] sm:$0xff] %v1390
  %1423 = vst [vmem:[%s6 + $0x18] sm:$0xff] %v1391
  %1424 = vst [vmem:[%s6 + $0x20] sm:$0xff] %v1392
  %1425 = vst [vmem:[%s6 + $0x28] sm:$0xff] %v1393
  %1426 = vst [vmem:[%s6 + $0x30] sm:$0xff] %v1394
  %1427 = vst [vmem:[%s6 + $0x38] sm:$0xff] %v1395
  %1428 = vst [vmem:[%s6 + $0x40] sm:$0xff] %v1396
  %1429 = vst [vmem:[%s6 + $0x48] sm:$0xff] %v1397
  %1430 = vst [vmem:[%s6 + $0x50] sm:$0xff] %v1398
  %1431 = vst [vmem:[%s6 + $0x58] sm:$0xff] %v1399
  %1432 = vst [vmem:[%s6 + $0x60] sm:$0xff] %v1400
  %1433 = vst [vmem:[%s6 + $0x68] sm:$0xff] %v1401
  %1434 = vst [vmem:[%s6 + $0x70] sm:$0x33] %v1402
  %1435 = vst [vmem:[%s6 + $0x78] sm:$0x33] %v1403
  %v1436 = vunpack.c.l.bf16 %v516
  %v1437 = vunpack.c.h.bf16 %v516
  %v1438 = vunpack.c.l.bf16 %v517
  %v1439 = vunpack.c.h.bf16 %v517
  %v1440 = vunpack.c.l.bf16 %v518
  %v1441 = vunpack.c.h.bf16 %v518
  %v1442 = vunpack.c.l.bf16 %v519
  %v1443 = vunpack.c.h.bf16 %v519
  %v1444 = vunpack.c.l.bf16 %v520
  %v1445 = vunpack.c.h.bf16 %v520
  %v1446 = vunpack.c.l.bf16 %v521
  %v1447 = vunpack.c.h.bf16 %v521
  %v1448 = vunpack.c.l.bf16 %v522
  %v1449 = vunpack.c.h.bf16 %v522
  %v1450 = vunpack.c.l.bf16 %v523
  %v1451 = vunpack.c.h.bf16 %v523
  %v1452 = vunpack.c.l.bf16 %v524
  %v1453 = vunpack.c.h.bf16 %v524
  %v1454 = vunpack.c.l.bf16 %v525
  %v1455 = vunpack.c.h.bf16 %v525
  %v1456 = vunpack.c.l.bf16 %v526
  %v1457 = vunpack.c.h.bf16 %v526
  %v1458 = vunpack.c.l.bf16 %v527
  %v1459 = vunpack.c.h.bf16 %v527
  %v1460 = vunpack.c.l.bf16 %v528
  %v1461 = vunpack.c.h.bf16 %v528
  %v1462 = vunpack.c.l.bf16 %v529
  %v1463 = vunpack.c.h.bf16 %v529
  %v1464 = vunpack.c.l.bf16 %v530
  %v1465 = vunpack.c.h.bf16 %v530
  %v1466 = vunpack.c.l.bf16 %v531
  %v1467 = vunpack.c.h.bf16 %v531
  %v1468 = vunpack.c.l.bf16 %v532
  %v1469 = vunpack.c.h.bf16 %v532
  %v1470 = vunpack.c.l.bf16 %v533
  %v1471 = vunpack.c.h.bf16 %v533
  %v1472 = vunpack.c.l.bf16 %v534
  %v1473 = vunpack.c.h.bf16 %v534
  %v1474 = vunpack.c.l.bf16 %v535
  %v1475 = vunpack.c.h.bf16 %v535
  %v1476 = vunpack.c.l.bf16 %v536
  %v1477 = vunpack.c.h.bf16 %v536
  %v1478 = vunpack.c.l.bf16 %v537
  %v1479 = vunpack.c.h.bf16 %v537
  %v1480 = vunpack.c.l.bf16 %v538
  %v1481 = vunpack.c.h.bf16 %v538
  %v1482 = vunpack.c.l.bf16 %v539
  %v1483 = vunpack.c.h.bf16 %v539
  %v1484 = vunpack.c.l.bf16 %v540
  %v1485 = vunpack.c.h.bf16 %v540
  %v1486 = vunpack.c.l.bf16 %v541
  %v1487 = vunpack.c.h.bf16 %v541
  %v1488 = vunpack.c.l.bf16 %v542
  %v1489 = vunpack.c.h.bf16 %v542
  %v1490 = vunpack.c.l.bf16 %v543
  %v1491 = vunpack.c.h.bf16 %v543
  %v1492 = vunpack.c.l.bf16 %v544
  %v1493 = vunpack.c.h.bf16 %v544
  %v1494 = vunpack.c.l.bf16 %v545
  %v1495 = vunpack.c.h.bf16 %v545
  %v1496 = vadd.f32 %v1436, %v1437
  %v1497 = vadd.f32 %v1440, %v1441
  %v1498 = vadd.f32 %v1444, %v1445
  %v1499 = vadd.f32 %v1448, %v1449
  %v1500 = vadd.f32 %v1452, %v1453
  %v1501 = vadd.f32 %v1456, %v1457
  %v1502 = vadd.f32 %v1460, %v1461
  %v1503 = vadd.f32 %v1464, %v1465
  %v1504 = vadd.f32 %v1468, %v1469
  %v1505 = vadd.f32 %v1472, %v1473
  %v1506 = vadd.f32 %v1476, %v1477
  %v1507 = vadd.f32 %v1480, %v1481
  %v1508 = vadd.f32 %v1484, %v1485
  %v1509 = vadd.f32 %v1488, %v1489
  %v1510 = vadd.f32 %v1492, %v1493
  %v1511 = vadd.f32 %v1496, %v1438
  %v1512 = vadd.f32 %v1497, %v1442
  %v1513 = vadd.f32 %v1498, %v1446
  %v1514 = vadd.f32 %v1499, %v1450
  %v1515 = vadd.f32 %v1500, %v1454
  %v1516 = vadd.f32 %v1501, %v1458
  %v1517 = vadd.f32 %v1502, %v1462
  %v1518 = vadd.f32 %v1503, %v1466
  %v1519 = vadd.f32 %v1504, %v1470
  %v1520 = vadd.f32 %v1505, %v1474
  %v1521 = vadd.f32 %v1506, %v1478
  %v1522 = vadd.f32 %v1507, %v1482
  %v1523 = vadd.f32 %v1508, %v1486
  %v1524 = vadd.f32 %v1509, %v1490
  %v1525 = vadd.f32 %v1510, %v1494
  %v1526 = vadd.f32 %v1511, %v1439
  %v1527 = vadd.f32 %v1512, %v1443
  %v1528 = vadd.f32 %v1513, %v1447
  %v1529 = vadd.f32 %v1514, %v1451
  %v1530 = vadd.f32 %v1515, %v1455
  %v1531 = vadd.f32 %v1516, %v1459
  %v1532 = vadd.f32 %v1517, %v1463
  %v1533 = vadd.f32 %v1518, %v1467
  %v1534 = vadd.f32 %v1519, %v1471
  %v1535 = vadd.f32 %v1520, %v1475
  %v1536 = vadd.f32 %v1521, %v1479
  %v1537 = vadd.f32 %v1522, %v1483
  %v1538 = vadd.f32 %v1523, %v1487
  %v1539 = vadd.f32 %v1524, %v1491
  %v1540 = vadd.f32 %v1525, %v1495
  %v1541 = vmul.f32 %v1436, %v1436
  %v1542 = vmul.f32 %v1437, %v1437
  %v1543 = vmul.f32 %v1438, %v1438
  %v1544 = vmul.f32 %v1439, %v1439
  %v1545 = vmul.f32 %v1440, %v1440
  %v1546 = vmul.f32 %v1441, %v1441
  %v1547 = vmul.f32 %v1442, %v1442
  %v1548 = vmul.f32 %v1443, %v1443
  %v1549 = vmul.f32 %v1444, %v1444
  %v1550 = vmul.f32 %v1445, %v1445
  %v1551 = vmul.f32 %v1446, %v1446
  %v1552 = vmul.f32 %v1447, %v1447
  %v1553 = vmul.f32 %v1448, %v1448
  %v1554 = vmul.f32 %v1449, %v1449
  %v1555 = vmul.f32 %v1450, %v1450
  %v1556 = vmul.f32 %v1451, %v1451
  %v1557 = vmul.f32 %v1452, %v1452
  %v1558 = vmul.f32 %v1453, %v1453
  %v1559 = vmul.f32 %v1454, %v1454
  %v1560 = vmul.f32 %v1455, %v1455
  %v1561 = vmul.f32 %v1456, %v1456
  %v1562 = vmul.f32 %v1457, %v1457
  %v1563 = vmul.f32 %v1458, %v1458
  %v1564 = vmul.f32 %v1459, %v1459
  %v1565 = vmul.f32 %v1460, %v1460
  %v1566 = vmul.f32 %v1461, %v1461
  %v1567 = vmul.f32 %v1462, %v1462
  %v1568 = vmul.f32 %v1463, %v1463
  %v1569 = vmul.f32 %v1464, %v1464
  %v1570 = vmul.f32 %v1465, %v1465
  %v1571 = vmul.f32 %v1466, %v1466
  %v1572 = vmul.f32 %v1467, %v1467
  %v1573 = vmul.f32 %v1468, %v1468
  %v1574 = vmul.f32 %v1469, %v1469
  %v1575 = vmul.f32 %v1470, %v1470
  %v1576 = vmul.f32 %v1471, %v1471
  %v1577 = vmul.f32 %v1472, %v1472
  %v1578 = vmul.f32 %v1473, %v1473
  %v1579 = vmul.f32 %v1474, %v1474
  %v1580 = vmul.f32 %v1475, %v1475
  %v1581 = vmul.f32 %v1476, %v1476
  %v1582 = vmul.f32 %v1477, %v1477
  %v1583 = vmul.f32 %v1478, %v1478
  %v1584 = vmul.f32 %v1479, %v1479
  %v1585 = vmul.f32 %v1480, %v1480
  %v1586 = vmul.f32 %v1481, %v1481
  %v1587 = vmul.f32 %v1482, %v1482
  %v1588 = vmul.f32 %v1483, %v1483
  %v1589 = vmul.f32 %v1484, %v1484
  %v1590 = vmul.f32 %v1485, %v1485
  %v1591 = vmul.f32 %v1486, %v1486
  %v1592 = vmul.f32 %v1487, %v1487
  %v1593 = vmul.f32 %v1488, %v1488
  %v1594 = vmul.f32 %v1489, %v1489
  %v1595 = vmul.f32 %v1490, %v1490
  %v1596 = vmul.f32 %v1491, %v1491
  %v1597 = vmul.f32 %v1492, %v1492
  %v1598 = vmul.f32 %v1493, %v1493
  %v1599 = vmul.f32 %v1494, %v1494
  %v1600 = vmul.f32 %v1495, %v1495
  %v1601 = vadd.f32 %v1541, %v1542
  %v1602 = vadd.f32 %v1545, %v1546
  %v1603 = vadd.f32 %v1549, %v1550
  %v1604 = vadd.f32 %v1553, %v1554
  %v1605 = vadd.f32 %v1557, %v1558
  %v1606 = vadd.f32 %v1561, %v1562
  %v1607 = vadd.f32 %v1565, %v1566
  %v1608 = vadd.f32 %v1569, %v1570
  %v1609 = vadd.f32 %v1573, %v1574
  %v1610 = vadd.f32 %v1577, %v1578
  %v1611 = vadd.f32 %v1581, %v1582
  %v1612 = vadd.f32 %v1585, %v1586
  %v1613 = vadd.f32 %v1589, %v1590
  %v1614 = vadd.f32 %v1593, %v1594
  %v1615 = vadd.f32 %v1597, %v1598
  %v1616 = vadd.f32 %v1601, %v1543
  %v1617 = vadd.f32 %v1602, %v1547
  %v1618 = vadd.f32 %v1603, %v1551
  %v1619 = vadd.f32 %v1604, %v1555
  %v1620 = vadd.f32 %v1605, %v1559
  %v1621 = vadd.f32 %v1606, %v1563
  %v1622 = vadd.f32 %v1607, %v1567
  %v1623 = vadd.f32 %v1608, %v1571
  %v1624 = vadd.f32 %v1609, %v1575
  %v1625 = vadd.f32 %v1610, %v1579
  %v1626 = vadd.f32 %v1611, %v1583
  %v1627 = vadd.f32 %v1612, %v1587
  %v1628 = vadd.f32 %v1613, %v1591
  %v1629 = vadd.f32 %v1614, %v1595
  %v1630 = vadd.f32 %v1615, %v1599
  %v1631 = vadd.f32 %v1616, %v1544
  %v1632 = vadd.f32 %v1617, %v1548
  %v1633 = vadd.f32 %v1618, %v1552
  %v1634 = vadd.f32 %v1619, %v1556
  %v1635 = vadd.f32 %v1620, %v1560
  %v1636 = vadd.f32 %v1621, %v1564
  %v1637 = vadd.f32 %v1622, %v1568
  %v1638 = vadd.f32 %v1623, %v1572
  %v1639 = vadd.f32 %v1624, %v1576
  %v1640 = vadd.f32 %v1625, %v1580
  %v1641 = vadd.f32 %v1626, %v1584
  %v1642 = vadd.f32 %v1627, %v1588
  %v1643 = vadd.f32 %v1628, %v1592
  %v1644 = vadd.f32 %v1629, %v1596
  %v1645 = vadd.f32 %v1630, %v1600
  %1646 = vst [vmem:[%s7] sm:$0xff] %v1526
  %1647 = vst [vmem:[%s7 + $0x8] sm:$0xff] %v1527
  %1648 = vst [vmem:[%s7 + $0x10] sm:$0xff] %v1528
  %1649 = vst [vmem:[%s7 + $0x18] sm:$0xff] %v1529
  %1650 = vst [vmem:[%s7 + $0x20] sm:$0xff] %v1530
  %1651 = vst [vmem:[%s7 + $0x28] sm:$0xff] %v1531
  %1652 = vst [vmem:[%s7 + $0x30] sm:$0xff] %v1532
  %1653 = vst [vmem:[%s7 + $0x38] sm:$0xff] %v1533
  %1654 = vst [vmem:[%s7 + $0x40] sm:$0xff] %v1534
  %1655 = vst [vmem:[%s7 + $0x48] sm:$0xff] %v1535
  %1656 = vst [vmem:[%s7 + $0x50] sm:$0xff] %v1536
  %1657 = vst [vmem:[%s7 + $0x58] sm:$0xff] %v1537
  %1658 = vst [vmem:[%s7 + $0x60] sm:$0xff] %v1538
  %1659 = vst [vmem:[%s7 + $0x68] sm:$0xff] %v1539
  %1660 = vst [vmem:[%s7 + $0x70] sm:$0xff] %v1540
  %1661 = vst [vmem:[%s8] sm:$0xff] %v1631
  %1662 = vst [vmem:[%s8 + $0x8] sm:$0xff] %v1632
  %1663 = vst [vmem:[%s8 + $0x10] sm:$0xff] %v1633
  %1664 = vst [vmem:[%s8 + $0x18] sm:$0xff] %v1634
  %1665 = vst [vmem:[%s8 + $0x20] sm:$0xff] %v1635
  %1666 = vst [vmem:[%s8 + $0x28] sm:$0xff] %v1636
  %1667 = vst [vmem:[%s8 + $0x30] sm:$0xff] %v1637
  %1668 = vst [vmem:[%s8 + $0x38] sm:$0xff] %v1638
  %1669 = vst [vmem:[%s8 + $0x40] sm:$0xff] %v1639
  %1670 = vst [vmem:[%s8 + $0x48] sm:$0xff] %v1640
  %1671 = vst [vmem:[%s8 + $0x50] sm:$0xff] %v1641
  %1672 = vst [vmem:[%s8 + $0x58] sm:$0xff] %v1642
  %1673 = vst [vmem:[%s8 + $0x60] sm:$0xff] %v1643
  %1674 = vst [vmem:[%s8 + $0x68] sm:$0xff] %v1644
  %1675 = vst [vmem:[%s8 + $0x70] sm:$0xff] %v1645
  %v1676 = vunpack.c.l.bf16 %v1324
  %v1677 = vunpack.c.l.bf16 %v1325
  %v1678 = vunpack.c.l.bf16 %v1326
  %v1679 = vunpack.c.l.bf16 %v1327
  %v1680 = vunpack.c.h.bf16 %v1324
  %v1681 = vunpack.c.h.bf16 %v1325
  %v1682 = vunpack.c.h.bf16 %v1326
  %v1683 = vunpack.c.h.bf16 %v1327
  %v1684 = vunpack.c.l.bf16 %v1328
  %v1685 = vunpack.c.l.bf16 %v1329
  %v1686 = vunpack.c.l.bf16 %v1330
  %v1687 = vunpack.c.l.bf16 %v1331
  %v1688 = vunpack.c.h.bf16 %v1328
  %v1689 = vunpack.c.h.bf16 %v1329
  %v1690 = vunpack.c.h.bf16 %v1330
  %v1691 = vunpack.c.h.bf16 %v1331
  %v1692 = vunpack.c.l.bf16 %v1332
  %v1693 = vunpack.c.l.bf16 %v1333
  %v1694 = vunpack.c.l.bf16 %v1334
  %v1695 = vunpack.c.l.bf16 %v1335
  %v1696 = vunpack.c.h.bf16 %v1332
  %v1697 = vunpack.c.h.bf16 %v1333
  %v1698 = vunpack.c.h.bf16 %v1334
  %v1699 = vunpack.c.h.bf16 %v1335
  %v1700 = vunpack.c.l.bf16 %v1336
  %v1701 = vunpack.c.l.bf16 %v1337
  %v1702 = vunpack.c.l.bf16 %v1338
  %v1703 = vunpack.c.l.bf16 %v1339
  %v1704 = vunpack.c.h.bf16 %v1336
  %v1705 = vunpack.c.h.bf16 %v1337
  %v1706 = vunpack.c.h.bf16 %v1338
  %v1707 = vunpack.c.h.bf16 %v1339
  %v1708 = vadd.f32 %v1676, %v1677
  %v1709 = vadd.f32 %v1680, %v1681
  %v1710 = vadd.f32 %v1684, %v1685
  %v1711 = vadd.f32 %v1688, %v1689
  %v1712 = vadd.f32 %v1692, %v1693
  %v1713 = vadd.f32 %v1696, %v1697
  %v1714 = vadd.f32 %v1700, %v1701
  %v1715 = vadd.f32 %v1704, %v1705
  %v1716 = vadd.f32 %v1708, %v1678
  %v1717 = vadd.f32 %v1709, %v1682
  %v1718 = vadd.f32 %v1710, %v1686
  %v1719 = vadd.f32 %v1711, %v1690
  %v1720 = vadd.f32 %v1712, %v1694
  %v1721 = vadd.f32 %v1713, %v1698
  %v1722 = vadd.f32 %v1714, %v1702
  %v1723 = vadd.f32 %v1715, %v1706
  %v1724 = vadd.f32 %v1716, %v1679
  %v1725 = vadd.f32 %v1717, %v1683
  %v1726 = vadd.f32 %v1718, %v1687
  %v1727 = vadd.f32 %v1719, %v1691
  %v1728 = vadd.f32 %v1720, %v1695
  %v1729 = vadd.f32 %v1721, %v1699
  %v1730 = vadd.f32 %v1722, %v1703
  %v1731 = vadd.f32 %v1723, %v1707
  %v1732 = vmul.f32 %v1676, %v1676
  %v1733 = vmul.f32 %v1677, %v1677
  %v1734 = vmul.f32 %v1678, %v1678
  %v1735 = vmul.f32 %v1679, %v1679
  %v1736 = vmul.f32 %v1680, %v1680
  %v1737 = vmul.f32 %v1681, %v1681
  %v1738 = vmul.f32 %v1682, %v1682
  %v1739 = vmul.f32 %v1683, %v1683
  %v1740 = vmul.f32 %v1684, %v1684
  %v1741 = vmul.f32 %v1685, %v1685
  %v1742 = vmul.f32 %v1686, %v1686
  %v1743 = vmul.f32 %v1687, %v1687
  %v1744 = vmul.f32 %v1688, %v1688
  %v1745 = vmul.f32 %v1689, %v1689
  %v1746 = vmul.f32 %v1690, %v1690
  %v1747 = vmul.f32 %v1691, %v1691
  %v1748 = vmul.f32 %v1692, %v1692
  %v1749 = vmul.f32 %v1693, %v1693
  %v1750 = vmul.f32 %v1694, %v1694
  %v1751 = vmul.f32 %v1695, %v1695
  %v1752 = vmul.f32 %v1696, %v1696
  %v1753 = vmul.f32 %v1697, %v1697
  %v1754 = vmul.f32 %v1698, %v1698
  %v1755 = vmul.f32 %v1699, %v1699
  %v1756 = vmul.f32 %v1700, %v1700
  %v1757 = vmul.f32 %v1701, %v1701
  %v1758 = vmul.f32 %v1702, %v1702
  %v1759 = vmul.f32 %v1703, %v1703
  %v1760 = vmul.f32 %v1704, %v1704
  %v1761 = vmul.f32 %v1705, %v1705
  %v1762 = vmul.f32 %v1706, %v1706
  %v1763 = vmul.f32 %v1707, %v1707
  %v1764 = vadd.f32 %v1732, %v1733
  %v1765 = vadd.f32 %v1736, %v1737
  %v1766 = vadd.f32 %v1740, %v1741
  %v1767 = vadd.f32 %v1744, %v1745
  %v1768 = vadd.f32 %v1748, %v1749
  %v1769 = vadd.f32 %v1752, %v1753
  %v1770 = vadd.f32 %v1756, %v1757
  %v1771 = vadd.f32 %v1760, %v1761
  %v1772 = vadd.f32 %v1764, %v1734
  %v1773 = vadd.f32 %v1765, %v1738
  %v1774 = vadd.f32 %v1766, %v1742
  %v1775 = vadd.f32 %v1767, %v1746
  %v1776 = vadd.f32 %v1768, %v1750
  %v1777 = vadd.f32 %v1769, %v1754
  %v1778 = vadd.f32 %v1770, %v1758
  %v1779 = vadd.f32 %v1771, %v1762
  %v1780 = vadd.f32 %v1772, %v1735
  %v1781 = vadd.f32 %v1773, %v1739
  %v1782 = vadd.f32 %v1774, %v1743
  %v1783 = vadd.f32 %v1775, %v1747
  %v1784 = vadd.f32 %v1776, %v1751
  %v1785 = vadd.f32 %v1777, %v1755
  %v1786 = vadd.f32 %v1778, %v1759
  %v1787 = vadd.f32 %v1779, %v1763
  %1788 = vst [vmem:[%s9] sm:$0xff] %v1724
  %1789 = vst [vmem:[%s9 + $0x8] sm:$0xff] %v1725
  %1790 = vst [vmem:[%s9 + $0x10] sm:$0xff] %v1726
  %1791 = vst [vmem:[%s9 + $0x18] sm:$0xff] %v1727
  %1792 = vst [vmem:[%s9 + $0x20] sm:$0xff] %v1728
  %1793 = vst [vmem:[%s9 + $0x28] sm:$0xff] %v1729
  %1794 = vst [vmem:[%s9 + $0x30] sm:$0xff] %v1730
  %1795 = vst [vmem:[%s9 + $0x38] sm:$0xf] %v1731
  %1796 = vst [vmem:[%s10] sm:$0xff] %v1780
  %1797 = vst [vmem:[%s10 + $0x8] sm:$0xff] %v1781
  %1798 = vst [vmem:[%s10 + $0x10] sm:$0xff] %v1782
  %1799 = vst [vmem:[%s10 + $0x18] sm:$0xff] %v1783
  %1800 = vst [vmem:[%s10 + $0x20] sm:$0xff] %v1784
  %1801 = vst [vmem:[%s10 + $0x28] sm:$0xff] %v1785
  %1802 = vst [vmem:[%s10 + $0x30] sm:$0xff] %v1786
  %1803 = vst [vmem:[%s10 + $0x38] sm:$0xf] %v1787
  // Predicated region
  $region26: #{m_resblock1_forward.6} parent=0 // pred_check
    _
  $region27: #{m_resblock1_forward.6} parent=0 // pred_check_branch
    %1805 = sbr.rel (0) target = $region29
  $region28: #{m_resblock1_forward.6} parent=0 // pred_region
    _
  $region29: #{m_resblock1_forward.6} parent=0 // pred_fallthru
    _
  // Predicated region
  $region30: #{m_resblock1_forward.6} parent=0 // pred_check
    _
  $region31: #{m_resblock1_forward.6} parent=0 // pred_check_branch
    %1807 = sbr.rel (0) target = $region33
  $region32: #{m_resblock1_forward.6} parent=0 // pred_region
    _
  $region33: #{m_resblock1_forward.6} parent=0 // pred_fallthru
    _
  // Predicated region
  $region34: #{m_resblock1_forward.6} parent=0 // pred_check
    _
  $region35: #{m_resblock1_forward.6} parent=0 // pred_check_branch
    %1809 = sbr.rel (0) target = $region37
  $region36: #{m_resblock1_forward.6} parent=0 // pred_region
    _
  $region37: #{m_resblock1_forward.6} parent=0 // pred_fallthru
    _
  // Predicated region
  $region38: #{m_resblock1_forward.6} parent=0 // pred_check
    _
  $region39: #{m_resblock1_forward.6} parent=0 // pred_check_branch
    %1811 = sbr.rel (0) target = $region41
  $region40: #{m_resblock1_forward.6} parent=0 // pred_region
    _
  $region41: #{m_resblock1_forward.6} parent=0 // pred_fallthru
    _
  // Predicated region
  $region42: #{m_resblock1_forward.6} parent=0 // pred_check
    _
  $region43: #{m_resblock1_forward.6} parent=0 // pred_check_branch
    %1813 = sbr.rel (0) target = $region45
  $region44: #{m_resblock1_forward.6} parent=0 // pred_region
    _
  $region45: #{m_resblock1_forward.6} parent=0 // pred_fallthru
    _
  // Predicated region
  $region46: #{m_resblock1_forward.6} parent=0 // pred_check
    _
  $region47: #{m_resblock1_forward.6} parent=0 // pred_check_branch
    %1815 = sbr.rel (0) target = $region49
  $region48: #{m_resblock1_forward.6} parent=0 // pred_region
    _
  $region49: #{m_resblock1_forward.6} parent=0 // pred_fallthru
    _
  // Predicated region
  $region50: #{m_resblock1_forward.6} parent=0 // pred_check
    _
  $region51: #{m_resblock1_forward.6} parent=0 // pred_check_branch
    %1817 = sbr.rel (0) target = $region53
  $region52: #{m_resblock1_forward.6} parent=0 // pred_region
    _
  $region53: #{m_resblock1_forward.6} parent=0 // pred_fallthru
    _
  // Predicated region
  $region54: #{m_resblock1_forward.6} parent=0 // pred_check
    _
  $region55: #{m_resblock1_forward.6} parent=0 // pred_check_branch
    %1819 = sbr.rel (0) target = $region57
  $region56: #{m_resblock1_forward.6} parent=0 // pred_region
    _
  $region57: #{m_resblock1_forward.6} parent=0 // pred_fallthru
    _
  // Predicated region
  $region58: #{m_resblock1_forward.6} parent=0 // pred_check
    _
  $region59: #{m_resblock1_forward.6} parent=0 // pred_check_branch
    %1821 = sbr.rel (0) target = $region61
  $region60: #{m_resblock1_forward.6} parent=0 // pred_region
    _
  $region61: #{m_resblock1_forward.6} parent=0 // pred_fallthru
    _
  // Predicated region
  $region62: #{m_resblock1_forward.6} parent=0 // pred_check
    _
  $region63: #{m_resblock1_forward.6} parent=0 // pred_check_branch
    %1823 = sbr.rel (0) target = $region65
  $region64: #{m_resblock1_forward.6} parent=0 // pred_region
    _
  $region65: #{m_resblock1_forward.6} parent=0 // pred_fallthru
    _

// kernel: m_resblock1_forward.7
$region0: #{m_resblock1_forward.7}
  #allocation0 [shape = 'u32[]', space=smem, size = 0x4, offset = 0x4, fixed_abs, tag = 'smem constant byte address 0x4 - core index']
  #allocation1 [shape = 'u32[144,128]{1,0:T(1,128)}', space=vmem, size = 0x12000, scoped, tag = 'internal scratch']
  %s0 = inlined_call_operand.vmem [shape: bf16[120,512], index: 0, kind: input, shape index: {}]
  %s1 = inlined_call_operand.vmem [shape: bf16[60,512], index: 1, kind: input, shape index: {}]
  %s2 = inlined_call_operand.vmem [shape: f32[120,1], index: 2, kind: input, shape index: {}]
  %s3 = inlined_call_operand.vmem [shape: f32[120,1], index: 3, kind: input, shape index: {}]
  %s4 = inlined_call_operand.vmem [shape: f32[300,1], index: 4, kind: input, shape index: {}]
  %s5 = inlined_call_operand.vmem [shape: f32[300,1], index: 5, kind: input, shape index: {}]
  %s6 = inlined_call_operand.vmem [shape: bf16[60,120], index: 6, kind: input, shape index: {}]
  %s7 = inlined_call_operand.vmem [shape: bf16[60,120], index: 7, kind: input, shape index: {}]
  %s8 = inlined_call_operand.vmem [shape: bf16[60,60], index: 8, kind: input, shape index: {}]
  %s9 = inlined_call_operand.vmem [shape: f32[60,1], index: 9, kind: input, shape index: {}]
  %s10 = inlined_call_operand.vmem [shape: bf16[60,512], index: 10, kind: output, shape index: {0}]
  %s11 = inlined_call_operand.vmem [shape: f32[60,128], index: 11, kind: output, shape index: {1}]
  %s12 = inlined_call_operand.vmem [shape: f32[60,128], index: 12, kind: output, shape index: {2}]
  %13 = xla_tuple %s10, %s11, %s12
  %s14 = sld [smem:[#allocation0]]
  $region66: #{m_resblock1_forward.7} parent=0
    _
  %s16 = ssub.s32 1, %s14
  %s17 = scalar_select 0, %s16, %s14
  // Predicated region
  $region2: #{m_resblock1_forward.7} parent=0 // pred_check
    _
  $region3: #{m_resblock1_forward.7} parent=0 // pred_check_branch
    %19 = sbr.rel (0) target = $region5
  $region4: #{m_resblock1_forward.7} parent=0 // pred_region
    _
  $region5: #{m_resblock1_forward.7} parent=0 // pred_fallthru
    _
  // Predicated region
  $region6: #{m_resblock1_forward.7} parent=0 // pred_check
    _
  $region7: #{m_resblock1_forward.7} parent=0 // pred_check_branch
    %21 = sbr.rel (0) target = $region9
  $region8: #{m_resblock1_forward.7} parent=0 // pred_region
    _
  $region9: #{m_resblock1_forward.7} parent=0 // pred_fallthru
    _
  // Predicated region
  $region10: #{m_resblock1_forward.7} parent=0 // pred_check
    _
  $region11: #{m_resblock1_forward.7} parent=0 // pred_check_branch
    %23 = sbr.rel (0) target = $region13
  $region12: #{m_resblock1_forward.7} parent=0 // pred_region
    _
  $region13: #{m_resblock1_forward.7} parent=0 // pred_fallthru
    _
  // Predicated region
  $region14: #{m_resblock1_forward.7} parent=0 // pred_check
    _
  $region15: #{m_resblock1_forward.7} parent=0 // pred_check_branch
    %25 = sbr.rel (0) target = $region17
  $region16: #{m_resblock1_forward.7} parent=0 // pred_region
    _
  $region17: #{m_resblock1_forward.7} parent=0 // pred_fallthru
    _
  // Predicated region
  $region18: #{m_resblock1_forward.7} parent=0 // pred_check
    _
  $region19: #{m_resblock1_forward.7} parent=0 // pred_check_branch
    %27 = sbr.rel (0) target = $region21
  $region20: #{m_resblock1_forward.7} parent=0 // pred_region
    _
  $region21: #{m_resblock1_forward.7} parent=0 // pred_fallthru
    _
  // Predicated region
  $region22: #{m_resblock1_forward.7} parent=0 // pred_check
    _
  $region23: #{m_resblock1_forward.7} parent=0 // pred_check_branch
    %29 = sbr.rel (0) target = $region25
  $region24: #{m_resblock1_forward.7} parent=0 // pred_region
    _
  $region25: #{m_resblock1_forward.7} parent=0 // pred_fallthru
    _
  // Predicated region
  $region26: #{m_resblock1_forward.7} parent=0 // pred_check
    _
  $region27: #{m_resblock1_forward.7} parent=0 // pred_check_branch
    %31 = sbr.rel (0) target = $region29
  $region28: #{m_resblock1_forward.7} parent=0 // pred_region
    _
  $region29: #{m_resblock1_forward.7} parent=0 // pred_fallthru
    _
  // Predicated region
  $region30: #{m_resblock1_forward.7} parent=0 // pred_check
    _
  $region31: #{m_resblock1_forward.7} parent=0 // pred_check_branch
    %33 = sbr.rel (0) target = $region33
  $region32: #{m_resblock1_forward.7} parent=0 // pred_region
    _
  $region33: #{m_resblock1_forward.7} parent=0 // pred_fallthru
    _
  // Predicated region
  $region34: #{m_resblock1_forward.7} parent=0 // pred_check
    _
  $region35: #{m_resblock1_forward.7} parent=0 // pred_check_branch
    %35 = sbr.rel (0) target = $region37
  $region36: #{m_resblock1_forward.7} parent=0 // pred_region
    _
  $region37: #{m_resblock1_forward.7} parent=0 // pred_fallthru
    _
  // Predicated region
  $region38: #{m_resblock1_forward.7} parent=0 // pred_check
    _
  $region39: #{m_resblock1_forward.7} parent=0 // pred_check_branch
    %37 = sbr.rel (0) target = $region41
  $region40: #{m_resblock1_forward.7} parent=0 // pred_region
    _
  $region41: #{m_resblock1_forward.7} parent=0 // pred_fallthru
    _
  %v40 = vld [vmem:[%s0] sm:$0xff]
  %v41 = vld [vmem:[%s0 + $0x8] sm:$0xff]
  %v42 = vld [vmem:[%s0 + $0x10] sm:$0xff]
  %v43 = vld [vmem:[%s0 + $0x18] sm:$0xff]
  %v44 = vld [vmem:[%s0 + $0x20] sm:$0xff]
  %v45 = vld [vmem:[%s0 + $0x28] sm:$0xff]
  %v46 = vld [vmem:[%s0 + $0x30] sm:$0xff]
  %v47 = vld [vmem:[%s0 + $0x38] sm:$0xff]
  %v48 = vld [vmem:[%s0 + $0x40] sm:$0xff]
  %v49 = vld [vmem:[%s0 + $0x48] sm:$0xff]
  %v50 = vld [vmem:[%s0 + $0x50] sm:$0xff]
  %v51 = vld [vmem:[%s0 + $0x58] sm:$0xff]
  %v52 = vld [vmem:[%s0 + $0x60] sm:$0xff]
  %v53 = vld [vmem:[%s0 + $0x68] sm:$0xff]
  %v54 = vld [vmem:[%s0 + $0x70] sm:$0xff]
  %v55 = vld [vmem:[%s0 + $0x78] sm:$0xff]
  %v56 = vld [vmem:[%s0 + $0x80] sm:$0xff]
  %v57 = vld [vmem:[%s0 + $0x88] sm:$0xff]
  %v58 = vld [vmem:[%s0 + $0x90] sm:$0xff]
  %v59 = vld [vmem:[%s0 + $0x98] sm:$0xff]
  %v60 = vld [vmem:[%s0 + $0xa0] sm:$0xff]
  %v61 = vld [vmem:[%s0 + $0xa8] sm:$0xff]
  %v62 = vld [vmem:[%s0 + $0xb0] sm:$0xff]
  %v63 = vld [vmem:[%s0 + $0xb8] sm:$0xff]
  %v64 = vld [vmem:[%s0 + $0xc0] sm:$0xff]
  %v65 = vld [vmem:[%s0 + $0xc8] sm:$0xff]
  %v66 = vld [vmem:[%s0 + $0xd0] sm:$0xff]
  %v67 = vld [vmem:[%s0 + $0xd8] sm:$0xff]
  %v68 = vld [vmem:[%s0 + $0xe0] sm:$0xff]
  %v69 = vld [vmem:[%s0 + $0xe8] sm:$0xff]
  %v70 = vld [vmem:[%s2] sm:$0xff]
  %v71 = vld [vmem:[%s2 + $0x8] sm:$0xff]
  %v72 = vld [vmem:[%s2 + $0x10] sm:$0xff]
  %v73 = vld [vmem:[%s2 + $0x18] sm:$0xff]
  %v74 = vld [vmem:[%s2 + $0x20] sm:$0xff]
  %v75 = vld [vmem:[%s2 + $0x28] sm:$0xff]
  %v76 = vld [vmem:[%s2 + $0x30] sm:$0xff]
  %v77 = vld [vmem:[%s2 + $0x38] sm:$0xff]
  %v78 = vld [vmem:[%s2 + $0x40] sm:$0xff]
  %v79 = vld [vmem:[%s2 + $0x48] sm:$0xff]
  %v80 = vld [vmem:[%s2 + $0x50] sm:$0xff]
  %v81 = vld [vmem:[%s2 + $0x58] sm:$0xff]
  %v82 = vld [vmem:[%s2 + $0x60] sm:$0xff]
  %v83 = vld [vmem:[%s2 + $0x68] sm:$0xff]
  %v84 = vld [vmem:[%s2 + $0x70] sm:$0xff]
  %v85 = vpack.c.bf16 %v71, %v70
  %v86 = vpack.c.bf16 %v73, %v72
  %v87 = vpack.c.bf16 %v75, %v74
  %v88 = vpack.c.bf16 %v77, %v76
  %v89 = vpack.c.bf16 %v79, %v78
  %v90 = vpack.c.bf16 %v81, %v80
  %v91 = vpack.c.bf16 %v83, %v82
  %v92 = vpack.c.bf16 %v84, %v84
  %94 = vset.pattern.permute.xlu0 0
  %95 = vperm.xlu0 %94, %v85
  %v96 = vpop.permute.xlu0 %95
  %98 = vset.pattern.permute.xlu0 0
  %99 = vperm.xlu0 %98, %v86
  %v100 = vpop.permute.xlu0 %99
  %102 = vset.pattern.permute.xlu0 0
  %103 = vperm.xlu0 %102, %v87
  %v104 = vpop.permute.xlu0 %103
  %106 = vset.pattern.permute.xlu0 0
  %107 = vperm.xlu0 %106, %v88
  %v108 = vpop.permute.xlu0 %107
  %110 = vset.pattern.permute.xlu0 0
  %111 = vperm.xlu0 %110, %v89
  %v112 = vpop.permute.xlu0 %111
  %114 = vset.pattern.permute.xlu0 0
  %115 = vperm.xlu0 %114, %v90
  %v116 = vpop.permute.xlu0 %115
  %118 = vset.pattern.permute.xlu0 0
  %119 = vperm.xlu0 %118, %v91
  %v120 = vpop.permute.xlu0 %119
  %122 = vset.pattern.permute.xlu0 0
  %123 = vperm.xlu0 %122, %v92
  %v124 = vpop.permute.xlu0 %123
  %v134 = vunpack.c.l.s4 839922192
  %v135 = vunpack.c.0.s8 %v134
  %v136 = vlaneseq
  %v137 = vshrl.u32 %v136, 7
  %v138 = vsub.s32 %v135, %v137
  %v139 = vrot.slane %v96, %v138
  %v141 = vunpack.c.l.s4 1985246804
  %v142 = vunpack.c.0.s8 %v141
  %v143 = vlaneseq
  %v144 = vshrl.u32 %v143, 7
  %v145 = vsub.s32 %v142, %v144
  %v146 = vrot.slane %v96, %v145
  %v148 = vunpack.c.l.s4 839922192
  %v149 = vunpack.c.0.s8 %v148
  %v150 = vlaneseq
  %v151 = vshrl.u32 %v150, 7
  %v152 = vsub.s32 %v149, %v151
  %v153 = vrot.slane %v100, %v152
  %v155 = vunpack.c.l.s4 1985246804
  %v156 = vunpack.c.0.s8 %v155
  %v157 = vlaneseq
  %v158 = vshrl.u32 %v157, 7
  %v159 = vsub.s32 %v156, %v158
  %v160 = vrot.slane %v100, %v159
  %v162 = vunpack.c.l.s4 839922192
  %v163 = vunpack.c.0.s8 %v162
  %v164 = vlaneseq
  %v165 = vshrl.u32 %v164, 7
  %v166 = vsub.s32 %v163, %v165
  %v167 = vrot.slane %v104, %v166
  %v169 = vunpack.c.l.s4 1985246804
  %v170 = vunpack.c.0.s8 %v169
  %v171 = vlaneseq
  %v172 = vshrl.u32 %v171, 7
  %v173 = vsub.s32 %v170, %v172
  %v174 = vrot.slane %v104, %v173
  %v176 = vunpack.c.l.s4 839922192
  %v177 = vunpack.c.0.s8 %v176
  %v178 = vlaneseq
  %v179 = vshrl.u32 %v178, 7
  %v180 = vsub.s32 %v177, %v179
  %v181 = vrot.slane %v108, %v180
  %v183 = vunpack.c.l.s4 1985246804
  %v184 = vunpack.c.0.s8 %v183
  %v185 = vlaneseq
  %v186 = vshrl.u32 %v185, 7
  %v187 = vsub.s32 %v184, %v186
  %v188 = vrot.slane %v108, %v187
  %v190 = vunpack.c.l.s4 839922192
  %v191 = vunpack.c.0.s8 %v190
  %v192 = vlaneseq
  %v193 = vshrl.u32 %v192, 7
  %v194 = vsub.s32 %v191, %v193
  %v195 = vrot.slane %v112, %v194
  %v197 = vunpack.c.l.s4 1985246804
  %v198 = vunpack.c.0.s8 %v197
  %v199 = vlaneseq
  %v200 = vshrl.u32 %v199, 7
  %v201 = vsub.s32 %v198, %v200
  %v202 = vrot.slane %v112, %v201
  %v204 = vunpack.c.l.s4 839922192
  %v205 = vunpack.c.0.s8 %v204
  %v206 = vlaneseq
  %v207 = vshrl.u32 %v206, 7
  %v208 = vsub.s32 %v205, %v207
  %v209 = vrot.slane %v116, %v208
  %v211 = vunpack.c.l.s4 1985246804
  %v212 = vunpack.c.0.s8 %v211
  %v213 = vlaneseq
  %v214 = vshrl.u32 %v213, 7
  %v215 = vsub.s32 %v212, %v214
  %v216 = vrot.slane %v116, %v215
  %v218 = vunpack.c.l.s4 839922192
  %v219 = vunpack.c.0.s8 %v218
  %v220 = vlaneseq
  %v221 = vshrl.u32 %v220, 7
  %v222 = vsub.s32 %v219, %v221
  %v223 = vrot.slane %v120, %v222
  %v225 = vunpack.c.l.s4 1985246804
  %v226 = vunpack.c.0.s8 %v225
  %v227 = vlaneseq
  %v228 = vshrl.u32 %v227, 7
  %v229 = vsub.s32 %v226, %v228
  %v230 = vrot.slane %v120, %v229
  %v232 = vunpack.c.l.s4 839922192
  %v233 = vunpack.c.0.s8 %v232
  %v234 = vlaneseq
  %v235 = vshrl.u32 %v234, 7
  %v236 = vsub.s32 %v233, %v235
  %v237 = vrot.slane %v124, %v236
  %v253 = vmul.bf16 %v40, %v139
  %v254 = vmul.bf16 %v41, %v139
  %v255 = vmul.bf16 %v42, %v146
  %v256 = vmul.bf16 %v43, %v146
  %v257 = vmul.bf16 %v44, %v153
  %v258 = vmul.bf16 %v45, %v153
  %v259 = vmul.bf16 %v46, %v160
  %v260 = vmul.bf16 %v47, %v160
  %v261 = vmul.bf16 %v48, %v167
  %v262 = vmul.bf16 %v49, %v167
  %v263 = vmul.bf16 %v50, %v174
  %v264 = vmul.bf16 %v51, %v174
  %v265 = vmul.bf16 %v52, %v181
  %v266 = vmul.bf16 %v53, %v181
  %v267 = vmul.bf16 %v54, %v188
  %v268 = vmul.bf16 %v55, %v188
  %v269 = vmul.bf16 %v56, %v195
  %v270 = vmul.bf16 %v57, %v195
  %v271 = vmul.bf16 %v58, %v202
  %v272 = vmul.bf16 %v59, %v202
  %v273 = vmul.bf16 %v60, %v209
  %v274 = vmul.bf16 %v61, %v209
  %v275 = vmul.bf16 %v62, %v216
  %v276 = vmul.bf16 %v63, %v216
  %v277 = vmul.bf16 %v64, %v223
  %v278 = vmul.bf16 %v65, %v223
  %v279 = vmul.bf16 %v66, %v230
  %v280 = vmul.bf16 %v67, %v230
  %v281 = vmul.bf16 %v68, %v237
  %v282 = vmul.bf16 %v69, %v237
  %v283 = vld [vmem:[%s3] sm:$0xff]
  %v284 = vld [vmem:[%s3 + $0x8] sm:$0xff]
  %v285 = vld [vmem:[%s3 + $0x10] sm:$0xff]
  %v286 = vld [vmem:[%s3 + $0x18] sm:$0xff]
  %v287 = vld [vmem:[%s3 + $0x20] sm:$0xff]
  %v288 = vld [vmem:[%s3 + $0x28] sm:$0xff]
  %v289 = vld [vmem:[%s3 + $0x30] sm:$0xff]
  %v290 = vld [vmem:[%s3 + $0x38] sm:$0xff]
  %v291 = vld [vmem:[%s3 + $0x40] sm:$0xff]
  %v292 = vld [vmem:[%s3 + $0x48] sm:$0xff]
  %v293 = vld [vmem:[%s3 + $0x50] sm:$0xff]
  %v294 = vld [vmem:[%s3 + $0x58] sm:$0xff]
  %v295 = vld [vmem:[%s3 + $0x60] sm:$0xff]
  %v296 = vld [vmem:[%s3 + $0x68] sm:$0xff]
  %v297 = vld [vmem:[%s3 + $0x70] sm:$0xff]
  %v298 = vpack.c.bf16 %v284, %v283
  %v299 = vpack.c.bf16 %v286, %v285
  %v300 = vpack.c.bf16 %v288, %v287
  %v301 = vpack.c.bf16 %v290, %v289
  %v302 = vpack.c.bf16 %v292, %v291
  %v303 = vpack.c.bf16 %v294, %v293
  %v304 = vpack.c.bf16 %v296, %v295
  %v305 = vpack.c.bf16 %v297, %v297
  %307 = vset.pattern.permute.xlu0 0
  %308 = vperm.xlu0 %307, %v298
  %v309 = vpop.permute.xlu0 %308
  %311 = vset.pattern.permute.xlu0 0
  %312 = vperm.xlu0 %311, %v299
  %v313 = vpop.permute.xlu0 %312
  %315 = vset.pattern.permute.xlu0 0
  %316 = vperm.xlu0 %315, %v300
  %v317 = vpop.permute.xlu0 %316
  %319 = vset.pattern.permute.xlu0 0
  %320 = vperm.xlu0 %319, %v301
  %v321 = vpop.permute.xlu0 %320
  %323 = vset.pattern.permute.xlu0 0
  %324 = vperm.xlu0 %323, %v302
  %v325 = vpop.permute.xlu0 %324
  %327 = vset.pattern.permute.xlu0 0
  %328 = vperm.xlu0 %327, %v303
  %v329 = vpop.permute.xlu0 %328
  %331 = vset.pattern.permute.xlu0 0
  %332 = vperm.xlu0 %331, %v304
  %v333 = vpop.permute.xlu0 %332
  %335 = vset.pattern.permute.xlu0 0
  %336 = vperm.xlu0 %335, %v305
  %v337 = vpop.permute.xlu0 %336
  %v347 = vunpack.c.l.s4 839922192
  %v348 = vunpack.c.0.s8 %v347
  %v349 = vlaneseq
  %v350 = vshrl.u32 %v349, 7
  %v351 = vsub.s32 %v348, %v350
  %v352 = vrot.slane %v309, %v351
  %v354 = vunpack.c.l.s4 1985246804
  %v355 = vunpack.c.0.s8 %v354
  %v356 = vlaneseq
  %v357 = vshrl.u32 %v356, 7
  %v358 = vsub.s32 %v355, %v357
  %v359 = vrot.slane %v309, %v358
  %v361 = vunpack.c.l.s4 839922192
  %v362 = vunpack.c.0.s8 %v361
  %v363 = vlaneseq
  %v364 = vshrl.u32 %v363, 7
  %v365 = vsub.s32 %v362, %v364
  %v366 = vrot.slane %v313, %v365
  %v368 = vunpack.c.l.s4 1985246804
  %v369 = vunpack.c.0.s8 %v368
  %v370 = vlaneseq
  %v371 = vshrl.u32 %v370, 7
  %v372 = vsub.s32 %v369, %v371
  %v373 = vrot.slane %v313, %v372
  %v375 = vunpack.c.l.s4 839922192
  %v376 = vunpack.c.0.s8 %v375
  %v377 = vlaneseq
  %v378 = vshrl.u32 %v377, 7
  %v379 = vsub.s32 %v376, %v378
  %v380 = vrot.slane %v317, %v379
  %v382 = vunpack.c.l.s4 1985246804
  %v383 = vunpack.c.0.s8 %v382
  %v384 = vlaneseq
  %v385 = vshrl.u32 %v384, 7
  %v386 = vsub.s32 %v383, %v385
  %v387 = vrot.slane %v317, %v386
  %v389 = vunpack.c.l.s4 839922192
  %v390 = vunpack.c.0.s8 %v389
  %v391 = vlaneseq
  %v392 = vshrl.u32 %v391, 7
  %v393 = vsub.s32 %v390, %v392
  %v394 = vrot.slane %v321, %v393
  %v396 = vunpack.c.l.s4 1985246804
  %v397 = vunpack.c.0.s8 %v396
  %v398 = vlaneseq
  %v399 = vshrl.u32 %v398, 7
  %v400 = vsub.s32 %v397, %v399
  %v401 = vrot.slane %v321, %v400
  %v403 = vunpack.c.l.s4 839922192
  %v404 = vunpack.c.0.s8 %v403
  %v405 = vlaneseq
  %v406 = vshrl.u32 %v405, 7
  %v407 = vsub.s32 %v404, %v406
  %v408 = vrot.slane %v325, %v407
  %v410 = vunpack.c.l.s4 1985246804
  %v411 = vunpack.c.0.s8 %v410
  %v412 = vlaneseq
  %v413 = vshrl.u32 %v412, 7
  %v414 = vsub.s32 %v411, %v413
  %v415 = vrot.slane %v325, %v414
  %v417 = vunpack.c.l.s4 839922192
  %v418 = vunpack.c.0.s8 %v417
  %v419 = vlaneseq
  %v420 = vshrl.u32 %v419, 7
  %v421 = vsub.s32 %v418, %v420
  %v422 = vrot.slane %v329, %v421
  %v424 = vunpack.c.l.s4 1985246804
  %v425 = vunpack.c.0.s8 %v424
  %v426 = vlaneseq
  %v427 = vshrl.u32 %v426, 7
  %v428 = vsub.s32 %v425, %v427
  %v429 = vrot.slane %v329, %v428
  %v431 = vunpack.c.l.s4 839922192
  %v432 = vunpack.c.0.s8 %v431
  %v433 = vlaneseq
  %v434 = vshrl.u32 %v433, 7
  %v435 = vsub.s32 %v432, %v434
  %v436 = vrot.slane %v333, %v435
  %v438 = vunpack.c.l.s4 1985246804
  %v439 = vunpack.c.0.s8 %v438
  %v440 = vlaneseq
  %v441 = vshrl.u32 %v440, 7
  %v442 = vsub.s32 %v439, %v441
  %v443 = vrot.slane %v333, %v442
  %v445 = vunpack.c.l.s4 839922192
  %v446 = vunpack.c.0.s8 %v445
  %v447 = vlaneseq
  %v448 = vshrl.u32 %v447, 7
  %v449 = vsub.s32 %v446, %v448
  %v450 = vrot.slane %v337, %v449
  %v466 = vadd.bf16 %v253, %v352
  %v467 = vadd.bf16 %v254, %v352
  %v468 = vadd.bf16 %v255, %v359
  %v469 = vadd.bf16 %v256, %v359
  %v470 = vadd.bf16 %v257, %v366
  %v471 = vadd.bf16 %v258, %v366
  %v472 = vadd.bf16 %v259, %v373
  %v473 = vadd.bf16 %v260, %v373
  %v474 = vadd.bf16 %v261, %v380
  %v475 = vadd.bf16 %v262, %v380
  %v476 = vadd.bf16 %v263, %v387
  %v477 = vadd.bf16 %v264, %v387
  %v478 = vadd.bf16 %v265, %v394
  %v479 = vadd.bf16 %v266, %v394
  %v480 = vadd.bf16 %v267, %v401
  %v481 = vadd.bf16 %v268, %v401
  %v482 = vadd.bf16 %v269, %v408
  %v483 = vadd.bf16 %v270, %v408
  %v484 = vadd.bf16 %v271, %v415
  %v485 = vadd.bf16 %v272, %v415
  %v486 = vadd.bf16 %v273, %v422
  %v487 = vadd.bf16 %v274, %v422
  %v488 = vadd.bf16 %v275, %v429
  %v489 = vadd.bf16 %v276, %v429
  %v490 = vadd.bf16 %v277, %v436
  %v491 = vadd.bf16 %v278, %v436
  %v492 = vadd.bf16 %v279, %v443
  %v493 = vadd.bf16 %v280, %v443
  %v494 = vadd.bf16 %v281, %v450
  %v495 = vadd.bf16 %v282, %v450
  %v496 = vmul.bf16 %v466, 1009007652
  %v497 = vmul.bf16 %v467, 1009007652
  %v498 = vmul.bf16 %v468, 1009007652
  %v499 = vmul.bf16 %v469, 1009007652
  %v500 = vmul.bf16 %v470, 1009007652
  %v501 = vmul.bf16 %v471, 1009007652
  %v502 = vmul.bf16 %v472, 1009007652
  %v503 = vmul.bf16 %v473, 1009007652
  %v504 = vmul.bf16 %v474, 1009007652
  %v505 = vmul.bf16 %v475, 1009007652
  %v506 = vmul.bf16 %v476, 1009007652
  %v507 = vmul.bf16 %v477, 1009007652
  %v508 = vmul.bf16 %v478, 1009007652
  %v509 = vmul.bf16 %v479, 1009007652
  %v510 = vmul.bf16 %v480, 1009007652
  %v511 = vmul.bf16 %v481, 1009007652
  %v512 = vmul.bf16 %v482, 1009007652
  %v513 = vmul.bf16 %v483, 1009007652
  %v514 = vmul.bf16 %v484, 1009007652
  %v515 = vmul.bf16 %v485, 1009007652
  %v516 = vmul.bf16 %v486, 1009007652
  %v517 = vmul.bf16 %v487, 1009007652
  %v518 = vmul.bf16 %v488, 1009007652
  %v519 = vmul.bf16 %v489, 1009007652
  %v520 = vmul.bf16 %v490, 1009007652
  %v521 = vmul.bf16 %v491, 1009007652
  %v522 = vmul.bf16 %v492, 1009007652
  %v523 = vmul.bf16 %v493, 1009007652
  %v524 = vmul.bf16 %v494, 1009007652
  %v525 = vmul.bf16 %v495, 1009007652
  %v526 = vmax.bf16 %v466, %v496
  %v527 = vmax.bf16 %v467, %v497
  %v528 = vmax.bf16 %v468, %v498
  %v529 = vmax.bf16 %v469, %v499
  %v530 = vmax.bf16 %v470, %v500
  %v531 = vmax.bf16 %v471, %v501
  %v532 = vmax.bf16 %v472, %v502
  %v533 = vmax.bf16 %v473, %v503
  %v534 = vmax.bf16 %v474, %v504
  %v535 = vmax.bf16 %v475, %v505
  %v536 = vmax.bf16 %v476, %v506
  %v537 = vmax.bf16 %v477, %v507
  %v538 = vmax.bf16 %v478, %v508
  %v539 = vmax.bf16 %v479, %v509
  %v540 = vmax.bf16 %v480, %v510
  %v541 = vmax.bf16 %v481, %v511
  %v542 = vmax.bf16 %v482, %v512
  %v543 = vmax.bf16 %v483, %v513
  %v544 = vmax.bf16 %v484, %v514
  %v545 = vmax.bf16 %v485, %v515
  %v546 = vmax.bf16 %v486, %v516
  %v547 = vmax.bf16 %v487, %v517
  %v548 = vmax.bf16 %v488, %v518
  %v549 = vmax.bf16 %v489, %v519
  %v550 = vmax.bf16 %v490, %v520
  %v551 = vmax.bf16 %v491, %v521
  %v552 = vmax.bf16 %v492, %v522
  %v553 = vmax.bf16 %v493, %v523
  %v554 = vmax.bf16 %v494, %v524
  %v555 = vmax.bf16 %v495, %v525
  %v556 = vld [vmem:[%s1] sm:$0xff]
  %v557 = vld [vmem:[%s1 + $0x8] sm:$0xff]
  %v558 = vld [vmem:[%s1 + $0x10] sm:$0xff]
  %v559 = vld [vmem:[%s1 + $0x18] sm:$0xff]
  %v560 = vld [vmem:[%s1 + $0x20] sm:$0xff]
  %v561 = vld [vmem:[%s1 + $0x28] sm:$0xff]
  %v562 = vld [vmem:[%s1 + $0x30] sm:$0xff]
  %v563 = vld [vmem:[%s1 + $0x38] sm:$0xff]
  %v564 = vld [vmem:[%s1 + $0x40] sm:$0xff]
  %v565 = vld [vmem:[%s1 + $0x48] sm:$0xff]
  %v566 = vld [vmem:[%s1 + $0x50] sm:$0xff]
  %v567 = vld [vmem:[%s1 + $0x58] sm:$0xff]
  %v568 = vld [vmem:[%s1 + $0x60] sm:$0xff]
  %v569 = vld [vmem:[%s1 + $0x68] sm:$0xff]
  %v570 = vld [vmem:[%s1 + $0x70] sm:$0x33]
  %v571 = vld [vmem:[%s1 + $0x78] sm:$0x33]
  %v572 = vld [vmem:[%s4] sm:$0xff]
  %v573 = vld [vmem:[%s4 + $0x8] sm:$0xff]
  %v574 = vld [vmem:[%s4 + $0x10] sm:$0xff]
  %v575 = vld [vmem:[%s4 + $0x18] sm:$0xff]
  %v576 = vld [vmem:[%s4 + $0x20] sm:$0xff]
  %v577 = vld [vmem:[%s4 + $0x28] sm:$0xff]
  %v578 = vld [vmem:[%s4 + $0x30] sm:$0xff]
  %v579 = vld [vmem:[%s4 + $0x38] sm:$0xff]
  %v580 = vld [vmem:[%s4 + $0x40] sm:$0xff]
  %v581 = vld [vmem:[%s4 + $0x48] sm:$0xff]
  %v582 = vld [vmem:[%s4 + $0x50] sm:$0xff]
  %v583 = vld [vmem:[%s4 + $0x58] sm:$0xff]
  %v584 = vld [vmem:[%s4 + $0x60] sm:$0xff]
  %v585 = vld [vmem:[%s4 + $0x68] sm:$0xff]
  %v586 = vld [vmem:[%s4 + $0x70] sm:$0xff]
  %v587 = vld [vmem:[%s4 + $0x78] sm:$0xff]
  %v588 = vld [vmem:[%s4 + $0x80] sm:$0xff]
  %v589 = vld [vmem:[%s4 + $0x88] sm:$0xff]
  %v590 = vld [vmem:[%s4 + $0x90] sm:$0xff]
  %v591 = vld [vmem:[%s4 + $0x98] sm:$0xff]
  %v592 = vld [vmem:[%s4 + $0xa0] sm:$0xff]
  %v593 = vld [vmem:[%s4 + $0xa8] sm:$0xff]
  %v594 = vld [vmem:[%s4 + $0xb0] sm:$0xff]
  %v595 = vld [vmem:[%s4 + $0xb8] sm:$0xff]
  %v596 = vld [vmem:[%s4 + $0xc0] sm:$0xff]
  %v597 = vld [vmem:[%s4 + $0xc8] sm:$0xff]
  %v598 = vld [vmem:[%s4 + $0xd0] sm:$0xff]
  %v599 = vld [vmem:[%s4 + $0xd8] sm:$0xff]
  %v600 = vld [vmem:[%s4 + $0xe0] sm:$0xff]
  %v601 = vld [vmem:[%s4 + $0xe8] sm:$0xff]
  %v602 = vld [vmem:[%s4 + $0xf0] sm:$0xff]
  %v603 = vld [vmem:[%s4 + $0xf8] sm:$0xff]
  %v604 = vld [vmem:[%s4 + $0x100] sm:$0xff]
  %v605 = vld [vmem:[%s4 + $0x108] sm:$0xff]
  %v606 = vld [vmem:[%s4 + $0x110] sm:$0xff]
  %v607 = vld [vmem:[%s4 + $0x118] sm:$0xff]
  %v608 = vld [vmem:[%s4 + $0x120] sm:$0xff]
  %v609 = vld [vmem:[%s4 + $0x128] sm:$0xf]
  %v610 = vld [vmem:[%s5] sm:$0xff]
  %v611 = vld [vmem:[%s5 + $0x8] sm:$0xff]
  %v612 = vld [vmem:[%s5 + $0x10] sm:$0xff]
  %v613 = vld [vmem:[%s5 + $0x18] sm:$0xff]
  %v614 = vld [vmem:[%s5 + $0x20] sm:$0xff]
  %v615 = vld [vmem:[%s5 + $0x28] sm:$0xff]
  %v616 = vld [vmem:[%s5 + $0x30] sm:$0xff]
  %v617 = vld [vmem:[%s5 + $0x38] sm:$0xff]
  %v618 = vld [vmem:[%s5 + $0x40] sm:$0xff]
  %v619 = vld [vmem:[%s5 + $0x48] sm:$0xff]
  %v620 = vld [vmem:[%s5 + $0x50] sm:$0xff]
  %v621 = vld [vmem:[%s5 + $0x58] sm:$0xff]
  %v622 = vld [vmem:[%s5 + $0x60] sm:$0xff]
  %v623 = vld [vmem:[%s5 + $0x68] sm:$0xff]
  %v624 = vld [vmem:[%s5 + $0x70] sm:$0xff]
  %v625 = vld [vmem:[%s5 + $0x78] sm:$0xff]
  %v626 = vld [vmem:[%s5 + $0x80] sm:$0xff]
  %v627 = vld [vmem:[%s5 + $0x88] sm:$0xff]
  %v628 = vld [vmem:[%s5 + $0x90] sm:$0xff]
  %v629 = vld [vmem:[%s5 + $0x98] sm:$0xff]
  %v630 = vld [vmem:[%s5 + $0xa0] sm:$0xff]
  %v631 = vld [vmem:[%s5 + $0xa8] sm:$0xff]
  %v632 = vld [vmem:[%s5 + $0xb0] sm:$0xff]
  %v633 = vld [vmem:[%s5 + $0xb8] sm:$0xff]
  %v634 = vld [vmem:[%s5 + $0xc0] sm:$0xff]
  %v635 = vld [vmem:[%s5 + $0xc8] sm:$0xff]
  %v636 = vld [vmem:[%s5 + $0xd0] sm:$0xff]
  %v637 = vld [vmem:[%s5 + $0xd8] sm:$0xff]
  %v638 = vld [vmem:[%s5 + $0xe0] sm:$0xff]
  %v639 = vld [vmem:[%s5 + $0xe8] sm:$0xff]
  %v640 = vld [vmem:[%s5 + $0xf0] sm:$0xff]
  %v641 = vld [vmem:[%s5 + $0xf8] sm:$0xff]
  %v642 = vld [vmem:[%s5 + $0x100] sm:$0xff]
  %v643 = vld [vmem:[%s5 + $0x108] sm:$0xff]
  %v644 = vld [vmem:[%s5 + $0x110] sm:$0xff]
  %v645 = vld [vmem:[%s5 + $0x118] sm:$0xff]
  %v646 = vld [vmem:[%s5 + $0x120] sm:$0xff]
  %v647 = vld [vmem:[%s5 + $0x128] sm:$0xf]
  %v648 = vpack.c.bf16 %v573, %v572
  %v649 = vpack.c.bf16 %v575, %v574
  %v650 = vpack.c.bf16 %v577, %v576
  %v651 = vpack.c.bf16 %v579, %v578
  %v652 = vpack.c.bf16 %v581, %v580
  %v653 = vpack.c.bf16 %v583, %v582
  %v654 = vpack.c.bf16 %v585, %v584
  %v655 = vpack.c.bf16 %v586, %v586
  %v656 = vpack.c.bf16 %v611, %v610
  %v657 = vpack.c.bf16 %v613, %v612
  %v658 = vpack.c.bf16 %v615, %v614
  %v659 = vpack.c.bf16 %v617, %v616
  %v660 = vpack.c.bf16 %v619, %v618
  %v661 = vpack.c.bf16 %v621, %v620
  %v662 = vpack.c.bf16 %v623, %v622
  %v663 = vpack.c.bf16 %v624, %v624
  %665 = vset.pattern.permute.xlu0 0
  %666 = vperm.xlu0 %665, %v648
  %v667 = vpop.permute.xlu0 %666
  %669 = vset.pattern.permute.xlu0 0
  %670 = vperm.xlu0 %669, %v649
  %v671 = vpop.permute.xlu0 %670
  %673 = vset.pattern.permute.xlu0 0
  %674 = vperm.xlu0 %673, %v650
  %v675 = vpop.permute.xlu0 %674
  %677 = vset.pattern.permute.xlu0 0
  %678 = vperm.xlu0 %677, %v651
  %v679 = vpop.permute.xlu0 %678
  %681 = vset.pattern.permute.xlu0 0
  %682 = vperm.xlu0 %681, %v652
  %v683 = vpop.permute.xlu0 %682
  %685 = vset.pattern.permute.xlu0 0
  %686 = vperm.xlu0 %685, %v653
  %v687 = vpop.permute.xlu0 %686
  %689 = vset.pattern.permute.xlu0 0
  %690 = vperm.xlu0 %689, %v654
  %v691 = vpop.permute.xlu0 %690
  %693 = vset.pattern.permute.xlu0 0
  %694 = vperm.xlu0 %693, %v655
  %v695 = vpop.permute.xlu0 %694
  %v705 = vunpack.c.l.s4 839922192
  %v706 = vunpack.c.0.s8 %v705
  %v707 = vlaneseq
  %v708 = vshrl.u32 %v707, 7
  %v709 = vsub.s32 %v706, %v708
  %v710 = vrot.slane %v667, %v709
  %v712 = vunpack.c.l.s4 1985246804
  %v713 = vunpack.c.0.s8 %v712
  %v714 = vlaneseq
  %v715 = vshrl.u32 %v714, 7
  %v716 = vsub.s32 %v713, %v715
  %v717 = vrot.slane %v667, %v716
  %v719 = vunpack.c.l.s4 839922192
  %v720 = vunpack.c.0.s8 %v719
  %v721 = vlaneseq
  %v722 = vshrl.u32 %v721, 7
  %v723 = vsub.s32 %v720, %v722
  %v724 = vrot.slane %v671, %v723
  %v726 = vunpack.c.l.s4 1985246804
  %v727 = vunpack.c.0.s8 %v726
  %v728 = vlaneseq
  %v729 = vshrl.u32 %v728, 7
  %v730 = vsub.s32 %v727, %v729
  %v731 = vrot.slane %v671, %v730
  %v733 = vunpack.c.l.s4 839922192
  %v734 = vunpack.c.0.s8 %v733
  %v735 = vlaneseq
  %v736 = vshrl.u32 %v735, 7
  %v737 = vsub.s32 %v734, %v736
  %v738 = vrot.slane %v675, %v737
  %v740 = vunpack.c.l.s4 1985246804
  %v741 = vunpack.c.0.s8 %v740
  %v742 = vlaneseq
  %v743 = vshrl.u32 %v742, 7
  %v744 = vsub.s32 %v741, %v743
  %v745 = vrot.slane %v675, %v744
  %v747 = vunpack.c.l.s4 839922192
  %v748 = vunpack.c.0.s8 %v747
  %v749 = vlaneseq
  %v750 = vshrl.u32 %v749, 7
  %v751 = vsub.s32 %v748, %v750
  %v752 = vrot.slane %v679, %v751
  %v754 = vunpack.c.l.s4 1985246804
  %v755 = vunpack.c.0.s8 %v754
  %v756 = vlaneseq
  %v757 = vshrl.u32 %v756, 7
  %v758 = vsub.s32 %v755, %v757
  %v759 = vrot.slane %v679, %v758
  %v761 = vunpack.c.l.s4 839922192
  %v762 = vunpack.c.0.s8 %v761
  %v763 = vlaneseq
  %v764 = vshrl.u32 %v763, 7
  %v765 = vsub.s32 %v762, %v764
  %v766 = vrot.slane %v683, %v765
  %v768 = vunpack.c.l.s4 1985246804
  %v769 = vunpack.c.0.s8 %v768
  %v770 = vlaneseq
  %v771 = vshrl.u32 %v770, 7
  %v772 = vsub.s32 %v769, %v771
  %v773 = vrot.slane %v683, %v772
  %v775 = vunpack.c.l.s4 839922192
  %v776 = vunpack.c.0.s8 %v775
  %v777 = vlaneseq
  %v778 = vshrl.u32 %v777, 7
  %v779 = vsub.s32 %v776, %v778
  %v780 = vrot.slane %v687, %v779
  %v782 = vunpack.c.l.s4 1985246804
  %v783 = vunpack.c.0.s8 %v782
  %v784 = vlaneseq
  %v785 = vshrl.u32 %v784, 7
  %v786 = vsub.s32 %v783, %v785
  %v787 = vrot.slane %v687, %v786
  %v789 = vunpack.c.l.s4 839922192
  %v790 = vunpack.c.0.s8 %v789
  %v791 = vlaneseq
  %v792 = vshrl.u32 %v791, 7
  %v793 = vsub.s32 %v790, %v792
  %v794 = vrot.slane %v691, %v793
  %v796 = vunpack.c.l.s4 1985246804
  %v797 = vunpack.c.0.s8 %v796
  %v798 = vlaneseq
  %v799 = vshrl.u32 %v798, 7
  %v800 = vsub.s32 %v797, %v799
  %v801 = vrot.slane %v691, %v800
  %v803 = vunpack.c.l.s4 839922192
  %v804 = vunpack.c.0.s8 %v803
  %v805 = vlaneseq
  %v806 = vshrl.u32 %v805, 7
  %v807 = vsub.s32 %v804, %v806
  %v808 = vrot.slane %v695, %v807
  %v824 = vmul.bf16 %v40, %v710
  %v825 = vmul.bf16 %v41, %v710
  %v826 = vmul.bf16 %v42, %v717
  %v827 = vmul.bf16 %v43, %v717
  %v828 = vmul.bf16 %v44, %v724
  %v829 = vmul.bf16 %v45, %v724
  %v830 = vmul.bf16 %v46, %v731
  %v831 = vmul.bf16 %v47, %v731
  %v832 = vmul.bf16 %v48, %v738
  %v833 = vmul.bf16 %v49, %v738
  %v834 = vmul.bf16 %v50, %v745
  %v835 = vmul.bf16 %v51, %v745
  %v836 = vmul.bf16 %v52, %v752
  %v837 = vmul.bf16 %v53, %v752
  %v838 = vmul.bf16 %v54, %v759
  %v839 = vmul.bf16 %v55, %v759
  %v840 = vmul.bf16 %v56, %v766
  %v841 = vmul.bf16 %v57, %v766
  %v842 = vmul.bf16 %v58, %v773
  %v843 = vmul.bf16 %v59, %v773
  %v844 = vmul.bf16 %v60, %v780
  %v845 = vmul.bf16 %v61, %v780
  %v846 = vmul.bf16 %v62, %v787
  %v847 = vmul.bf16 %v63, %v787
  %v848 = vmul.bf16 %v64, %v794
  %v849 = vmul.bf16 %v65, %v794
  %v850 = vmul.bf16 %v66, %v801
  %v851 = vmul.bf16 %v67, %v801
  %v852 = vmul.bf16 %v68, %v808
  %v853 = vmul.bf16 %v69, %v808
  %855 = vset.pattern.permute.xlu0 0
  %856 = vperm.xlu0 %855, %v656
  %v857 = vpop.permute.xlu0 %856
  %859 = vset.pattern.permute.xlu0 0
  %860 = vperm.xlu0 %859, %v657
  %v861 = vpop.permute.xlu0 %860
  %863 = vset.pattern.permute.xlu0 0
  %864 = vperm.xlu0 %863, %v658
  %v865 = vpop.permute.xlu0 %864
  %867 = vset.pattern.permute.xlu0 0
  %868 = vperm.xlu0 %867, %v659
  %v869 = vpop.permute.xlu0 %868
  %871 = vset.pattern.permute.xlu0 0
  %872 = vperm.xlu0 %871, %v660
  %v873 = vpop.permute.xlu0 %872
  %875 = vset.pattern.permute.xlu0 0
  %876 = vperm.xlu0 %875, %v661
  %v877 = vpop.permute.xlu0 %876
  %879 = vset.pattern.permute.xlu0 0
  %880 = vperm.xlu0 %879, %v662
  %v881 = vpop.permute.xlu0 %880
  %883 = vset.pattern.permute.xlu0 0
  %884 = vperm.xlu0 %883, %v663
  %v885 = vpop.permute.xlu0 %884
  %v895 = vunpack.c.l.s4 839922192
  %v896 = vunpack.c.0.s8 %v895
  %v897 = vlaneseq
  %v898 = vshrl.u32 %v897, 7
  %v899 = vsub.s32 %v896, %v898
  %v900 = vrot.slane %v857, %v899
  %v902 = vunpack.c.l.s4 1985246804
  %v903 = vunpack.c.0.s8 %v902
  %v904 = vlaneseq
  %v905 = vshrl.u32 %v904, 7
  %v906 = vsub.s32 %v903, %v905
  %v907 = vrot.slane %v857, %v906
  %v909 = vunpack.c.l.s4 839922192
  %v910 = vunpack.c.0.s8 %v909
  %v911 = vlaneseq
  %v912 = vshrl.u32 %v911, 7
  %v913 = vsub.s32 %v910, %v912
  %v914 = vrot.slane %v861, %v913
  %v916 = vunpack.c.l.s4 1985246804
  %v917 = vunpack.c.0.s8 %v916
  %v918 = vlaneseq
  %v919 = vshrl.u32 %v918, 7
  %v920 = vsub.s32 %v917, %v919
  %v921 = vrot.slane %v861, %v920
  %v923 = vunpack.c.l.s4 839922192
  %v924 = vunpack.c.0.s8 %v923
  %v925 = vlaneseq
  %v926 = vshrl.u32 %v925, 7
  %v927 = vsub.s32 %v924, %v926
  %v928 = vrot.slane %v865, %v927
  %v930 = vunpack.c.l.s4 1985246804
  %v931 = vunpack.c.0.s8 %v930
  %v932 = vlaneseq
  %v933 = vshrl.u32 %v932, 7
  %v934 = vsub.s32 %v931, %v933
  %v935 = vrot.slane %v865, %v934
  %v937 = vunpack.c.l.s4 839922192
  %v938 = vunpack.c.0.s8 %v937
  %v939 = vlaneseq
  %v940 = vshrl.u32 %v939, 7
  %v941 = vsub.s32 %v938, %v940
  %v942 = vrot.slane %v869, %v941
  %v944 = vunpack.c.l.s4 1985246804
  %v945 = vunpack.c.0.s8 %v944
  %v946 = vlaneseq
  %v947 = vshrl.u32 %v946, 7
  %v948 = vsub.s32 %v945, %v947
  %v949 = vrot.slane %v869, %v948
  %v951 = vunpack.c.l.s4 839922192
  %v952 = vunpack.c.0.s8 %v951
  %v953 = vlaneseq
  %v954 = vshrl.u32 %v953, 7
  %v955 = vsub.s32 %v952, %v954
  %v956 = vrot.slane %v873, %v955
  %v958 = vunpack.c.l.s4 1985246804
  %v959 = vunpack.c.0.s8 %v958
  %v960 = vlaneseq
  %v961 = vshrl.u32 %v960, 7
  %v962 = vsub.s32 %v959, %v961
  %v963 = vrot.slane %v873, %v962
  %v965 = vunpack.c.l.s4 839922192
  %v966 = vunpack.c.0.s8 %v965
  %v967 = vlaneseq
  %v968 = vshrl.u32 %v967, 7
  %v969 = vsub.s32 %v966, %v968
  %v970 = vrot.slane %v877, %v969
  %v972 = vunpack.c.l.s4 1985246804
  %v973 = vunpack.c.0.s8 %v972
  %v974 = vlaneseq
  %v975 = vshrl.u32 %v974, 7
  %v976 = vsub.s32 %v973, %v975
  %v977 = vrot.slane %v877, %v976
  %v979 = vunpack.c.l.s4 839922192
  %v980 = vunpack.c.0.s8 %v979
  %v981 = vlaneseq
  %v982 = vshrl.u32 %v981, 7
  %v983 = vsub.s32 %v980, %v982
  %v984 = vrot.slane %v881, %v983
  %v986 = vunpack.c.l.s4 1985246804
  %v987 = vunpack.c.0.s8 %v986
  %v988 = vlaneseq
  %v989 = vshrl.u32 %v988, 7
  %v990 = vsub.s32 %v987, %v989
  %v991 = vrot.slane %v881, %v990
  %v993 = vunpack.c.l.s4 839922192
  %v994 = vunpack.c.0.s8 %v993
  %v995 = vlaneseq
  %v996 = vshrl.u32 %v995, 7
  %v997 = vsub.s32 %v994, %v996
  %v998 = vrot.slane %v885, %v997
  %v1014 = vadd.bf16 %v824, %v900
  %v1015 = vadd.bf16 %v825, %v900
  %v1016 = vadd.bf16 %v826, %v907
  %v1017 = vadd.bf16 %v827, %v907
  %v1018 = vadd.bf16 %v828, %v914
  %v1019 = vadd.bf16 %v829, %v914
  %v1020 = vadd.bf16 %v830, %v921
  %v1021 = vadd.bf16 %v831, %v921
  %v1022 = vadd.bf16 %v832, %v928
  %v1023 = vadd.bf16 %v833, %v928
  %v1024 = vadd.bf16 %v834, %v935
  %v1025 = vadd.bf16 %v835, %v935
  %v1026 = vadd.bf16 %v836, %v942
  %v1027 = vadd.bf16 %v837, %v942
  %v1028 = vadd.bf16 %v838, %v949
  %v1029 = vadd.bf16 %v839, %v949
  %v1030 = vadd.bf16 %v840, %v956
  %v1031 = vadd.bf16 %v841, %v956
  %v1032 = vadd.bf16 %v842, %v963
  %v1033 = vadd.bf16 %v843, %v963
  %v1034 = vadd.bf16 %v844, %v970
  %v1035 = vadd.bf16 %v845, %v970
  %v1036 = vadd.bf16 %v846, %v977
  %v1037 = vadd.bf16 %v847, %v977
  %v1038 = vadd.bf16 %v848, %v984
  %v1039 = vadd.bf16 %v849, %v984
  %v1040 = vadd.bf16 %v850, %v991
  %v1041 = vadd.bf16 %v851, %v991
  %v1042 = vadd.bf16 %v852, %v998
  %v1043 = vadd.bf16 %v853, %v998
  %v1044 = vmul.bf16 %v1014, 1009007652
  %v1045 = vmul.bf16 %v1015, 1009007652
  %v1046 = vmul.bf16 %v1016, 1009007652
  %v1047 = vmul.bf16 %v1017, 1009007652
  %v1048 = vmul.bf16 %v1018, 1009007652
  %v1049 = vmul.bf16 %v1019, 1009007652
  %v1050 = vmul.bf16 %v1020, 1009007652
  %v1051 = vmul.bf16 %v1021, 1009007652
  %v1052 = vmul.bf16 %v1022, 1009007652
  %v1053 = vmul.bf16 %v1023, 1009007652
  %v1054 = vmul.bf16 %v1024, 1009007652
  %v1055 = vmul.bf16 %v1025, 1009007652
  %v1056 = vmul.bf16 %v1026, 1009007652
  %v1057 = vmul.bf16 %v1027, 1009007652
  %v1058 = vmul.bf16 %v1028, 1009007652
  %v1059 = vmul.bf16 %v1029, 1009007652
  %v1060 = vmul.bf16 %v1030, 1009007652
  %v1061 = vmul.bf16 %v1031, 1009007652
  %v1062 = vmul.bf16 %v1032, 1009007652
  %v1063 = vmul.bf16 %v1033, 1009007652
  %v1064 = vmul.bf16 %v1034, 1009007652
  %v1065 = vmul.bf16 %v1035, 1009007652
  %v1066 = vmul.bf16 %v1036, 1009007652
  %v1067 = vmul.bf16 %v1037, 1009007652
  %v1068 = vmul.bf16 %v1038, 1009007652
  %v1069 = vmul.bf16 %v1039, 1009007652
  %v1070 = vmul.bf16 %v1040, 1009007652
  %v1071 = vmul.bf16 %v1041, 1009007652
  %v1072 = vmul.bf16 %v1042, 1009007652
  %v1073 = vmul.bf16 %v1043, 1009007652
  %v1074 = vmax.bf16 %v1014, %v1044
  %v1075 = vmax.bf16 %v1015, %v1045
  %v1076 = vmax.bf16 %v1016, %v1046
  %v1077 = vmax.bf16 %v1017, %v1047
  %v1078 = vmax.bf16 %v1018, %v1048
  %v1079 = vmax.bf16 %v1019, %v1049
  %v1080 = vmax.bf16 %v1020, %v1050
  %v1081 = vmax.bf16 %v1021, %v1051
  %v1082 = vmax.bf16 %v1022, %v1052
  %v1083 = vmax.bf16 %v1023, %v1053
  %v1084 = vmax.bf16 %v1024, %v1054
  %v1085 = vmax.bf16 %v1025, %v1055
  %v1086 = vmax.bf16 %v1026, %v1056
  %v1087 = vmax.bf16 %v1027, %v1057
  %v1088 = vmax.bf16 %v1028, %v1058
  %v1089 = vmax.bf16 %v1029, %v1059
  %v1090 = vmax.bf16 %v1030, %v1060
  %v1091 = vmax.bf16 %v1031, %v1061
  %v1092 = vmax.bf16 %v1032, %v1062
  %v1093 = vmax.bf16 %v1033, %v1063
  %v1094 = vmax.bf16 %v1034, %v1064
  %v1095 = vmax.bf16 %v1035, %v1065
  %v1096 = vmax.bf16 %v1036, %v1066
  %v1097 = vmax.bf16 %v1037, %v1067
  %v1098 = vmax.bf16 %v1038, %v1068
  %v1099 = vmax.bf16 %v1039, %v1069
  %v1100 = vmax.bf16 %v1040, %v1070
  %v1101 = vmax.bf16 %v1041, %v1071
  %v1102 = vmax.bf16 %v1042, %v1072
  %v1103 = vmax.bf16 %v1043, %v1073
  %v1104 = vld [vmem:[%s6] sm:$0xf]
  %v1105 = vld [vmem:[%s6 + $0x4] sm:$0xf]
  %v1106 = vld [vmem:[%s6 + $0x8] sm:$0xf]
  %v1107 = vld [vmem:[%s6 + $0xc] sm:$0xf]
  %v1108 = vld [vmem:[%s6 + $0x10] sm:$0xf]
  %v1109 = vld [vmem:[%s6 + $0x14] sm:$0xf]
  %v1110 = vld [vmem:[%s6 + $0x18] sm:$0xf]
  %v1111 = vld [vmem:[%s6 + $0x1c] sm:$0x3]
  %v1112 = vpack.c.bf16 %v588, %v587
  %v1113 = vpack.c.bf16 %v590, %v589
  %v1114 = vpack.c.bf16 %v592, %v591
  %v1115 = vpack.c.bf16 %v594, %v593
  %v1116 = vpack.c.bf16 %v596, %v595
  %v1117 = vpack.c.bf16 %v598, %v597
  %v1118 = vpack.c.bf16 %v600, %v599
  %v1119 = vpack.c.bf16 %v601, %v601
  %v1120 = vpack.c.bf16 %v626, %v625
  %v1121 = vpack.c.bf16 %v628, %v627
  %v1122 = vpack.c.bf16 %v630, %v629
  %v1123 = vpack.c.bf16 %v632, %v631
  %v1124 = vpack.c.bf16 %v634, %v633
  %v1125 = vpack.c.bf16 %v636, %v635
  %v1126 = vpack.c.bf16 %v638, %v637
  %v1127 = vpack.c.bf16 %v639, %v639
  %1129 = vset.pattern.permute.xlu0 0
  %1130 = vperm.xlu0 %1129, %v1112
  %v1131 = vpop.permute.xlu0 %1130
  %1133 = vset.pattern.permute.xlu0 0
  %1134 = vperm.xlu0 %1133, %v1113
  %v1135 = vpop.permute.xlu0 %1134
  %1137 = vset.pattern.permute.xlu0 0
  %1138 = vperm.xlu0 %1137, %v1114
  %v1139 = vpop.permute.xlu0 %1138
  %1141 = vset.pattern.permute.xlu0 0
  %1142 = vperm.xlu0 %1141, %v1115
  %v1143 = vpop.permute.xlu0 %1142
  %1145 = vset.pattern.permute.xlu0 0
  %1146 = vperm.xlu0 %1145, %v1116
  %v1147 = vpop.permute.xlu0 %1146
  %1149 = vset.pattern.permute.xlu0 0
  %1150 = vperm.xlu0 %1149, %v1117
  %v1151 = vpop.permute.xlu0 %1150
  %1153 = vset.pattern.permute.xlu0 0
  %1154 = vperm.xlu0 %1153, %v1118
  %v1155 = vpop.permute.xlu0 %1154
  %1157 = vset.pattern.permute.xlu0 0
  %1158 = vperm.xlu0 %1157, %v1119
  %v1159 = vpop.permute.xlu0 %1158
  %v1169 = vunpack.c.l.s4 839922192
  %v1170 = vunpack.c.0.s8 %v1169
  %v1171 = vlaneseq
  %v1172 = vshrl.u32 %v1171, 7
  %v1173 = vsub.s32 %v1170, %v1172
  %v1174 = vrot.slane %v1131, %v1173
  %v1176 = vunpack.c.l.s4 1985246804
  %v1177 = vunpack.c.0.s8 %v1176
  %v1178 = vlaneseq
  %v1179 = vshrl.u32 %v1178, 7
  %v1180 = vsub.s32 %v1177, %v1179
  %v1181 = vrot.slane %v1131, %v1180
  %v1183 = vunpack.c.l.s4 839922192
  %v1184 = vunpack.c.0.s8 %v1183
  %v1185 = vlaneseq
  %v1186 = vshrl.u32 %v1185, 7
  %v1187 = vsub.s32 %v1184, %v1186
  %v1188 = vrot.slane %v1135, %v1187
  %v1190 = vunpack.c.l.s4 1985246804
  %v1191 = vunpack.c.0.s8 %v1190
  %v1192 = vlaneseq
  %v1193 = vshrl.u32 %v1192, 7
  %v1194 = vsub.s32 %v1191, %v1193
  %v1195 = vrot.slane %v1135, %v1194
  %v1197 = vunpack.c.l.s4 839922192
  %v1198 = vunpack.c.0.s8 %v1197
  %v1199 = vlaneseq
  %v1200 = vshrl.u32 %v1199, 7
  %v1201 = vsub.s32 %v1198, %v1200
  %v1202 = vrot.slane %v1139, %v1201
  %v1204 = vunpack.c.l.s4 1985246804
  %v1205 = vunpack.c.0.s8 %v1204
  %v1206 = vlaneseq
  %v1207 = vshrl.u32 %v1206, 7
  %v1208 = vsub.s32 %v1205, %v1207
  %v1209 = vrot.slane %v1139, %v1208
  %v1211 = vunpack.c.l.s4 839922192
  %v1212 = vunpack.c.0.s8 %v1211
  %v1213 = vlaneseq
  %v1214 = vshrl.u32 %v1213, 7
  %v1215 = vsub.s32 %v1212, %v1214
  %v1216 = vrot.slane %v1143, %v1215
  %v1218 = vunpack.c.l.s4 1985246804
  %v1219 = vunpack.c.0.s8 %v1218
  %v1220 = vlaneseq
  %v1221 = vshrl.u32 %v1220, 7
  %v1222 = vsub.s32 %v1219, %v1221
  %v1223 = vrot.slane %v1143, %v1222
  %v1225 = vunpack.c.l.s4 839922192
  %v1226 = vunpack.c.0.s8 %v1225
  %v1227 = vlaneseq
  %v1228 = vshrl.u32 %v1227, 7
  %v1229 = vsub.s32 %v1226, %v1228
  %v1230 = vrot.slane %v1147, %v1229
  %v1232 = vunpack.c.l.s4 1985246804
  %v1233 = vunpack.c.0.s8 %v1232
  %v1234 = vlaneseq
  %v1235 = vshrl.u32 %v1234, 7
  %v1236 = vsub.s32 %v1233, %v1235
  %v1237 = vrot.slane %v1147, %v1236
  %v1239 = vunpack.c.l.s4 839922192
  %v1240 = vunpack.c.0.s8 %v1239
  %v1241 = vlaneseq
  %v1242 = vshrl.u32 %v1241, 7
  %v1243 = vsub.s32 %v1240, %v1242
  %v1244 = vrot.slane %v1151, %v1243
  %v1246 = vunpack.c.l.s4 1985246804
  %v1247 = vunpack.c.0.s8 %v1246
  %v1248 = vlaneseq
  %v1249 = vshrl.u32 %v1248, 7
  %v1250 = vsub.s32 %v1247, %v1249
  %v1251 = vrot.slane %v1151, %v1250
  %v1253 = vunpack.c.l.s4 839922192
  %v1254 = vunpack.c.0.s8 %v1253
  %v1255 = vlaneseq
  %v1256 = vshrl.u32 %v1255, 7
  %v1257 = vsub.s32 %v1254, %v1256
  %v1258 = vrot.slane %v1155, %v1257
  %v1260 = vunpack.c.l.s4 1985246804
  %v1261 = vunpack.c.0.s8 %v1260
  %v1262 = vlaneseq
  %v1263 = vshrl.u32 %v1262, 7
  %v1264 = vsub.s32 %v1261, %v1263
  %v1265 = vrot.slane %v1155, %v1264
  %v1267 = vunpack.c.l.s4 839922192
  %v1268 = vunpack.c.0.s8 %v1267
  %v1269 = vlaneseq
  %v1270 = vshrl.u32 %v1269, 7
  %v1271 = vsub.s32 %v1268, %v1270
  %v1272 = vrot.slane %v1159, %v1271
  %v1288 = vmul.bf16 %v526, %v1174
  %v1289 = vmul.bf16 %v527, %v1174
  %v1290 = vmul.bf16 %v528, %v1181
  %v1291 = vmul.bf16 %v529, %v1181
  %v1292 = vmul.bf16 %v530, %v1188
  %v1293 = vmul.bf16 %v531, %v1188
  %v1294 = vmul.bf16 %v532, %v1195
  %v1295 = vmul.bf16 %v533, %v1195
  %v1296 = vmul.bf16 %v534, %v1202
  %v1297 = vmul.bf16 %v535, %v1202
  %v1298 = vmul.bf16 %v536, %v1209
  %v1299 = vmul.bf16 %v537, %v1209
  %v1300 = vmul.bf16 %v538, %v1216
  %v1301 = vmul.bf16 %v539, %v1216
  %v1302 = vmul.bf16 %v540, %v1223
  %v1303 = vmul.bf16 %v541, %v1223
  %v1304 = vmul.bf16 %v542, %v1230
  %v1305 = vmul.bf16 %v543, %v1230
  %v1306 = vmul.bf16 %v544, %v1237
  %v1307 = vmul.bf16 %v545, %v1237
  %v1308 = vmul.bf16 %v546, %v1244
  %v1309 = vmul.bf16 %v547, %v1244
  %v1310 = vmul.bf16 %v548, %v1251
  %v1311 = vmul.bf16 %v549, %v1251
  %v1312 = vmul.bf16 %v550, %v1258
  %v1313 = vmul.bf16 %v551, %v1258
  %v1314 = vmul.bf16 %v552, %v1265
  %v1315 = vmul.bf16 %v553, %v1265
  %v1316 = vmul.bf16 %v554, %v1272
  %v1317 = vmul.bf16 %v555, %v1272
  %1319 = vset.pattern.permute.xlu0 0
  %1320 = vperm.xlu0 %1319, %v1120
  %v1321 = vpop.permute.xlu0 %1320
  %1323 = vset.pattern.permute.xlu0 0
  %1324 = vperm.xlu0 %1323, %v1121
  %v1325 = vpop.permute.xlu0 %1324
  %1327 = vset.pattern.permute.xlu0 0
  %1328 = vperm.xlu0 %1327, %v1122
  %v1329 = vpop.permute.xlu0 %1328
  %1331 = vset.pattern.permute.xlu0 0
  %1332 = vperm.xlu0 %1331, %v1123
  %v1333 = vpop.permute.xlu0 %1332
  %1335 = vset.pattern.permute.xlu0 0
  %1336 = vperm.xlu0 %1335, %v1124
  %v1337 = vpop.permute.xlu0 %1336
  %1339 = vset.pattern.permute.xlu0 0
  %1340 = vperm.xlu0 %1339, %v1125
  %v1341 = vpop.permute.xlu0 %1340
  %1343 = vset.pattern.permute.xlu0 0
  %1344 = vperm.xlu0 %1343, %v1126
  %v1345 = vpop.permute.xlu0 %1344
  %1347 = vset.pattern.permute.xlu0 0
  %1348 = vperm.xlu0 %1347, %v1127
  %v1349 = vpop.permute.xlu0 %1348
  %v1359 = vunpack.c.l.s4 839922192
  %v1360 = vunpack.c.0.s8 %v1359
  %v1361 = vlaneseq
  %v1362 = vshrl.u32 %v1361, 7
  %v1363 = vsub.s32 %v1360, %v1362
  %v1364 = vrot.slane %v1321, %v1363
  %v1366 = vunpack.c.l.s4 1985246804
  %v1367 = vunpack.c.0.s8 %v1366
  %v1368 = vlaneseq
  %v1369 = vshrl.u32 %v1368, 7
  %v1370 = vsub.s32 %v1367, %v1369
  %v1371 = vrot.slane %v1321, %v1370
  %v1373 = vunpack.c.l.s4 839922192
  %v1374 = vunpack.c.0.s8 %v1373
  %v1375 = vlaneseq
  %v1376 = vshrl.u32 %v1375, 7
  %v1377 = vsub.s32 %v1374, %v1376
  %v1378 = vrot.slane %v1325, %v1377
  %v1380 = vunpack.c.l.s4 1985246804
  %v1381 = vunpack.c.0.s8 %v1380
  %v1382 = vlaneseq
  %v1383 = vshrl.u32 %v1382, 7
  %v1384 = vsub.s32 %v1381, %v1383
  %v1385 = vrot.slane %v1325, %v1384
  %v1387 = vunpack.c.l.s4 839922192
  %v1388 = vunpack.c.0.s8 %v1387
  %v1389 = vlaneseq
  %v1390 = vshrl.u32 %v1389, 7
  %v1391 = vsub.s32 %v1388, %v1390
  %v1392 = vrot.slane %v1329, %v1391
  %v1394 = vunpack.c.l.s4 1985246804
  %v1395 = vunpack.c.0.s8 %v1394
  %v1396 = vlaneseq
  %v1397 = vshrl.u32 %v1396, 7
  %v1398 = vsub.s32 %v1395, %v1397
  %v1399 = vrot.slane %v1329, %v1398
  %v1401 = vunpack.c.l.s4 839922192
  %v1402 = vunpack.c.0.s8 %v1401
  %v1403 = vlaneseq
  %v1404 = vshrl.u32 %v1403, 7
  %v1405 = vsub.s32 %v1402, %v1404
  %v1406 = vrot.slane %v1333, %v1405
  %v1408 = vunpack.c.l.s4 1985246804
  %v1409 = vunpack.c.0.s8 %v1408
  %v1410 = vlaneseq
  %v1411 = vshrl.u32 %v1410, 7
  %v1412 = vsub.s32 %v1409, %v1411
  %v1413 = vrot.slane %v1333, %v1412
  %v1415 = vunpack.c.l.s4 839922192
  %v1416 = vunpack.c.0.s8 %v1415
  %v1417 = vlaneseq
  %v1418 = vshrl.u32 %v1417, 7
  %v1419 = vsub.s32 %v1416, %v1418
  %v1420 = vrot.slane %v1337, %v1419
  %v1422 = vunpack.c.l.s4 1985246804
  %v1423 = vunpack.c.0.s8 %v1422
  %v1424 = vlaneseq
  %v1425 = vshrl.u32 %v1424, 7
  %v1426 = vsub.s32 %v1423, %v1425
  %v1427 = vrot.slane %v1337, %v1426
  %v1429 = vunpack.c.l.s4 839922192
  %v1430 = vunpack.c.0.s8 %v1429
  %v1431 = vlaneseq
  %v1432 = vshrl.u32 %v1431, 7
  %v1433 = vsub.s32 %v1430, %v1432
  %v1434 = vrot.slane %v1341, %v1433
  %v1436 = vunpack.c.l.s4 1985246804
  %v1437 = vunpack.c.0.s8 %v1436
  %v1438 = vlaneseq
  %v1439 = vshrl.u32 %v1438, 7
  %v1440 = vsub.s32 %v1437, %v1439
  %v1441 = vrot.slane %v1341, %v1440
  %v1443 = vunpack.c.l.s4 839922192
  %v1444 = vunpack.c.0.s8 %v1443
  %v1445 = vlaneseq
  %v1446 = vshrl.u32 %v1445, 7
  %v1447 = vsub.s32 %v1444, %v1446
  %v1448 = vrot.slane %v1345, %v1447
  %v1450 = vunpack.c.l.s4 1985246804
  %v1451 = vunpack.c.0.s8 %v1450
  %v1452 = vlaneseq
  %v1453 = vshrl.u32 %v1452, 7
  %v1454 = vsub.s32 %v1451, %v1453
  %v1455 = vrot.slane %v1345, %v1454
  %v1457 = vunpack.c.l.s4 839922192
  %v1458 = vunpack.c.0.s8 %v1457
  %v1459 = vlaneseq
  %v1460 = vshrl.u32 %v1459, 7
  %v1461 = vsub.s32 %v1458, %v1460
  %v1462 = vrot.slane %v1349, %v1461
  %v1478 = vadd.bf16 %v1288, %v1364
  %v1479 = vadd.bf16 %v1289, %v1364
  %v1480 = vadd.bf16 %v1290, %v1371
  %v1481 = vadd.bf16 %v1291, %v1371
  %v1482 = vadd.bf16 %v1292, %v1378
  %v1483 = vadd.bf16 %v1293, %v1378
  %v1484 = vadd.bf16 %v1294, %v1385
  %v1485 = vadd.bf16 %v1295, %v1385
  %v1486 = vadd.bf16 %v1296, %v1392
  %v1487 = vadd.bf16 %v1297, %v1392
  %v1488 = vadd.bf16 %v1298, %v1399
  %v1489 = vadd.bf16 %v1299, %v1399
  %v1490 = vadd.bf16 %v1300, %v1406
  %v1491 = vadd.bf16 %v1301, %v1406
  %v1492 = vadd.bf16 %v1302, %v1413
  %v1493 = vadd.bf16 %v1303, %v1413
  %v1494 = vadd.bf16 %v1304, %v1420
  %v1495 = vadd.bf16 %v1305, %v1420
  %v1496 = vadd.bf16 %v1306, %v1427
  %v1497 = vadd.bf16 %v1307, %v1427
  %v1498 = vadd.bf16 %v1308, %v1434
  %v1499 = vadd.bf16 %v1309, %v1434
  %v1500 = vadd.bf16 %v1310, %v1441
  %v1501 = vadd.bf16 %v1311, %v1441
  %v1502 = vadd.bf16 %v1312, %v1448
  %v1503 = vadd.bf16 %v1313, %v1448
  %v1504 = vadd.bf16 %v1314, %v1455
  %v1505 = vadd.bf16 %v1315, %v1455
  %v1506 = vadd.bf16 %v1316, %v1462
  %v1507 = vadd.bf16 %v1317, %v1462
  %v1508 = vmul.bf16 %v1478, 1009007652
  %v1509 = vmul.bf16 %v1479, 1009007652
  %v1510 = vmul.bf16 %v1480, 1009007652
  %v1511 = vmul.bf16 %v1481, 1009007652
  %v1512 = vmul.bf16 %v1482, 1009007652
  %v1513 = vmul.bf16 %v1483, 1009007652
  %v1514 = vmul.bf16 %v1484, 1009007652
  %v1515 = vmul.bf16 %v1485, 1009007652
  %v1516 = vmul.bf16 %v1486, 1009007652
  %v1517 = vmul.bf16 %v1487, 1009007652
  %v1518 = vmul.bf16 %v1488, 1009007652
  %v1519 = vmul.bf16 %v1489, 1009007652
  %v1520 = vmul.bf16 %v1490, 1009007652
  %v1521 = vmul.bf16 %v1491, 1009007652
  %v1522 = vmul.bf16 %v1492, 1009007652
  %v1523 = vmul.bf16 %v1493, 1009007652
  %v1524 = vmul.bf16 %v1494, 1009007652
  %v1525 = vmul.bf16 %v1495, 1009007652
  %v1526 = vmul.bf16 %v1496, 1009007652
  %v1527 = vmul.bf16 %v1497, 1009007652
  %v1528 = vmul.bf16 %v1498, 1009007652
  %v1529 = vmul.bf16 %v1499, 1009007652
  %v1530 = vmul.bf16 %v1500, 1009007652
  %v1531 = vmul.bf16 %v1501, 1009007652
  %v1532 = vmul.bf16 %v1502, 1009007652
  %v1533 = vmul.bf16 %v1503, 1009007652
  %v1534 = vmul.bf16 %v1504, 1009007652
  %v1535 = vmul.bf16 %v1505, 1009007652
  %v1536 = vmul.bf16 %v1506, 1009007652
  %v1537 = vmul.bf16 %v1507, 1009007652
  %v1538 = vmax.bf16 %v1478, %v1508
  %v1539 = vmax.bf16 %v1479, %v1509
  %v1540 = vmax.bf16 %v1480, %v1510
  %v1541 = vmax.bf16 %v1481, %v1511
  %v1542 = vmax.bf16 %v1482, %v1512
  %v1543 = vmax.bf16 %v1483, %v1513
  %v1544 = vmax.bf16 %v1484, %v1514
  %v1545 = vmax.bf16 %v1485, %v1515
  %v1546 = vmax.bf16 %v1486, %v1516
  %v1547 = vmax.bf16 %v1487, %v1517
  %v1548 = vmax.bf16 %v1488, %v1518
  %v1549 = vmax.bf16 %v1489, %v1519
  %v1550 = vmax.bf16 %v1490, %v1520
  %v1551 = vmax.bf16 %v1491, %v1521
  %v1552 = vmax.bf16 %v1492, %v1522
  %v1553 = vmax.bf16 %v1493, %v1523
  %v1554 = vmax.bf16 %v1494, %v1524
  %v1555 = vmax.bf16 %v1495, %v1525
  %v1556 = vmax.bf16 %v1496, %v1526
  %v1557 = vmax.bf16 %v1497, %v1527
  %v1558 = vmax.bf16 %v1498, %v1528
  %v1559 = vmax.bf16 %v1499, %v1529
  %v1560 = vmax.bf16 %v1500, %v1530
  %v1561 = vmax.bf16 %v1501, %v1531
  %v1562 = vmax.bf16 %v1502, %v1532
  %v1563 = vmax.bf16 %v1503, %v1533
  %v1564 = vmax.bf16 %v1504, %v1534
  %v1565 = vmax.bf16 %v1505, %v1535
  %v1566 = vmax.bf16 %v1506, %v1536
  %v1567 = vmax.bf16 %v1507, %v1537
  %v1568 = vld [vmem:[%s7] sm:$0xf]
  %v1569 = vld [vmem:[%s7 + $0x4] sm:$0xf]
  %v1570 = vld [vmem:[%s7 + $0x8] sm:$0xf]
  %v1571 = vld [vmem:[%s7 + $0xc] sm:$0xf]
  %v1572 = vld [vmem:[%s7 + $0x10] sm:$0xf]
  %v1573 = vld [vmem:[%s7 + $0x14] sm:$0xf]
  %v1574 = vld [vmem:[%s7 + $0x18] sm:$0xf]
  %v1575 = vld [vmem:[%s7 + $0x1c] sm:$0x3]
  %v1584 = vunpack.c.l.b16 %v1568
  %v1585 = vunpack.c.l.b16 %v1569
  %v1586 = vunpack.c.l.b16 %v1570
  %v1587 = vunpack.c.l.b16 %v1571
  %v1588 = vunpack.c.l.b16 %v1572
  %v1589 = vunpack.c.l.b16 %v1573
  %v1590 = vunpack.c.l.b16 %v1574
  %v1591 = vunpack.c.l.b16 %v1575
  %v1592 = vpack.c.b16 %v1585, %v1584
  %v1593 = vpack.c.b16 %v1587, %v1586
  %v1594 = vpack.c.b16 %v1589, %v1588
  %v1595 = vpack.c.b16 %v1591, %v1590
  %v1626 = vunpack.c.l.b16 %v1538
  %v1627 = vunpack.c.h.b16 %v1538
  %v1628 = vunpack.c.l.b16 %v1539
  %v1629 = vunpack.c.h.b16 %v1539
  %v1630 = vunpack.c.l.b16 %v1540
  %v1631 = vunpack.c.h.b16 %v1540
  %v1632 = vunpack.c.l.b16 %v1541
  %v1633 = vunpack.c.h.b16 %v1541
  %v1634 = vunpack.c.l.b16 %v1542
  %v1635 = vunpack.c.h.b16 %v1542
  %v1636 = vunpack.c.l.b16 %v1543
  %v1637 = vunpack.c.h.b16 %v1543
  %v1638 = vunpack.c.l.b16 %v1544
  %v1639 = vunpack.c.h.b16 %v1544
  %v1640 = vunpack.c.l.b16 %v1545
  %v1641 = vunpack.c.h.b16 %v1545
  %v1642 = vunpack.c.l.b16 %v1546
  %v1643 = vunpack.c.h.b16 %v1546
  %v1644 = vunpack.c.l.b16 %v1547
  %v1645 = vunpack.c.h.b16 %v1547
  %v1646 = vunpack.c.l.b16 %v1548
  %v1647 = vunpack.c.h.b16 %v1548
  %v1648 = vunpack.c.l.b16 %v1549
  %v1649 = vunpack.c.h.b16 %v1549
  %v1650 = vunpack.c.l.b16 %v1550
  %v1651 = vunpack.c.h.b16 %v1550
  %v1652 = vunpack.c.l.b16 %v1551
  %v1653 = vunpack.c.h.b16 %v1551
  %v1654 = vunpack.c.l.b16 %v1552
  %v1655 = vunpack.c.h.b16 %v1552
  %v1656 = vunpack.c.l.b16 %v1553
  %v1657 = vunpack.c.h.b16 %v1553
  %v1658 = vunpack.c.l.b16 %v1554
  %v1659 = vunpack.c.h.b16 %v1554
  %v1660 = vunpack.c.l.b16 %v1555
  %v1661 = vunpack.c.h.b16 %v1555
  %v1662 = vunpack.c.l.b16 %v1556
  %v1663 = vunpack.c.h.b16 %v1556
  %v1664 = vunpack.c.l.b16 %v1557
  %v1665 = vunpack.c.h.b16 %v1557
  %v1666 = vunpack.c.l.b16 %v1558
  %v1667 = vunpack.c.h.b16 %v1558
  %v1668 = vunpack.c.l.b16 %v1559
  %v1669 = vunpack.c.h.b16 %v1559
  %v1670 = vunpack.c.l.b16 %v1560
  %v1671 = vunpack.c.h.b16 %v1560
  %v1672 = vunpack.c.l.b16 %v1561
  %v1673 = vunpack.c.h.b16 %v1561
  %v1674 = vunpack.c.l.b16 %v1562
  %v1675 = vunpack.c.h.b16 %v1562
  %v1676 = vunpack.c.l.b16 %v1563
  %v1677 = vunpack.c.h.b16 %v1563
  %v1678 = vunpack.c.l.b16 %v1564
  %v1679 = vunpack.c.h.b16 %v1564
  %v1680 = vunpack.c.l.b16 %v1565
  %v1681 = vunpack.c.h.b16 %v1565
  %v1682 = vunpack.c.l.b16 %v1566
  %v1683 = vunpack.c.h.b16 %v1566
  %v1684 = vunpack.c.l.b16 %v1567
  %v1685 = vunpack.c.h.b16 %v1567
  %v1686 = vpack.c.b16 %v1630, %v1626
  %v1687 = vpack.c.b16 %v1631, %v1627
  %v1688 = vpack.c.b16 %v1632, %v1628
  %v1689 = vpack.c.b16 %v1633, %v1629
  %v1690 = vpack.c.b16 %v1638, %v1634
  %v1691 = vpack.c.b16 %v1639, %v1635
  %v1692 = vpack.c.b16 %v1640, %v1636
  %v1693 = vpack.c.b16 %v1641, %v1637
  %v1694 = vpack.c.b16 %v1646, %v1642
  %v1695 = vpack.c.b16 %v1647, %v1643
  %v1696 = vpack.c.b16 %v1648, %v1644
  %v1697 = vpack.c.b16 %v1649, %v1645
  %v1698 = vpack.c.b16 %v1654, %v1650
  %v1699 = vpack.c.b16 %v1655, %v1651
  %v1700 = vpack.c.b16 %v1656, %v1652
  %v1701 = vpack.c.b16 %v1657, %v1653
  %v1702 = vpack.c.b16 %v1662, %v1658
  %v1703 = vpack.c.b16 %v1663, %v1659
  %v1704 = vpack.c.b16 %v1664, %v1660
  %v1705 = vpack.c.b16 %v1665, %v1661
  %v1706 = vpack.c.b16 %v1670, %v1666
  %v1707 = vpack.c.b16 %v1671, %v1667
  %v1708 = vpack.c.b16 %v1672, %v1668
  %v1709 = vpack.c.b16 %v1673, %v1669
  %v1710 = vpack.c.b16 %v1678, %v1674
  %v1711 = vpack.c.b16 %v1679, %v1675
  %v1712 = vpack.c.b16 %v1680, %v1676
  %v1713 = vpack.c.b16 %v1681, %v1677
  %v1714 = vpack.c.b16 %v1682, %v1682
  %v1715 = vpack.c.b16 %v1683, %v1683
  %v1716 = vpack.c.b16 %v1684, %v1684
  %v1717 = vpack.c.b16 %v1685, %v1685
  %vm1746 = vcmask 982016
  %v1748 = vsel %vm1746, %v1592, 0
  %v1751 = vsel %vm1746, %v1593, 0
  %v1754 = vsel %vm1746, %v1594, 0
  %v1757 = vsel %vm1746, %v1595, 0
  %vm1759 = vcmask 1043456
  %v1761 = vsel %vm1759, %v1714, 0
  %v1764 = vsel %vm1759, %v1715, 0
  %v1767 = vsel %vm1759, %v1716, 0
  %v1770 = vsel %vm1759, %v1717, 0
  %1772 = vmatprep.subr.bf16.mxu0 %v1764
  %1773 = vmatpush1.bf16.msra.mxu0 %v1761
  %1774 = vmatprep.subr.bf16.mxu0 %v1711
  %1775 = vmatpush1.bf16.msra.mxu0 %v1710
  %1776 = vmatprep.subr.bf16.mxu0 %v1707
  %1777 = vmatpush1.bf16.msra.mxu0 %v1706
  %1778 = vmatprep.subr.bf16.mxu0 %v1703
  %1779 = vmatpush1.bf16.msra.mxu0 %v1702
  %1780 = vmatprep.subr.bf16.mxu0 %v1699
  %1781 = vmatpush1.bf16.msra.mxu0 %v1698
  %1782 = vmatprep.subr.bf16.mxu0 %v1695
  %1783 = vmatpush1.bf16.msra.mxu0 %v1694
  %1784 = vmatprep.subr.bf16.mxu0 %v1691
  %1785 = vmatpush1.bf16.msra.mxu0 %v1690
  %1786 = vmatprep.subr.bf16.mxu0 %v1687
  %1787 = vmatpush1.bf16.msra.mxu0 %v1686
  %1788 = vmatprep.subr.bf16.mxu0 0
  %1789 = vmatpush2.bf16.msra.mxu0 0
  %1790 = vmatprep.subr.bf16.mxu0 0
  %1791 = vmatpush2.bf16.msra.mxu0 0
  %1792 = vmatprep.subr.bf16.mxu0 0
  %1793 = vmatpush2.bf16.msra.mxu0 0
  %1794 = vmatprep.subr.bf16.mxu0 0
  %1795 = vmatpush2.bf16.msra.mxu0 0
  %1796 = vmatprep.subr.bf16.mxu0 0
  %1797 = vmatpush2.bf16.msra.mxu0 0
  %1798 = vmatprep.subr.bf16.mxu0 0
  %1799 = vmatpush2.bf16.msra.mxu0 0
  %1800 = vmatprep.subr.bf16.mxu0 0
  %1801 = vmatpush2.bf16.msra.mxu0 0
  %1802 = vmatprep.subr.bf16.mxu0 0
  %1803 = vmatpush2.bf16.msra.mxu0 0
  %1804 = vmatprep.mubr.bf16.mxu0 0
  %1805 = vmatmul.mubr.bf16.gmra.mxu0 %v1748
  %v1806 = vpop.f32.mrf.mxu0
  %v1807 = vadd.f32 0.0, %v1806
  %v1808 = vpop.f32.mrf.mxu0
  %v1809 = vadd.f32 0.0, %v1808
  %v1810 = vpop.f32.mrf.mxu0
  %v1811 = vadd.f32 0.0, %v1810
  %v1812 = vpop.f32.mrf.mxu0
  %v1813 = vadd.f32 0.0, %v1812
  %1814 = vmatprep.mubr.bf16.mxu0 0
  %1815 = vmatmul.mubr.bf16.gmra.mxu0 %v1751
  %v1816 = vpop.f32.mrf.mxu0
  %v1817 = vadd.f32 0.0, %v1816
  %v1818 = vpop.f32.mrf.mxu0
  %v1819 = vadd.f32 0.0, %v1818
  %v1820 = vpop.f32.mrf.mxu0
  %v1821 = vadd.f32 0.0, %v1820
  %v1822 = vpop.f32.mrf.mxu0
  %v1823 = vadd.f32 0.0, %v1822
  %1824 = vmatprep.mubr.bf16.mxu0 0
  %1825 = vmatmul.mubr.bf16.gmra.mxu0 %v1754
  %v1826 = vpop.f32.mrf.mxu0
  %v1827 = vadd.f32 0.0, %v1826
  %v1828 = vpop.f32.mrf.mxu0
  %v1829 = vadd.f32 0.0, %v1828
  %v1830 = vpop.f32.mrf.mxu0
  %v1831 = vadd.f32 0.0, %v1830
  %v1832 = vpop.f32.mrf.mxu0
  %v1833 = vadd.f32 0.0, %v1832
  %1834 = vmatprep.mubr.bf16.mxu0 0
  %1835 = vmatmul.mubr.bf16.gmra.mxu0 %v1757
  %v1836 = vpop.f32.mrf.mxu0
  %v1837 = vadd.f32 0.0, %v1836
  %v1838 = vpop.f32.mrf.mxu0
  %v1839 = vadd.f32 0.0, %v1838
  %v1840 = vpop.f32.mrf.mxu0
  %v1841 = vadd.f32 0.0, %v1840
  %v1842 = vpop.f32.mrf.mxu0
  %v1843 = vadd.f32 0.0, %v1842
  %1844 = vdwg.mxu0
  %1845 = vmatprep.subr.bf16.mxu0 %v1770
  %1846 = vmatpush1.bf16.msra.mxu0 %v1767
  %1847 = vmatprep.subr.bf16.mxu0 %v1713
  %1848 = vmatpush1.bf16.msra.mxu0 %v1712
  %1849 = vmatprep.subr.bf16.mxu0 %v1709
  %1850 = vmatpush1.bf16.msra.mxu0 %v1708
  %1851 = vmatprep.subr.bf16.mxu0 %v1705
  %1852 = vmatpush1.bf16.msra.mxu0 %v1704
  %1853 = vmatprep.subr.bf16.mxu0 %v1701
  %1854 = vmatpush1.bf16.msra.mxu0 %v1700
  %1855 = vmatprep.subr.bf16.mxu0 %v1697
  %1856 = vmatpush1.bf16.msra.mxu0 %v1696
  %1857 = vmatprep.subr.bf16.mxu0 %v1693
  %1858 = vmatpush1.bf16.msra.mxu0 %v1692
  %1859 = vmatprep.subr.bf16.mxu0 %v1689
  %1860 = vmatpush1.bf16.msra.mxu0 %v1688
  %1861 = vmatprep.subr.bf16.mxu0 0
  %1862 = vmatpush2.bf16.msra.mxu0 0
  %1863 = vmatprep.subr.bf16.mxu0 0
  %1864 = vmatpush2.bf16.msra.mxu0 0
  %1865 = vmatprep.subr.bf16.mxu0 0
  %1866 = vmatpush2.bf16.msra.mxu0 0
  %1867 = vmatprep.subr.bf16.mxu0 0
  %1868 = vmatpush2.bf16.msra.mxu0 0
  %1869 = vmatprep.subr.bf16.mxu0 0
  %1870 = vmatpush2.bf16.msra.mxu0 0
  %1871 = vmatprep.subr.bf16.mxu0 0
  %1872 = vmatpush2.bf16.msra.mxu0 0
  %1873 = vmatprep.subr.bf16.mxu0 0
  %1874 = vmatpush2.bf16.msra.mxu0 0
  %1875 = vmatprep.subr.bf16.mxu0 0
  %1876 = vmatpush2.bf16.msra.mxu0 0
  %1877 = vmatprep.mubr.bf16.mxu0 0
  %1878 = vmatmul.mubr.bf16.gmra.mxu0 %v1748
  %v1879 = vpop.f32.mrf.mxu0
  %v1880 = vadd.f32 0.0, %v1879
  %v1881 = vpop.f32.mrf.mxu0
  %v1882 = vadd.f32 0.0, %v1881
  %v1883 = vpop.f32.mrf.mxu0
  %v1884 = vadd.f32 0.0, %v1883
  %v1885 = vpop.f32.mrf.mxu0
  %v1886 = vadd.f32 0.0, %v1885
  %1887 = vmatprep.mubr.bf16.mxu0 0
  %1888 = vmatmul.mubr.bf16.gmra.mxu0 %v1751
  %v1889 = vpop.f32.mrf.mxu0
  %v1890 = vadd.f32 0.0, %v1889
  %v1891 = vpop.f32.mrf.mxu0
  %v1892 = vadd.f32 0.0, %v1891
  %v1893 = vpop.f32.mrf.mxu0
  %v1894 = vadd.f32 0.0, %v1893
  %v1895 = vpop.f32.mrf.mxu0
  %v1896 = vadd.f32 0.0, %v1895
  %1897 = vmatprep.mubr.bf16.mxu0 0
  %1898 = vmatmul.mubr.bf16.gmra.mxu0 %v1754
  %v1899 = vpop.f32.mrf.mxu0
  %v1900 = vadd.f32 0.0, %v1899
  %v1901 = vpop.f32.mrf.mxu0
  %v1902 = vadd.f32 0.0, %v1901
  %v1903 = vpop.f32.mrf.mxu0
  %v1904 = vadd.f32 0.0, %v1903
  %v1905 = vpop.f32.mrf.mxu0
  %v1906 = vadd.f32 0.0, %v1905
  %1907 = vmatprep.mubr.bf16.mxu0 0
  %1908 = vmatmul.mubr.bf16.gmra.mxu0 %v1757
  %v1909 = vpop.f32.mrf.mxu0
  %v1910 = vadd.f32 0.0, %v1909
  %v1911 = vpop.f32.mrf.mxu0
  %v1912 = vadd.f32 0.0, %v1911
  %v1913 = vpop.f32.mrf.mxu0
  %v1914 = vadd.f32 0.0, %v1913
  %v1915 = vpop.f32.mrf.mxu0
  %v1916 = vadd.f32 0.0, %v1915
  %1917 = vdwg.mxu0
  %v1926 = vunpack.c.l.b16 %v1104
  %v1927 = vunpack.c.l.b16 %v1105
  %v1928 = vunpack.c.l.b16 %v1106
  %v1929 = vunpack.c.l.b16 %v1107
  %v1930 = vunpack.c.l.b16 %v1108
  %v1931 = vunpack.c.l.b16 %v1109
  %v1932 = vunpack.c.l.b16 %v1110
  %v1933 = vunpack.c.l.b16 %v1111
  %v1934 = vpack.c.b16 %v1927, %v1926
  %v1935 = vpack.c.b16 %v1929, %v1928
  %v1936 = vpack.c.b16 %v1931, %v1930
  %v1937 = vpack.c.b16 %v1933, %v1932
  %v1968 = vunpack.c.l.b16 %v1074
  %v1969 = vunpack.c.h.b16 %v1074
  %v1970 = vunpack.c.l.b16 %v1075
  %v1971 = vunpack.c.h.b16 %v1075
  %v1972 = vunpack.c.l.b16 %v1076
  %v1973 = vunpack.c.h.b16 %v1076
  %v1974 = vunpack.c.l.b16 %v1077
  %v1975 = vunpack.c.h.b16 %v1077
  %v1976 = vunpack.c.l.b16 %v1078
  %v1977 = vunpack.c.h.b16 %v1078
  %v1978 = vunpack.c.l.b16 %v1079
  %v1979 = vunpack.c.h.b16 %v1079
  %v1980 = vunpack.c.l.b16 %v1080
  %v1981 = vunpack.c.h.b16 %v1080
  %v1982 = vunpack.c.l.b16 %v1081
  %v1983 = vunpack.c.h.b16 %v1081
  %v1984 = vunpack.c.l.b16 %v1082
  %v1985 = vunpack.c.h.b16 %v1082
  %v1986 = vunpack.c.l.b16 %v1083
  %v1987 = vunpack.c.h.b16 %v1083
  %v1988 = vunpack.c.l.b16 %v1084
  %v1989 = vunpack.c.h.b16 %v1084
  %v1990 = vunpack.c.l.b16 %v1085
  %v1991 = vunpack.c.h.b16 %v1085
  %v1992 = vunpack.c.l.b16 %v1086
  %v1993 = vunpack.c.h.b16 %v1086
  %v1994 = vunpack.c.l.b16 %v1087
  %v1995 = vunpack.c.h.b16 %v1087
  %v1996 = vunpack.c.l.b16 %v1088
  %v1997 = vunpack.c.h.b16 %v1088
  %v1998 = vunpack.c.l.b16 %v1089
  %v1999 = vunpack.c.h.b16 %v1089
  %v2000 = vunpack.c.l.b16 %v1090
  %v2001 = vunpack.c.h.b16 %v1090
  %v2002 = vunpack.c.l.b16 %v1091
  %v2003 = vunpack.c.h.b16 %v1091
  %v2004 = vunpack.c.l.b16 %v1092
  %v2005 = vunpack.c.h.b16 %v1092
  %v2006 = vunpack.c.l.b16 %v1093
  %v2007 = vunpack.c.h.b16 %v1093
  %v2008 = vunpack.c.l.b16 %v1094
  %v2009 = vunpack.c.h.b16 %v1094
  %v2010 = vunpack.c.l.b16 %v1095
  %v2011 = vunpack.c.h.b16 %v1095
  %v2012 = vunpack.c.l.b16 %v1096
  %v2013 = vunpack.c.h.b16 %v1096
  %v2014 = vunpack.c.l.b16 %v1097
  %v2015 = vunpack.c.h.b16 %v1097
  %v2016 = vunpack.c.l.b16 %v1098
  %v2017 = vunpack.c.h.b16 %v1098
  %v2018 = vunpack.c.l.b16 %v1099
  %v2019 = vunpack.c.h.b16 %v1099
  %v2020 = vunpack.c.l.b16 %v1100
  %v2021 = vunpack.c.h.b16 %v1100
  %v2022 = vunpack.c.l.b16 %v1101
  %v2023 = vunpack.c.h.b16 %v1101
  %v2024 = vunpack.c.l.b16 %v1102
  %v2025 = vunpack.c.h.b16 %v1102
  %v2026 = vunpack.c.l.b16 %v1103
  %v2027 = vunpack.c.h.b16 %v1103
  %v2028 = vpack.c.b16 %v1972, %v1968
  %v2029 = vpack.c.b16 %v1973, %v1969
  %v2030 = vpack.c.b16 %v1974, %v1970
  %v2031 = vpack.c.b16 %v1975, %v1971
  %v2032 = vpack.c.b16 %v1980, %v1976
  %v2033 = vpack.c.b16 %v1981, %v1977
  %v2034 = vpack.c.b16 %v1982, %v1978
  %v2035 = vpack.c.b16 %v1983, %v1979
  %v2036 = vpack.c.b16 %v1988, %v1984
  %v2037 = vpack.c.b16 %v1989, %v1985
  %v2038 = vpack.c.b16 %v1990, %v1986
  %v2039 = vpack.c.b16 %v1991, %v1987
  %v2040 = vpack.c.b16 %v1996, %v1992
  %v2041 = vpack.c.b16 %v1997, %v1993
  %v2042 = vpack.c.b16 %v1998, %v1994
  %v2043 = vpack.c.b16 %v1999, %v1995
  %v2044 = vpack.c.b16 %v2004, %v2000
  %v2045 = vpack.c.b16 %v2005, %v2001
  %v2046 = vpack.c.b16 %v2006, %v2002
  %v2047 = vpack.c.b16 %v2007, %v2003
  %v2048 = vpack.c.b16 %v2012, %v2008
  %v2049 = vpack.c.b16 %v2013, %v2009
  %v2050 = vpack.c.b16 %v2014, %v2010
  %v2051 = vpack.c.b16 %v2015, %v2011
  %v2052 = vpack.c.b16 %v2020, %v2016
  %v2053 = vpack.c.b16 %v2021, %v2017
  %v2054 = vpack.c.b16 %v2022, %v2018
  %v2055 = vpack.c.b16 %v2023, %v2019
  %v2056 = vpack.c.b16 %v2024, %v2024
  %v2057 = vpack.c.b16 %v2025, %v2025
  %v2058 = vpack.c.b16 %v2026, %v2026
  %v2059 = vpack.c.b16 %v2027, %v2027
  %v2089 = vsel %vm1746, %v1934, 0
  %v2092 = vsel %vm1746, %v1935, 0
  %v2095 = vsel %vm1746, %v1936, 0
  %v2098 = vsel %vm1746, %v1937, 0
  %v2101 = vsel %vm1759, %v2056, 0
  %v2104 = vsel %vm1759, %v2057, 0
  %v2107 = vsel %vm1759, %v2058, 0
  %v2110 = vsel %vm1759, %v2059, 0
  %2112 = vmatprep.subr.bf16.mxu0 %v2104
  %2113 = vmatpush1.bf16.msra.mxu0 %v2101
  %2114 = vmatprep.subr.bf16.mxu0 %v2053
  %2115 = vmatpush1.bf16.msra.mxu0 %v2052
  %2116 = vmatprep.subr.bf16.mxu0 %v2049
  %2117 = vmatpush1.bf16.msra.mxu0 %v2048
  %2118 = vmatprep.subr.bf16.mxu0 %v2045
  %2119 = vmatpush1.bf16.msra.mxu0 %v2044
  %2120 = vmatprep.subr.bf16.mxu0 %v2041
  %2121 = vmatpush1.bf16.msra.mxu0 %v2040
  %2122 = vmatprep.subr.bf16.mxu0 %v2037
  %2123 = vmatpush1.bf16.msra.mxu0 %v2036
  %2124 = vmatprep.subr.bf16.mxu0 %v2033
  %2125 = vmatpush1.bf16.msra.mxu0 %v2032
  %2126 = vmatprep.subr.bf16.mxu0 %v2029
  %2127 = vmatpush1.bf16.msra.mxu0 %v2028
  %2128 = vmatprep.subr.bf16.mxu0 0
  %2129 = vmatpush2.bf16.msra.mxu0 0
  %2130 = vmatprep.subr.bf16.mxu0 0
  %2131 = vmatpush2.bf16.msra.mxu0 0
  %2132 = vmatprep.subr.bf16.mxu0 0
  %2133 = vmatpush2.bf16.msra.mxu0 0
  %2134 = vmatprep.subr.bf16.mxu0 0
  %2135 = vmatpush2.bf16.msra.mxu0 0
  %2136 = vmatprep.subr.bf16.mxu0 0
  %2137 = vmatpush2.bf16.msra.mxu0 0
  %2138 = vmatprep.subr.bf16.mxu0 0
  %2139 = vmatpush2.bf16.msra.mxu0 0
  %2140 = vmatprep.subr.bf16.mxu0 0
  %2141 = vmatpush2.bf16.msra.mxu0 0
  %2142 = vmatprep.subr.bf16.mxu0 0
  %2143 = vmatpush2.bf16.msra.mxu0 0
  %2144 = vmatprep.mubr.bf16.mxu0 0
  %2145 = vmatmul.mubr.bf16.gmra.mxu0 %v2089
  %v2146 = vpop.f32.mrf.mxu0
  %v2147 = vadd.f32 %v1807, %v2146
  %v2148 = vpop.f32.mrf.mxu0
  %v2149 = vadd.f32 %v1809, %v2148
  %v2150 = vpop.f32.mrf.mxu0
  %v2151 = vadd.f32 %v1811, %v2150
  %v2152 = vpop.f32.mrf.mxu0
  %v2153 = vadd.f32 %v1813, %v2152
  %2154 = vmatprep.mubr.bf16.mxu0 0
  %2155 = vmatmul.mubr.bf16.gmra.mxu0 %v2092
  %v2156 = vpop.f32.mrf.mxu0
  %v2157 = vadd.f32 %v1817, %v2156
  %v2158 = vpop.f32.mrf.mxu0
  %v2159 = vadd.f32 %v1819, %v2158
  %v2160 = vpop.f32.mrf.mxu0
  %v2161 = vadd.f32 %v1821, %v2160
  %v2162 = vpop.f32.mrf.mxu0
  %v2163 = vadd.f32 %v1823, %v2162
  %2164 = vmatprep.mubr.bf16.mxu0 0
  %2165 = vmatmul.mubr.bf16.gmra.mxu0 %v2095
  %v2166 = vpop.f32.mrf.mxu0
  %v2167 = vadd.f32 %v1827, %v2166
  %v2168 = vpop.f32.mrf.mxu0
  %v2169 = vadd.f32 %v1829, %v2168
  %v2170 = vpop.f32.mrf.mxu0
  %v2171 = vadd.f32 %v1831, %v2170
  %v2172 = vpop.f32.mrf.mxu0
  %v2173 = vadd.f32 %v1833, %v2172
  %2174 = vmatprep.mubr.bf16.mxu0 0
  %2175 = vmatmul.mubr.bf16.gmra.mxu0 %v2098
  %v2176 = vpop.f32.mrf.mxu0
  %v2177 = vadd.f32 %v1837, %v2176
  %v2178 = vpop.f32.mrf.mxu0
  %v2179 = vadd.f32 %v1839, %v2178
  %v2180 = vpop.f32.mrf.mxu0
  %v2181 = vadd.f32 %v1841, %v2180
  %v2182 = vpop.f32.mrf.mxu0
  %v2183 = vadd.f32 %v1843, %v2182
  %2184 = vdwg.mxu0
  %2185 = vmatprep.subr.bf16.mxu0 %v2110
  %2186 = vmatpush1.bf16.msra.mxu0 %v2107
  %2187 = vmatprep.subr.bf16.mxu0 %v2055
  %2188 = vmatpush1.bf16.msra.mxu0 %v2054
  %2189 = vmatprep.subr.bf16.mxu0 %v2051
  %2190 = vmatpush1.bf16.msra.mxu0 %v2050
  %2191 = vmatprep.subr.bf16.mxu0 %v2047
  %2192 = vmatpush1.bf16.msra.mxu0 %v2046
  %2193 = vmatprep.subr.bf16.mxu0 %v2043
  %2194 = vmatpush1.bf16.msra.mxu0 %v2042
  %2195 = vmatprep.subr.bf16.mxu0 %v2039
  %2196 = vmatpush1.bf16.msra.mxu0 %v2038
  %2197 = vmatprep.subr.bf16.mxu0 %v2035
  %2198 = vmatpush1.bf16.msra.mxu0 %v2034
  %2199 = vmatprep.subr.bf16.mxu0 %v2031
  %2200 = vmatpush1.bf16.msra.mxu0 %v2030
  %2201 = vmatprep.subr.bf16.mxu0 0
  %2202 = vmatpush2.bf16.msra.mxu0 0
  %2203 = vmatprep.subr.bf16.mxu0 0
  %2204 = vmatpush2.bf16.msra.mxu0 0
  %2205 = vmatprep.subr.bf16.mxu0 0
  %2206 = vmatpush2.bf16.msra.mxu0 0
  %2207 = vmatprep.subr.bf16.mxu0 0
  %2208 = vmatpush2.bf16.msra.mxu0 0
  %2209 = vmatprep.subr.bf16.mxu0 0
  %2210 = vmatpush2.bf16.msra.mxu0 0
  %2211 = vmatprep.subr.bf16.mxu0 0
  %2212 = vmatpush2.bf16.msra.mxu0 0
  %2213 = vmatprep.subr.bf16.mxu0 0
  %2214 = vmatpush2.bf16.msra.mxu0 0
  %2215 = vmatprep.subr.bf16.mxu0 0
  %2216 = vmatpush2.bf16.msra.mxu0 0
  %2217 = vmatprep.mubr.bf16.mxu0 0
  %2218 = vmatmul.mubr.bf16.gmra.mxu0 %v2089
  %v2219 = vpop.f32.mrf.mxu0
  %v2220 = vadd.f32 %v1880, %v2219
  %v2221 = vpop.f32.mrf.mxu0
  %v2222 = vadd.f32 %v1882, %v2221
  %v2223 = vpop.f32.mrf.mxu0
  %v2224 = vadd.f32 %v1884, %v2223
  %v2225 = vpop.f32.mrf.mxu0
  %v2226 = vadd.f32 %v1886, %v2225
  %2227 = vmatprep.mubr.bf16.mxu0 0
  %2228 = vmatmul.mubr.bf16.gmra.mxu0 %v2092
  %v2229 = vpop.f32.mrf.mxu0
  %v2230 = vadd.f32 %v1890, %v2229
  %v2231 = vpop.f32.mrf.mxu0
  %v2232 = vadd.f32 %v1892, %v2231
  %v2233 = vpop.f32.mrf.mxu0
  %v2234 = vadd.f32 %v1894, %v2233
  %v2235 = vpop.f32.mrf.mxu0
  %v2236 = vadd.f32 %v1896, %v2235
  %2237 = vmatprep.mubr.bf16.mxu0 0
  %2238 = vmatmul.mubr.bf16.gmra.mxu0 %v2095
  %v2239 = vpop.f32.mrf.mxu0
  %v2240 = vadd.f32 %v1900, %v2239
  %v2241 = vpop.f32.mrf.mxu0
  %v2242 = vadd.f32 %v1902, %v2241
  %v2243 = vpop.f32.mrf.mxu0
  %v2244 = vadd.f32 %v1904, %v2243
  %v2245 = vpop.f32.mrf.mxu0
  %v2246 = vadd.f32 %v1906, %v2245
  %2247 = vmatprep.mubr.bf16.mxu0 0
  %2248 = vmatmul.mubr.bf16.gmra.mxu0 %v2098
  %v2249 = vpop.f32.mrf.mxu0
  %v2250 = vadd.f32 %v1910, %v2249
  %v2251 = vpop.f32.mrf.mxu0
  %v2252 = vadd.f32 %v1912, %v2251
  %v2253 = vpop.f32.mrf.mxu0
  %v2254 = vadd.f32 %v1914, %v2253
  %v2255 = vpop.f32.mrf.mxu0
  %v2256 = vadd.f32 %v1916, %v2255
  %2257 = vdwg.mxu0
  %v2258 = vpack.c.bf16 %v603, %v602
  %v2259 = vpack.c.bf16 %v605, %v604
  %v2260 = vpack.c.bf16 %v607, %v606
  %v2261 = vpack.c.bf16 %v609, %v608
  %v2262 = vpack.c.bf16 %v641, %v640
  %v2263 = vpack.c.bf16 %v643, %v642
  %v2264 = vpack.c.bf16 %v645, %v644
  %v2265 = vpack.c.bf16 %v647, %v646
  %2267 = vset.pattern.permute.xlu0 0
  %2268 = vperm.xlu0 %2267, %v2258
  %v2269 = vpop.permute.xlu0 %2268
  %2271 = vset.pattern.permute.xlu0 0
  %2272 = vperm.xlu0 %2271, %v2259
  %v2273 = vpop.permute.xlu0 %2272
  %2275 = vset.pattern.permute.xlu0 0
  %2276 = vperm.xlu0 %2275, %v2260
  %v2277 = vpop.permute.xlu0 %2276
  %2279 = vset.pattern.permute.xlu0 0
  %2280 = vperm.xlu0 %2279, %v2261
  %v2281 = vpop.permute.xlu0 %2280
  %v2287 = vunpack.c.l.s4 839922192
  %v2288 = vunpack.c.0.s8 %v2287
  %v2289 = vlaneseq
  %v2290 = vshrl.u32 %v2289, 7
  %v2291 = vsub.s32 %v2288, %v2290
  %v2292 = vrot.slane %v2269, %v2291
  %v2294 = vunpack.c.l.s4 1985246804
  %v2295 = vunpack.c.0.s8 %v2294
  %v2296 = vlaneseq
  %v2297 = vshrl.u32 %v2296, 7
  %v2298 = vsub.s32 %v2295, %v2297
  %v2299 = vrot.slane %v2269, %v2298
  %v2301 = vunpack.c.l.s4 839922192
  %v2302 = vunpack.c.0.s8 %v2301
  %v2303 = vlaneseq
  %v2304 = vshrl.u32 %v2303, 7
  %v2305 = vsub.s32 %v2302, %v2304
  %v2306 = vrot.slane %v2273, %v2305
  %v2308 = vunpack.c.l.s4 1985246804
  %v2309 = vunpack.c.0.s8 %v2308
  %v2310 = vlaneseq
  %v2311 = vshrl.u32 %v2310, 7
  %v2312 = vsub.s32 %v2309, %v2311
  %v2313 = vrot.slane %v2273, %v2312
  %v2315 = vunpack.c.l.s4 839922192
  %v2316 = vunpack.c.0.s8 %v2315
  %v2317 = vlaneseq
  %v2318 = vshrl.u32 %v2317, 7
  %v2319 = vsub.s32 %v2316, %v2318
  %v2320 = vrot.slane %v2277, %v2319
  %v2322 = vunpack.c.l.s4 1985246804
  %v2323 = vunpack.c.0.s8 %v2322
  %v2324 = vlaneseq
  %v2325 = vshrl.u32 %v2324, 7
  %v2326 = vsub.s32 %v2323, %v2325
  %v2327 = vrot.slane %v2277, %v2326
  %v2329 = vunpack.c.l.s4 839922192
  %v2330 = vunpack.c.0.s8 %v2329
  %v2331 = vlaneseq
  %v2332 = vshrl.u32 %v2331, 7
  %v2333 = vsub.s32 %v2330, %v2332
  %v2334 = vrot.slane %v2281, %v2333
  %v2336 = vunpack.c.l.s4 1985246804
  %v2337 = vunpack.c.0.s8 %v2336
  %v2338 = vlaneseq
  %v2339 = vshrl.u32 %v2338, 7
  %v2340 = vsub.s32 %v2337, %v2339
  %v2341 = vrot.slane %v2281, %v2340
  %v2350 = vmul.bf16 %v556, %v2292
  %v2351 = vmul.bf16 %v557, %v2292
  %v2352 = vmul.bf16 %v558, %v2299
  %v2353 = vmul.bf16 %v559, %v2299
  %v2354 = vmul.bf16 %v560, %v2306
  %v2355 = vmul.bf16 %v561, %v2306
  %v2356 = vmul.bf16 %v562, %v2313
  %v2357 = vmul.bf16 %v563, %v2313
  %v2358 = vmul.bf16 %v564, %v2320
  %v2359 = vmul.bf16 %v565, %v2320
  %v2360 = vmul.bf16 %v566, %v2327
  %v2361 = vmul.bf16 %v567, %v2327
  %v2362 = vmul.bf16 %v568, %v2334
  %v2363 = vmul.bf16 %v569, %v2334
  %v2364 = vmul.bf16 %v570, %v2341
  %v2365 = vmul.bf16 %v571, %v2341
  %2367 = vset.pattern.permute.xlu0 0
  %2368 = vperm.xlu0 %2367, %v2262
  %v2369 = vpop.permute.xlu0 %2368
  %2371 = vset.pattern.permute.xlu0 0
  %2372 = vperm.xlu0 %2371, %v2263
  %v2373 = vpop.permute.xlu0 %2372
  %2375 = vset.pattern.permute.xlu0 0
  %2376 = vperm.xlu0 %2375, %v2264
  %v2377 = vpop.permute.xlu0 %2376
  %2379 = vset.pattern.permute.xlu0 0
  %2380 = vperm.xlu0 %2379, %v2265
  %v2381 = vpop.permute.xlu0 %2380
  %v2387 = vunpack.c.l.s4 839922192
  %v2388 = vunpack.c.0.s8 %v2387
  %v2389 = vlaneseq
  %v2390 = vshrl.u32 %v2389, 7
  %v2391 = vsub.s32 %v2388, %v2390
  %v2392 = vrot.slane %v2369, %v2391
  %v2394 = vunpack.c.l.s4 1985246804
  %v2395 = vunpack.c.0.s8 %v2394
  %v2396 = vlaneseq
  %v2397 = vshrl.u32 %v2396, 7
  %v2398 = vsub.s32 %v2395, %v2397
  %v2399 = vrot.slane %v2369, %v2398
  %v2401 = vunpack.c.l.s4 839922192
  %v2402 = vunpack.c.0.s8 %v2401
  %v2403 = vlaneseq
  %v2404 = vshrl.u32 %v2403, 7
  %v2405 = vsub.s32 %v2402, %v2404
  %v2406 = vrot.slane %v2373, %v2405
  %v2408 = vunpack.c.l.s4 1985246804
  %v2409 = vunpack.c.0.s8 %v2408
  %v2410 = vlaneseq
  %v2411 = vshrl.u32 %v2410, 7
  %v2412 = vsub.s32 %v2409, %v2411
  %v2413 = vrot.slane %v2373, %v2412
  %v2415 = vunpack.c.l.s4 839922192
  %v2416 = vunpack.c.0.s8 %v2415
  %v2417 = vlaneseq
  %v2418 = vshrl.u32 %v2417, 7
  %v2419 = vsub.s32 %v2416, %v2418
  %v2420 = vrot.slane %v2377, %v2419
  %v2422 = vunpack.c.l.s4 1985246804
  %v2423 = vunpack.c.0.s8 %v2422
  %v2424 = vlaneseq
  %v2425 = vshrl.u32 %v2424, 7
  %v2426 = vsub.s32 %v2423, %v2425
  %v2427 = vrot.slane %v2377, %v2426
  %v2429 = vunpack.c.l.s4 839922192
  %v2430 = vunpack.c.0.s8 %v2429
  %v2431 = vlaneseq
  %v2432 = vshrl.u32 %v2431, 7
  %v2433 = vsub.s32 %v2430, %v2432
  %v2434 = vrot.slane %v2381, %v2433
  %v2436 = vunpack.c.l.s4 1985246804
  %v2437 = vunpack.c.0.s8 %v2436
  %v2438 = vlaneseq
  %v2439 = vshrl.u32 %v2438, 7
  %v2440 = vsub.s32 %v2437, %v2439
  %v2441 = vrot.slane %v2381, %v2440
  %v2450 = vadd.bf16 %v2350, %v2392
  %v2451 = vadd.bf16 %v2351, %v2392
  %v2452 = vadd.bf16 %v2352, %v2399
  %v2453 = vadd.bf16 %v2353, %v2399
  %v2454 = vadd.bf16 %v2354, %v2406
  %v2455 = vadd.bf16 %v2355, %v2406
  %v2456 = vadd.bf16 %v2356, %v2413
  %v2457 = vadd.bf16 %v2357, %v2413
  %v2458 = vadd.bf16 %v2358, %v2420
  %v2459 = vadd.bf16 %v2359, %v2420
  %v2460 = vadd.bf16 %v2360, %v2427
  %v2461 = vadd.bf16 %v2361, %v2427
  %v2462 = vadd.bf16 %v2362, %v2434
  %v2463 = vadd.bf16 %v2363, %v2434
  %v2464 = vadd.bf16 %v2364, %v2441
  %v2465 = vadd.bf16 %v2365, %v2441
  %v2466 = vmul.bf16 %v2450, 1009007652
  %v2467 = vmul.bf16 %v2451, 1009007652
  %v2468 = vmul.bf16 %v2452, 1009007652
  %v2469 = vmul.bf16 %v2453, 1009007652
  %v2470 = vmul.bf16 %v2454, 1009007652
  %v2471 = vmul.bf16 %v2455, 1009007652
  %v2472 = vmul.bf16 %v2456, 1009007652
  %v2473 = vmul.bf16 %v2457, 1009007652
  %v2474 = vmul.bf16 %v2458, 1009007652
  %v2475 = vmul.bf16 %v2459, 1009007652
  %v2476 = vmul.bf16 %v2460, 1009007652
  %v2477 = vmul.bf16 %v2461, 1009007652
  %v2478 = vmul.bf16 %v2462, 1009007652
  %v2479 = vmul.bf16 %v2463, 1009007652
  %v2480 = vmul.bf16 %v2464, 1009007652
  %v2481 = vmul.bf16 %v2465, 1009007652
  %v2482 = vmax.bf16 %v2450, %v2466
  %v2483 = vmax.bf16 %v2451, %v2467
  %v2484 = vmax.bf16 %v2452, %v2468
  %v2485 = vmax.bf16 %v2453, %v2469
  %v2486 = vmax.bf16 %v2454, %v2470
  %v2487 = vmax.bf16 %v2455, %v2471
  %v2488 = vmax.bf16 %v2456, %v2472
  %v2489 = vmax.bf16 %v2457, %v2473
  %v2490 = vmax.bf16 %v2458, %v2474
  %v2491 = vmax.bf16 %v2459, %v2475
  %v2492 = vmax.bf16 %v2460, %v2476
  %v2493 = vmax.bf16 %v2461, %v2477
  %v2494 = vmax.bf16 %v2462, %v2478
  %v2495 = vmax.bf16 %v2463, %v2479
  %v2496 = vmax.bf16 %v2464, %v2480
  %v2497 = vmax.bf16 %v2465, %v2481
  %v2498 = vld [vmem:[%s8] sm:$0xf]
  %v2499 = vld [vmem:[%s8 + $0x4] sm:$0xf]
  %v2500 = vld [vmem:[%s8 + $0x8] sm:$0xf]
  %v2501 = vld [vmem:[%s8 + $0xc] sm:$0xf]
  %v2502 = vld [vmem:[%s8 + $0x10] sm:$0xf]
  %v2503 = vld [vmem:[%s8 + $0x14] sm:$0xf]
  %v2504 = vld [vmem:[%s8 + $0x18] sm:$0xf]
  %v2505 = vld [vmem:[%s8 + $0x1c] sm:$0x3]
  %v2514 = vunpack.c.l.b16 %v2498
  %v2515 = vunpack.c.l.b16 %v2499
  %v2516 = vunpack.c.l.b16 %v2500
  %v2517 = vunpack.c.l.b16 %v2501
  %v2518 = vunpack.c.l.b16 %v2502
  %v2519 = vunpack.c.l.b16 %v2503
  %v2520 = vunpack.c.l.b16 %v2504
  %v2521 = vunpack.c.l.b16 %v2505
  %v2522 = vpack.c.b16 %v2515, %v2514
  %v2523 = vpack.c.b16 %v2517, %v2516
  %v2524 = vpack.c.b16 %v2519, %v2518
  %v2525 = vpack.c.b16 %v2521, %v2520
  %v2542 = vunpack.c.l.b16 %v2482
  %v2543 = vunpack.c.h.b16 %v2482
  %v2544 = vunpack.c.l.b16 %v2483
  %v2545 = vunpack.c.h.b16 %v2483
  %v2546 = vunpack.c.l.b16 %v2484
  %v2547 = vunpack.c.h.b16 %v2484
  %v2548 = vunpack.c.l.b16 %v2485
  %v2549 = vunpack.c.h.b16 %v2485
  %v2550 = vunpack.c.l.b16 %v2486
  %v2551 = vunpack.c.h.b16 %v2486
  %v2552 = vunpack.c.l.b16 %v2487
  %v2553 = vunpack.c.h.b16 %v2487
  %v2554 = vunpack.c.l.b16 %v2488
  %v2555 = vunpack.c.h.b16 %v2488
  %v2556 = vunpack.c.l.b16 %v2489
  %v2557 = vunpack.c.h.b16 %v2489
  %v2558 = vunpack.c.l.b16 %v2490
  %v2559 = vunpack.c.h.b16 %v2490
  %v2560 = vunpack.c.l.b16 %v2491
  %v2561 = vunpack.c.h.b16 %v2491
  %v2562 = vunpack.c.l.b16 %v2492
  %v2563 = vunpack.c.h.b16 %v2492
  %v2564 = vunpack.c.l.b16 %v2493
  %v2565 = vunpack.c.h.b16 %v2493
  %v2566 = vunpack.c.l.b16 %v2494
  %v2567 = vunpack.c.h.b16 %v2494
  %v2568 = vunpack.c.l.b16 %v2495
  %v2569 = vunpack.c.h.b16 %v2495
  %v2570 = vunpack.c.l.b16 %v2496
  %v2571 = vunpack.c.h.b16 %v2496
  %v2572 = vunpack.c.l.b16 %v2497
  %v2573 = vunpack.c.h.b16 %v2497
  %v2574 = vpack.c.b16 %v2546, %v2542
  %v2575 = vpack.c.b16 %v2547, %v2543
  %v2576 = vpack.c.b16 %v2548, %v2544
  %v2577 = vpack.c.b16 %v2549, %v2545
  %v2578 = vpack.c.b16 %v2554, %v2550
  %v2579 = vpack.c.b16 %v2555, %v2551
  %v2580 = vpack.c.b16 %v2556, %v2552
  %v2581 = vpack.c.b16 %v2557, %v2553
  %v2582 = vpack.c.b16 %v2562, %v2558
  %v2583 = vpack.c.b16 %v2563, %v2559
  %v2584 = vpack.c.b16 %v2564, %v2560
  %v2585 = vpack.c.b16 %v2565, %v2561
  %v2586 = vpack.c.b16 %v2570, %v2566
  %v2587 = vpack.c.b16 %v2571, %v2567
  %v2588 = vpack.c.b16 %v2572, %v2568
  %v2589 = vpack.c.b16 %v2573, %v2569
  %vm2602 = vcmask 490496
  %v2604 = vsel %vm2602, %v2522, 0
  %v2607 = vsel %vm2602, %v2523, 0
  %v2610 = vsel %vm2602, %v2524, 0
  %v2613 = vsel %vm2602, %v2525, 0
  %vm2615 = vcmask 1045504
  %v2617 = vsel %vm2615, %v2586, 0
  %v2620 = vsel %vm2615, %v2587, 0
  %v2623 = vsel %vm2615, %v2588, 0
  %v2626 = vsel %vm2615, %v2589, 0
  %2628 = vmatprep.subr.bf16.mxu0 0
  %2629 = vmatpush1.bf16.msra.mxu0 0
  %2630 = vmatprep.subr.bf16.mxu0 0
  %2631 = vmatpush1.bf16.msra.mxu0 0
  %2632 = vmatprep.subr.bf16.mxu0 0
  %2633 = vmatpush1.bf16.msra.mxu0 0
  %2634 = vmatprep.subr.bf16.mxu0 0
  %2635 = vmatpush1.bf16.msra.mxu0 0
  %2636 = vmatprep.subr.bf16.mxu0 %v2620
  %2637 = vmatpush1.bf16.msra.mxu0 %v2617
  %2638 = vmatprep.subr.bf16.mxu0 %v2583
  %2639 = vmatpush1.bf16.msra.mxu0 %v2582
  %2640 = vmatprep.subr.bf16.mxu0 %v2579
  %2641 = vmatpush1.bf16.msra.mxu0 %v2578
  %2642 = vmatprep.subr.bf16.mxu0 %v2575
  %2643 = vmatpush1.bf16.msra.mxu0 %v2574
  %2644 = vmatprep.subr.bf16.mxu0 0
  %2645 = vmatpush2.bf16.msra.mxu0 0
  %2646 = vmatprep.subr.bf16.mxu0 0
  %2647 = vmatpush2.bf16.msra.mxu0 0
  %2648 = vmatprep.subr.bf16.mxu0 0
  %2649 = vmatpush2.bf16.msra.mxu0 0
  %2650 = vmatprep.subr.bf16.mxu0 0
  %2651 = vmatpush2.bf16.msra.mxu0 0
  %2652 = vmatprep.subr.bf16.mxu0 0
  %2653 = vmatpush2.bf16.msra.mxu0 0
  %2654 = vmatprep.subr.bf16.mxu0 0
  %2655 = vmatpush2.bf16.msra.mxu0 0
  %2656 = vmatprep.subr.bf16.mxu0 0
  %2657 = vmatpush2.bf16.msra.mxu0 0
  %2658 = vmatprep.subr.bf16.mxu0 0
  %2659 = vmatpush2.bf16.msra.mxu0 0
  %2660 = vmatprep.mubr.bf16.mxu0 0
  %2661 = vmatmul.mubr.bf16.gmra.mxu0 %v2604
  %v2662 = vpop.f32.mrf.mxu0
  %v2663 = vadd.f32 0.0, %v2662
  %v2664 = vpop.f32.mrf.mxu0
  %v2665 = vadd.f32 0.0, %v2664
  %v2666 = vpop.f32.mrf.mxu0
  %v2667 = vadd.f32 0.0, %v2666
  %v2668 = vpop.f32.mrf.mxu0
  %v2669 = vadd.f32 0.0, %v2668
  %2670 = vmatprep.mubr.bf16.mxu0 0
  %2671 = vmatmul.mubr.bf16.gmra.mxu0 %v2607
  %v2672 = vpop.f32.mrf.mxu0
  %v2673 = vadd.f32 0.0, %v2672
  %v2674 = vpop.f32.mrf.mxu0
  %v2675 = vadd.f32 0.0, %v2674
  %v2676 = vpop.f32.mrf.mxu0
  %v2677 = vadd.f32 0.0, %v2676
  %v2678 = vpop.f32.mrf.mxu0
  %v2679 = vadd.f32 0.0, %v2678
  %2680 = vmatprep.mubr.bf16.mxu0 0
  %2681 = vmatmul.mubr.bf16.gmra.mxu0 %v2610
  %v2682 = vpop.f32.mrf.mxu0
  %v2683 = vadd.f32 0.0, %v2682
  %v2684 = vpop.f32.mrf.mxu0
  %v2685 = vadd.f32 0.0, %v2684
  %v2686 = vpop.f32.mrf.mxu0
  %v2687 = vadd.f32 0.0, %v2686
  %v2688 = vpop.f32.mrf.mxu0
  %v2689 = vadd.f32 0.0, %v2688
  %2690 = vmatprep.mubr.bf16.mxu0 0
  %2691 = vmatmul.mubr.bf16.gmra.mxu0 %v2613
  %v2692 = vpop.f32.mrf.mxu0
  %v2693 = vadd.f32 0.0, %v2692
  %v2694 = vpop.f32.mrf.mxu0
  %v2695 = vadd.f32 0.0, %v2694
  %v2696 = vpop.f32.mrf.mxu0
  %v2697 = vadd.f32 0.0, %v2696
  %v2698 = vpop.f32.mrf.mxu0
  %v2699 = vadd.f32 0.0, %v2698
  %2700 = vdwg.mxu0
  %2701 = vmatprep.subr.bf16.mxu0 0
  %2702 = vmatpush1.bf16.msra.mxu0 0
  %2703 = vmatprep.subr.bf16.mxu0 0
  %2704 = vmatpush1.bf16.msra.mxu0 0
  %2705 = vmatprep.subr.bf16.mxu0 0
  %2706 = vmatpush1.bf16.msra.mxu0 0
  %2707 = vmatprep.subr.bf16.mxu0 0
  %2708 = vmatpush1.bf16.msra.mxu0 0
  %2709 = vmatprep.subr.bf16.mxu0 %v2626
  %2710 = vmatpush1.bf16.msra.mxu0 %v2623
  %2711 = vmatprep.subr.bf16.mxu0 %v2585
  %2712 = vmatpush1.bf16.msra.mxu0 %v2584
  %2713 = vmatprep.subr.bf16.mxu0 %v2581
  %2714 = vmatpush1.bf16.msra.mxu0 %v2580
  %2715 = vmatprep.subr.bf16.mxu0 %v2577
  %2716 = vmatpush1.bf16.msra.mxu0 %v2576
  %2717 = vmatprep.subr.bf16.mxu0 0
  %2718 = vmatpush2.bf16.msra.mxu0 0
  %2719 = vmatprep.subr.bf16.mxu0 0
  %2720 = vmatpush2.bf16.msra.mxu0 0
  %2721 = vmatprep.subr.bf16.mxu0 0
  %2722 = vmatpush2.bf16.msra.mxu0 0
  %2723 = vmatprep.subr.bf16.mxu0 0
  %2724 = vmatpush2.bf16.msra.mxu0 0
  %2725 = vmatprep.subr.bf16.mxu0 0
  %2726 = vmatpush2.bf16.msra.mxu0 0
  %2727 = vmatprep.subr.bf16.mxu0 0
  %2728 = vmatpush2.bf16.msra.mxu0 0
  %2729 = vmatprep.subr.bf16.mxu0 0
  %2730 = vmatpush2.bf16.msra.mxu0 0
  %2731 = vmatprep.subr.bf16.mxu0 0
  %2732 = vmatpush2.bf16.msra.mxu0 0
  %2733 = vmatprep.mubr.bf16.mxu0 0
  %2734 = vmatmul.mubr.bf16.gmra.mxu0 %v2604
  %v2735 = vpop.f32.mrf.mxu0
  %v2736 = vadd.f32 0.0, %v2735
  %v2737 = vpop.f32.mrf.mxu0
  %v2738 = vadd.f32 0.0, %v2737
  %v2739 = vpop.f32.mrf.mxu0
  %v2740 = vadd.f32 0.0, %v2739
  %v2741 = vpop.f32.mrf.mxu0
  %v2742 = vadd.f32 0.0, %v2741
  %2743 = vmatprep.mubr.bf16.mxu0 0
  %2744 = vmatmul.mubr.bf16.gmra.mxu0 %v2607
  %v2745 = vpop.f32.mrf.mxu0
  %v2746 = vadd.f32 0.0, %v2745
  %v2747 = vpop.f32.mrf.mxu0
  %v2748 = vadd.f32 0.0, %v2747
  %v2749 = vpop.f32.mrf.mxu0
  %v2750 = vadd.f32 0.0, %v2749
  %v2751 = vpop.f32.mrf.mxu0
  %v2752 = vadd.f32 0.0, %v2751
  %2753 = vmatprep.mubr.bf16.mxu0 0
  %2754 = vmatmul.mubr.bf16.gmra.mxu0 %v2610
  %v2755 = vpop.f32.mrf.mxu0
  %v2756 = vadd.f32 0.0, %v2755
  %v2757 = vpop.f32.mrf.mxu0
  %v2758 = vadd.f32 0.0, %v2757
  %v2759 = vpop.f32.mrf.mxu0
  %v2760 = vadd.f32 0.0, %v2759
  %v2761 = vpop.f32.mrf.mxu0
  %v2762 = vadd.f32 0.0, %v2761
  %2763 = vmatprep.mubr.bf16.mxu0 0
  %2764 = vmatmul.mubr.bf16.gmra.mxu0 %v2613
  %v2765 = vpop.f32.mrf.mxu0
  %v2766 = vadd.f32 0.0, %v2765
  %v2767 = vpop.f32.mrf.mxu0
  %v2768 = vadd.f32 0.0, %v2767
  %v2769 = vpop.f32.mrf.mxu0
  %v2770 = vadd.f32 0.0, %v2769
  %v2771 = vpop.f32.mrf.mxu0
  %v2772 = vadd.f32 0.0, %v2771
  %2773 = vdwg.mxu0
  %v2774 = vadd.f32 %v2147, %v2663
  %v2775 = vadd.f32 %v2149, %v2665
  %v2776 = vadd.f32 %v2220, %v2736
  %v2777 = vadd.f32 %v2222, %v2738
  %v2778 = vadd.f32 %v2151, %v2667
  %v2779 = vadd.f32 %v2153, %v2669
  %v2780 = vadd.f32 %v2224, %v2740
  %v2781 = vadd.f32 %v2226, %v2742
  %v2782 = vadd.f32 %v2157, %v2673
  %v2783 = vadd.f32 %v2159, %v2675
  %v2784 = vadd.f32 %v2230, %v2746
  %v2785 = vadd.f32 %v2232, %v2748
  %v2786 = vadd.f32 %v2161, %v2677
  %v2787 = vadd.f32 %v2163, %v2679
  %v2788 = vadd.f32 %v2234, %v2750
  %v2789 = vadd.f32 %v2236, %v2752
  %v2790 = vadd.f32 %v2167, %v2683
  %v2791 = vadd.f32 %v2169, %v2685
  %v2792 = vadd.f32 %v2240, %v2756
  %v2793 = vadd.f32 %v2242, %v2758
  %v2794 = vadd.f32 %v2171, %v2687
  %v2795 = vadd.f32 %v2173, %v2689
  %v2796 = vadd.f32 %v2244, %v2760
  %v2797 = vadd.f32 %v2246, %v2762
  %v2798 = vadd.f32 %v2177, %v2693
  %v2799 = vadd.f32 %v2179, %v2695
  %v2800 = vadd.f32 %v2250, %v2766
  %v2801 = vadd.f32 %v2252, %v2768
  %v2802 = vadd.f32 %v2181, %v2697
  %v2803 = vadd.f32 %v2183, %v2699
  %v2804 = vadd.f32 %v2254, %v2770
  %v2805 = vadd.f32 %v2256, %v2772
  %v2806 = vld [vmem:[%s9] sm:$0xff]
  %v2807 = vld [vmem:[%s9 + $0x8] sm:$0xff]
  %v2808 = vld [vmem:[%s9 + $0x10] sm:$0xff]
  %v2809 = vld [vmem:[%s9 + $0x18] sm:$0xff]
  %v2810 = vld [vmem:[%s9 + $0x20] sm:$0xff]
  %v2811 = vld [vmem:[%s9 + $0x28] sm:$0xff]
  %v2812 = vld [vmem:[%s9 + $0x30] sm:$0xff]
  %v2813 = vld [vmem:[%s9 + $0x38] sm:$0xf]
  %2815 = vset.pattern.permute.xlu0 0
  %2816 = vperm.xlu0 %2815, %v2806
  %v2817 = vpop.permute.xlu0 %2816
  %2820 = vset.pattern.permute.xlu0 0
  %2821 = vperm.xlu0 %2820, %v2807
  %v2822 = vpop.permute.xlu0 %2821
  %2825 = vset.pattern.permute.xlu0 0
  %2826 = vperm.xlu0 %2825, %v2808
  %v2827 = vpop.permute.xlu0 %2826
  %2830 = vset.pattern.permute.xlu0 0
  %2831 = vperm.xlu0 %2830, %v2809
  %v2832 = vpop.permute.xlu0 %2831
  %2835 = vset.pattern.permute.xlu0 0
  %2836 = vperm.xlu0 %2835, %v2810
  %v2837 = vpop.permute.xlu0 %2836
  %2840 = vset.pattern.permute.xlu0 0
  %2841 = vperm.xlu0 %2840, %v2811
  %v2842 = vpop.permute.xlu0 %2841
  %2845 = vset.pattern.permute.xlu0 0
  %2846 = vperm.xlu0 %2845, %v2812
  %v2847 = vpop.permute.xlu0 %2846
  %2850 = vset.pattern.permute.xlu0 0
  %2851 = vperm.xlu0 %2850, %v2813
  %v2852 = vpop.permute.xlu0 %2851
  %v2854 = vadd.f32 %v2774, %v2817
  %v2855 = vadd.f32 %v2775, %v2817
  %v2856 = vadd.f32 %v2776, %v2817
  %v2857 = vadd.f32 %v2777, %v2817
  %v2858 = vadd.f32 %v2778, %v2822
  %v2859 = vadd.f32 %v2779, %v2822
  %v2860 = vadd.f32 %v2780, %v2822
  %v2861 = vadd.f32 %v2781, %v2822
  %v2862 = vadd.f32 %v2782, %v2827
  %v2863 = vadd.f32 %v2783, %v2827
  %v2864 = vadd.f32 %v2784, %v2827
  %v2865 = vadd.f32 %v2785, %v2827
  %v2866 = vadd.f32 %v2786, %v2832
  %v2867 = vadd.f32 %v2787, %v2832
  %v2868 = vadd.f32 %v2788, %v2832
  %v2869 = vadd.f32 %v2789, %v2832
  %v2870 = vadd.f32 %v2790, %v2837
  %v2871 = vadd.f32 %v2791, %v2837
  %v2872 = vadd.f32 %v2792, %v2837
  %v2873 = vadd.f32 %v2793, %v2837
  %v2874 = vadd.f32 %v2794, %v2842
  %v2875 = vadd.f32 %v2795, %v2842
  %v2876 = vadd.f32 %v2796, %v2842
  %v2877 = vadd.f32 %v2797, %v2842
  %v2878 = vadd.f32 %v2798, %v2847
  %v2879 = vadd.f32 %v2799, %v2847
  %v2880 = vadd.f32 %v2800, %v2847
  %v2881 = vadd.f32 %v2801, %v2847
  %v2882 = vadd.f32 %v2802, %v2852
  %v2883 = vadd.f32 %v2803, %v2852
  %v2884 = vadd.f32 %v2804, %v2852
  %v2885 = vadd.f32 %v2805, %v2852
  %v2886 = vpack.c.bf16 %v2858, %v2854
  %v2887 = vpack.c.bf16 %v2859, %v2855
  %v2888 = vpack.c.bf16 %v2860, %v2856
  %v2889 = vpack.c.bf16 %v2861, %v2857
  %v2890 = vpack.c.bf16 %v2866, %v2862
  %v2891 = vpack.c.bf16 %v2867, %v2863
  %v2892 = vpack.c.bf16 %v2868, %v2864
  %v2893 = vpack.c.bf16 %v2869, %v2865
  %v2894 = vpack.c.bf16 %v2874, %v2870
  %v2895 = vpack.c.bf16 %v2875, %v2871
  %v2896 = vpack.c.bf16 %v2876, %v2872
  %v2897 = vpack.c.bf16 %v2877, %v2873
  %v2898 = vpack.c.bf16 %v2882, %v2878
  %v2899 = vpack.c.bf16 %v2883, %v2879
  %v2900 = vpack.c.bf16 %v2884, %v2880
  %v2901 = vpack.c.bf16 %v2885, %v2881
  %v2918 = vunpack.c.l.b16 %v2886
  %v2919 = vunpack.c.l.b16 %v2887
  %v2920 = vunpack.c.l.b16 %v2888
  %v2921 = vunpack.c.l.b16 %v2889
  %v2922 = vunpack.c.h.b16 %v2886
  %v2923 = vunpack.c.h.b16 %v2887
  %v2924 = vunpack.c.h.b16 %v2888
  %v2925 = vunpack.c.h.b16 %v2889
  %v2926 = vunpack.c.l.b16 %v2890
  %v2927 = vunpack.c.l.b16 %v2891
  %v2928 = vunpack.c.l.b16 %v2892
  %v2929 = vunpack.c.l.b16 %v2893
  %v2930 = vunpack.c.h.b16 %v2890
  %v2931 = vunpack.c.h.b16 %v2891
  %v2932 = vunpack.c.h.b16 %v2892
  %v2933 = vunpack.c.h.b16 %v2893
  %v2934 = vunpack.c.l.b16 %v2894
  %v2935 = vunpack.c.l.b16 %v2895
  %v2936 = vunpack.c.l.b16 %v2896
  %v2937 = vunpack.c.l.b16 %v2897
  %v2938 = vunpack.c.h.b16 %v2894
  %v2939 = vunpack.c.h.b16 %v2895
  %v2940 = vunpack.c.h.b16 %v2896
  %v2941 = vunpack.c.h.b16 %v2897
  %v2942 = vunpack.c.l.b16 %v2898
  %v2943 = vunpack.c.l.b16 %v2899
  %v2944 = vunpack.c.l.b16 %v2900
  %v2945 = vunpack.c.l.b16 %v2901
  %v2946 = vunpack.c.h.b16 %v2898
  %v2947 = vunpack.c.h.b16 %v2899
  %v2948 = vunpack.c.h.b16 %v2900
  %v2949 = vunpack.c.h.b16 %v2901
  %v2950 = vpack.c.b16 %v2919, %v2918
  %v2951 = vpack.c.b16 %v2921, %v2920
  %v2952 = vpack.c.b16 %v2923, %v2922
  %v2953 = vpack.c.b16 %v2925, %v2924
  %v2954 = vpack.c.b16 %v2927, %v2926
  %v2955 = vpack.c.b16 %v2929, %v2928
  %v2956 = vpack.c.b16 %v2931, %v2930
  %v2957 = vpack.c.b16 %v2933, %v2932
  %v2958 = vpack.c.b16 %v2935, %v2934
  %v2959 = vpack.c.b16 %v2937, %v2936
  %v2960 = vpack.c.b16 %v2939, %v2938
  %v2961 = vpack.c.b16 %v2941, %v2940
  %v2962 = vpack.c.b16 %v2943, %v2942
  %v2963 = vpack.c.b16 %v2945, %v2944
  %v2964 = vpack.c.b16 %v2947, %v2946
  %v2965 = vpack.c.b16 %v2949, %v2948
  %2982 = vst [vmem:[%s10] sm:$0xff] %v2950
  %2983 = vst [vmem:[%s10 + $0x8] sm:$0xff] %v2951
  %2984 = vst [vmem:[%s10 + $0x10] sm:$0xff] %v2952
  %2985 = vst [vmem:[%s10 + $0x18] sm:$0xff] %v2953
  %2986 = vst [vmem:[%s10 + $0x20] sm:$0xff] %v2954
  %2987 = vst [vmem:[%s10 + $0x28] sm:$0xff] %v2955
  %2988 = vst [vmem:[%s10 + $0x30] sm:$0xff] %v2956
  %2989 = vst [vmem:[%s10 + $0x38] sm:$0xff] %v2957
  %2990 = vst [vmem:[%s10 + $0x40] sm:$0xff] %v2958
  %2991 = vst [vmem:[%s10 + $0x48] sm:$0xff] %v2959
  %2992 = vst [vmem:[%s10 + $0x50] sm:$0xff] %v2960
  %2993 = vst [vmem:[%s10 + $0x58] sm:$0xff] %v2961
  %2994 = vst [vmem:[%s10 + $0x60] sm:$0xff] %v2962
  %2995 = vst [vmem:[%s10 + $0x68] sm:$0xff] %v2963
  %2996 = vst [vmem:[%s10 + $0x70] sm:$0x33] %v2964
  %2997 = vst [vmem:[%s10 + $0x78] sm:$0x33] %v2965
  %v2998 = vunpack.c.l.bf16 %v2886
  %v2999 = vunpack.c.l.bf16 %v2887
  %v3000 = vunpack.c.l.bf16 %v2888
  %v3001 = vunpack.c.l.bf16 %v2889
  %v3002 = vunpack.c.h.bf16 %v2886
  %v3003 = vunpack.c.h.bf16 %v2887
  %v3004 = vunpack.c.h.bf16 %v2888
  %v3005 = vunpack.c.h.bf16 %v2889
  %v3006 = vunpack.c.l.bf16 %v2890
  %v3007 = vunpack.c.l.bf16 %v2891
  %v3008 = vunpack.c.l.bf16 %v2892
  %v3009 = vunpack.c.l.bf16 %v2893
  %v3010 = vunpack.c.h.bf16 %v2890
  %v3011 = vunpack.c.h.bf16 %v2891
  %v3012 = vunpack.c.h.bf16 %v2892
  %v3013 = vunpack.c.h.bf16 %v2893
  %v3014 = vunpack.c.l.bf16 %v2894
  %v3015 = vunpack.c.l.bf16 %v2895
  %v3016 = vunpack.c.l.bf16 %v2896
  %v3017 = vunpack.c.l.bf16 %v2897
  %v3018 = vunpack.c.h.bf16 %v2894
  %v3019 = vunpack.c.h.bf16 %v2895
  %v3020 = vunpack.c.h.bf16 %v2896
  %v3021 = vunpack.c.h.bf16 %v2897
  %v3022 = vunpack.c.l.bf16 %v2898
  %v3023 = vunpack.c.l.bf16 %v2899
  %v3024 = vunpack.c.l.bf16 %v2900
  %v3025 = vunpack.c.l.bf16 %v2901
  %v3026 = vunpack.c.h.bf16 %v2898
  %v3027 = vunpack.c.h.bf16 %v2899
  %v3028 = vunpack.c.h.bf16 %v2900
  %v3029 = vunpack.c.h.bf16 %v2901
  %v3030 = vadd.f32 %v2998, %v2999
  %v3031 = vadd.f32 %v3002, %v3003
  %v3032 = vadd.f32 %v3006, %v3007
  %v3033 = vadd.f32 %v3010, %v3011
  %v3034 = vadd.f32 %v3014, %v3015
  %v3035 = vadd.f32 %v3018, %v3019
  %v3036 = vadd.f32 %v3022, %v3023
  %v3037 = vadd.f32 %v3026, %v3027
  %v3038 = vadd.f32 %v3030, %v3000
  %v3039 = vadd.f32 %v3031, %v3004
  %v3040 = vadd.f32 %v3032, %v3008
  %v3041 = vadd.f32 %v3033, %v3012
  %v3042 = vadd.f32 %v3034, %v3016
  %v3043 = vadd.f32 %v3035, %v3020
  %v3044 = vadd.f32 %v3036, %v3024
  %v3045 = vadd.f32 %v3037, %v3028
  %v3046 = vadd.f32 %v3038, %v3001
  %v3047 = vadd.f32 %v3039, %v3005
  %v3048 = vadd.f32 %v3040, %v3009
  %v3049 = vadd.f32 %v3041, %v3013
  %v3050 = vadd.f32 %v3042, %v3017
  %v3051 = vadd.f32 %v3043, %v3021
  %v3052 = vadd.f32 %v3044, %v3025
  %v3053 = vadd.f32 %v3045, %v3029
  %v3054 = vmul.f32 %v2998, %v2998
  %v3055 = vmul.f32 %v2999, %v2999
  %v3056 = vmul.f32 %v3000, %v3000
  %v3057 = vmul.f32 %v3001, %v3001
  %v3058 = vmul.f32 %v3002, %v3002
  %v3059 = vmul.f32 %v3003, %v3003
  %v3060 = vmul.f32 %v3004, %v3004
  %v3061 = vmul.f32 %v3005, %v3005
  %v3062 = vmul.f32 %v3006, %v3006
  %v3063 = vmul.f32 %v3007, %v3007
  %v3064 = vmul.f32 %v3008, %v3008
  %v3065 = vmul.f32 %v3009, %v3009
  %v3066 = vmul.f32 %v3010, %v3010
  %v3067 = vmul.f32 %v3011, %v3011
  %v3068 = vmul.f32 %v3012, %v3012
  %v3069 = vmul.f32 %v3013, %v3013
  %v3070 = vmul.f32 %v3014, %v3014
  %v3071 = vmul.f32 %v3015, %v3015
  %v3072 = vmul.f32 %v3016, %v3016
  %v3073 = vmul.f32 %v3017, %v3017
  %v3074 = vmul.f32 %v3018, %v3018
  %v3075 = vmul.f32 %v3019, %v3019
  %v3076 = vmul.f32 %v3020, %v3020
  %v3077 = vmul.f32 %v3021, %v3021
  %v3078 = vmul.f32 %v3022, %v3022
  %v3079 = vmul.f32 %v3023, %v3023
  %v3080 = vmul.f32 %v3024, %v3024
  %v3081 = vmul.f32 %v3025, %v3025
  %v3082 = vmul.f32 %v3026, %v3026
  %v3083 = vmul.f32 %v3027, %v3027
  %v3084 = vmul.f32 %v3028, %v3028
  %v3085 = vmul.f32 %v3029, %v3029
  %v3086 = vadd.f32 %v3054, %v3055
  %v3087 = vadd.f32 %v3058, %v3059
  %v3088 = vadd.f32 %v3062, %v3063
  %v3089 = vadd.f32 %v3066, %v3067
  %v3090 = vadd.f32 %v3070, %v3071
  %v3091 = vadd.f32 %v3074, %v3075
  %v3092 = vadd.f32 %v3078, %v3079
  %v3093 = vadd.f32 %v3082, %v3083
  %v3094 = vadd.f32 %v3086, %v3056
  %v3095 = vadd.f32 %v3087, %v3060
  %v3096 = vadd.f32 %v3088, %v3064
  %v3097 = vadd.f32 %v3089, %v3068
  %v3098 = vadd.f32 %v3090, %v3072
  %v3099 = vadd.f32 %v3091, %v3076
  %v3100 = vadd.f32 %v3092, %v3080
  %v3101 = vadd.f32 %v3093, %v3084
  %v3102 = vadd.f32 %v3094, %v3057
  %v3103 = vadd.f32 %v3095, %v3061
  %v3104 = vadd.f32 %v3096, %v3065
  %v3105 = vadd.f32 %v3097, %v3069
  %v3106 = vadd.f32 %v3098, %v3073
  %v3107 = vadd.f32 %v3099, %v3077
  %v3108 = vadd.f32 %v3100, %v3081
  %v3109 = vadd.f32 %v3101, %v3085
  %3110 = vst [vmem:[%s11] sm:$0xff] %v3046
  %3111 = vst [vmem:[%s11 + $0x8] sm:$0xff] %v3047
  %3112 = vst [vmem:[%s11 + $0x10] sm:$0xff] %v3048
  %3113 = vst [vmem:[%s11 + $0x18] sm:$0xff] %v3049
  %3114 = vst [vmem:[%s11 + $0x20] sm:$0xff] %v3050
  %3115 = vst [vmem:[%s11 + $0x28] sm:$0xff] %v3051
  %3116 = vst [vmem:[%s11 + $0x30] sm:$0xff] %v3052
  %3117 = vst [vmem:[%s11 + $0x38] sm:$0xf] %v3053
  %3118 = vst [vmem:[%s12] sm:$0xff] %v3102
  %3119 = vst [vmem:[%s12 + $0x8] sm:$0xff] %v3103
  %3120 = vst [vmem:[%s12 + $0x10] sm:$0xff] %v3104
  %3121 = vst [vmem:[%s12 + $0x18] sm:$0xff] %v3105
  %3122 = vst [vmem:[%s12 + $0x20] sm:$0xff] %v3106
  %3123 = vst [vmem:[%s12 + $0x28] sm:$0xff] %v3107
  %3124 = vst [vmem:[%s12 + $0x30] sm:$0xff] %v3108
  %3125 = vst [vmem:[%s12 + $0x38] sm:$0xf] %v3109
  // Predicated region
  $region42: #{m_resblock1_forward.7} parent=0 // pred_check
    _
  $region43: #{m_resblock1_forward.7} parent=0 // pred_check_branch
    %3127 = sbr.rel (0) target = $region45
  $region44: #{m_resblock1_forward.7} parent=0 // pred_region
    _
  $region45: #{m_resblock1_forward.7} parent=0 // pred_fallthru
    _
  // Predicated region
  $region46: #{m_resblock1_forward.7} parent=0 // pred_check
    _
  $region47: #{m_resblock1_forward.7} parent=0 // pred_check_branch
    %3129 = sbr.rel (0) target = $region49
  $region48: #{m_resblock1_forward.7} parent=0 // pred_region
    _
  $region49: #{m_resblock1_forward.7} parent=0 // pred_fallthru
    _
  // Predicated region
  $region50: #{m_resblock1_forward.7} parent=0 // pred_check
    _
  $region51: #{m_resblock1_forward.7} parent=0 // pred_check_branch
    %3131 = sbr.rel (0) target = $region53
  $region52: #{m_resblock1_forward.7} parent=0 // pred_region
    _
  $region53: #{m_resblock1_forward.7} parent=0 // pred_fallthru
    _
  // Predicated region
  $region54: #{m_resblock1_forward.7} parent=0 // pred_check
    _
  $region55: #{m_resblock1_forward.7} parent=0 // pred_check_branch
    %3133 = sbr.rel (0) target = $region57
  $region56: #{m_resblock1_forward.7} parent=0 // pred_region
    _
  $region57: #{m_resblock1_forward.7} parent=0 // pred_fallthru
    _
  // Predicated region
  $region58: #{m_resblock1_forward.7} parent=0 // pred_check
    _
  $region59: #{m_resblock1_forward.7} parent=0 // pred_check_branch
    %3135 = sbr.rel (0) target = $region61
  $region60: #{m_resblock1_forward.7} parent=0 // pred_region
    _
  $region61: #{m_resblock1_forward.7} parent=0 // pred_fallthru
    _
  // Predicated region
  $region62: #{m_resblock1_forward.7} parent=0 // pred_check
    _
  $region63: #{m_resblock1_forward.7} parent=0 // pred_check_branch
    %3137 = sbr.rel (0) target = $region65
  $region64: #{m_resblock1_forward.7} parent=0 // pred_region
    _
  $region65: #{m_resblock1_forward.7} parent=0 // pred_fallthru
    _

// kernel: m_resblock1_forward.8
$region0: #{m_resblock1_forward.8}
  #allocation0 [shape = 'u32[]', space=smem, size = 0x4, offset = 0x4, fixed_abs, tag = 'smem constant byte address 0x4 - core index']
  #allocation1 [shape = 'u32[144,128]{1,0:T(1,128)}', space=vmem, size = 0x12000, scoped, tag = 'internal scratch']
  %s0 = inlined_call_operand.vmem [shape: bf16[120,512], index: 0, kind: input, shape index: {}]
  %s1 = inlined_call_operand.vmem [shape: bf16[60,512], index: 1, kind: input, shape index: {}]
  %s2 = inlined_call_operand.vmem [shape: bf16[60,512], index: 2, kind: input, shape index: {}]
  %s3 = inlined_call_operand.vmem [shape: f32[120,1], index: 3, kind: input, shape index: {}]
  %s4 = inlined_call_operand.vmem [shape: f32[120,1], index: 4, kind: input, shape index: {}]
  %s5 = inlined_call_operand.vmem [shape: f32[360,1], index: 5, kind: input, shape index: {}]
  %s6 = inlined_call_operand.vmem [shape: f32[360,1], index: 6, kind: input, shape index: {}]
  %s7 = inlined_call_operand.vmem [shape: bf16[60,120], index: 7, kind: input, shape index: {}]
  %s8 = inlined_call_operand.vmem [shape: bf16[60,120], index: 8, kind: input, shape index: {}]
  %s9 = inlined_call_operand.vmem [shape: bf16[60,60], index: 9, kind: input, shape index: {}]
  %s10 = inlined_call_operand.vmem [shape: bf16[60,60], index: 10, kind: input, shape index: {}]
  %s11 = inlined_call_operand.vmem [shape: f32[60,1], index: 11, kind: input, shape index: {}]
  %s12 = inlined_call_operand.vmem [shape: bf16[60,512], index: 12, kind: output, shape index: {0}]
  %s13 = inlined_call_operand.vmem [shape: f32[60,128], index: 13, kind: output, shape index: {1}]
  %s14 = inlined_call_operand.vmem [shape: f32[60,128], index: 14, kind: output, shape index: {2}]
  %15 = xla_tuple %s12, %s13, %s14
  %s16 = sld [smem:[#allocation0]]
  $region74: #{m_resblock1_forward.8} parent=0
    _
  %s18 = ssub.s32 1, %s16
  %s19 = scalar_select 0, %s18, %s16
  // Predicated region
  $region2: #{m_resblock1_forward.8} parent=0 // pred_check
    _
  $region3: #{m_resblock1_forward.8} parent=0 // pred_check_branch
    %21 = sbr.rel (0) target = $region5
  $region4: #{m_resblock1_forward.8} parent=0 // pred_region
    _
  $region5: #{m_resblock1_forward.8} parent=0 // pred_fallthru
    _
  // Predicated region
  $region6: #{m_resblock1_forward.8} parent=0 // pred_check
    _
  $region7: #{m_resblock1_forward.8} parent=0 // pred_check_branch
    %23 = sbr.rel (0) target = $region9
  $region8: #{m_resblock1_forward.8} parent=0 // pred_region
    _
  $region9: #{m_resblock1_forward.8} parent=0 // pred_fallthru
    _
  // Predicated region
  $region10: #{m_resblock1_forward.8} parent=0 // pred_check
    _
  $region11: #{m_resblock1_forward.8} parent=0 // pred_check_branch
    %25 = sbr.rel (0) target = $region13
  $region12: #{m_resblock1_forward.8} parent=0 // pred_region
    _
  $region13: #{m_resblock1_forward.8} parent=0 // pred_fallthru
    _
  // Predicated region
  $region14: #{m_resblock1_forward.8} parent=0 // pred_check
    _
  $region15: #{m_resblock1_forward.8} parent=0 // pred_check_branch
    %27 = sbr.rel (0) target = $region17
  $region16: #{m_resblock1_forward.8} parent=0 // pred_region
    _
  $region17: #{m_resblock1_forward.8} parent=0 // pred_fallthru
    _
  // Predicated region
  $region18: #{m_resblock1_forward.8} parent=0 // pred_check
    _
  $region19: #{m_resblock1_forward.8} parent=0 // pred_check_branch
    %29 = sbr.rel (0) target = $region21
  $region20: #{m_resblock1_forward.8} parent=0 // pred_region
    _
  $region21: #{m_resblock1_forward.8} parent=0 // pred_fallthru
    _
  // Predicated region
  $region22: #{m_resblock1_forward.8} parent=0 // pred_check
    _
  $region23: #{m_resblock1_forward.8} parent=0 // pred_check_branch
    %31 = sbr.rel (0) target = $region25
  $region24: #{m_resblock1_forward.8} parent=0 // pred_region
    _
  $region25: #{m_resblock1_forward.8} parent=0 // pred_fallthru
    _
  // Predicated region
  $region26: #{m_resblock1_forward.8} parent=0 // pred_check
    _
  $region27: #{m_resblock1_forward.8} parent=0 // pred_check_branch
    %33 = sbr.rel (0) target = $region29
  $region28: #{m_resblock1_forward.8} parent=0 // pred_region
    _
  $region29: #{m_resblock1_forward.8} parent=0 // pred_fallthru
    _
  // Predicated region
  $region30: #{m_resblock1_forward.8} parent=0 // pred_check
    _
  $region31: #{m_resblock1_forward.8} parent=0 // pred_check_branch
    %35 = sbr.rel (0) target = $region33
  $region32: #{m_resblock1_forward.8} parent=0 // pred_region
    _
  $region33: #{m_resblock1_forward.8} parent=0 // pred_fallthru
    _
  // Predicated region
  $region34: #{m_resblock1_forward.8} parent=0 // pred_check
    _
  $region35: #{m_resblock1_forward.8} parent=0 // pred_check_branch
    %37 = sbr.rel (0) target = $region37
  $region36: #{m_resblock1_forward.8} parent=0 // pred_region
    _
  $region37: #{m_resblock1_forward.8} parent=0 // pred_fallthru
    _
  // Predicated region
  $region38: #{m_resblock1_forward.8} parent=0 // pred_check
    _
  $region39: #{m_resblock1_forward.8} parent=0 // pred_check_branch
    %39 = sbr.rel (0) target = $region41
  $region40: #{m_resblock1_forward.8} parent=0 // pred_region
    _
  $region41: #{m_resblock1_forward.8} parent=0 // pred_fallthru
    _
  // Predicated region
  $region42: #{m_resblock1_forward.8} parent=0 // pred_check
    _
  $region43: #{m_resblock1_forward.8} parent=0 // pred_check_branch
    %41 = sbr.rel (0) target = $region45
  $region44: #{m_resblock1_forward.8} parent=0 // pred_region
    _
  $region45: #{m_resblock1_forward.8} parent=0 // pred_fallthru
    _
  // Predicated region
  $region46: #{m_resblock1_forward.8} parent=0 // pred_check
    _
  $region47: #{m_resblock1_forward.8} parent=0 // pred_check_branch
    %43 = sbr.rel (0) target = $region49
  $region48: #{m_resblock1_forward.8} parent=0 // pred_region
    _
  $region49: #{m_resblock1_forward.8} parent=0 // pred_fallthru
    _
  %v46 = vld [vmem:[%s0] sm:$0xff]
  %v47 = vld [vmem:[%s0 + $0x8] sm:$0xff]
  %v48 = vld [vmem:[%s0 + $0x10] sm:$0xff]
  %v49 = vld [vmem:[%s0 + $0x18] sm:$0xff]
  %v50 = vld [vmem:[%s0 + $0x20] sm:$0xff]
  %v51 = vld [vmem:[%s0 + $0x28] sm:$0xff]
  %v52 = vld [vmem:[%s0 + $0x30] sm:$0xff]
  %v53 = vld [vmem:[%s0 + $0x38] sm:$0xff]
  %v54 = vld [vmem:[%s0 + $0x40] sm:$0xff]
  %v55 = vld [vmem:[%s0 + $0x48] sm:$0xff]
  %v56 = vld [vmem:[%s0 + $0x50] sm:$0xff]
  %v57 = vld [vmem:[%s0 + $0x58] sm:$0xff]
  %v58 = vld [vmem:[%s0 + $0x60] sm:$0xff]
  %v59 = vld [vmem:[%s0 + $0x68] sm:$0xff]
  %v60 = vld [vmem:[%s0 + $0x70] sm:$0xff]
  %v61 = vld [vmem:[%s0 + $0x78] sm:$0xff]
  %v62 = vld [vmem:[%s0 + $0x80] sm:$0xff]
  %v63 = vld [vmem:[%s0 + $0x88] sm:$0xff]
  %v64 = vld [vmem:[%s0 + $0x90] sm:$0xff]
  %v65 = vld [vmem:[%s0 + $0x98] sm:$0xff]
  %v66 = vld [vmem:[%s0 + $0xa0] sm:$0xff]
  %v67 = vld [vmem:[%s0 + $0xa8] sm:$0xff]
  %v68 = vld [vmem:[%s0 + $0xb0] sm:$0xff]
  %v69 = vld [vmem:[%s0 + $0xb8] sm:$0xff]
  %v70 = vld [vmem:[%s0 + $0xc0] sm:$0xff]
  %v71 = vld [vmem:[%s0 + $0xc8] sm:$0xff]
  %v72 = vld [vmem:[%s0 + $0xd0] sm:$0xff]
  %v73 = vld [vmem:[%s0 + $0xd8] sm:$0xff]
  %v74 = vld [vmem:[%s0 + $0xe0] sm:$0xff]
  %v75 = vld [vmem:[%s0 + $0xe8] sm:$0xff]
  %v76 = vld [vmem:[%s3] sm:$0xff]
  %v77 = vld [vmem:[%s3 + $0x8] sm:$0xff]
  %v78 = vld [vmem:[%s3 + $0x10] sm:$0xff]
  %v79 = vld [vmem:[%s3 + $0x18] sm:$0xff]
  %v80 = vld [vmem:[%s3 + $0x20] sm:$0xff]
  %v81 = vld [vmem:[%s3 + $0x28] sm:$0xff]
  %v82 = vld [vmem:[%s3 + $0x30] sm:$0xff]
  %v83 = vld [vmem:[%s3 + $0x38] sm:$0xff]
  %v84 = vld [vmem:[%s3 + $0x40] sm:$0xff]
  %v85 = vld [vmem:[%s3 + $0x48] sm:$0xff]
  %v86 = vld [vmem:[%s3 + $0x50] sm:$0xff]
  %v87 = vld [vmem:[%s3 + $0x58] sm:$0xff]
  %v88 = vld [vmem:[%s3 + $0x60] sm:$0xff]
  %v89 = vld [vmem:[%s3 + $0x68] sm:$0xff]
  %v90 = vld [vmem:[%s3 + $0x70] sm:$0xff]
  %v91 = vpack.c.bf16 %v77, %v76
  %v92 = vpack.c.bf16 %v79, %v78
  %v93 = vpack.c.bf16 %v81, %v80
  %v94 = vpack.c.bf16 %v83, %v82
  %v95 = vpack.c.bf16 %v85, %v84
  %v96 = vpack.c.bf16 %v87, %v86
  %v97 = vpack.c.bf16 %v89, %v88
  %v98 = vpack.c.bf16 %v90, %v90
  %100 = vset.pattern.permute.xlu0 0
  %101 = vperm.xlu0 %100, %v91
  %v102 = vpop.permute.xlu0 %101
  %104 = vset.pattern.permute.xlu0 0
  %105 = vperm.xlu0 %104, %v92
  %v106 = vpop.permute.xlu0 %105
  %108 = vset.pattern.permute.xlu0 0
  %109 = vperm.xlu0 %108, %v93
  %v110 = vpop.permute.xlu0 %109
  %112 = vset.pattern.permute.xlu0 0
  %113 = vperm.xlu0 %112, %v94
  %v114 = vpop.permute.xlu0 %113
  %116 = vset.pattern.permute.xlu0 0
  %117 = vperm.xlu0 %116, %v95
  %v118 = vpop.permute.xlu0 %117
  %120 = vset.pattern.permute.xlu0 0
  %121 = vperm.xlu0 %120, %v96
  %v122 = vpop.permute.xlu0 %121
  %124 = vset.pattern.permute.xlu0 0
  %125 = vperm.xlu0 %124, %v97
  %v126 = vpop.permute.xlu0 %125
  %128 = vset.pattern.permute.xlu0 0
  %129 = vperm.xlu0 %128, %v98
  %v130 = vpop.permute.xlu0 %129
  %v140 = vunpack.c.l.s4 839922192
  %v141 = vunpack.c.0.s8 %v140
  %v142 = vlaneseq
  %v143 = vshrl.u32 %v142, 7
  %v144 = vsub.s32 %v141, %v143
  %v145 = vrot.slane %v102, %v144
  %v147 = vunpack.c.l.s4 1985246804
  %v148 = vunpack.c.0.s8 %v147
  %v149 = vlaneseq
  %v150 = vshrl.u32 %v149, 7
  %v151 = vsub.s32 %v148, %v150
  %v152 = vrot.slane %v102, %v151
  %v154 = vunpack.c.l.s4 839922192
  %v155 = vunpack.c.0.s8 %v154
  %v156 = vlaneseq
  %v157 = vshrl.u32 %v156, 7
  %v158 = vsub.s32 %v155, %v157
  %v159 = vrot.slane %v106, %v158
  %v161 = vunpack.c.l.s4 1985246804
  %v162 = vunpack.c.0.s8 %v161
  %v163 = vlaneseq
  %v164 = vshrl.u32 %v163, 7
  %v165 = vsub.s32 %v162, %v164
  %v166 = vrot.slane %v106, %v165
  %v168 = vunpack.c.l.s4 839922192
  %v169 = vunpack.c.0.s8 %v168
  %v170 = vlaneseq
  %v171 = vshrl.u32 %v170, 7
  %v172 = vsub.s32 %v169, %v171
  %v173 = vrot.slane %v110, %v172
  %v175 = vunpack.c.l.s4 1985246804
  %v176 = vunpack.c.0.s8 %v175
  %v177 = vlaneseq
  %v178 = vshrl.u32 %v177, 7
  %v179 = vsub.s32 %v176, %v178
  %v180 = vrot.slane %v110, %v179
  %v182 = vunpack.c.l.s4 839922192
  %v183 = vunpack.c.0.s8 %v182
  %v184 = vlaneseq
  %v185 = vshrl.u32 %v184, 7
  %v186 = vsub.s32 %v183, %v185
  %v187 = vrot.slane %v114, %v186
  %v189 = vunpack.c.l.s4 1985246804
  %v190 = vunpack.c.0.s8 %v189
  %v191 = vlaneseq
  %v192 = vshrl.u32 %v191, 7
  %v193 = vsub.s32 %v190, %v192
  %v194 = vrot.slane %v114, %v193
  %v196 = vunpack.c.l.s4 839922192
  %v197 = vunpack.c.0.s8 %v196
  %v198 = vlaneseq
  %v199 = vshrl.u32 %v198, 7
  %v200 = vsub.s32 %v197, %v199
  %v201 = vrot.slane %v118, %v200
  %v203 = vunpack.c.l.s4 1985246804
  %v204 = vunpack.c.0.s8 %v203
  %v205 = vlaneseq
  %v206 = vshrl.u32 %v205, 7
  %v207 = vsub.s32 %v204, %v206
  %v208 = vrot.slane %v118, %v207
  %v210 = vunpack.c.l.s4 839922192
  %v211 = vunpack.c.0.s8 %v210
  %v212 = vlaneseq
  %v213 = vshrl.u32 %v212, 7
  %v214 = vsub.s32 %v211, %v213
  %v215 = vrot.slane %v122, %v214
  %v217 = vunpack.c.l.s4 1985246804
  %v218 = vunpack.c.0.s8 %v217
  %v219 = vlaneseq
  %v220 = vshrl.u32 %v219, 7
  %v221 = vsub.s32 %v218, %v220
  %v222 = vrot.slane %v122, %v221
  %v224 = vunpack.c.l.s4 839922192
  %v225 = vunpack.c.0.s8 %v224
  %v226 = vlaneseq
  %v227 = vshrl.u32 %v226, 7
  %v228 = vsub.s32 %v225, %v227
  %v229 = vrot.slane %v126, %v228
  %v231 = vunpack.c.l.s4 1985246804
  %v232 = vunpack.c.0.s8 %v231
  %v233 = vlaneseq
  %v234 = vshrl.u32 %v233, 7
  %v235 = vsub.s32 %v232, %v234
  %v236 = vrot.slane %v126, %v235
  %v238 = vunpack.c.l.s4 839922192
  %v239 = vunpack.c.0.s8 %v238
  %v240 = vlaneseq
  %v241 = vshrl.u32 %v240, 7
  %v242 = vsub.s32 %v239, %v241
  %v243 = vrot.slane %v130, %v242
  %v259 = vmul.bf16 %v46, %v145
  %v260 = vmul.bf16 %v47, %v145
  %v261 = vmul.bf16 %v48, %v152
  %v262 = vmul.bf16 %v49, %v152
  %v263 = vmul.bf16 %v50, %v159
  %v264 = vmul.bf16 %v51, %v159
  %v265 = vmul.bf16 %v52, %v166
  %v266 = vmul.bf16 %v53, %v166
  %v267 = vmul.bf16 %v54, %v173
  %v268 = vmul.bf16 %v55, %v173
  %v269 = vmul.bf16 %v56, %v180
  %v270 = vmul.bf16 %v57, %v180
  %v271 = vmul.bf16 %v58, %v187
  %v272 = vmul.bf16 %v59, %v187
  %v273 = vmul.bf16 %v60, %v194
  %v274 = vmul.bf16 %v61, %v194
  %v275 = vmul.bf16 %v62, %v201
  %v276 = vmul.bf16 %v63, %v201
  %v277 = vmul.bf16 %v64, %v208
  %v278 = vmul.bf16 %v65, %v208
  %v279 = vmul.bf16 %v66, %v215
  %v280 = vmul.bf16 %v67, %v215
  %v281 = vmul.bf16 %v68, %v222
  %v282 = vmul.bf16 %v69, %v222
  %v283 = vmul.bf16 %v70, %v229
  %v284 = vmul.bf16 %v71, %v229
  %v285 = vmul.bf16 %v72, %v236
  %v286 = vmul.bf16 %v73, %v236
  %v287 = vmul.bf16 %v74, %v243
  %v288 = vmul.bf16 %v75, %v243
  %v289 = vld [vmem:[%s4] sm:$0xff]
  %v290 = vld [vmem:[%s4 + $0x8] sm:$0xff]
  %v291 = vld [vmem:[%s4 + $0x10] sm:$0xff]
  %v292 = vld [vmem:[%s4 + $0x18] sm:$0xff]
  %v293 = vld [vmem:[%s4 + $0x20] sm:$0xff]
  %v294 = vld [vmem:[%s4 + $0x28] sm:$0xff]
  %v295 = vld [vmem:[%s4 + $0x30] sm:$0xff]
  %v296 = vld [vmem:[%s4 + $0x38] sm:$0xff]
  %v297 = vld [vmem:[%s4 + $0x40] sm:$0xff]
  %v298 = vld [vmem:[%s4 + $0x48] sm:$0xff]
  %v299 = vld [vmem:[%s4 + $0x50] sm:$0xff]
  %v300 = vld [vmem:[%s4 + $0x58] sm:$0xff]
  %v301 = vld [vmem:[%s4 + $0x60] sm:$0xff]
  %v302 = vld [vmem:[%s4 + $0x68] sm:$0xff]
  %v303 = vld [vmem:[%s4 + $0x70] sm:$0xff]
  %v304 = vpack.c.bf16 %v290, %v289
  %v305 = vpack.c.bf16 %v292, %v291
  %v306 = vpack.c.bf16 %v294, %v293
  %v307 = vpack.c.bf16 %v296, %v295
  %v308 = vpack.c.bf16 %v298, %v297
  %v309 = vpack.c.bf16 %v300, %v299
  %v310 = vpack.c.bf16 %v302, %v301
  %v311 = vpack.c.bf16 %v303, %v303
  %313 = vset.pattern.permute.xlu0 0
  %314 = vperm.xlu0 %313, %v304
  %v315 = vpop.permute.xlu0 %314
  %317 = vset.pattern.permute.xlu0 0
  %318 = vperm.xlu0 %317, %v305
  %v319 = vpop.permute.xlu0 %318
  %321 = vset.pattern.permute.xlu0 0
  %322 = vperm.xlu0 %321, %v306
  %v323 = vpop.permute.xlu0 %322
  %325 = vset.pattern.permute.xlu0 0
  %326 = vperm.xlu0 %325, %v307
  %v327 = vpop.permute.xlu0 %326
  %329 = vset.pattern.permute.xlu0 0
  %330 = vperm.xlu0 %329, %v308
  %v331 = vpop.permute.xlu0 %330
  %333 = vset.pattern.permute.xlu0 0
  %334 = vperm.xlu0 %333, %v309
  %v335 = vpop.permute.xlu0 %334
  %337 = vset.pattern.permute.xlu0 0
  %338 = vperm.xlu0 %337, %v310
  %v339 = vpop.permute.xlu0 %338
  %341 = vset.pattern.permute.xlu0 0
  %342 = vperm.xlu0 %341, %v311
  %v343 = vpop.permute.xlu0 %342
  %v353 = vunpack.c.l.s4 839922192
  %v354 = vunpack.c.0.s8 %v353
  %v355 = vlaneseq
  %v356 = vshrl.u32 %v355, 7
  %v357 = vsub.s32 %v354, %v356
  %v358 = vrot.slane %v315, %v357
  %v360 = vunpack.c.l.s4 1985246804
  %v361 = vunpack.c.0.s8 %v360
  %v362 = vlaneseq
  %v363 = vshrl.u32 %v362, 7
  %v364 = vsub.s32 %v361, %v363
  %v365 = vrot.slane %v315, %v364
  %v367 = vunpack.c.l.s4 839922192
  %v368 = vunpack.c.0.s8 %v367
  %v369 = vlaneseq
  %v370 = vshrl.u32 %v369, 7
  %v371 = vsub.s32 %v368, %v370
  %v372 = vrot.slane %v319, %v371
  %v374 = vunpack.c.l.s4 1985246804
  %v375 = vunpack.c.0.s8 %v374
  %v376 = vlaneseq
  %v377 = vshrl.u32 %v376, 7
  %v378 = vsub.s32 %v375, %v377
  %v379 = vrot.slane %v319, %v378
  %v381 = vunpack.c.l.s4 839922192
  %v382 = vunpack.c.0.s8 %v381
  %v383 = vlaneseq
  %v384 = vshrl.u32 %v383, 7
  %v385 = vsub.s32 %v382, %v384
  %v386 = vrot.slane %v323, %v385
  %v388 = vunpack.c.l.s4 1985246804
  %v389 = vunpack.c.0.s8 %v388
  %v390 = vlaneseq
  %v391 = vshrl.u32 %v390, 7
  %v392 = vsub.s32 %v389, %v391
  %v393 = vrot.slane %v323, %v392
  %v395 = vunpack.c.l.s4 839922192
  %v396 = vunpack.c.0.s8 %v395
  %v397 = vlaneseq
  %v398 = vshrl.u32 %v397, 7
  %v399 = vsub.s32 %v396, %v398
  %v400 = vrot.slane %v327, %v399
  %v402 = vunpack.c.l.s4 1985246804
  %v403 = vunpack.c.0.s8 %v402
  %v404 = vlaneseq
  %v405 = vshrl.u32 %v404, 7
  %v406 = vsub.s32 %v403, %v405
  %v407 = vrot.slane %v327, %v406
  %v409 = vunpack.c.l.s4 839922192
  %v410 = vunpack.c.0.s8 %v409
  %v411 = vlaneseq
  %v412 = vshrl.u32 %v411, 7
  %v413 = vsub.s32 %v410, %v412
  %v414 = vrot.slane %v331, %v413
  %v416 = vunpack.c.l.s4 1985246804
  %v417 = vunpack.c.0.s8 %v416
  %v418 = vlaneseq
  %v419 = vshrl.u32 %v418, 7
  %v420 = vsub.s32 %v417, %v419
  %v421 = vrot.slane %v331, %v420
  %v423 = vunpack.c.l.s4 839922192
  %v424 = vunpack.c.0.s8 %v423
  %v425 = vlaneseq
  %v426 = vshrl.u32 %v425, 7
  %v427 = vsub.s32 %v424, %v426
  %v428 = vrot.slane %v335, %v427
  %v430 = vunpack.c.l.s4 1985246804
  %v431 = vunpack.c.0.s8 %v430
  %v432 = vlaneseq
  %v433 = vshrl.u32 %v432, 7
  %v434 = vsub.s32 %v431, %v433
  %v435 = vrot.slane %v335, %v434
  %v437 = vunpack.c.l.s4 839922192
  %v438 = vunpack.c.0.s8 %v437
  %v439 = vlaneseq
  %v440 = vshrl.u32 %v439, 7
  %v441 = vsub.s32 %v438, %v440
  %v442 = vrot.slane %v339, %v441
  %v444 = vunpack.c.l.s4 1985246804
  %v445 = vunpack.c.0.s8 %v444
  %v446 = vlaneseq
  %v447 = vshrl.u32 %v446, 7
  %v448 = vsub.s32 %v445, %v447
  %v449 = vrot.slane %v339, %v448
  %v451 = vunpack.c.l.s4 839922192
  %v452 = vunpack.c.0.s8 %v451
  %v453 = vlaneseq
  %v454 = vshrl.u32 %v453, 7
  %v455 = vsub.s32 %v452, %v454
  %v456 = vrot.slane %v343, %v455
  %v472 = vadd.bf16 %v259, %v358
  %v473 = vadd.bf16 %v260, %v358
  %v474 = vadd.bf16 %v261, %v365
  %v475 = vadd.bf16 %v262, %v365
  %v476 = vadd.bf16 %v263, %v372
  %v477 = vadd.bf16 %v264, %v372
  %v478 = vadd.bf16 %v265, %v379
  %v479 = vadd.bf16 %v266, %v379
  %v480 = vadd.bf16 %v267, %v386
  %v481 = vadd.bf16 %v268, %v386
  %v482 = vadd.bf16 %v269, %v393
  %v483 = vadd.bf16 %v270, %v393
  %v484 = vadd.bf16 %v271, %v400
  %v485 = vadd.bf16 %v272, %v400
  %v486 = vadd.bf16 %v273, %v407
  %v487 = vadd.bf16 %v274, %v407
  %v488 = vadd.bf16 %v275, %v414
  %v489 = vadd.bf16 %v276, %v414
  %v490 = vadd.bf16 %v277, %v421
  %v491 = vadd.bf16 %v278, %v421
  %v492 = vadd.bf16 %v279, %v428
  %v493 = vadd.bf16 %v280, %v428
  %v494 = vadd.bf16 %v281, %v435
  %v495 = vadd.bf16 %v282, %v435
  %v496 = vadd.bf16 %v283, %v442
  %v497 = vadd.bf16 %v284, %v442
  %v498 = vadd.bf16 %v285, %v449
  %v499 = vadd.bf16 %v286, %v449
  %v500 = vadd.bf16 %v287, %v456
  %v501 = vadd.bf16 %v288, %v456
  %v502 = vmul.bf16 %v472, 1009007652
  %v503 = vmul.bf16 %v473, 1009007652
  %v504 = vmul.bf16 %v474, 1009007652
  %v505 = vmul.bf16 %v475, 1009007652
  %v506 = vmul.bf16 %v476, 1009007652
  %v507 = vmul.bf16 %v477, 1009007652
  %v508 = vmul.bf16 %v478, 1009007652
  %v509 = vmul.bf16 %v479, 1009007652
  %v510 = vmul.bf16 %v480, 1009007652
  %v511 = vmul.bf16 %v481, 1009007652
  %v512 = vmul.bf16 %v482, 1009007652
  %v513 = vmul.bf16 %v483, 1009007652
  %v514 = vmul.bf16 %v484, 1009007652
  %v515 = vmul.bf16 %v485, 1009007652
  %v516 = vmul.bf16 %v486, 1009007652
  %v517 = vmul.bf16 %v487, 1009007652
  %v518 = vmul.bf16 %v488, 1009007652
  %v519 = vmul.bf16 %v489, 1009007652
  %v520 = vmul.bf16 %v490, 1009007652
  %v521 = vmul.bf16 %v491, 1009007652
  %v522 = vmul.bf16 %v492, 1009007652
  %v523 = vmul.bf16 %v493, 1009007652
  %v524 = vmul.bf16 %v494, 1009007652
  %v525 = vmul.bf16 %v495, 1009007652
  %v526 = vmul.bf16 %v496, 1009007652
  %v527 = vmul.bf16 %v497, 1009007652
  %v528 = vmul.bf16 %v498, 1009007652
  %v529 = vmul.bf16 %v499, 1009007652
  %v530 = vmul.bf16 %v500, 1009007652
  %v531 = vmul.bf16 %v501, 1009007652
  %v532 = vmax.bf16 %v472, %v502
  %v533 = vmax.bf16 %v473, %v503
  %v534 = vmax.bf16 %v474, %v504
  %v535 = vmax.bf16 %v475, %v505
  %v536 = vmax.bf16 %v476, %v506
  %v537 = vmax.bf16 %v477, %v507
  %v538 = vmax.bf16 %v478, %v508
  %v539 = vmax.bf16 %v479, %v509
  %v540 = vmax.bf16 %v480, %v510
  %v541 = vmax.bf16 %v481, %v511
  %v542 = vmax.bf16 %v482, %v512
  %v543 = vmax.bf16 %v483, %v513
  %v544 = vmax.bf16 %v484, %v514
  %v545 = vmax.bf16 %v485, %v515
  %v546 = vmax.bf16 %v486, %v516
  %v547 = vmax.bf16 %v487, %v517
  %v548 = vmax.bf16 %v488, %v518
  %v549 = vmax.bf16 %v489, %v519
  %v550 = vmax.bf16 %v490, %v520
  %v551 = vmax.bf16 %v491, %v521
  %v552 = vmax.bf16 %v492, %v522
  %v553 = vmax.bf16 %v493, %v523
  %v554 = vmax.bf16 %v494, %v524
  %v555 = vmax.bf16 %v495, %v525
  %v556 = vmax.bf16 %v496, %v526
  %v557 = vmax.bf16 %v497, %v527
  %v558 = vmax.bf16 %v498, %v528
  %v559 = vmax.bf16 %v499, %v529
  %v560 = vmax.bf16 %v500, %v530
  %v561 = vmax.bf16 %v501, %v531
  %v562 = vld [vmem:[%s1] sm:$0xff]
  %v563 = vld [vmem:[%s1 + $0x8] sm:$0xff]
  %v564 = vld [vmem:[%s1 + $0x10] sm:$0xff]
  %v565 = vld [vmem:[%s1 + $0x18] sm:$0xff]
  %v566 = vld [vmem:[%s1 + $0x20] sm:$0xff]
  %v567 = vld [vmem:[%s1 + $0x28] sm:$0xff]
  %v568 = vld [vmem:[%s1 + $0x30] sm:$0xff]
  %v569 = vld [vmem:[%s1 + $0x38] sm:$0xff]
  %v570 = vld [vmem:[%s1 + $0x40] sm:$0xff]
  %v571 = vld [vmem:[%s1 + $0x48] sm:$0xff]
  %v572 = vld [vmem:[%s1 + $0x50] sm:$0xff]
  %v573 = vld [vmem:[%s1 + $0x58] sm:$0xff]
  %v574 = vld [vmem:[%s1 + $0x60] sm:$0xff]
  %v575 = vld [vmem:[%s1 + $0x68] sm:$0xff]
  %v576 = vld [vmem:[%s1 + $0x70] sm:$0x33]
  %v577 = vld [vmem:[%s1 + $0x78] sm:$0x33]
  %v578 = vld [vmem:[%s2] sm:$0xff]
  %v579 = vld [vmem:[%s2 + $0x8] sm:$0xff]
  %v580 = vld [vmem:[%s2 + $0x10] sm:$0xff]
  %v581 = vld [vmem:[%s2 + $0x18] sm:$0xff]
  %v582 = vld [vmem:[%s2 + $0x20] sm:$0xff]
  %v583 = vld [vmem:[%s2 + $0x28] sm:$0xff]
  %v584 = vld [vmem:[%s2 + $0x30] sm:$0xff]
  %v585 = vld [vmem:[%s2 + $0x38] sm:$0xff]
  %v586 = vld [vmem:[%s2 + $0x40] sm:$0xff]
  %v587 = vld [vmem:[%s2 + $0x48] sm:$0xff]
  %v588 = vld [vmem:[%s2 + $0x50] sm:$0xff]
  %v589 = vld [vmem:[%s2 + $0x58] sm:$0xff]
  %v590 = vld [vmem:[%s2 + $0x60] sm:$0xff]
  %v591 = vld [vmem:[%s2 + $0x68] sm:$0xff]
  %v592 = vld [vmem:[%s2 + $0x70] sm:$0x33]
  %v593 = vld [vmem:[%s2 + $0x78] sm:$0x33]
  %v594 = vld [vmem:[%s5] sm:$0xff]
  %v595 = vld [vmem:[%s5 + $0x8] sm:$0xff]
  %v596 = vld [vmem:[%s5 + $0x10] sm:$0xff]
  %v597 = vld [vmem:[%s5 + $0x18] sm:$0xff]
  %v598 = vld [vmem:[%s5 + $0x20] sm:$0xff]
  %v599 = vld [vmem:[%s5 + $0x28] sm:$0xff]
  %v600 = vld [vmem:[%s5 + $0x30] sm:$0xff]
  %v601 = vld [vmem:[%s5 + $0x38] sm:$0xff]
  %v602 = vld [vmem:[%s5 + $0x40] sm:$0xff]
  %v603 = vld [vmem:[%s5 + $0x48] sm:$0xff]
  %v604 = vld [vmem:[%s5 + $0x50] sm:$0xff]
  %v605 = vld [vmem:[%s5 + $0x58] sm:$0xff]
  %v606 = vld [vmem:[%s5 + $0x60] sm:$0xff]
  %v607 = vld [vmem:[%s5 + $0x68] sm:$0xff]
  %v608 = vld [vmem:[%s5 + $0x70] sm:$0xff]
  %v609 = vld [vmem:[%s5 + $0x78] sm:$0xff]
  %v610 = vld [vmem:[%s5 + $0x80] sm:$0xff]
  %v611 = vld [vmem:[%s5 + $0x88] sm:$0xff]
  %v612 = vld [vmem:[%s5 + $0x90] sm:$0xff]
  %v613 = vld [vmem:[%s5 + $0x98] sm:$0xff]
  %v614 = vld [vmem:[%s5 + $0xa0] sm:$0xff]
  %v615 = vld [vmem:[%s5 + $0xa8] sm:$0xff]
  %v616 = vld [vmem:[%s5 + $0xb0] sm:$0xff]
  %v617 = vld [vmem:[%s5 + $0xb8] sm:$0xff]
  %v618 = vld [vmem:[%s5 + $0xc0] sm:$0xff]
  %v619 = vld [vmem:[%s5 + $0xc8] sm:$0xff]
  %v620 = vld [vmem:[%s5 + $0xd0] sm:$0xff]
  %v621 = vld [vmem:[%s5 + $0xd8] sm:$0xff]
  %v622 = vld [vmem:[%s5 + $0xe0] sm:$0xff]
  %v623 = vld [vmem:[%s5 + $0xe8] sm:$0xff]
  %v624 = vld [vmem:[%s5 + $0xf0] sm:$0xff]
  %v625 = vld [vmem:[%s5 + $0xf8] sm:$0xff]
  %v626 = vld [vmem:[%s5 + $0x100] sm:$0xff]
  %v627 = vld [vmem:[%s5 + $0x108] sm:$0xff]
  %v628 = vld [vmem:[%s5 + $0x110] sm:$0xff]
  %v629 = vld [vmem:[%s5 + $0x118] sm:$0xff]
  %v630 = vld [vmem:[%s5 + $0x120] sm:$0xff]
  %v631 = vld [vmem:[%s5 + $0x128] sm:$0xff]
  %v632 = vld [vmem:[%s5 + $0x130] sm:$0xff]
  %v633 = vld [vmem:[%s5 + $0x138] sm:$0xff]
  %v634 = vld [vmem:[%s5 + $0x140] sm:$0xff]
  %v635 = vld [vmem:[%s5 + $0x148] sm:$0xff]
  %v636 = vld [vmem:[%s5 + $0x150] sm:$0xff]
  %v637 = vld [vmem:[%s5 + $0x158] sm:$0xff]
  %v638 = vld [vmem:[%s5 + $0x160] sm:$0xff]
  %v639 = vld [vmem:[%s6] sm:$0xff]
  %v640 = vld [vmem:[%s6 + $0x8] sm:$0xff]
  %v641 = vld [vmem:[%s6 + $0x10] sm:$0xff]
  %v642 = vld [vmem:[%s6 + $0x18] sm:$0xff]
  %v643 = vld [vmem:[%s6 + $0x20] sm:$0xff]
  %v644 = vld [vmem:[%s6 + $0x28] sm:$0xff]
  %v645 = vld [vmem:[%s6 + $0x30] sm:$0xff]
  %v646 = vld [vmem:[%s6 + $0x38] sm:$0xff]
  %v647 = vld [vmem:[%s6 + $0x40] sm:$0xff]
  %v648 = vld [vmem:[%s6 + $0x48] sm:$0xff]
  %v649 = vld [vmem:[%s6 + $0x50] sm:$0xff]
  %v650 = vld [vmem:[%s6 + $0x58] sm:$0xff]
  %v651 = vld [vmem:[%s6 + $0x60] sm:$0xff]
  %v652 = vld [vmem:[%s6 + $0x68] sm:$0xff]
  %v653 = vld [vmem:[%s6 + $0x70] sm:$0xff]
  %v654 = vld [vmem:[%s6 + $0x78] sm:$0xff]
  %v655 = vld [vmem:[%s6 + $0x80] sm:$0xff]
  %v656 = vld [vmem:[%s6 + $0x88] sm:$0xff]
  %v657 = vld [vmem:[%s6 + $0x90] sm:$0xff]
  %v658 = vld [vmem:[%s6 + $0x98] sm:$0xff]
  %v659 = vld [vmem:[%s6 + $0xa0] sm:$0xff]
  %v660 = vld [vmem:[%s6 + $0xa8] sm:$0xff]
  %v661 = vld [vmem:[%s6 + $0xb0] sm:$0xff]
  %v662 = vld [vmem:[%s6 + $0xb8] sm:$0xff]
  %v663 = vld [vmem:[%s6 + $0xc0] sm:$0xff]
  %v664 = vld [vmem:[%s6 + $0xc8] sm:$0xff]
  %v665 = vld [vmem:[%s6 + $0xd0] sm:$0xff]
  %v666 = vld [vmem:[%s6 + $0xd8] sm:$0xff]
  %v667 = vld [vmem:[%s6 + $0xe0] sm:$0xff]
  %v668 = vld [vmem:[%s6 + $0xe8] sm:$0xff]
  %v669 = vld [vmem:[%s6 + $0xf0] sm:$0xff]
  %v670 = vld [vmem:[%s6 + $0xf8] sm:$0xff]
  %v671 = vld [vmem:[%s6 + $0x100] sm:$0xff]
  %v672 = vld [vmem:[%s6 + $0x108] sm:$0xff]
  %v673 = vld [vmem:[%s6 + $0x110] sm:$0xff]
  %v674 = vld [vmem:[%s6 + $0x118] sm:$0xff]
  %v675 = vld [vmem:[%s6 + $0x120] sm:$0xff]
  %v676 = vld [vmem:[%s6 + $0x128] sm:$0xff]
  %v677 = vld [vmem:[%s6 + $0x130] sm:$0xff]
  %v678 = vld [vmem:[%s6 + $0x138] sm:$0xff]
  %v679 = vld [vmem:[%s6 + $0x140] sm:$0xff]
  %v680 = vld [vmem:[%s6 + $0x148] sm:$0xff]
  %v681 = vld [vmem:[%s6 + $0x150] sm:$0xff]
  %v682 = vld [vmem:[%s6 + $0x158] sm:$0xff]
  %v683 = vld [vmem:[%s6 + $0x160] sm:$0xff]
  %v684 = vpack.c.bf16 %v595, %v594
  %v685 = vpack.c.bf16 %v597, %v596
  %v686 = vpack.c.bf16 %v599, %v598
  %v687 = vpack.c.bf16 %v601, %v600
  %v688 = vpack.c.bf16 %v603, %v602
  %v689 = vpack.c.bf16 %v605, %v604
  %v690 = vpack.c.bf16 %v607, %v606
  %v691 = vpack.c.bf16 %v608, %v608
  %v692 = vpack.c.bf16 %v640, %v639
  %v693 = vpack.c.bf16 %v642, %v641
  %v694 = vpack.c.bf16 %v644, %v643
  %v695 = vpack.c.bf16 %v646, %v645
  %v696 = vpack.c.bf16 %v648, %v647
  %v697 = vpack.c.bf16 %v650, %v649
  %v698 = vpack.c.bf16 %v652, %v651
  %v699 = vpack.c.bf16 %v653, %v653
  %701 = vset.pattern.permute.xlu0 0
  %702 = vperm.xlu0 %701, %v684
  %v703 = vpop.permute.xlu0 %702
  %705 = vset.pattern.permute.xlu0 0
  %706 = vperm.xlu0 %705, %v685
  %v707 = vpop.permute.xlu0 %706
  %709 = vset.pattern.permute.xlu0 0
  %710 = vperm.xlu0 %709, %v686
  %v711 = vpop.permute.xlu0 %710
  %713 = vset.pattern.permute.xlu0 0
  %714 = vperm.xlu0 %713, %v687
  %v715 = vpop.permute.xlu0 %714
  %717 = vset.pattern.permute.xlu0 0
  %718 = vperm.xlu0 %717, %v688
  %v719 = vpop.permute.xlu0 %718
  %721 = vset.pattern.permute.xlu0 0
  %722 = vperm.xlu0 %721, %v689
  %v723 = vpop.permute.xlu0 %722
  %725 = vset.pattern.permute.xlu0 0
  %726 = vperm.xlu0 %725, %v690
  %v727 = vpop.permute.xlu0 %726
  %729 = vset.pattern.permute.xlu0 0
  %730 = vperm.xlu0 %729, %v691
  %v731 = vpop.permute.xlu0 %730
  %v741 = vunpack.c.l.s4 839922192
  %v742 = vunpack.c.0.s8 %v741
  %v743 = vlaneseq
  %v744 = vshrl.u32 %v743, 7
  %v745 = vsub.s32 %v742, %v744
  %v746 = vrot.slane %v703, %v745
  %v748 = vunpack.c.l.s4 1985246804
  %v749 = vunpack.c.0.s8 %v748
  %v750 = vlaneseq
  %v751 = vshrl.u32 %v750, 7
  %v752 = vsub.s32 %v749, %v751
  %v753 = vrot.slane %v703, %v752
  %v755 = vunpack.c.l.s4 839922192
  %v756 = vunpack.c.0.s8 %v755
  %v757 = vlaneseq
  %v758 = vshrl.u32 %v757, 7
  %v759 = vsub.s32 %v756, %v758
  %v760 = vrot.slane %v707, %v759
  %v762 = vunpack.c.l.s4 1985246804
  %v763 = vunpack.c.0.s8 %v762
  %v764 = vlaneseq
  %v765 = vshrl.u32 %v764, 7
  %v766 = vsub.s32 %v763, %v765
  %v767 = vrot.slane %v707, %v766
  %v769 = vunpack.c.l.s4 839922192
  %v770 = vunpack.c.0.s8 %v769
  %v771 = vlaneseq
  %v772 = vshrl.u32 %v771, 7
  %v773 = vsub.s32 %v770, %v772
  %v774 = vrot.slane %v711, %v773
  %v776 = vunpack.c.l.s4 1985246804
  %v777 = vunpack.c.0.s8 %v776
  %v778 = vlaneseq
  %v779 = vshrl.u32 %v778, 7
  %v780 = vsub.s32 %v777, %v779
  %v781 = vrot.slane %v711, %v780
  %v783 = vunpack.c.l.s4 839922192
  %v784 = vunpack.c.0.s8 %v783
  %v785 = vlaneseq
  %v786 = vshrl.u32 %v785, 7
  %v787 = vsub.s32 %v784, %v786
  %v788 = vrot.slane %v715, %v787
  %v790 = vunpack.c.l.s4 1985246804
  %v791 = vunpack.c.0.s8 %v790
  %v792 = vlaneseq
  %v793 = vshrl.u32 %v792, 7
  %v794 = vsub.s32 %v791, %v793
  %v795 = vrot.slane %v715, %v794
  %v797 = vunpack.c.l.s4 839922192
  %v798 = vunpack.c.0.s8 %v797
  %v799 = vlaneseq
  %v800 = vshrl.u32 %v799, 7
  %v801 = vsub.s32 %v798, %v800
  %v802 = vrot.slane %v719, %v801
  %v804 = vunpack.c.l.s4 1985246804
  %v805 = vunpack.c.0.s8 %v804
  %v806 = vlaneseq
  %v807 = vshrl.u32 %v806, 7
  %v808 = vsub.s32 %v805, %v807
  %v809 = vrot.slane %v719, %v808
  %v811 = vunpack.c.l.s4 839922192
  %v812 = vunpack.c.0.s8 %v811
  %v813 = vlaneseq
  %v814 = vshrl.u32 %v813, 7
  %v815 = vsub.s32 %v812, %v814
  %v816 = vrot.slane %v723, %v815
  %v818 = vunpack.c.l.s4 1985246804
  %v819 = vunpack.c.0.s8 %v818
  %v820 = vlaneseq
  %v821 = vshrl.u32 %v820, 7
  %v822 = vsub.s32 %v819, %v821
  %v823 = vrot.slane %v723, %v822
  %v825 = vunpack.c.l.s4 839922192
  %v826 = vunpack.c.0.s8 %v825
  %v827 = vlaneseq
  %v828 = vshrl.u32 %v827, 7
  %v829 = vsub.s32 %v826, %v828
  %v830 = vrot.slane %v727, %v829
  %v832 = vunpack.c.l.s4 1985246804
  %v833 = vunpack.c.0.s8 %v832
  %v834 = vlaneseq
  %v835 = vshrl.u32 %v834, 7
  %v836 = vsub.s32 %v833, %v835
  %v837 = vrot.slane %v727, %v836
  %v839 = vunpack.c.l.s4 839922192
  %v840 = vunpack.c.0.s8 %v839
  %v841 = vlaneseq
  %v842 = vshrl.u32 %v841, 7
  %v843 = vsub.s32 %v840, %v842
  %v844 = vrot.slane %v731, %v843
  %v860 = vmul.bf16 %v46, %v746
  %v861 = vmul.bf16 %v47, %v746
  %v862 = vmul.bf16 %v48, %v753
  %v863 = vmul.bf16 %v49, %v753
  %v864 = vmul.bf16 %v50, %v760
  %v865 = vmul.bf16 %v51, %v760
  %v866 = vmul.bf16 %v52, %v767
  %v867 = vmul.bf16 %v53, %v767
  %v868 = vmul.bf16 %v54, %v774
  %v869 = vmul.bf16 %v55, %v774
  %v870 = vmul.bf16 %v56, %v781
  %v871 = vmul.bf16 %v57, %v781
  %v872 = vmul.bf16 %v58, %v788
  %v873 = vmul.bf16 %v59, %v788
  %v874 = vmul.bf16 %v60, %v795
  %v875 = vmul.bf16 %v61, %v795
  %v876 = vmul.bf16 %v62, %v802
  %v877 = vmul.bf16 %v63, %v802
  %v878 = vmul.bf16 %v64, %v809
  %v879 = vmul.bf16 %v65, %v809
  %v880 = vmul.bf16 %v66, %v816
  %v881 = vmul.bf16 %v67, %v816
  %v882 = vmul.bf16 %v68, %v823
  %v883 = vmul.bf16 %v69, %v823
  %v884 = vmul.bf16 %v70, %v830
  %v885 = vmul.bf16 %v71, %v830
  %v886 = vmul.bf16 %v72, %v837
  %v887 = vmul.bf16 %v73, %v837
  %v888 = vmul.bf16 %v74, %v844
  %v889 = vmul.bf16 %v75, %v844
  %891 = vset.pattern.permute.xlu0 0
  %892 = vperm.xlu0 %891, %v692
  %v893 = vpop.permute.xlu0 %892
  %895 = vset.pattern.permute.xlu0 0
  %896 = vperm.xlu0 %895, %v693
  %v897 = vpop.permute.xlu0 %896
  %899 = vset.pattern.permute.xlu0 0
  %900 = vperm.xlu0 %899, %v694
  %v901 = vpop.permute.xlu0 %900
  %903 = vset.pattern.permute.xlu0 0
  %904 = vperm.xlu0 %903, %v695
  %v905 = vpop.permute.xlu0 %904
  %907 = vset.pattern.permute.xlu0 0
  %908 = vperm.xlu0 %907, %v696
  %v909 = vpop.permute.xlu0 %908
  %911 = vset.pattern.permute.xlu0 0
  %912 = vperm.xlu0 %911, %v697
  %v913 = vpop.permute.xlu0 %912
  %915 = vset.pattern.permute.xlu0 0
  %916 = vperm.xlu0 %915, %v698
  %v917 = vpop.permute.xlu0 %916
  %919 = vset.pattern.permute.xlu0 0
  %920 = vperm.xlu0 %919, %v699
  %v921 = vpop.permute.xlu0 %920
  %v931 = vunpack.c.l.s4 839922192
  %v932 = vunpack.c.0.s8 %v931
  %v933 = vlaneseq
  %v934 = vshrl.u32 %v933, 7
  %v935 = vsub.s32 %v932, %v934
  %v936 = vrot.slane %v893, %v935
  %v938 = vunpack.c.l.s4 1985246804
  %v939 = vunpack.c.0.s8 %v938
  %v940 = vlaneseq
  %v941 = vshrl.u32 %v940, 7
  %v942 = vsub.s32 %v939, %v941
  %v943 = vrot.slane %v893, %v942
  %v945 = vunpack.c.l.s4 839922192
  %v946 = vunpack.c.0.s8 %v945
  %v947 = vlaneseq
  %v948 = vshrl.u32 %v947, 7
  %v949 = vsub.s32 %v946, %v948
  %v950 = vrot.slane %v897, %v949
  %v952 = vunpack.c.l.s4 1985246804
  %v953 = vunpack.c.0.s8 %v952
  %v954 = vlaneseq
  %v955 = vshrl.u32 %v954, 7
  %v956 = vsub.s32 %v953, %v955
  %v957 = vrot.slane %v897, %v956
  %v959 = vunpack.c.l.s4 839922192
  %v960 = vunpack.c.0.s8 %v959
  %v961 = vlaneseq
  %v962 = vshrl.u32 %v961, 7
  %v963 = vsub.s32 %v960, %v962
  %v964 = vrot.slane %v901, %v963
  %v966 = vunpack.c.l.s4 1985246804
  %v967 = vunpack.c.0.s8 %v966
  %v968 = vlaneseq
  %v969 = vshrl.u32 %v968, 7
  %v970 = vsub.s32 %v967, %v969
  %v971 = vrot.slane %v901, %v970
  %v973 = vunpack.c.l.s4 839922192
  %v974 = vunpack.c.0.s8 %v973
  %v975 = vlaneseq
  %v976 = vshrl.u32 %v975, 7
  %v977 = vsub.s32 %v974, %v976
  %v978 = vrot.slane %v905, %v977
  %v980 = vunpack.c.l.s4 1985246804
  %v981 = vunpack.c.0.s8 %v980
  %v982 = vlaneseq
  %v983 = vshrl.u32 %v982, 7
  %v984 = vsub.s32 %v981, %v983
  %v985 = vrot.slane %v905, %v984
  %v987 = vunpack.c.l.s4 839922192
  %v988 = vunpack.c.0.s8 %v987
  %v989 = vlaneseq
  %v990 = vshrl.u32 %v989, 7
  %v991 = vsub.s32 %v988, %v990
  %v992 = vrot.slane %v909, %v991
  %v994 = vunpack.c.l.s4 1985246804
  %v995 = vunpack.c.0.s8 %v994
  %v996 = vlaneseq
  %v997 = vshrl.u32 %v996, 7
  %v998 = vsub.s32 %v995, %v997
  %v999 = vrot.slane %v909, %v998
  %v1001 = vunpack.c.l.s4 839922192
  %v1002 = vunpack.c.0.s8 %v1001
  %v1003 = vlaneseq
  %v1004 = vshrl.u32 %v1003, 7
  %v1005 = vsub.s32 %v1002, %v1004
  %v1006 = vrot.slane %v913, %v1005
  %v1008 = vunpack.c.l.s4 1985246804
  %v1009 = vunpack.c.0.s8 %v1008
  %v1010 = vlaneseq
  %v1011 = vshrl.u32 %v1010, 7
  %v1012 = vsub.s32 %v1009, %v1011
  %v1013 = vrot.slane %v913, %v1012
  %v1015 = vunpack.c.l.s4 839922192
  %v1016 = vunpack.c.0.s8 %v1015
  %v1017 = vlaneseq
  %v1018 = vshrl.u32 %v1017, 7
  %v1019 = vsub.s32 %v1016, %v1018
  %v1020 = vrot.slane %v917, %v1019
  %v1022 = vunpack.c.l.s4 1985246804
  %v1023 = vunpack.c.0.s8 %v1022
  %v1024 = vlaneseq
  %v1025 = vshrl.u32 %v1024, 7
  %v1026 = vsub.s32 %v1023, %v1025
  %v1027 = vrot.slane %v917, %v1026
  %v1029 = vunpack.c.l.s4 839922192
  %v1030 = vunpack.c.0.s8 %v1029
  %v1031 = vlaneseq
  %v1032 = vshrl.u32 %v1031, 7
  %v1033 = vsub.s32 %v1030, %v1032
  %v1034 = vrot.slane %v921, %v1033
  %v1050 = vadd.bf16 %v860, %v936
  %v1051 = vadd.bf16 %v861, %v936
  %v1052 = vadd.bf16 %v862, %v943
  %v1053 = vadd.bf16 %v863, %v943
  %v1054 = vadd.bf16 %v864, %v950
  %v1055 = vadd.bf16 %v865, %v950
  %v1056 = vadd.bf16 %v866, %v957
  %v1057 = vadd.bf16 %v867, %v957
  %v1058 = vadd.bf16 %v868, %v964
  %v1059 = vadd.bf16 %v869, %v964
  %v1060 = vadd.bf16 %v870, %v971
  %v1061 = vadd.bf16 %v871, %v971
  %v1062 = vadd.bf16 %v872, %v978
  %v1063 = vadd.bf16 %v873, %v978
  %v1064 = vadd.bf16 %v874, %v985
  %v1065 = vadd.bf16 %v875, %v985
  %v1066 = vadd.bf16 %v876, %v992
  %v1067 = vadd.bf16 %v877, %v992
  %v1068 = vadd.bf16 %v878, %v999
  %v1069 = vadd.bf16 %v879, %v999
  %v1070 = vadd.bf16 %v880, %v1006
  %v1071 = vadd.bf16 %v881, %v1006
  %v1072 = vadd.bf16 %v882, %v1013
  %v1073 = vadd.bf16 %v883, %v1013
  %v1074 = vadd.bf16 %v884, %v1020
  %v1075 = vadd.bf16 %v885, %v1020
  %v1076 = vadd.bf16 %v886, %v1027
  %v1077 = vadd.bf16 %v887, %v1027
  %v1078 = vadd.bf16 %v888, %v1034
  %v1079 = vadd.bf16 %v889, %v1034
  %v1080 = vmul.bf16 %v1050, 1009007652
  %v1081 = vmul.bf16 %v1051, 1009007652
  %v1082 = vmul.bf16 %v1052, 1009007652
  %v1083 = vmul.bf16 %v1053, 1009007652
  %v1084 = vmul.bf16 %v1054, 1009007652
  %v1085 = vmul.bf16 %v1055, 1009007652
  %v1086 = vmul.bf16 %v1056, 1009007652
  %v1087 = vmul.bf16 %v1057, 1009007652
  %v1088 = vmul.bf16 %v1058, 1009007652
  %v1089 = vmul.bf16 %v1059, 1009007652
  %v1090 = vmul.bf16 %v1060, 1009007652
  %v1091 = vmul.bf16 %v1061, 1009007652
  %v1092 = vmul.bf16 %v1062, 1009007652
  %v1093 = vmul.bf16 %v1063, 1009007652
  %v1094 = vmul.bf16 %v1064, 1009007652
  %v1095 = vmul.bf16 %v1065, 1009007652
  %v1096 = vmul.bf16 %v1066, 1009007652
  %v1097 = vmul.bf16 %v1067, 1009007652
  %v1098 = vmul.bf16 %v1068, 1009007652
  %v1099 = vmul.bf16 %v1069, 1009007652
  %v1100 = vmul.bf16 %v1070, 1009007652
  %v1101 = vmul.bf16 %v1071, 1009007652
  %v1102 = vmul.bf16 %v1072, 1009007652
  %v1103 = vmul.bf16 %v1073, 1009007652
  %v1104 = vmul.bf16 %v1074, 1009007652
  %v1105 = vmul.bf16 %v1075, 1009007652
  %v1106 = vmul.bf16 %v1076, 1009007652
  %v1107 = vmul.bf16 %v1077, 1009007652
  %v1108 = vmul.bf16 %v1078, 1009007652
  %v1109 = vmul.bf16 %v1079, 1009007652
  %v1110 = vmax.bf16 %v1050, %v1080
  %v1111 = vmax.bf16 %v1051, %v1081
  %v1112 = vmax.bf16 %v1052, %v1082
  %v1113 = vmax.bf16 %v1053, %v1083
  %v1114 = vmax.bf16 %v1054, %v1084
  %v1115 = vmax.bf16 %v1055, %v1085
  %v1116 = vmax.bf16 %v1056, %v1086
  %v1117 = vmax.bf16 %v1057, %v1087
  %v1118 = vmax.bf16 %v1058, %v1088
  %v1119 = vmax.bf16 %v1059, %v1089
  %v1120 = vmax.bf16 %v1060, %v1090
  %v1121 = vmax.bf16 %v1061, %v1091
  %v1122 = vmax.bf16 %v1062, %v1092
  %v1123 = vmax.bf16 %v1063, %v1093
  %v1124 = vmax.bf16 %v1064, %v1094
  %v1125 = vmax.bf16 %v1065, %v1095
  %v1126 = vmax.bf16 %v1066, %v1096
  %v1127 = vmax.bf16 %v1067, %v1097
  %v1128 = vmax.bf16 %v1068, %v1098
  %v1129 = vmax.bf16 %v1069, %v1099
  %v1130 = vmax.bf16 %v1070, %v1100
  %v1131 = vmax.bf16 %v1071, %v1101
  %v1132 = vmax.bf16 %v1072, %v1102
  %v1133 = vmax.bf16 %v1073, %v1103
  %v1134 = vmax.bf16 %v1074, %v1104
  %v1135 = vmax.bf16 %v1075, %v1105
  %v1136 = vmax.bf16 %v1076, %v1106
  %v1137 = vmax.bf16 %v1077, %v1107
  %v1138 = vmax.bf16 %v1078, %v1108
  %v1139 = vmax.bf16 %v1079, %v1109
  %v1140 = vld [vmem:[%s7] sm:$0xf]
  %v1141 = vld [vmem:[%s7 + $0x4] sm:$0xf]
  %v1142 = vld [vmem:[%s7 + $0x8] sm:$0xf]
  %v1143 = vld [vmem:[%s7 + $0xc] sm:$0xf]
  %v1144 = vld [vmem:[%s7 + $0x10] sm:$0xf]
  %v1145 = vld [vmem:[%s7 + $0x14] sm:$0xf]
  %v1146 = vld [vmem:[%s7 + $0x18] sm:$0xf]
  %v1147 = vld [vmem:[%s7 + $0x1c] sm:$0x3]
  %v1148 = vpack.c.bf16 %v610, %v609
  %v1149 = vpack.c.bf16 %v612, %v611
  %v1150 = vpack.c.bf16 %v614, %v613
  %v1151 = vpack.c.bf16 %v616, %v615
  %v1152 = vpack.c.bf16 %v618, %v617
  %v1153 = vpack.c.bf16 %v620, %v619
  %v1154 = vpack.c.bf16 %v622, %v621
  %v1155 = vpack.c.bf16 %v623, %v623
  %v1156 = vpack.c.bf16 %v655, %v654
  %v1157 = vpack.c.bf16 %v657, %v656
  %v1158 = vpack.c.bf16 %v659, %v658
  %v1159 = vpack.c.bf16 %v661, %v660
  %v1160 = vpack.c.bf16 %v663, %v662
  %v1161 = vpack.c.bf16 %v665, %v664
  %v1162 = vpack.c.bf16 %v667, %v666
  %v1163 = vpack.c.bf16 %v668, %v668
  %1165 = vset.pattern.permute.xlu0 0
  %1166 = vperm.xlu0 %1165, %v1148
  %v1167 = vpop.permute.xlu0 %1166
  %1169 = vset.pattern.permute.xlu0 0
  %1170 = vperm.xlu0 %1169, %v1149
  %v1171 = vpop.permute.xlu0 %1170
  %1173 = vset.pattern.permute.xlu0 0
  %1174 = vperm.xlu0 %1173, %v1150
  %v1175 = vpop.permute.xlu0 %1174
  %1177 = vset.pattern.permute.xlu0 0
  %1178 = vperm.xlu0 %1177, %v1151
  %v1179 = vpop.permute.xlu0 %1178
  %1181 = vset.pattern.permute.xlu0 0
  %1182 = vperm.xlu0 %1181, %v1152
  %v1183 = vpop.permute.xlu0 %1182
  %1185 = vset.pattern.permute.xlu0 0
  %1186 = vperm.xlu0 %1185, %v1153
  %v1187 = vpop.permute.xlu0 %1186
  %1189 = vset.pattern.permute.xlu0 0
  %1190 = vperm.xlu0 %1189, %v1154
  %v1191 = vpop.permute.xlu0 %1190
  %1193 = vset.pattern.permute.xlu0 0
  %1194 = vperm.xlu0 %1193, %v1155
  %v1195 = vpop.permute.xlu0 %1194
  %v1205 = vunpack.c.l.s4 839922192
  %v1206 = vunpack.c.0.s8 %v1205
  %v1207 = vlaneseq
  %v1208 = vshrl.u32 %v1207, 7
  %v1209 = vsub.s32 %v1206, %v1208
  %v1210 = vrot.slane %v1167, %v1209
  %v1212 = vunpack.c.l.s4 1985246804
  %v1213 = vunpack.c.0.s8 %v1212
  %v1214 = vlaneseq
  %v1215 = vshrl.u32 %v1214, 7
  %v1216 = vsub.s32 %v1213, %v1215
  %v1217 = vrot.slane %v1167, %v1216
  %v1219 = vunpack.c.l.s4 839922192
  %v1220 = vunpack.c.0.s8 %v1219
  %v1221 = vlaneseq
  %v1222 = vshrl.u32 %v1221, 7
  %v1223 = vsub.s32 %v1220, %v1222
  %v1224 = vrot.slane %v1171, %v1223
  %v1226 = vunpack.c.l.s4 1985246804
  %v1227 = vunpack.c.0.s8 %v1226
  %v1228 = vlaneseq
  %v1229 = vshrl.u32 %v1228, 7
  %v1230 = vsub.s32 %v1227, %v1229
  %v1231 = vrot.slane %v1171, %v1230
  %v1233 = vunpack.c.l.s4 839922192
  %v1234 = vunpack.c.0.s8 %v1233
  %v1235 = vlaneseq
  %v1236 = vshrl.u32 %v1235, 7
  %v1237 = vsub.s32 %v1234, %v1236
  %v1238 = vrot.slane %v1175, %v1237
  %v1240 = vunpack.c.l.s4 1985246804
  %v1241 = vunpack.c.0.s8 %v1240
  %v1242 = vlaneseq
  %v1243 = vshrl.u32 %v1242, 7
  %v1244 = vsub.s32 %v1241, %v1243
  %v1245 = vrot.slane %v1175, %v1244
  %v1247 = vunpack.c.l.s4 839922192
  %v1248 = vunpack.c.0.s8 %v1247
  %v1249 = vlaneseq
  %v1250 = vshrl.u32 %v1249, 7
  %v1251 = vsub.s32 %v1248, %v1250
  %v1252 = vrot.slane %v1179, %v1251
  %v1254 = vunpack.c.l.s4 1985246804
  %v1255 = vunpack.c.0.s8 %v1254
  %v1256 = vlaneseq
  %v1257 = vshrl.u32 %v1256, 7
  %v1258 = vsub.s32 %v1255, %v1257
  %v1259 = vrot.slane %v1179, %v1258
  %v1261 = vunpack.c.l.s4 839922192
  %v1262 = vunpack.c.0.s8 %v1261
  %v1263 = vlaneseq
  %v1264 = vshrl.u32 %v1263, 7
  %v1265 = vsub.s32 %v1262, %v1264
  %v1266 = vrot.slane %v1183, %v1265
  %v1268 = vunpack.c.l.s4 1985246804
  %v1269 = vunpack.c.0.s8 %v1268
  %v1270 = vlaneseq
  %v1271 = vshrl.u32 %v1270, 7
  %v1272 = vsub.s32 %v1269, %v1271
  %v1273 = vrot.slane %v1183, %v1272
  %v1275 = vunpack.c.l.s4 839922192
  %v1276 = vunpack.c.0.s8 %v1275
  %v1277 = vlaneseq
  %v1278 = vshrl.u32 %v1277, 7
  %v1279 = vsub.s32 %v1276, %v1278
  %v1280 = vrot.slane %v1187, %v1279
  %v1282 = vunpack.c.l.s4 1985246804
  %v1283 = vunpack.c.0.s8 %v1282
  %v1284 = vlaneseq
  %v1285 = vshrl.u32 %v1284, 7
  %v1286 = vsub.s32 %v1283, %v1285
  %v1287 = vrot.slane %v1187, %v1286
  %v1289 = vunpack.c.l.s4 839922192
  %v1290 = vunpack.c.0.s8 %v1289
  %v1291 = vlaneseq
  %v1292 = vshrl.u32 %v1291, 7
  %v1293 = vsub.s32 %v1290, %v1292
  %v1294 = vrot.slane %v1191, %v1293
  %v1296 = vunpack.c.l.s4 1985246804
  %v1297 = vunpack.c.0.s8 %v1296
  %v1298 = vlaneseq
  %v1299 = vshrl.u32 %v1298, 7
  %v1300 = vsub.s32 %v1297, %v1299
  %v1301 = vrot.slane %v1191, %v1300
  %v1303 = vunpack.c.l.s4 839922192
  %v1304 = vunpack.c.0.s8 %v1303
  %v1305 = vlaneseq
  %v1306 = vshrl.u32 %v1305, 7
  %v1307 = vsub.s32 %v1304, %v1306
  %v1308 = vrot.slane %v1195, %v1307
  %v1324 = vmul.bf16 %v532, %v1210
  %v1325 = vmul.bf16 %v533, %v1210
  %v1326 = vmul.bf16 %v534, %v1217
  %v1327 = vmul.bf16 %v535, %v1217
  %v1328 = vmul.bf16 %v536, %v1224
  %v1329 = vmul.bf16 %v537, %v1224
  %v1330 = vmul.bf16 %v538, %v1231
  %v1331 = vmul.bf16 %v539, %v1231
  %v1332 = vmul.bf16 %v540, %v1238
  %v1333 = vmul.bf16 %v541, %v1238
  %v1334 = vmul.bf16 %v542, %v1245
  %v1335 = vmul.bf16 %v543, %v1245
  %v1336 = vmul.bf16 %v544, %v1252
  %v1337 = vmul.bf16 %v545, %v1252
  %v1338 = vmul.bf16 %v546, %v1259
  %v1339 = vmul.bf16 %v547, %v1259
  %v1340 = vmul.bf16 %v548, %v1266
  %v1341 = vmul.bf16 %v549, %v1266
  %v1342 = vmul.bf16 %v550, %v1273
  %v1343 = vmul.bf16 %v551, %v1273
  %v1344 = vmul.bf16 %v552, %v1280
  %v1345 = vmul.bf16 %v553, %v1280
  %v1346 = vmul.bf16 %v554, %v1287
  %v1347 = vmul.bf16 %v555, %v1287
  %v1348 = vmul.bf16 %v556, %v1294
  %v1349 = vmul.bf16 %v557, %v1294
  %v1350 = vmul.bf16 %v558, %v1301
  %v1351 = vmul.bf16 %v559, %v1301
  %v1352 = vmul.bf16 %v560, %v1308
  %v1353 = vmul.bf16 %v561, %v1308
  %1355 = vset.pattern.permute.xlu0 0
  %1356 = vperm.xlu0 %1355, %v1156
  %v1357 = vpop.permute.xlu0 %1356
  %1359 = vset.pattern.permute.xlu0 0
  %1360 = vperm.xlu0 %1359, %v1157
  %v1361 = vpop.permute.xlu0 %1360
  %1363 = vset.pattern.permute.xlu0 0
  %1364 = vperm.xlu0 %1363, %v1158
  %v1365 = vpop.permute.xlu0 %1364
  %1367 = vset.pattern.permute.xlu0 0
  %1368 = vperm.xlu0 %1367, %v1159
  %v1369 = vpop.permute.xlu0 %1368
  %1371 = vset.pattern.permute.xlu0 0
  %1372 = vperm.xlu0 %1371, %v1160
  %v1373 = vpop.permute.xlu0 %1372
  %1375 = vset.pattern.permute.xlu0 0
  %1376 = vperm.xlu0 %1375, %v1161
  %v1377 = vpop.permute.xlu0 %1376
  %1379 = vset.pattern.permute.xlu0 0
  %1380 = vperm.xlu0 %1379, %v1162
  %v1381 = vpop.permute.xlu0 %1380
  %1383 = vset.pattern.permute.xlu0 0
  %1384 = vperm.xlu0 %1383, %v1163
  %v1385 = vpop.permute.xlu0 %1384
  %v1395 = vunpack.c.l.s4 839922192
  %v1396 = vunpack.c.0.s8 %v1395
  %v1397 = vlaneseq
  %v1398 = vshrl.u32 %v1397, 7
  %v1399 = vsub.s32 %v1396, %v1398
  %v1400 = vrot.slane %v1357, %v1399
  %v1402 = vunpack.c.l.s4 1985246804
  %v1403 = vunpack.c.0.s8 %v1402
  %v1404 = vlaneseq
  %v1405 = vshrl.u32 %v1404, 7
  %v1406 = vsub.s32 %v1403, %v1405
  %v1407 = vrot.slane %v1357, %v1406
  %v1409 = vunpack.c.l.s4 839922192
  %v1410 = vunpack.c.0.s8 %v1409
  %v1411 = vlaneseq
  %v1412 = vshrl.u32 %v1411, 7
  %v1413 = vsub.s32 %v1410, %v1412
  %v1414 = vrot.slane %v1361, %v1413
  %v1416 = vunpack.c.l.s4 1985246804
  %v1417 = vunpack.c.0.s8 %v1416
  %v1418 = vlaneseq
  %v1419 = vshrl.u32 %v1418, 7
  %v1420 = vsub.s32 %v1417, %v1419
  %v1421 = vrot.slane %v1361, %v1420
  %v1423 = vunpack.c.l.s4 839922192
  %v1424 = vunpack.c.0.s8 %v1423
  %v1425 = vlaneseq
  %v1426 = vshrl.u32 %v1425, 7
  %v1427 = vsub.s32 %v1424, %v1426
  %v1428 = vrot.slane %v1365, %v1427
  %v1430 = vunpack.c.l.s4 1985246804
  %v1431 = vunpack.c.0.s8 %v1430
  %v1432 = vlaneseq
  %v1433 = vshrl.u32 %v1432, 7
  %v1434 = vsub.s32 %v1431, %v1433
  %v1435 = vrot.slane %v1365, %v1434
  %v1437 = vunpack.c.l.s4 839922192
  %v1438 = vunpack.c.0.s8 %v1437
  %v1439 = vlaneseq
  %v1440 = vshrl.u32 %v1439, 7
  %v1441 = vsub.s32 %v1438, %v1440
  %v1442 = vrot.slane %v1369, %v1441
  %v1444 = vunpack.c.l.s4 1985246804
  %v1445 = vunpack.c.0.s8 %v1444
  %v1446 = vlaneseq
  %v1447 = vshrl.u32 %v1446, 7
  %v1448 = vsub.s32 %v1445, %v1447
  %v1449 = vrot.slane %v1369, %v1448
  %v1451 = vunpack.c.l.s4 839922192
  %v1452 = vunpack.c.0.s8 %v1451
  %v1453 = vlaneseq
  %v1454 = vshrl.u32 %v1453, 7
  %v1455 = vsub.s32 %v1452, %v1454
  %v1456 = vrot.slane %v1373, %v1455
  %v1458 = vunpack.c.l.s4 1985246804
  %v1459 = vunpack.c.0.s8 %v1458
  %v1460 = vlaneseq
  %v1461 = vshrl.u32 %v1460, 7
  %v1462 = vsub.s32 %v1459, %v1461
  %v1463 = vrot.slane %v1373, %v1462
  %v1465 = vunpack.c.l.s4 839922192
  %v1466 = vunpack.c.0.s8 %v1465
  %v1467 = vlaneseq
  %v1468 = vshrl.u32 %v1467, 7
  %v1469 = vsub.s32 %v1466, %v1468
  %v1470 = vrot.slane %v1377, %v1469
  %v1472 = vunpack.c.l.s4 1985246804
  %v1473 = vunpack.c.0.s8 %v1472
  %v1474 = vlaneseq
  %v1475 = vshrl.u32 %v1474, 7
  %v1476 = vsub.s32 %v1473, %v1475
  %v1477 = vrot.slane %v1377, %v1476
  %v1479 = vunpack.c.l.s4 839922192
  %v1480 = vunpack.c.0.s8 %v1479
  %v1481 = vlaneseq
  %v1482 = vshrl.u32 %v1481, 7
  %v1483 = vsub.s32 %v1480, %v1482
  %v1484 = vrot.slane %v1381, %v1483
  %v1486 = vunpack.c.l.s4 1985246804
  %v1487 = vunpack.c.0.s8 %v1486
  %v1488 = vlaneseq
  %v1489 = vshrl.u32 %v1488, 7
  %v1490 = vsub.s32 %v1487, %v1489
  %v1491 = vrot.slane %v1381, %v1490
  %v1493 = vunpack.c.l.s4 839922192
  %v1494 = vunpack.c.0.s8 %v1493
  %v1495 = vlaneseq
  %v1496 = vshrl.u32 %v1495, 7
  %v1497 = vsub.s32 %v1494, %v1496
  %v1498 = vrot.slane %v1385, %v1497
  %v1514 = vadd.bf16 %v1324, %v1400
  %v1515 = vadd.bf16 %v1325, %v1400
  %v1516 = vadd.bf16 %v1326, %v1407
  %v1517 = vadd.bf16 %v1327, %v1407
  %v1518 = vadd.bf16 %v1328, %v1414
  %v1519 = vadd.bf16 %v1329, %v1414
  %v1520 = vadd.bf16 %v1330, %v1421
  %v1521 = vadd.bf16 %v1331, %v1421
  %v1522 = vadd.bf16 %v1332, %v1428
  %v1523 = vadd.bf16 %v1333, %v1428
  %v1524 = vadd.bf16 %v1334, %v1435
  %v1525 = vadd.bf16 %v1335, %v1435
  %v1526 = vadd.bf16 %v1336, %v1442
  %v1527 = vadd.bf16 %v1337, %v1442
  %v1528 = vadd.bf16 %v1338, %v1449
  %v1529 = vadd.bf16 %v1339, %v1449
  %v1530 = vadd.bf16 %v1340, %v1456
  %v1531 = vadd.bf16 %v1341, %v1456
  %v1532 = vadd.bf16 %v1342, %v1463
  %v1533 = vadd.bf16 %v1343, %v1463
  %v1534 = vadd.bf16 %v1344, %v1470
  %v1535 = vadd.bf16 %v1345, %v1470
  %v1536 = vadd.bf16 %v1346, %v1477
  %v1537 = vadd.bf16 %v1347, %v1477
  %v1538 = vadd.bf16 %v1348, %v1484
  %v1539 = vadd.bf16 %v1349, %v1484
  %v1540 = vadd.bf16 %v1350, %v1491
  %v1541 = vadd.bf16 %v1351, %v1491
  %v1542 = vadd.bf16 %v1352, %v1498
  %v1543 = vadd.bf16 %v1353, %v1498
  %v1544 = vmul.bf16 %v1514, 1009007652
  %v1545 = vmul.bf16 %v1515, 1009007652
  %v1546 = vmul.bf16 %v1516, 1009007652
  %v1547 = vmul.bf16 %v1517, 1009007652
  %v1548 = vmul.bf16 %v1518, 1009007652
  %v1549 = vmul.bf16 %v1519, 1009007652
  %v1550 = vmul.bf16 %v1520, 1009007652
  %v1551 = vmul.bf16 %v1521, 1009007652
  %v1552 = vmul.bf16 %v1522, 1009007652
  %v1553 = vmul.bf16 %v1523, 1009007652
  %v1554 = vmul.bf16 %v1524, 1009007652
  %v1555 = vmul.bf16 %v1525, 1009007652
  %v1556 = vmul.bf16 %v1526, 1009007652
  %v1557 = vmul.bf16 %v1527, 1009007652
  %v1558 = vmul.bf16 %v1528, 1009007652
  %v1559 = vmul.bf16 %v1529, 1009007652
  %v1560 = vmul.bf16 %v1530, 1009007652
  %v1561 = vmul.bf16 %v1531, 1009007652
  %v1562 = vmul.bf16 %v1532, 1009007652
  %v1563 = vmul.bf16 %v1533, 1009007652
  %v1564 = vmul.bf16 %v1534, 1009007652
  %v1565 = vmul.bf16 %v1535, 1009007652
  %v1566 = vmul.bf16 %v1536, 1009007652
  %v1567 = vmul.bf16 %v1537, 1009007652
  %v1568 = vmul.bf16 %v1538, 1009007652
  %v1569 = vmul.bf16 %v1539, 1009007652
  %v1570 = vmul.bf16 %v1540, 1009007652
  %v1571 = vmul.bf16 %v1541, 1009007652
  %v1572 = vmul.bf16 %v1542, 1009007652
  %v1573 = vmul.bf16 %v1543, 1009007652
  %v1574 = vmax.bf16 %v1514, %v1544
  %v1575 = vmax.bf16 %v1515, %v1545
  %v1576 = vmax.bf16 %v1516, %v1546
  %v1577 = vmax.bf16 %v1517, %v1547
  %v1578 = vmax.bf16 %v1518, %v1548
  %v1579 = vmax.bf16 %v1519, %v1549
  %v1580 = vmax.bf16 %v1520, %v1550
  %v1581 = vmax.bf16 %v1521, %v1551
  %v1582 = vmax.bf16 %v1522, %v1552
  %v1583 = vmax.bf16 %v1523, %v1553
  %v1584 = vmax.bf16 %v1524, %v1554
  %v1585 = vmax.bf16 %v1525, %v1555
  %v1586 = vmax.bf16 %v1526, %v1556
  %v1587 = vmax.bf16 %v1527, %v1557
  %v1588 = vmax.bf16 %v1528, %v1558
  %v1589 = vmax.bf16 %v1529, %v1559
  %v1590 = vmax.bf16 %v1530, %v1560
  %v1591 = vmax.bf16 %v1531, %v1561
  %v1592 = vmax.bf16 %v1532, %v1562
  %v1593 = vmax.bf16 %v1533, %v1563
  %v1594 = vmax.bf16 %v1534, %v1564
  %v1595 = vmax.bf16 %v1535, %v1565
  %v1596 = vmax.bf16 %v1536, %v1566
  %v1597 = vmax.bf16 %v1537, %v1567
  %v1598 = vmax.bf16 %v1538, %v1568
  %v1599 = vmax.bf16 %v1539, %v1569
  %v1600 = vmax.bf16 %v1540, %v1570
  %v1601 = vmax.bf16 %v1541, %v1571
  %v1602 = vmax.bf16 %v1542, %v1572
  %v1603 = vmax.bf16 %v1543, %v1573
  %v1604 = vld [vmem:[%s8] sm:$0xf]
  %v1605 = vld [vmem:[%s8 + $0x4] sm:$0xf]
  %v1606 = vld [vmem:[%s8 + $0x8] sm:$0xf]
  %v1607 = vld [vmem:[%s8 + $0xc] sm:$0xf]
  %v1608 = vld [vmem:[%s8 + $0x10] sm:$0xf]
  %v1609 = vld [vmem:[%s8 + $0x14] sm:$0xf]
  %v1610 = vld [vmem:[%s8 + $0x18] sm:$0xf]
  %v1611 = vld [vmem:[%s8 + $0x1c] sm:$0x3]
  %v1620 = vunpack.c.l.b16 %v1604
  %v1621 = vunpack.c.l.b16 %v1605
  %v1622 = vunpack.c.l.b16 %v1606
  %v1623 = vunpack.c.l.b16 %v1607
  %v1624 = vunpack.c.l.b16 %v1608
  %v1625 = vunpack.c.l.b16 %v1609
  %v1626 = vunpack.c.l.b16 %v1610
  %v1627 = vunpack.c.l.b16 %v1611
  %v1628 = vpack.c.b16 %v1621, %v1620
  %v1629 = vpack.c.b16 %v1623, %v1622
  %v1630 = vpack.c.b16 %v1625, %v1624
  %v1631 = vpack.c.b16 %v1627, %v1626
  %v1662 = vunpack.c.l.b16 %v1574
  %v1663 = vunpack.c.h.b16 %v1574
  %v1664 = vunpack.c.l.b16 %v1575
  %v1665 = vunpack.c.h.b16 %v1575
  %v1666 = vunpack.c.l.b16 %v1576
  %v1667 = vunpack.c.h.b16 %v1576
  %v1668 = vunpack.c.l.b16 %v1577
  %v1669 = vunpack.c.h.b16 %v1577
  %v1670 = vunpack.c.l.b16 %v1578
  %v1671 = vunpack.c.h.b16 %v1578
  %v1672 = vunpack.c.l.b16 %v1579
  %v1673 = vunpack.c.h.b16 %v1579
  %v1674 = vunpack.c.l.b16 %v1580
  %v1675 = vunpack.c.h.b16 %v1580
  %v1676 = vunpack.c.l.b16 %v1581
  %v1677 = vunpack.c.h.b16 %v1581
  %v1678 = vunpack.c.l.b16 %v1582
  %v1679 = vunpack.c.h.b16 %v1582
  %v1680 = vunpack.c.l.b16 %v1583
  %v1681 = vunpack.c.h.b16 %v1583
  %v1682 = vunpack.c.l.b16 %v1584
  %v1683 = vunpack.c.h.b16 %v1584
  %v1684 = vunpack.c.l.b16 %v1585
  %v1685 = vunpack.c.h.b16 %v1585
  %v1686 = vunpack.c.l.b16 %v1586
  %v1687 = vunpack.c.h.b16 %v1586
  %v1688 = vunpack.c.l.b16 %v1587
  %v1689 = vunpack.c.h.b16 %v1587
  %v1690 = vunpack.c.l.b16 %v1588
  %v1691 = vunpack.c.h.b16 %v1588
  %v1692 = vunpack.c.l.b16 %v1589
  %v1693 = vunpack.c.h.b16 %v1589
  %v1694 = vunpack.c.l.b16 %v1590
  %v1695 = vunpack.c.h.b16 %v1590
  %v1696 = vunpack.c.l.b16 %v1591
  %v1697 = vunpack.c.h.b16 %v1591
  %v1698 = vunpack.c.l.b16 %v1592
  %v1699 = vunpack.c.h.b16 %v1592
  %v1700 = vunpack.c.l.b16 %v1593
  %v1701 = vunpack.c.h.b16 %v1593
  %v1702 = vunpack.c.l.b16 %v1594
  %v1703 = vunpack.c.h.b16 %v1594
  %v1704 = vunpack.c.l.b16 %v1595
  %v1705 = vunpack.c.h.b16 %v1595
  %v1706 = vunpack.c.l.b16 %v1596
  %v1707 = vunpack.c.h.b16 %v1596
  %v1708 = vunpack.c.l.b16 %v1597
  %v1709 = vunpack.c.h.b16 %v1597
  %v1710 = vunpack.c.l.b16 %v1598
  %v1711 = vunpack.c.h.b16 %v1598
  %v1712 = vunpack.c.l.b16 %v1599
  %v1713 = vunpack.c.h.b16 %v1599
  %v1714 = vunpack.c.l.b16 %v1600
  %v1715 = vunpack.c.h.b16 %v1600
  %v1716 = vunpack.c.l.b16 %v1601
  %v1717 = vunpack.c.h.b16 %v1601
  %v1718 = vunpack.c.l.b16 %v1602
  %v1719 = vunpack.c.h.b16 %v1602
  %v1720 = vunpack.c.l.b16 %v1603
  %v1721 = vunpack.c.h.b16 %v1603
  %v1722 = vpack.c.b16 %v1666, %v1662
  %v1723 = vpack.c.b16 %v1667, %v1663
  %v1724 = vpack.c.b16 %v1668, %v1664
  %v1725 = vpack.c.b16 %v1669, %v1665
  %v1726 = vpack.c.b16 %v1674, %v1670
  %v1727 = vpack.c.b16 %v1675, %v1671
  %v1728 = vpack.c.b16 %v1676, %v1672
  %v1729 = vpack.c.b16 %v1677, %v1673
  %v1730 = vpack.c.b16 %v1682, %v1678
  %v1731 = vpack.c.b16 %v1683, %v1679
  %v1732 = vpack.c.b16 %v1684, %v1680
  %v1733 = vpack.c.b16 %v1685, %v1681
  %v1734 = vpack.c.b16 %v1690, %v1686
  %v1735 = vpack.c.b16 %v1691, %v1687
  %v1736 = vpack.c.b16 %v1692, %v1688
  %v1737 = vpack.c.b16 %v1693, %v1689
  %v1738 = vpack.c.b16 %v1698, %v1694
  %v1739 = vpack.c.b16 %v1699, %v1695
  %v1740 = vpack.c.b16 %v1700, %v1696
  %v1741 = vpack.c.b16 %v1701, %v1697
  %v1742 = vpack.c.b16 %v1706, %v1702
  %v1743 = vpack.c.b16 %v1707, %v1703
  %v1744 = vpack.c.b16 %v1708, %v1704
  %v1745 = vpack.c.b16 %v1709, %v1705
  %v1746 = vpack.c.b16 %v1714, %v1710
  %v1747 = vpack.c.b16 %v1715, %v1711
  %v1748 = vpack.c.b16 %v1716, %v1712
  %v1749 = vpack.c.b16 %v1717, %v1713
  %v1750 = vpack.c.b16 %v1718, %v1718
  %v1751 = vpack.c.b16 %v1719, %v1719
  %v1752 = vpack.c.b16 %v1720, %v1720
  %v1753 = vpack.c.b16 %v1721, %v1721
  %vm1782 = vcmask 982016
  %v1784 = vsel %vm1782, %v1628, 0
  %v1787 = vsel %vm1782, %v1629, 0
  %v1790 = vsel %vm1782, %v1630, 0
  %v1793 = vsel %vm1782, %v1631, 0
  %vm1795 = vcmask 1043456
  %v1797 = vsel %vm1795, %v1750, 0
  %v1800 = vsel %vm1795, %v1751, 0
  %v1803 = vsel %vm1795, %v1752, 0
  %v1806 = vsel %vm1795, %v1753, 0
  %1808 = vmatprep.subr.bf16.mxu0 %v1800
  %1809 = vmatpush1.bf16.msra.mxu0 %v1797
  %1810 = vmatprep.subr.bf16.mxu0 %v1747
  %1811 = vmatpush1.bf16.msra.mxu0 %v1746
  %1812 = vmatprep.subr.bf16.mxu0 %v1743
  %1813 = vmatpush1.bf16.msra.mxu0 %v1742
  %1814 = vmatprep.subr.bf16.mxu0 %v1739
  %1815 = vmatpush1.bf16.msra.mxu0 %v1738
  %1816 = vmatprep.subr.bf16.mxu0 %v1735
  %1817 = vmatpush1.bf16.msra.mxu0 %v1734
  %1818 = vmatprep.subr.bf16.mxu0 %v1731
  %1819 = vmatpush1.bf16.msra.mxu0 %v1730
  %1820 = vmatprep.subr.bf16.mxu0 %v1727
  %1821 = vmatpush1.bf16.msra.mxu0 %v1726
  %1822 = vmatprep.subr.bf16.mxu0 %v1723
  %1823 = vmatpush1.bf16.msra.mxu0 %v1722
  %1824 = vmatprep.subr.bf16.mxu0 0
  %1825 = vmatpush2.bf16.msra.mxu0 0
  %1826 = vmatprep.subr.bf16.mxu0 0
  %1827 = vmatpush2.bf16.msra.mxu0 0
  %1828 = vmatprep.subr.bf16.mxu0 0
  %1829 = vmatpush2.bf16.msra.mxu0 0
  %1830 = vmatprep.subr.bf16.mxu0 0
  %1831 = vmatpush2.bf16.msra.mxu0 0
  %1832 = vmatprep.subr.bf16.mxu0 0
  %1833 = vmatpush2.bf16.msra.mxu0 0
  %1834 = vmatprep.subr.bf16.mxu0 0
  %1835 = vmatpush2.bf16.msra.mxu0 0
  %1836 = vmatprep.subr.bf16.mxu0 0
  %1837 = vmatpush2.bf16.msra.mxu0 0
  %1838 = vmatprep.subr.bf16.mxu0 0
  %1839 = vmatpush2.bf16.msra.mxu0 0
  %1840 = vmatprep.mubr.bf16.mxu0 0
  %1841 = vmatmul.mubr.bf16.gmra.mxu0 %v1784
  %v1842 = vpop.f32.mrf.mxu0
  %v1843 = vadd.f32 0.0, %v1842
  %v1844 = vpop.f32.mrf.mxu0
  %v1845 = vadd.f32 0.0, %v1844
  %v1846 = vpop.f32.mrf.mxu0
  %v1847 = vadd.f32 0.0, %v1846
  %v1848 = vpop.f32.mrf.mxu0
  %v1849 = vadd.f32 0.0, %v1848
  %1850 = vmatprep.mubr.bf16.mxu0 0
  %1851 = vmatmul.mubr.bf16.gmra.mxu0 %v1787
  %v1852 = vpop.f32.mrf.mxu0
  %v1853 = vadd.f32 0.0, %v1852
  %v1854 = vpop.f32.mrf.mxu0
  %v1855 = vadd.f32 0.0, %v1854
  %v1856 = vpop.f32.mrf.mxu0
  %v1857 = vadd.f32 0.0, %v1856
  %v1858 = vpop.f32.mrf.mxu0
  %v1859 = vadd.f32 0.0, %v1858
  %1860 = vmatprep.mubr.bf16.mxu0 0
  %1861 = vmatmul.mubr.bf16.gmra.mxu0 %v1790
  %v1862 = vpop.f32.mrf.mxu0
  %v1863 = vadd.f32 0.0, %v1862
  %v1864 = vpop.f32.mrf.mxu0
  %v1865 = vadd.f32 0.0, %v1864
  %v1866 = vpop.f32.mrf.mxu0
  %v1867 = vadd.f32 0.0, %v1866
  %v1868 = vpop.f32.mrf.mxu0
  %v1869 = vadd.f32 0.0, %v1868
  %1870 = vmatprep.mubr.bf16.mxu0 0
  %1871 = vmatmul.mubr.bf16.gmra.mxu0 %v1793
  %v1872 = vpop.f32.mrf.mxu0
  %v1873 = vadd.f32 0.0, %v1872
  %v1874 = vpop.f32.mrf.mxu0
  %v1875 = vadd.f32 0.0, %v1874
  %v1876 = vpop.f32.mrf.mxu0
  %v1877 = vadd.f32 0.0, %v1876
  %v1878 = vpop.f32.mrf.mxu0
  %v1879 = vadd.f32 0.0, %v1878
  %1880 = vdwg.mxu0
  %1881 = vmatprep.subr.bf16.mxu0 %v1806
  %1882 = vmatpush1.bf16.msra.mxu0 %v1803
  %1883 = vmatprep.subr.bf16.mxu0 %v1749
  %1884 = vmatpush1.bf16.msra.mxu0 %v1748
  %1885 = vmatprep.subr.bf16.mxu0 %v1745
  %1886 = vmatpush1.bf16.msra.mxu0 %v1744
  %1887 = vmatprep.subr.bf16.mxu0 %v1741
  %1888 = vmatpush1.bf16.msra.mxu0 %v1740
  %1889 = vmatprep.subr.bf16.mxu0 %v1737
  %1890 = vmatpush1.bf16.msra.mxu0 %v1736
  %1891 = vmatprep.subr.bf16.mxu0 %v1733
  %1892 = vmatpush1.bf16.msra.mxu0 %v1732
  %1893 = vmatprep.subr.bf16.mxu0 %v1729
  %1894 = vmatpush1.bf16.msra.mxu0 %v1728
  %1895 = vmatprep.subr.bf16.mxu0 %v1725
  %1896 = vmatpush1.bf16.msra.mxu0 %v1724
  %1897 = vmatprep.subr.bf16.mxu0 0
  %1898 = vmatpush2.bf16.msra.mxu0 0
  %1899 = vmatprep.subr.bf16.mxu0 0
  %1900 = vmatpush2.bf16.msra.mxu0 0
  %1901 = vmatprep.subr.bf16.mxu0 0
  %1902 = vmatpush2.bf16.msra.mxu0 0
  %1903 = vmatprep.subr.bf16.mxu0 0
  %1904 = vmatpush2.bf16.msra.mxu0 0
  %1905 = vmatprep.subr.bf16.mxu0 0
  %1906 = vmatpush2.bf16.msra.mxu0 0
  %1907 = vmatprep.subr.bf16.mxu0 0
  %1908 = vmatpush2.bf16.msra.mxu0 0
  %1909 = vmatprep.subr.bf16.mxu0 0
  %1910 = vmatpush2.bf16.msra.mxu0 0
  %1911 = vmatprep.subr.bf16.mxu0 0
  %1912 = vmatpush2.bf16.msra.mxu0 0
  %1913 = vmatprep.mubr.bf16.mxu0 0
  %1914 = vmatmul.mubr.bf16.gmra.mxu0 %v1784
  %v1915 = vpop.f32.mrf.mxu0
  %v1916 = vadd.f32 0.0, %v1915
  %v1917 = vpop.f32.mrf.mxu0
  %v1918 = vadd.f32 0.0, %v1917
  %v1919 = vpop.f32.mrf.mxu0
  %v1920 = vadd.f32 0.0, %v1919
  %v1921 = vpop.f32.mrf.mxu0
  %v1922 = vadd.f32 0.0, %v1921
  %1923 = vmatprep.mubr.bf16.mxu0 0
  %1924 = vmatmul.mubr.bf16.gmra.mxu0 %v1787
  %v1925 = vpop.f32.mrf.mxu0
  %v1926 = vadd.f32 0.0, %v1925
  %v1927 = vpop.f32.mrf.mxu0
  %v1928 = vadd.f32 0.0, %v1927
  %v1929 = vpop.f32.mrf.mxu0
  %v1930 = vadd.f32 0.0, %v1929
  %v1931 = vpop.f32.mrf.mxu0
  %v1932 = vadd.f32 0.0, %v1931
  %1933 = vmatprep.mubr.bf16.mxu0 0
  %1934 = vmatmul.mubr.bf16.gmra.mxu0 %v1790
  %v1935 = vpop.f32.mrf.mxu0
  %v1936 = vadd.f32 0.0, %v1935
  %v1937 = vpop.f32.mrf.mxu0
  %v1938 = vadd.f32 0.0, %v1937
  %v1939 = vpop.f32.mrf.mxu0
  %v1940 = vadd.f32 0.0, %v1939
  %v1941 = vpop.f32.mrf.mxu0
  %v1942 = vadd.f32 0.0, %v1941
  %1943 = vmatprep.mubr.bf16.mxu0 0
  %1944 = vmatmul.mubr.bf16.gmra.mxu0 %v1793
  %v1945 = vpop.f32.mrf.mxu0
  %v1946 = vadd.f32 0.0, %v1945
  %v1947 = vpop.f32.mrf.mxu0
  %v1948 = vadd.f32 0.0, %v1947
  %v1949 = vpop.f32.mrf.mxu0
  %v1950 = vadd.f32 0.0, %v1949
  %v1951 = vpop.f32.mrf.mxu0
  %v1952 = vadd.f32 0.0, %v1951
  %1953 = vdwg.mxu0
  %v1962 = vunpack.c.l.b16 %v1140
  %v1963 = vunpack.c.l.b16 %v1141
  %v1964 = vunpack.c.l.b16 %v1142
  %v1965 = vunpack.c.l.b16 %v1143
  %v1966 = vunpack.c.l.b16 %v1144
  %v1967 = vunpack.c.l.b16 %v1145
  %v1968 = vunpack.c.l.b16 %v1146
  %v1969 = vunpack.c.l.b16 %v1147
  %v1970 = vpack.c.b16 %v1963, %v1962
  %v1971 = vpack.c.b16 %v1965, %v1964
  %v1972 = vpack.c.b16 %v1967, %v1966
  %v1973 = vpack.c.b16 %v1969, %v1968
  %v2004 = vunpack.c.l.b16 %v1110
  %v2005 = vunpack.c.h.b16 %v1110
  %v2006 = vunpack.c.l.b16 %v1111
  %v2007 = vunpack.c.h.b16 %v1111
  %v2008 = vunpack.c.l.b16 %v1112
  %v2009 = vunpack.c.h.b16 %v1112
  %v2010 = vunpack.c.l.b16 %v1113
  %v2011 = vunpack.c.h.b16 %v1113
  %v2012 = vunpack.c.l.b16 %v1114
  %v2013 = vunpack.c.h.b16 %v1114
  %v2014 = vunpack.c.l.b16 %v1115
  %v2015 = vunpack.c.h.b16 %v1115
  %v2016 = vunpack.c.l.b16 %v1116
  %v2017 = vunpack.c.h.b16 %v1116
  %v2018 = vunpack.c.l.b16 %v1117
  %v2019 = vunpack.c.h.b16 %v1117
  %v2020 = vunpack.c.l.b16 %v1118
  %v2021 = vunpack.c.h.b16 %v1118
  %v2022 = vunpack.c.l.b16 %v1119
  %v2023 = vunpack.c.h.b16 %v1119
  %v2024 = vunpack.c.l.b16 %v1120
  %v2025 = vunpack.c.h.b16 %v1120
  %v2026 = vunpack.c.l.b16 %v1121
  %v2027 = vunpack.c.h.b16 %v1121
  %v2028 = vunpack.c.l.b16 %v1122
  %v2029 = vunpack.c.h.b16 %v1122
  %v2030 = vunpack.c.l.b16 %v1123
  %v2031 = vunpack.c.h.b16 %v1123
  %v2032 = vunpack.c.l.b16 %v1124
  %v2033 = vunpack.c.h.b16 %v1124
  %v2034 = vunpack.c.l.b16 %v1125
  %v2035 = vunpack.c.h.b16 %v1125
  %v2036 = vunpack.c.l.b16 %v1126
  %v2037 = vunpack.c.h.b16 %v1126
  %v2038 = vunpack.c.l.b16 %v1127
  %v2039 = vunpack.c.h.b16 %v1127
  %v2040 = vunpack.c.l.b16 %v1128
  %v2041 = vunpack.c.h.b16 %v1128
  %v2042 = vunpack.c.l.b16 %v1129
  %v2043 = vunpack.c.h.b16 %v1129
  %v2044 = vunpack.c.l.b16 %v1130
  %v2045 = vunpack.c.h.b16 %v1130
  %v2046 = vunpack.c.l.b16 %v1131
  %v2047 = vunpack.c.h.b16 %v1131
  %v2048 = vunpack.c.l.b16 %v1132
  %v2049 = vunpack.c.h.b16 %v1132
  %v2050 = vunpack.c.l.b16 %v1133
  %v2051 = vunpack.c.h.b16 %v1133
  %v2052 = vunpack.c.l.b16 %v1134
  %v2053 = vunpack.c.h.b16 %v1134
  %v2054 = vunpack.c.l.b16 %v1135
  %v2055 = vunpack.c.h.b16 %v1135
  %v2056 = vunpack.c.l.b16 %v1136
  %v2057 = vunpack.c.h.b16 %v1136
  %v2058 = vunpack.c.l.b16 %v1137
  %v2059 = vunpack.c.h.b16 %v1137
  %v2060 = vunpack.c.l.b16 %v1138
  %v2061 = vunpack.c.h.b16 %v1138
  %v2062 = vunpack.c.l.b16 %v1139
  %v2063 = vunpack.c.h.b16 %v1139
  %v2064 = vpack.c.b16 %v2008, %v2004
  %v2065 = vpack.c.b16 %v2009, %v2005
  %v2066 = vpack.c.b16 %v2010, %v2006
  %v2067 = vpack.c.b16 %v2011, %v2007
  %v2068 = vpack.c.b16 %v2016, %v2012
  %v2069 = vpack.c.b16 %v2017, %v2013
  %v2070 = vpack.c.b16 %v2018, %v2014
  %v2071 = vpack.c.b16 %v2019, %v2015
  %v2072 = vpack.c.b16 %v2024, %v2020
  %v2073 = vpack.c.b16 %v2025, %v2021
  %v2074 = vpack.c.b16 %v2026, %v2022
  %v2075 = vpack.c.b16 %v2027, %v2023
  %v2076 = vpack.c.b16 %v2032, %v2028
  %v2077 = vpack.c.b16 %v2033, %v2029
  %v2078 = vpack.c.b16 %v2034, %v2030
  %v2079 = vpack.c.b16 %v2035, %v2031
  %v2080 = vpack.c.b16 %v2040, %v2036
  %v2081 = vpack.c.b16 %v2041, %v2037
  %v2082 = vpack.c.b16 %v2042, %v2038
  %v2083 = vpack.c.b16 %v2043, %v2039
  %v2084 = vpack.c.b16 %v2048, %v2044
  %v2085 = vpack.c.b16 %v2049, %v2045
  %v2086 = vpack.c.b16 %v2050, %v2046
  %v2087 = vpack.c.b16 %v2051, %v2047
  %v2088 = vpack.c.b16 %v2056, %v2052
  %v2089 = vpack.c.b16 %v2057, %v2053
  %v2090 = vpack.c.b16 %v2058, %v2054
  %v2091 = vpack.c.b16 %v2059, %v2055
  %v2092 = vpack.c.b16 %v2060, %v2060
  %v2093 = vpack.c.b16 %v2061, %v2061
  %v2094 = vpack.c.b16 %v2062, %v2062
  %v2095 = vpack.c.b16 %v2063, %v2063
  %v2125 = vsel %vm1782, %v1970, 0
  %v2128 = vsel %vm1782, %v1971, 0
  %v2131 = vsel %vm1782, %v1972, 0
  %v2134 = vsel %vm1782, %v1973, 0
  %v2137 = vsel %vm1795, %v2092, 0
  %v2140 = vsel %vm1795, %v2093, 0
  %v2143 = vsel %vm1795, %v2094, 0
  %v2146 = vsel %vm1795, %v2095, 0
  %2148 = vmatprep.subr.bf16.mxu0 %v2140
  %2149 = vmatpush1.bf16.msra.mxu0 %v2137
  %2150 = vmatprep.subr.bf16.mxu0 %v2089
  %2151 = vmatpush1.bf16.msra.mxu0 %v2088
  %2152 = vmatprep.subr.bf16.mxu0 %v2085
  %2153 = vmatpush1.bf16.msra.mxu0 %v2084
  %2154 = vmatprep.subr.bf16.mxu0 %v2081
  %2155 = vmatpush1.bf16.msra.mxu0 %v2080
  %2156 = vmatprep.subr.bf16.mxu0 %v2077
  %2157 = vmatpush1.bf16.msra.mxu0 %v2076
  %2158 = vmatprep.subr.bf16.mxu0 %v2073
  %2159 = vmatpush1.bf16.msra.mxu0 %v2072
  %2160 = vmatprep.subr.bf16.mxu0 %v2069
  %2161 = vmatpush1.bf16.msra.mxu0 %v2068
  %2162 = vmatprep.subr.bf16.mxu0 %v2065
  %2163 = vmatpush1.bf16.msra.mxu0 %v2064
  %2164 = vmatprep.subr.bf16.mxu0 0
  %2165 = vmatpush2.bf16.msra.mxu0 0
  %2166 = vmatprep.subr.bf16.mxu0 0
  %2167 = vmatpush2.bf16.msra.mxu0 0
  %2168 = vmatprep.subr.bf16.mxu0 0
  %2169 = vmatpush2.bf16.msra.mxu0 0
  %2170 = vmatprep.subr.bf16.mxu0 0
  %2171 = vmatpush2.bf16.msra.mxu0 0
  %2172 = vmatprep.subr.bf16.mxu0 0
  %2173 = vmatpush2.bf16.msra.mxu0 0
  %2174 = vmatprep.subr.bf16.mxu0 0
  %2175 = vmatpush2.bf16.msra.mxu0 0
  %2176 = vmatprep.subr.bf16.mxu0 0
  %2177 = vmatpush2.bf16.msra.mxu0 0
  %2178 = vmatprep.subr.bf16.mxu0 0
  %2179 = vmatpush2.bf16.msra.mxu0 0
  %2180 = vmatprep.mubr.bf16.mxu0 0
  %2181 = vmatmul.mubr.bf16.gmra.mxu0 %v2125
  %v2182 = vpop.f32.mrf.mxu0
  %v2183 = vadd.f32 %v1843, %v2182
  %v2184 = vpop.f32.mrf.mxu0
  %v2185 = vadd.f32 %v1845, %v2184
  %v2186 = vpop.f32.mrf.mxu0
  %v2187 = vadd.f32 %v1847, %v2186
  %v2188 = vpop.f32.mrf.mxu0
  %v2189 = vadd.f32 %v1849, %v2188
  %2190 = vmatprep.mubr.bf16.mxu0 0
  %2191 = vmatmul.mubr.bf16.gmra.mxu0 %v2128
  %v2192 = vpop.f32.mrf.mxu0
  %v2193 = vadd.f32 %v1853, %v2192
  %v2194 = vpop.f32.mrf.mxu0
  %v2195 = vadd.f32 %v1855, %v2194
  %v2196 = vpop.f32.mrf.mxu0
  %v2197 = vadd.f32 %v1857, %v2196
  %v2198 = vpop.f32.mrf.mxu0
  %v2199 = vadd.f32 %v1859, %v2198
  %2200 = vmatprep.mubr.bf16.mxu0 0
  %2201 = vmatmul.mubr.bf16.gmra.mxu0 %v2131
  %v2202 = vpop.f32.mrf.mxu0
  %v2203 = vadd.f32 %v1863, %v2202
  %v2204 = vpop.f32.mrf.mxu0
  %v2205 = vadd.f32 %v1865, %v2204
  %v2206 = vpop.f32.mrf.mxu0
  %v2207 = vadd.f32 %v1867, %v2206
  %v2208 = vpop.f32.mrf.mxu0
  %v2209 = vadd.f32 %v1869, %v2208
  %2210 = vmatprep.mubr.bf16.mxu0 0
  %2211 = vmatmul.mubr.bf16.gmra.mxu0 %v2134
  %v2212 = vpop.f32.mrf.mxu0
  %v2213 = vadd.f32 %v1873, %v2212
  %v2214 = vpop.f32.mrf.mxu0
  %v2215 = vadd.f32 %v1875, %v2214
  %v2216 = vpop.f32.mrf.mxu0
  %v2217 = vadd.f32 %v1877, %v2216
  %v2218 = vpop.f32.mrf.mxu0
  %v2219 = vadd.f32 %v1879, %v2218
  %2220 = vdwg.mxu0
  %2221 = vmatprep.subr.bf16.mxu0 %v2146
  %2222 = vmatpush1.bf16.msra.mxu0 %v2143
  %2223 = vmatprep.subr.bf16.mxu0 %v2091
  %2224 = vmatpush1.bf16.msra.mxu0 %v2090
  %2225 = vmatprep.subr.bf16.mxu0 %v2087
  %2226 = vmatpush1.bf16.msra.mxu0 %v2086
  %2227 = vmatprep.subr.bf16.mxu0 %v2083
  %2228 = vmatpush1.bf16.msra.mxu0 %v2082
  %2229 = vmatprep.subr.bf16.mxu0 %v2079
  %2230 = vmatpush1.bf16.msra.mxu0 %v2078
  %2231 = vmatprep.subr.bf16.mxu0 %v2075
  %2232 = vmatpush1.bf16.msra.mxu0 %v2074
  %2233 = vmatprep.subr.bf16.mxu0 %v2071
  %2234 = vmatpush1.bf16.msra.mxu0 %v2070
  %2235 = vmatprep.subr.bf16.mxu0 %v2067
  %2236 = vmatpush1.bf16.msra.mxu0 %v2066
  %2237 = vmatprep.subr.bf16.mxu0 0
  %2238 = vmatpush2.bf16.msra.mxu0 0
  %2239 = vmatprep.subr.bf16.mxu0 0
  %2240 = vmatpush2.bf16.msra.mxu0 0
  %2241 = vmatprep.subr.bf16.mxu0 0
  %2242 = vmatpush2.bf16.msra.mxu0 0
  %2243 = vmatprep.subr.bf16.mxu0 0
  %2244 = vmatpush2.bf16.msra.mxu0 0
  %2245 = vmatprep.subr.bf16.mxu0 0
  %2246 = vmatpush2.bf16.msra.mxu0 0
  %2247 = vmatprep.subr.bf16.mxu0 0
  %2248 = vmatpush2.bf16.msra.mxu0 0
  %2249 = vmatprep.subr.bf16.mxu0 0
  %2250 = vmatpush2.bf16.msra.mxu0 0
  %2251 = vmatprep.subr.bf16.mxu0 0
  %2252 = vmatpush2.bf16.msra.mxu0 0
  %2253 = vmatprep.mubr.bf16.mxu0 0
  %2254 = vmatmul.mubr.bf16.gmra.mxu0 %v2125
  %v2255 = vpop.f32.mrf.mxu0
  %v2256 = vadd.f32 %v1916, %v2255
  %v2257 = vpop.f32.mrf.mxu0
  %v2258 = vadd.f32 %v1918, %v2257
  %v2259 = vpop.f32.mrf.mxu0
  %v2260 = vadd.f32 %v1920, %v2259
  %v2261 = vpop.f32.mrf.mxu0
  %v2262 = vadd.f32 %v1922, %v2261
  %2263 = vmatprep.mubr.bf16.mxu0 0
  %2264 = vmatmul.mubr.bf16.gmra.mxu0 %v2128
  %v2265 = vpop.f32.mrf.mxu0
  %v2266 = vadd.f32 %v1926, %v2265
  %v2267 = vpop.f32.mrf.mxu0
  %v2268 = vadd.f32 %v1928, %v2267
  %v2269 = vpop.f32.mrf.mxu0
  %v2270 = vadd.f32 %v1930, %v2269
  %v2271 = vpop.f32.mrf.mxu0
  %v2272 = vadd.f32 %v1932, %v2271
  %2273 = vmatprep.mubr.bf16.mxu0 0
  %2274 = vmatmul.mubr.bf16.gmra.mxu0 %v2131
  %v2275 = vpop.f32.mrf.mxu0
  %v2276 = vadd.f32 %v1936, %v2275
  %v2277 = vpop.f32.mrf.mxu0
  %v2278 = vadd.f32 %v1938, %v2277
  %v2279 = vpop.f32.mrf.mxu0
  %v2280 = vadd.f32 %v1940, %v2279
  %v2281 = vpop.f32.mrf.mxu0
  %v2282 = vadd.f32 %v1942, %v2281
  %2283 = vmatprep.mubr.bf16.mxu0 0
  %2284 = vmatmul.mubr.bf16.gmra.mxu0 %v2134
  %v2285 = vpop.f32.mrf.mxu0
  %v2286 = vadd.f32 %v1946, %v2285
  %v2287 = vpop.f32.mrf.mxu0
  %v2288 = vadd.f32 %v1948, %v2287
  %v2289 = vpop.f32.mrf.mxu0
  %v2290 = vadd.f32 %v1950, %v2289
  %v2291 = vpop.f32.mrf.mxu0
  %v2292 = vadd.f32 %v1952, %v2291
  %2293 = vdwg.mxu0
  %v2294 = vpack.c.bf16 %v625, %v624
  %v2295 = vpack.c.bf16 %v627, %v626
  %v2296 = vpack.c.bf16 %v629, %v628
  %v2297 = vpack.c.bf16 %v631, %v630
  %v2298 = vpack.c.bf16 %v670, %v669
  %v2299 = vpack.c.bf16 %v672, %v671
  %v2300 = vpack.c.bf16 %v674, %v673
  %v2301 = vpack.c.bf16 %v676, %v675
  %2303 = vset.pattern.permute.xlu0 0
  %2304 = vperm.xlu0 %2303, %v2294
  %v2305 = vpop.permute.xlu0 %2304
  %2307 = vset.pattern.permute.xlu0 0
  %2308 = vperm.xlu0 %2307, %v2295
  %v2309 = vpop.permute.xlu0 %2308
  %2311 = vset.pattern.permute.xlu0 0
  %2312 = vperm.xlu0 %2311, %v2296
  %v2313 = vpop.permute.xlu0 %2312
  %2315 = vset.pattern.permute.xlu0 0
  %2316 = vperm.xlu0 %2315, %v2297
  %v2317 = vpop.permute.xlu0 %2316
  %v2323 = vunpack.c.l.s4 839922192
  %v2324 = vunpack.c.0.s8 %v2323
  %v2325 = vlaneseq
  %v2326 = vshrl.u32 %v2325, 7
  %v2327 = vsub.s32 %v2324, %v2326
  %v2328 = vrot.slane %v2305, %v2327
  %v2330 = vunpack.c.l.s4 1985246804
  %v2331 = vunpack.c.0.s8 %v2330
  %v2332 = vlaneseq
  %v2333 = vshrl.u32 %v2332, 7
  %v2334 = vsub.s32 %v2331, %v2333
  %v2335 = vrot.slane %v2305, %v2334
  %v2337 = vunpack.c.l.s4 839922192
  %v2338 = vunpack.c.0.s8 %v2337
  %v2339 = vlaneseq
  %v2340 = vshrl.u32 %v2339, 7
  %v2341 = vsub.s32 %v2338, %v2340
  %v2342 = vrot.slane %v2309, %v2341
  %v2344 = vunpack.c.l.s4 1985246804
  %v2345 = vunpack.c.0.s8 %v2344
  %v2346 = vlaneseq
  %v2347 = vshrl.u32 %v2346, 7
  %v2348 = vsub.s32 %v2345, %v2347
  %v2349 = vrot.slane %v2309, %v2348
  %v2351 = vunpack.c.l.s4 839922192
  %v2352 = vunpack.c.0.s8 %v2351
  %v2353 = vlaneseq
  %v2354 = vshrl.u32 %v2353, 7
  %v2355 = vsub.s32 %v2352, %v2354
  %v2356 = vrot.slane %v2313, %v2355
  %v2358 = vunpack.c.l.s4 1985246804
  %v2359 = vunpack.c.0.s8 %v2358
  %v2360 = vlaneseq
  %v2361 = vshrl.u32 %v2360, 7
  %v2362 = vsub.s32 %v2359, %v2361
  %v2363 = vrot.slane %v2313, %v2362
  %v2365 = vunpack.c.l.s4 839922192
  %v2366 = vunpack.c.0.s8 %v2365
  %v2367 = vlaneseq
  %v2368 = vshrl.u32 %v2367, 7
  %v2369 = vsub.s32 %v2366, %v2368
  %v2370 = vrot.slane %v2317, %v2369
  %v2372 = vunpack.c.l.s4 1985246804
  %v2373 = vunpack.c.0.s8 %v2372
  %v2374 = vlaneseq
  %v2375 = vshrl.u32 %v2374, 7
  %v2376 = vsub.s32 %v2373, %v2375
  %v2377 = vrot.slane %v2317, %v2376
  %v2386 = vmul.bf16 %v562, %v2328
  %v2387 = vmul.bf16 %v563, %v2328
  %v2388 = vmul.bf16 %v564, %v2335
  %v2389 = vmul.bf16 %v565, %v2335
  %v2390 = vmul.bf16 %v566, %v2342
  %v2391 = vmul.bf16 %v567, %v2342
  %v2392 = vmul.bf16 %v568, %v2349
  %v2393 = vmul.bf16 %v569, %v2349
  %v2394 = vmul.bf16 %v570, %v2356
  %v2395 = vmul.bf16 %v571, %v2356
  %v2396 = vmul.bf16 %v572, %v2363
  %v2397 = vmul.bf16 %v573, %v2363
  %v2398 = vmul.bf16 %v574, %v2370
  %v2399 = vmul.bf16 %v575, %v2370
  %v2400 = vmul.bf16 %v576, %v2377
  %v2401 = vmul.bf16 %v577, %v2377
  %2403 = vset.pattern.permute.xlu0 0
  %2404 = vperm.xlu0 %2403, %v2298
  %v2405 = vpop.permute.xlu0 %2404
  %2407 = vset.pattern.permute.xlu0 0
  %2408 = vperm.xlu0 %2407, %v2299
  %v2409 = vpop.permute.xlu0 %2408
  %2411 = vset.pattern.permute.xlu0 0
  %2412 = vperm.xlu0 %2411, %v2300
  %v2413 = vpop.permute.xlu0 %2412
  %2415 = vset.pattern.permute.xlu0 0
  %2416 = vperm.xlu0 %2415, %v2301
  %v2417 = vpop.permute.xlu0 %2416
  %v2423 = vunpack.c.l.s4 839922192
  %v2424 = vunpack.c.0.s8 %v2423
  %v2425 = vlaneseq
  %v2426 = vshrl.u32 %v2425, 7
  %v2427 = vsub.s32 %v2424, %v2426
  %v2428 = vrot.slane %v2405, %v2427
  %v2430 = vunpack.c.l.s4 1985246804
  %v2431 = vunpack.c.0.s8 %v2430
  %v2432 = vlaneseq
  %v2433 = vshrl.u32 %v2432, 7
  %v2434 = vsub.s32 %v2431, %v2433
  %v2435 = vrot.slane %v2405, %v2434
  %v2437 = vunpack.c.l.s4 839922192
  %v2438 = vunpack.c.0.s8 %v2437
  %v2439 = vlaneseq
  %v2440 = vshrl.u32 %v2439, 7
  %v2441 = vsub.s32 %v2438, %v2440
  %v2442 = vrot.slane %v2409, %v2441
  %v2444 = vunpack.c.l.s4 1985246804
  %v2445 = vunpack.c.0.s8 %v2444
  %v2446 = vlaneseq
  %v2447 = vshrl.u32 %v2446, 7
  %v2448 = vsub.s32 %v2445, %v2447
  %v2449 = vrot.slane %v2409, %v2448
  %v2451 = vunpack.c.l.s4 839922192
  %v2452 = vunpack.c.0.s8 %v2451
  %v2453 = vlaneseq
  %v2454 = vshrl.u32 %v2453, 7
  %v2455 = vsub.s32 %v2452, %v2454
  %v2456 = vrot.slane %v2413, %v2455
  %v2458 = vunpack.c.l.s4 1985246804
  %v2459 = vunpack.c.0.s8 %v2458
  %v2460 = vlaneseq
  %v2461 = vshrl.u32 %v2460, 7
  %v2462 = vsub.s32 %v2459, %v2461
  %v2463 = vrot.slane %v2413, %v2462
  %v2465 = vunpack.c.l.s4 839922192
  %v2466 = vunpack.c.0.s8 %v2465
  %v2467 = vlaneseq
  %v2468 = vshrl.u32 %v2467, 7
  %v2469 = vsub.s32 %v2466, %v2468
  %v2470 = vrot.slane %v2417, %v2469
  %v2472 = vunpack.c.l.s4 1985246804
  %v2473 = vunpack.c.0.s8 %v2472
  %v2474 = vlaneseq
  %v2475 = vshrl.u32 %v2474, 7
  %v2476 = vsub.s32 %v2473, %v2475
  %v2477 = vrot.slane %v2417, %v2476
  %v2486 = vadd.bf16 %v2386, %v2428
  %v2487 = vadd.bf16 %v2387, %v2428
  %v2488 = vadd.bf16 %v2388, %v2435
  %v2489 = vadd.bf16 %v2389, %v2435
  %v2490 = vadd.bf16 %v2390, %v2442
  %v2491 = vadd.bf16 %v2391, %v2442
  %v2492 = vadd.bf16 %v2392, %v2449
  %v2493 = vadd.bf16 %v2393, %v2449
  %v2494 = vadd.bf16 %v2394, %v2456
  %v2495 = vadd.bf16 %v2395, %v2456
  %v2496 = vadd.bf16 %v2396, %v2463
  %v2497 = vadd.bf16 %v2397, %v2463
  %v2498 = vadd.bf16 %v2398, %v2470
  %v2499 = vadd.bf16 %v2399, %v2470
  %v2500 = vadd.bf16 %v2400, %v2477
  %v2501 = vadd.bf16 %v2401, %v2477
  %v2502 = vmul.bf16 %v2486, 1009007652
  %v2503 = vmul.bf16 %v2487, 1009007652
  %v2504 = vmul.bf16 %v2488, 1009007652
  %v2505 = vmul.bf16 %v2489, 1009007652
  %v2506 = vmul.bf16 %v2490, 1009007652
  %v2507 = vmul.bf16 %v2491, 1009007652
  %v2508 = vmul.bf16 %v2492, 1009007652
  %v2509 = vmul.bf16 %v2493, 1009007652
  %v2510 = vmul.bf16 %v2494, 1009007652
  %v2511 = vmul.bf16 %v2495, 1009007652
  %v2512 = vmul.bf16 %v2496, 1009007652
  %v2513 = vmul.bf16 %v2497, 1009007652
  %v2514 = vmul.bf16 %v2498, 1009007652
  %v2515 = vmul.bf16 %v2499, 1009007652
  %v2516 = vmul.bf16 %v2500, 1009007652
  %v2517 = vmul.bf16 %v2501, 1009007652
  %v2518 = vmax.bf16 %v2486, %v2502
  %v2519 = vmax.bf16 %v2487, %v2503
  %v2520 = vmax.bf16 %v2488, %v2504
  %v2521 = vmax.bf16 %v2489, %v2505
  %v2522 = vmax.bf16 %v2490, %v2506
  %v2523 = vmax.bf16 %v2491, %v2507
  %v2524 = vmax.bf16 %v2492, %v2508
  %v2525 = vmax.bf16 %v2493, %v2509
  %v2526 = vmax.bf16 %v2494, %v2510
  %v2527 = vmax.bf16 %v2495, %v2511
  %v2528 = vmax.bf16 %v2496, %v2512
  %v2529 = vmax.bf16 %v2497, %v2513
  %v2530 = vmax.bf16 %v2498, %v2514
  %v2531 = vmax.bf16 %v2499, %v2515
  %v2532 = vmax.bf16 %v2500, %v2516
  %v2533 = vmax.bf16 %v2501, %v2517
  %v2534 = vld [vmem:[%s9] sm:$0xf]
  %v2535 = vld [vmem:[%s9 + $0x4] sm:$0xf]
  %v2536 = vld [vmem:[%s9 + $0x8] sm:$0xf]
  %v2537 = vld [vmem:[%s9 + $0xc] sm:$0xf]
  %v2538 = vld [vmem:[%s9 + $0x10] sm:$0xf]
  %v2539 = vld [vmem:[%s9 + $0x14] sm:$0xf]
  %v2540 = vld [vmem:[%s9 + $0x18] sm:$0xf]
  %v2541 = vld [vmem:[%s9 + $0x1c] sm:$0x3]
  %v2550 = vunpack.c.l.b16 %v2534
  %v2551 = vunpack.c.l.b16 %v2535
  %v2552 = vunpack.c.l.b16 %v2536
  %v2553 = vunpack.c.l.b16 %v2537
  %v2554 = vunpack.c.l.b16 %v2538
  %v2555 = vunpack.c.l.b16 %v2539
  %v2556 = vunpack.c.l.b16 %v2540
  %v2557 = vunpack.c.l.b16 %v2541
  %v2558 = vpack.c.b16 %v2551, %v2550
  %v2559 = vpack.c.b16 %v2553, %v2552
  %v2560 = vpack.c.b16 %v2555, %v2554
  %v2561 = vpack.c.b16 %v2557, %v2556
  %v2578 = vunpack.c.l.b16 %v2518
  %v2579 = vunpack.c.h.b16 %v2518
  %v2580 = vunpack.c.l.b16 %v2519
  %v2581 = vunpack.c.h.b16 %v2519
  %v2582 = vunpack.c.l.b16 %v2520
  %v2583 = vunpack.c.h.b16 %v2520
  %v2584 = vunpack.c.l.b16 %v2521
  %v2585 = vunpack.c.h.b16 %v2521
  %v2586 = vunpack.c.l.b16 %v2522
  %v2587 = vunpack.c.h.b16 %v2522
  %v2588 = vunpack.c.l.b16 %v2523
  %v2589 = vunpack.c.h.b16 %v2523
  %v2590 = vunpack.c.l.b16 %v2524
  %v2591 = vunpack.c.h.b16 %v2524
  %v2592 = vunpack.c.l.b16 %v2525
  %v2593 = vunpack.c.h.b16 %v2525
  %v2594 = vunpack.c.l.b16 %v2526
  %v2595 = vunpack.c.h.b16 %v2526
  %v2596 = vunpack.c.l.b16 %v2527
  %v2597 = vunpack.c.h.b16 %v2527
  %v2598 = vunpack.c.l.b16 %v2528
  %v2599 = vunpack.c.h.b16 %v2528
  %v2600 = vunpack.c.l.b16 %v2529
  %v2601 = vunpack.c.h.b16 %v2529
  %v2602 = vunpack.c.l.b16 %v2530
  %v2603 = vunpack.c.h.b16 %v2530
  %v2604 = vunpack.c.l.b16 %v2531
  %v2605 = vunpack.c.h.b16 %v2531
  %v2606 = vunpack.c.l.b16 %v2532
  %v2607 = vunpack.c.h.b16 %v2532
  %v2608 = vunpack.c.l.b16 %v2533
  %v2609 = vunpack.c.h.b16 %v2533
  %v2610 = vpack.c.b16 %v2582, %v2578
  %v2611 = vpack.c.b16 %v2583, %v2579
  %v2612 = vpack.c.b16 %v2584, %v2580
  %v2613 = vpack.c.b16 %v2585, %v2581
  %v2614 = vpack.c.b16 %v2590, %v2586
  %v2615 = vpack.c.b16 %v2591, %v2587
  %v2616 = vpack.c.b16 %v2592, %v2588
  %v2617 = vpack.c.b16 %v2593, %v2589
  %v2618 = vpack.c.b16 %v2598, %v2594
  %v2619 = vpack.c.b16 %v2599, %v2595
  %v2620 = vpack.c.b16 %v2600, %v2596
  %v2621 = vpack.c.b16 %v2601, %v2597
  %v2622 = vpack.c.b16 %v2606, %v2602
  %v2623 = vpack.c.b16 %v2607, %v2603
  %v2624 = vpack.c.b16 %v2608, %v2604
  %v2625 = vpack.c.b16 %v2609, %v2605
  %vm2638 = vcmask 490496
  %v2640 = vsel %vm2638, %v2558, 0
  %v2643 = vsel %vm2638, %v2559, 0
  %v2646 = vsel %vm2638, %v2560, 0
  %v2649 = vsel %vm2638, %v2561, 0
  %vm2651 = vcmask 1045504
  %v2653 = vsel %vm2651, %v2622, 0
  %v2656 = vsel %vm2651, %v2623, 0
  %v2659 = vsel %vm2651, %v2624, 0
  %v2662 = vsel %vm2651, %v2625, 0
  %2664 = vmatprep.subr.bf16.mxu0 0
  %2665 = vmatpush1.bf16.msra.mxu0 0
  %2666 = vmatprep.subr.bf16.mxu0 0
  %2667 = vmatpush1.bf16.msra.mxu0 0
  %2668 = vmatprep.subr.bf16.mxu0 0
  %2669 = vmatpush1.bf16.msra.mxu0 0
  %2670 = vmatprep.subr.bf16.mxu0 0
  %2671 = vmatpush1.bf16.msra.mxu0 0
  %2672 = vmatprep.subr.bf16.mxu0 %v2656
  %2673 = vmatpush1.bf16.msra.mxu0 %v2653
  %2674 = vmatprep.subr.bf16.mxu0 %v2619
  %2675 = vmatpush1.bf16.msra.mxu0 %v2618
  %2676 = vmatprep.subr.bf16.mxu0 %v2615
  %2677 = vmatpush1.bf16.msra.mxu0 %v2614
  %2678 = vmatprep.subr.bf16.mxu0 %v2611
  %2679 = vmatpush1.bf16.msra.mxu0 %v2610
  %2680 = vmatprep.subr.bf16.mxu0 0
  %2681 = vmatpush2.bf16.msra.mxu0 0
  %2682 = vmatprep.subr.bf16.mxu0 0
  %2683 = vmatpush2.bf16.msra.mxu0 0
  %2684 = vmatprep.subr.bf16.mxu0 0
  %2685 = vmatpush2.bf16.msra.mxu0 0
  %2686 = vmatprep.subr.bf16.mxu0 0
  %2687 = vmatpush2.bf16.msra.mxu0 0
  %2688 = vmatprep.subr.bf16.mxu0 0
  %2689 = vmatpush2.bf16.msra.mxu0 0
  %2690 = vmatprep.subr.bf16.mxu0 0
  %2691 = vmatpush2.bf16.msra.mxu0 0
  %2692 = vmatprep.subr.bf16.mxu0 0
  %2693 = vmatpush2.bf16.msra.mxu0 0
  %2694 = vmatprep.subr.bf16.mxu0 0
  %2695 = vmatpush2.bf16.msra.mxu0 0
  %2696 = vmatprep.mubr.bf16.mxu0 0
  %2697 = vmatmul.mubr.bf16.gmra.mxu0 %v2640
  %v2698 = vpop.f32.mrf.mxu0
  %v2699 = vadd.f32 0.0, %v2698
  %v2700 = vpop.f32.mrf.mxu0
  %v2701 = vadd.f32 0.0, %v2700
  %v2702 = vpop.f32.mrf.mxu0
  %v2703 = vadd.f32 0.0, %v2702
  %v2704 = vpop.f32.mrf.mxu0
  %v2705 = vadd.f32 0.0, %v2704
  %2706 = vmatprep.mubr.bf16.mxu0 0
  %2707 = vmatmul.mubr.bf16.gmra.mxu0 %v2643
  %v2708 = vpop.f32.mrf.mxu0
  %v2709 = vadd.f32 0.0, %v2708
  %v2710 = vpop.f32.mrf.mxu0
  %v2711 = vadd.f32 0.0, %v2710
  %v2712 = vpop.f32.mrf.mxu0
  %v2713 = vadd.f32 0.0, %v2712
  %v2714 = vpop.f32.mrf.mxu0
  %v2715 = vadd.f32 0.0, %v2714
  %2716 = vmatprep.mubr.bf16.mxu0 0
  %2717 = vmatmul.mubr.bf16.gmra.mxu0 %v2646
  %v2718 = vpop.f32.mrf.mxu0
  %v2719 = vadd.f32 0.0, %v2718
  %v2720 = vpop.f32.mrf.mxu0
  %v2721 = vadd.f32 0.0, %v2720
  %v2722 = vpop.f32.mrf.mxu0
  %v2723 = vadd.f32 0.0, %v2722
  %v2724 = vpop.f32.mrf.mxu0
  %v2725 = vadd.f32 0.0, %v2724
  %2726 = vmatprep.mubr.bf16.mxu0 0
  %2727 = vmatmul.mubr.bf16.gmra.mxu0 %v2649
  %v2728 = vpop.f32.mrf.mxu0
  %v2729 = vadd.f32 0.0, %v2728
  %v2730 = vpop.f32.mrf.mxu0
  %v2731 = vadd.f32 0.0, %v2730
  %v2732 = vpop.f32.mrf.mxu0
  %v2733 = vadd.f32 0.0, %v2732
  %v2734 = vpop.f32.mrf.mxu0
  %v2735 = vadd.f32 0.0, %v2734
  %2736 = vdwg.mxu0
  %2737 = vmatprep.subr.bf16.mxu0 0
  %2738 = vmatpush1.bf16.msra.mxu0 0
  %2739 = vmatprep.subr.bf16.mxu0 0
  %2740 = vmatpush1.bf16.msra.mxu0 0
  %2741 = vmatprep.subr.bf16.mxu0 0
  %2742 = vmatpush1.bf16.msra.mxu0 0
  %2743 = vmatprep.subr.bf16.mxu0 0
  %2744 = vmatpush1.bf16.msra.mxu0 0
  %2745 = vmatprep.subr.bf16.mxu0 %v2662
  %2746 = vmatpush1.bf16.msra.mxu0 %v2659
  %2747 = vmatprep.subr.bf16.mxu0 %v2621
  %2748 = vmatpush1.bf16.msra.mxu0 %v2620
  %2749 = vmatprep.subr.bf16.mxu0 %v2617
  %2750 = vmatpush1.bf16.msra.mxu0 %v2616
  %2751 = vmatprep.subr.bf16.mxu0 %v2613
  %2752 = vmatpush1.bf16.msra.mxu0 %v2612
  %2753 = vmatprep.subr.bf16.mxu0 0
  %2754 = vmatpush2.bf16.msra.mxu0 0
  %2755 = vmatprep.subr.bf16.mxu0 0
  %2756 = vmatpush2.bf16.msra.mxu0 0
  %2757 = vmatprep.subr.bf16.mxu0 0
  %2758 = vmatpush2.bf16.msra.mxu0 0
  %2759 = vmatprep.subr.bf16.mxu0 0
  %2760 = vmatpush2.bf16.msra.mxu0 0
  %2761 = vmatprep.subr.bf16.mxu0 0
  %2762 = vmatpush2.bf16.msra.mxu0 0
  %2763 = vmatprep.subr.bf16.mxu0 0
  %2764 = vmatpush2.bf16.msra.mxu0 0
  %2765 = vmatprep.subr.bf16.mxu0 0
  %2766 = vmatpush2.bf16.msra.mxu0 0
  %2767 = vmatprep.subr.bf16.mxu0 0
  %2768 = vmatpush2.bf16.msra.mxu0 0
  %2769 = vmatprep.mubr.bf16.mxu0 0
  %2770 = vmatmul.mubr.bf16.gmra.mxu0 %v2640
  %v2771 = vpop.f32.mrf.mxu0
  %v2772 = vadd.f32 0.0, %v2771
  %v2773 = vpop.f32.mrf.mxu0
  %v2774 = vadd.f32 0.0, %v2773
  %v2775 = vpop.f32.mrf.mxu0
  %v2776 = vadd.f32 0.0, %v2775
  %v2777 = vpop.f32.mrf.mxu0
  %v2778 = vadd.f32 0.0, %v2777
  %2779 = vmatprep.mubr.bf16.mxu0 0
  %2780 = vmatmul.mubr.bf16.gmra.mxu0 %v2643
  %v2781 = vpop.f32.mrf.mxu0
  %v2782 = vadd.f32 0.0, %v2781
  %v2783 = vpop.f32.mrf.mxu0
  %v2784 = vadd.f32 0.0, %v2783
  %v2785 = vpop.f32.mrf.mxu0
  %v2786 = vadd.f32 0.0, %v2785
  %v2787 = vpop.f32.mrf.mxu0
  %v2788 = vadd.f32 0.0, %v2787
  %2789 = vmatprep.mubr.bf16.mxu0 0
  %2790 = vmatmul.mubr.bf16.gmra.mxu0 %v2646
  %v2791 = vpop.f32.mrf.mxu0
  %v2792 = vadd.f32 0.0, %v2791
  %v2793 = vpop.f32.mrf.mxu0
  %v2794 = vadd.f32 0.0, %v2793
  %v2795 = vpop.f32.mrf.mxu0
  %v2796 = vadd.f32 0.0, %v2795
  %v2797 = vpop.f32.mrf.mxu0
  %v2798 = vadd.f32 0.0, %v2797
  %2799 = vmatprep.mubr.bf16.mxu0 0
  %2800 = vmatmul.mubr.bf16.gmra.mxu0 %v2649
  %v2801 = vpop.f32.mrf.mxu0
  %v2802 = vadd.f32 0.0, %v2801
  %v2803 = vpop.f32.mrf.mxu0
  %v2804 = vadd.f32 0.0, %v2803
  %v2805 = vpop.f32.mrf.mxu0
  %v2806 = vadd.f32 0.0, %v2805
  %v2807 = vpop.f32.mrf.mxu0
  %v2808 = vadd.f32 0.0, %v2807
  %2809 = vdwg.mxu0
  %v2810 = vadd.f32 %v2183, %v2699
  %v2811 = vadd.f32 %v2185, %v2701
  %v2812 = vadd.f32 %v2256, %v2772
  %v2813 = vadd.f32 %v2258, %v2774
  %v2814 = vadd.f32 %v2187, %v2703
  %v2815 = vadd.f32 %v2189, %v2705
  %v2816 = vadd.f32 %v2260, %v2776
  %v2817 = vadd.f32 %v2262, %v2778
  %v2818 = vadd.f32 %v2193, %v2709
  %v2819 = vadd.f32 %v2195, %v2711
  %v2820 = vadd.f32 %v2266, %v2782
  %v2821 = vadd.f32 %v2268, %v2784
  %v2822 = vadd.f32 %v2197, %v2713
  %v2823 = vadd.f32 %v2199, %v2715
  %v2824 = vadd.f32 %v2270, %v2786
  %v2825 = vadd.f32 %v2272, %v2788
  %v2826 = vadd.f32 %v2203, %v2719
  %v2827 = vadd.f32 %v2205, %v2721
  %v2828 = vadd.f32 %v2276, %v2792
  %v2829 = vadd.f32 %v2278, %v2794
  %v2830 = vadd.f32 %v2207, %v2723
  %v2831 = vadd.f32 %v2209, %v2725
  %v2832 = vadd.f32 %v2280, %v2796
  %v2833 = vadd.f32 %v2282, %v2798
  %v2834 = vadd.f32 %v2213, %v2729
  %v2835 = vadd.f32 %v2215, %v2731
  %v2836 = vadd.f32 %v2286, %v2802
  %v2837 = vadd.f32 %v2288, %v2804
  %v2838 = vadd.f32 %v2217, %v2733
  %v2839 = vadd.f32 %v2219, %v2735
  %v2840 = vadd.f32 %v2290, %v2806
  %v2841 = vadd.f32 %v2292, %v2808
  %v2842 = vpack.c.bf16 %v632, %v631
  %v2843 = vpack.c.bf16 %v634, %v633
  %v2844 = vpack.c.bf16 %v636, %v635
  %v2845 = vpack.c.bf16 %v638, %v637
  %v2846 = vpack.c.bf16 %v677, %v676
  %v2847 = vpack.c.bf16 %v679, %v678
  %v2848 = vpack.c.bf16 %v681, %v680
  %v2849 = vpack.c.bf16 %v683, %v682
  %2851 = vset.pattern.permute.xlu0 0
  %2852 = vperm.xlu0 %2851, %v2842
  %v2853 = vpop.permute.xlu0 %2852
  %2855 = vset.pattern.permute.xlu0 0
  %2856 = vperm.xlu0 %2855, %v2843
  %v2857 = vpop.permute.xlu0 %2856
  %2859 = vset.pattern.permute.xlu0 0
  %2860 = vperm.xlu0 %2859, %v2844
  %v2861 = vpop.permute.xlu0 %2860
  %2863 = vset.pattern.permute.xlu0 0
  %2864 = vperm.xlu0 %2863, %v2845
  %v2865 = vpop.permute.xlu0 %2864
  %v2871 = vunpack.c.l.s4 839922192
  %v2872 = vunpack.c.0.s8 %v2871
  %v2873 = vlaneseq
  %v2874 = vshrl.u32 %v2873, 7
  %v2875 = vsub.s32 %v2872, %v2874
  %v2876 = vrot.slane %v2853, %v2875
  %v2878 = vunpack.c.l.s4 1985246804
  %v2879 = vunpack.c.0.s8 %v2878
  %v2880 = vlaneseq
  %v2881 = vshrl.u32 %v2880, 7
  %v2882 = vsub.s32 %v2879, %v2881
  %v2883 = vrot.slane %v2853, %v2882
  %v2885 = vunpack.c.l.s4 839922192
  %v2886 = vunpack.c.0.s8 %v2885
  %v2887 = vlaneseq
  %v2888 = vshrl.u32 %v2887, 7
  %v2889 = vsub.s32 %v2886, %v2888
  %v2890 = vrot.slane %v2857, %v2889
  %v2892 = vunpack.c.l.s4 1985246804
  %v2893 = vunpack.c.0.s8 %v2892
  %v2894 = vlaneseq
  %v2895 = vshrl.u32 %v2894, 7
  %v2896 = vsub.s32 %v2893, %v2895
  %v2897 = vrot.slane %v2857, %v2896
  %v2899 = vunpack.c.l.s4 839922192
  %v2900 = vunpack.c.0.s8 %v2899
  %v2901 = vlaneseq
  %v2902 = vshrl.u32 %v2901, 7
  %v2903 = vsub.s32 %v2900, %v2902
  %v2904 = vrot.slane %v2861, %v2903
  %v2906 = vunpack.c.l.s4 1985246804
  %v2907 = vunpack.c.0.s8 %v2906
  %v2908 = vlaneseq
  %v2909 = vshrl.u32 %v2908, 7
  %v2910 = vsub.s32 %v2907, %v2909
  %v2911 = vrot.slane %v2861, %v2910
  %v2913 = vunpack.c.l.s4 839922192
  %v2914 = vunpack.c.0.s8 %v2913
  %v2915 = vlaneseq
  %v2916 = vshrl.u32 %v2915, 7
  %v2917 = vsub.s32 %v2914, %v2916
  %v2918 = vrot.slane %v2865, %v2917
  %v2920 = vunpack.c.l.s4 1985246804
  %v2921 = vunpack.c.0.s8 %v2920
  %v2922 = vlaneseq
  %v2923 = vshrl.u32 %v2922, 7
  %v2924 = vsub.s32 %v2921, %v2923
  %v2925 = vrot.slane %v2865, %v2924
  %vm2926 = vcmask 1041408
  %vm2927 = vcmask 1045508
  %vm2928 = vmor %vm2926, %vm2927
  %v2929 = vrot.slane %v2876, 6
  %v2930 = vrot.slane %v2929, 4
  %v2931 = vrot.slane %v2883, 6
  %v2932 = vsel %vm2928, %v2930, %v2931
  %v2933 = vrot.slane %v2931, 4
  %v2934 = vrot.slane %v2890, 6
  %v2935 = vsel %vm2928, %v2933, %v2934
  %v2936 = vrot.slane %v2934, 4
  %v2937 = vrot.slane %v2897, 6
  %v2938 = vsel %vm2928, %v2936, %v2937
  %v2939 = vrot.slane %v2937, 4
  %v2940 = vrot.slane %v2904, 6
  %v2941 = vsel %vm2928, %v2939, %v2940
  %v2942 = vrot.slane %v2940, 4
  %v2943 = vrot.slane %v2911, 6
  %v2944 = vsel %vm2928, %v2942, %v2943
  %v2945 = vrot.slane %v2943, 4
  %v2946 = vrot.slane %v2918, 6
  %v2947 = vsel %vm2928, %v2945, %v2946
  %v2948 = vrot.slane %v2946, 4
  %v2949 = vrot.slane %v2925, 6
  %v2950 = vsel %vm2928, %v2948, %v2949
  %v2951 = vrot.slane %v2949, 4
  %v2960 = vmul.bf16 %v578, %v2932
  %v2961 = vmul.bf16 %v579, %v2932
  %v2962 = vmul.bf16 %v580, %v2935
  %v2963 = vmul.bf16 %v581, %v2935
  %v2964 = vmul.bf16 %v582, %v2938
  %v2965 = vmul.bf16 %v583, %v2938
  %v2966 = vmul.bf16 %v584, %v2941
  %v2967 = vmul.bf16 %v585, %v2941
  %v2968 = vmul.bf16 %v586, %v2944
  %v2969 = vmul.bf16 %v587, %v2944
  %v2970 = vmul.bf16 %v588, %v2947
  %v2971 = vmul.bf16 %v589, %v2947
  %v2972 = vmul.bf16 %v590, %v2950
  %v2973 = vmul.bf16 %v591, %v2950
  %v2974 = vmul.bf16 %v592, %v2951
  %v2975 = vmul.bf16 %v593, %v2951
  %2977 = vset.pattern.permute.xlu0 0
  %2978 = vperm.xlu0 %2977, %v2846
  %v2979 = vpop.permute.xlu0 %2978
  %2981 = vset.pattern.permute.xlu0 0
  %2982 = vperm.xlu0 %2981, %v2847
  %v2983 = vpop.permute.xlu0 %2982
  %2985 = vset.pattern.permute.xlu0 0
  %2986 = vperm.xlu0 %2985, %v2848
  %v2987 = vpop.permute.xlu0 %2986
  %2989 = vset.pattern.permute.xlu0 0
  %2990 = vperm.xlu0 %2989, %v2849
  %v2991 = vpop.permute.xlu0 %2990
  %v2997 = vunpack.c.l.s4 839922192
  %v2998 = vunpack.c.0.s8 %v2997
  %v2999 = vlaneseq
  %v3000 = vshrl.u32 %v2999, 7
  %v3001 = vsub.s32 %v2998, %v3000
  %v3002 = vrot.slane %v2979, %v3001
  %v3004 = vunpack.c.l.s4 1985246804
  %v3005 = vunpack.c.0.s8 %v3004
  %v3006 = vlaneseq
  %v3007 = vshrl.u32 %v3006, 7
  %v3008 = vsub.s32 %v3005, %v3007
  %v3009 = vrot.slane %v2979, %v3008
  %v3011 = vunpack.c.l.s4 839922192
  %v3012 = vunpack.c.0.s8 %v3011
  %v3013 = vlaneseq
  %v3014 = vshrl.u32 %v3013, 7
  %v3015 = vsub.s32 %v3012, %v3014
  %v3016 = vrot.slane %v2983, %v3015
  %v3018 = vunpack.c.l.s4 1985246804
  %v3019 = vunpack.c.0.s8 %v3018
  %v3020 = vlaneseq
  %v3021 = vshrl.u32 %v3020, 7
  %v3022 = vsub.s32 %v3019, %v3021
  %v3023 = vrot.slane %v2983, %v3022
  %v3025 = vunpack.c.l.s4 839922192
  %v3026 = vunpack.c.0.s8 %v3025
  %v3027 = vlaneseq
  %v3028 = vshrl.u32 %v3027, 7
  %v3029 = vsub.s32 %v3026, %v3028
  %v3030 = vrot.slane %v2987, %v3029
  %v3032 = vunpack.c.l.s4 1985246804
  %v3033 = vunpack.c.0.s8 %v3032
  %v3034 = vlaneseq
  %v3035 = vshrl.u32 %v3034, 7
  %v3036 = vsub.s32 %v3033, %v3035
  %v3037 = vrot.slane %v2987, %v3036
  %v3039 = vunpack.c.l.s4 839922192
  %v3040 = vunpack.c.0.s8 %v3039
  %v3041 = vlaneseq
  %v3042 = vshrl.u32 %v3041, 7
  %v3043 = vsub.s32 %v3040, %v3042
  %v3044 = vrot.slane %v2991, %v3043
  %v3046 = vunpack.c.l.s4 1985246804
  %v3047 = vunpack.c.0.s8 %v3046
  %v3048 = vlaneseq
  %v3049 = vshrl.u32 %v3048, 7
  %v3050 = vsub.s32 %v3047, %v3049
  %v3051 = vrot.slane %v2991, %v3050
  %v3052 = vrot.slane %v3002, 6
  %v3053 = vrot.slane %v3052, 4
  %v3054 = vrot.slane %v3009, 6
  %v3055 = vsel %vm2928, %v3053, %v3054
  %v3056 = vrot.slane %v3054, 4
  %v3057 = vrot.slane %v3016, 6
  %v3058 = vsel %vm2928, %v3056, %v3057
  %v3059 = vrot.slane %v3057, 4
  %v3060 = vrot.slane %v3023, 6
  %v3061 = vsel %vm2928, %v3059, %v3060
  %v3062 = vrot.slane %v3060, 4
  %v3063 = vrot.slane %v3030, 6
  %v3064 = vsel %vm2928, %v3062, %v3063
  %v3065 = vrot.slane %v3063, 4
  %v3066 = vrot.slane %v3037, 6
  %v3067 = vsel %vm2928, %v3065, %v3066
  %v3068 = vrot.slane %v3066, 4
  %v3069 = vrot.slane %v3044, 6
  %v3070 = vsel %vm2928, %v3068, %v3069
  %v3071 = vrot.slane %v3069, 4
  %v3072 = vrot.slane %v3051, 6
  %v3073 = vsel %vm2928, %v3071, %v3072
  %v3074 = vrot.slane %v3072, 4
  %v3083 = vadd.bf16 %v2960, %v3055
  %v3084 = vadd.bf16 %v2961, %v3055
  %v3085 = vadd.bf16 %v2962, %v3058
  %v3086 = vadd.bf16 %v2963, %v3058
  %v3087 = vadd.bf16 %v2964, %v3061
  %v3088 = vadd.bf16 %v2965, %v3061
  %v3089 = vadd.bf16 %v2966, %v3064
  %v3090 = vadd.bf16 %v2967, %v3064
  %v3091 = vadd.bf16 %v2968, %v3067
  %v3092 = vadd.bf16 %v2969, %v3067
  %v3093 = vadd.bf16 %v2970, %v3070
  %v3094 = vadd.bf16 %v2971, %v3070
  %v3095 = vadd.bf16 %v2972, %v3073
  %v3096 = vadd.bf16 %v2973, %v3073
  %v3097 = vadd.bf16 %v2974, %v3074
  %v3098 = vadd.bf16 %v2975, %v3074
  %v3099 = vmul.bf16 %v3083, 1009007652
  %v3100 = vmul.bf16 %v3084, 1009007652
  %v3101 = vmul.bf16 %v3085, 1009007652
  %v3102 = vmul.bf16 %v3086, 1009007652
  %v3103 = vmul.bf16 %v3087, 1009007652
  %v3104 = vmul.bf16 %v3088, 1009007652
  %v3105 = vmul.bf16 %v3089, 1009007652
  %v3106 = vmul.bf16 %v3090, 1009007652
  %v3107 = vmul.bf16 %v3091, 1009007652
  %v3108 = vmul.bf16 %v3092, 1009007652
  %v3109 = vmul.bf16 %v3093, 1009007652
  %v3110 = vmul.bf16 %v3094, 1009007652
  %v3111 = vmul.bf16 %v3095, 1009007652
  %v3112 = vmul.bf16 %v3096, 1009007652
  %v3113 = vmul.bf16 %v3097, 1009007652
  %v3114 = vmul.bf16 %v3098, 1009007652
  %v3115 = vmax.bf16 %v3083, %v3099
  %v3116 = vmax.bf16 %v3084, %v3100
  %v3117 = vmax.bf16 %v3085, %v3101
  %v3118 = vmax.bf16 %v3086, %v3102
  %v3119 = vmax.bf16 %v3087, %v3103
  %v3120 = vmax.bf16 %v3088, %v3104
  %v3121 = vmax.bf16 %v3089, %v3105
  %v3122 = vmax.bf16 %v3090, %v3106
  %v3123 = vmax.bf16 %v3091, %v3107
  %v3124 = vmax.bf16 %v3092, %v3108
  %v3125 = vmax.bf16 %v3093, %v3109
  %v3126 = vmax.bf16 %v3094, %v3110
  %v3127 = vmax.bf16 %v3095, %v3111
  %v3128 = vmax.bf16 %v3096, %v3112
  %v3129 = vmax.bf16 %v3097, %v3113
  %v3130 = vmax.bf16 %v3098, %v3114
  %v3131 = vld [vmem:[%s10] sm:$0xf]
  %v3132 = vld [vmem:[%s10 + $0x4] sm:$0xf]
  %v3133 = vld [vmem:[%s10 + $0x8] sm:$0xf]
  %v3134 = vld [vmem:[%s10 + $0xc] sm:$0xf]
  %v3135 = vld [vmem:[%s10 + $0x10] sm:$0xf]
  %v3136 = vld [vmem:[%s10 + $0x14] sm:$0xf]
  %v3137 = vld [vmem:[%s10 + $0x18] sm:$0xf]
  %v3138 = vld [vmem:[%s10 + $0x1c] sm:$0x3]
  %v3147 = vunpack.c.l.b16 %v3131
  %v3148 = vunpack.c.l.b16 %v3132
  %v3149 = vunpack.c.l.b16 %v3133
  %v3150 = vunpack.c.l.b16 %v3134
  %v3151 = vunpack.c.l.b16 %v3135
  %v3152 = vunpack.c.l.b16 %v3136
  %v3153 = vunpack.c.l.b16 %v3137
  %v3154 = vunpack.c.l.b16 %v3138
  %v3155 = vpack.c.b16 %v3148, %v3147
  %v3156 = vpack.c.b16 %v3150, %v3149
  %v3157 = vpack.c.b16 %v3152, %v3151
  %v3158 = vpack.c.b16 %v3154, %v3153
  %v3175 = vunpack.c.l.b16 %v3115
  %v3176 = vunpack.c.h.b16 %v3115
  %v3177 = vunpack.c.l.b16 %v3116
  %v3178 = vunpack.c.h.b16 %v3116
  %v3179 = vunpack.c.l.b16 %v3117
  %v3180 = vunpack.c.h.b16 %v3117
  %v3181 = vunpack.c.l.b16 %v3118
  %v3182 = vunpack.c.h.b16 %v3118
  %v3183 = vunpack.c.l.b16 %v3119
  %v3184 = vunpack.c.h.b16 %v3119
  %v3185 = vunpack.c.l.b16 %v3120
  %v3186 = vunpack.c.h.b16 %v3120
  %v3187 = vunpack.c.l.b16 %v3121
  %v3188 = vunpack.c.h.b16 %v3121
  %v3189 = vunpack.c.l.b16 %v3122
  %v3190 = vunpack.c.h.b16 %v3122
  %v3191 = vunpack.c.l.b16 %v3123
  %v3192 = vunpack.c.h.b16 %v3123
  %v3193 = vunpack.c.l.b16 %v3124
  %v3194 = vunpack.c.h.b16 %v3124
  %v3195 = vunpack.c.l.b16 %v3125
  %v3196 = vunpack.c.h.b16 %v3125
  %v3197 = vunpack.c.l.b16 %v3126
  %v3198 = vunpack.c.h.b16 %v3126
  %v3199 = vunpack.c.l.b16 %v3127
  %v3200 = vunpack.c.h.b16 %v3127
  %v3201 = vunpack.c.l.b16 %v3128
  %v3202 = vunpack.c.h.b16 %v3128
  %v3203 = vunpack.c.l.b16 %v3129
  %v3204 = vunpack.c.h.b16 %v3129
  %v3205 = vunpack.c.l.b16 %v3130
  %v3206 = vunpack.c.h.b16 %v3130
  %v3207 = vpack.c.b16 %v3179, %v3175
  %v3208 = vpack.c.b16 %v3180, %v3176
  %v3209 = vpack.c.b16 %v3181, %v3177
  %v3210 = vpack.c.b16 %v3182, %v3178
  %v3211 = vpack.c.b16 %v3187, %v3183
  %v3212 = vpack.c.b16 %v3188, %v3184
  %v3213 = vpack.c.b16 %v3189, %v3185
  %v3214 = vpack.c.b16 %v3190, %v3186
  %v3215 = vpack.c.b16 %v3195, %v3191
  %v3216 = vpack.c.b16 %v3196, %v3192
  %v3217 = vpack.c.b16 %v3197, %v3193
  %v3218 = vpack.c.b16 %v3198, %v3194
  %v3219 = vpack.c.b16 %v3203, %v3199
  %v3220 = vpack.c.b16 %v3204, %v3200
  %v3221 = vpack.c.b16 %v3205, %v3201
  %v3222 = vpack.c.b16 %v3206, %v3202
  %v3236 = vsel %vm2638, %v3155, 0
  %v3239 = vsel %vm2638, %v3156, 0
  %v3242 = vsel %vm2638, %v3157, 0
  %v3245 = vsel %vm2638, %v3158, 0
  %v3248 = vsel %vm2651, %v3219, 0
  %v3251 = vsel %vm2651, %v3220, 0
  %v3254 = vsel %vm2651, %v3221, 0
  %v3257 = vsel %vm2651, %v3222, 0
  %3259 = vmatprep.subr.bf16.mxu0 0
  %3260 = vmatpush1.bf16.msra.mxu0 0
  %3261 = vmatprep.subr.bf16.mxu0 0
  %3262 = vmatpush1.bf16.msra.mxu0 0
  %3263 = vmatprep.subr.bf16.mxu0 0
  %3264 = vmatpush1.bf16.msra.mxu0 0
  %3265 = vmatprep.subr.bf16.mxu0 0
  %3266 = vmatpush1.bf16.msra.mxu0 0
  %3267 = vmatprep.subr.bf16.mxu0 %v3251
  %3268 = vmatpush1.bf16.msra.mxu0 %v3248
  %3269 = vmatprep.subr.bf16.mxu0 %v3216
  %3270 = vmatpush1.bf16.msra.mxu0 %v3215
  %3271 = vmatprep.subr.bf16.mxu0 %v3212
  %3272 = vmatpush1.bf16.msra.mxu0 %v3211
  %3273 = vmatprep.subr.bf16.mxu0 %v3208
  %3274 = vmatpush1.bf16.msra.mxu0 %v3207
  %3275 = vmatprep.subr.bf16.mxu0 0
  %3276 = vmatpush2.bf16.msra.mxu0 0
  %3277 = vmatprep.subr.bf16.mxu0 0
  %3278 = vmatpush2.bf16.msra.mxu0 0
  %3279 = vmatprep.subr.bf16.mxu0 0
  %3280 = vmatpush2.bf16.msra.mxu0 0
  %3281 = vmatprep.subr.bf16.mxu0 0
  %3282 = vmatpush2.bf16.msra.mxu0 0
  %3283 = vmatprep.subr.bf16.mxu0 0
  %3284 = vmatpush2.bf16.msra.mxu0 0
  %3285 = vmatprep.subr.bf16.mxu0 0
  %3286 = vmatpush2.bf16.msra.mxu0 0
  %3287 = vmatprep.subr.bf16.mxu0 0
  %3288 = vmatpush2.bf16.msra.mxu0 0
  %3289 = vmatprep.subr.bf16.mxu0 0
  %3290 = vmatpush2.bf16.msra.mxu0 0
  %3291 = vmatprep.mubr.bf16.mxu0 0
  %3292 = vmatmul.mubr.bf16.gmra.mxu0 %v3236
  %v3293 = vpop.f32.mrf.mxu0
  %v3294 = vadd.f32 0.0, %v3293
  %v3295 = vpop.f32.mrf.mxu0
  %v3296 = vadd.f32 0.0, %v3295
  %v3297 = vpop.f32.mrf.mxu0
  %v3298 = vadd.f32 0.0, %v3297
  %v3299 = vpop.f32.mrf.mxu0
  %v3300 = vadd.f32 0.0, %v3299
  %3301 = vmatprep.mubr.bf16.mxu0 0
  %3302 = vmatmul.mubr.bf16.gmra.mxu0 %v3239
  %v3303 = vpop.f32.mrf.mxu0
  %v3304 = vadd.f32 0.0, %v3303
  %v3305 = vpop.f32.mrf.mxu0
  %v3306 = vadd.f32 0.0, %v3305
  %v3307 = vpop.f32.mrf.mxu0
  %v3308 = vadd.f32 0.0, %v3307
  %v3309 = vpop.f32.mrf.mxu0
  %v3310 = vadd.f32 0.0, %v3309
  %3311 = vmatprep.mubr.bf16.mxu0 0
  %3312 = vmatmul.mubr.bf16.gmra.mxu0 %v3242
  %v3313 = vpop.f32.mrf.mxu0
  %v3314 = vadd.f32 0.0, %v3313
  %v3315 = vpop.f32.mrf.mxu0
  %v3316 = vadd.f32 0.0, %v3315
  %v3317 = vpop.f32.mrf.mxu0
  %v3318 = vadd.f32 0.0, %v3317
  %v3319 = vpop.f32.mrf.mxu0
  %v3320 = vadd.f32 0.0, %v3319
  %3321 = vmatprep.mubr.bf16.mxu0 0
  %3322 = vmatmul.mubr.bf16.gmra.mxu0 %v3245
  %v3323 = vpop.f32.mrf.mxu0
  %v3324 = vadd.f32 0.0, %v3323
  %v3325 = vpop.f32.mrf.mxu0
  %v3326 = vadd.f32 0.0, %v3325
  %v3327 = vpop.f32.mrf.mxu0
  %v3328 = vadd.f32 0.0, %v3327
  %v3329 = vpop.f32.mrf.mxu0
  %v3330 = vadd.f32 0.0, %v3329
  %3331 = vdwg.mxu0
  %3332 = vmatprep.subr.bf16.mxu0 0
  %3333 = vmatpush1.bf16.msra.mxu0 0
  %3334 = vmatprep.subr.bf16.mxu0 0
  %3335 = vmatpush1.bf16.msra.mxu0 0
  %3336 = vmatprep.subr.bf16.mxu0 0
  %3337 = vmatpush1.bf16.msra.mxu0 0
  %3338 = vmatprep.subr.bf16.mxu0 0
  %3339 = vmatpush1.bf16.msra.mxu0 0
  %3340 = vmatprep.subr.bf16.mxu0 %v3257
  %3341 = vmatpush1.bf16.msra.mxu0 %v3254
  %3342 = vmatprep.subr.bf16.mxu0 %v3218
  %3343 = vmatpush1.bf16.msra.mxu0 %v3217
  %3344 = vmatprep.subr.bf16.mxu0 %v3214
  %3345 = vmatpush1.bf16.msra.mxu0 %v3213
  %3346 = vmatprep.subr.bf16.mxu0 %v3210
  %3347 = vmatpush1.bf16.msra.mxu0 %v3209
  %3348 = vmatprep.subr.bf16.mxu0 0
  %3349 = vmatpush2.bf16.msra.mxu0 0
  %3350 = vmatprep.subr.bf16.mxu0 0
  %3351 = vmatpush2.bf16.msra.mxu0 0
  %3352 = vmatprep.subr.bf16.mxu0 0
  %3353 = vmatpush2.bf16.msra.mxu0 0
  %3354 = vmatprep.subr.bf16.mxu0 0
  %3355 = vmatpush2.bf16.msra.mxu0 0
  %3356 = vmatprep.subr.bf16.mxu0 0
  %3357 = vmatpush2.bf16.msra.mxu0 0
  %3358 = vmatprep.subr.bf16.mxu0 0
  %3359 = vmatpush2.bf16.msra.mxu0 0
  %3360 = vmatprep.subr.bf16.mxu0 0
  %3361 = vmatpush2.bf16.msra.mxu0 0
  %3362 = vmatprep.subr.bf16.mxu0 0
  %3363 = vmatpush2.bf16.msra.mxu0 0
  %3364 = vmatprep.mubr.bf16.mxu0 0
  %3365 = vmatmul.mubr.bf16.gmra.mxu0 %v3236
  %v3366 = vpop.f32.mrf.mxu0
  %v3367 = vadd.f32 0.0, %v3366
  %v3368 = vpop.f32.mrf.mxu0
  %v3369 = vadd.f32 0.0, %v3368
  %v3370 = vpop.f32.mrf.mxu0
  %v3371 = vadd.f32 0.0, %v3370
  %v3372 = vpop.f32.mrf.mxu0
  %v3373 = vadd.f32 0.0, %v3372
  %3374 = vmatprep.mubr.bf16.mxu0 0
  %3375 = vmatmul.mubr.bf16.gmra.mxu0 %v3239
  %v3376 = vpop.f32.mrf.mxu0
  %v3377 = vadd.f32 0.0, %v3376
  %v3378 = vpop.f32.mrf.mxu0
  %v3379 = vadd.f32 0.0, %v3378
  %v3380 = vpop.f32.mrf.mxu0
  %v3381 = vadd.f32 0.0, %v3380
  %v3382 = vpop.f32.mrf.mxu0
  %v3383 = vadd.f32 0.0, %v3382
  %3384 = vmatprep.mubr.bf16.mxu0 0
  %3385 = vmatmul.mubr.bf16.gmra.mxu0 %v3242
  %v3386 = vpop.f32.mrf.mxu0
  %v3387 = vadd.f32 0.0, %v3386
  %v3388 = vpop.f32.mrf.mxu0
  %v3389 = vadd.f32 0.0, %v3388
  %v3390 = vpop.f32.mrf.mxu0
  %v3391 = vadd.f32 0.0, %v3390
  %v3392 = vpop.f32.mrf.mxu0
  %v3393 = vadd.f32 0.0, %v3392
  %3394 = vmatprep.mubr.bf16.mxu0 0
  %3395 = vmatmul.mubr.bf16.gmra.mxu0 %v3245
  %v3396 = vpop.f32.mrf.mxu0
  %v3397 = vadd.f32 0.0, %v3396
  %v3398 = vpop.f32.mrf.mxu0
  %v3399 = vadd.f32 0.0, %v3398
  %v3400 = vpop.f32.mrf.mxu0
  %v3401 = vadd.f32 0.0, %v3400
  %v3402 = vpop.f32.mrf.mxu0
  %v3403 = vadd.f32 0.0, %v3402
  %3404 = vdwg.mxu0
  %v3405 = vadd.f32 %v2810, %v3294
  %v3406 = vadd.f32 %v2811, %v3296
  %v3407 = vadd.f32 %v2812, %v3367
  %v3408 = vadd.f32 %v2813, %v3369
  %v3409 = vadd.f32 %v2814, %v3298
  %v3410 = vadd.f32 %v2815, %v3300
  %v3411 = vadd.f32 %v2816, %v3371
  %v3412 = vadd.f32 %v2817, %v3373
  %v3413 = vadd.f32 %v2818, %v3304
  %v3414 = vadd.f32 %v2819, %v3306
  %v3415 = vadd.f32 %v2820, %v3377
  %v3416 = vadd.f32 %v2821, %v3379
  %v3417 = vadd.f32 %v2822, %v3308
  %v3418 = vadd.f32 %v2823, %v3310
  %v3419 = vadd.f32 %v2824, %v3381
  %v3420 = vadd.f32 %v2825, %v3383
  %v3421 = vadd.f32 %v2826, %v3314
  %v3422 = vadd.f32 %v2827, %v3316
  %v3423 = vadd.f32 %v2828, %v3387
  %v3424 = vadd.f32 %v2829, %v3389
  %v3425 = vadd.f32 %v2830, %v3318
  %v3426 = vadd.f32 %v2831, %v3320
  %v3427 = vadd.f32 %v2832, %v3391
  %v3428 = vadd.f32 %v2833, %v3393
  %v3429 = vadd.f32 %v2834, %v3324
  %v3430 = vadd.f32 %v2835, %v3326
  %v3431 = vadd.f32 %v2836, %v3397
  %v3432 = vadd.f32 %v2837, %v3399
  %v3433 = vadd.f32 %v2838, %v3328
  %v3434 = vadd.f32 %v2839, %v3330
  %v3435 = vadd.f32 %v2840, %v3401
  %v3436 = vadd.f32 %v2841, %v3403
  %v3437 = vld [vmem:[%s11] sm:$0xff]
  %v3438 = vld [vmem:[%s11 + $0x8] sm:$0xff]
  %v3439 = vld [vmem:[%s11 + $0x10] sm:$0xff]
  %v3440 = vld [vmem:[%s11 + $0x18] sm:$0xff]
  %v3441 = vld [vmem:[%s11 + $0x20] sm:$0xff]
  %v3442 = vld [vmem:[%s11 + $0x28] sm:$0xff]
  %v3443 = vld [vmem:[%s11 + $0x30] sm:$0xff]
  %v3444 = vld [vmem:[%s11 + $0x38] sm:$0xf]
  %3446 = vset.pattern.permute.xlu0 0
  %3447 = vperm.xlu0 %3446, %v3437
  %v3448 = vpop.permute.xlu0 %3447
  %3451 = vset.pattern.permute.xlu0 0
  %3452 = vperm.xlu0 %3451, %v3438
  %v3453 = vpop.permute.xlu0 %3452
  %3456 = vset.pattern.permute.xlu0 0
  %3457 = vperm.xlu0 %3456, %v3439
  %v3458 = vpop.permute.xlu0 %3457
  %3461 = vset.pattern.permute.xlu0 0
  %3462 = vperm.xlu0 %3461, %v3440
  %v3463 = vpop.permute.xlu0 %3462
  %3466 = vset.pattern.permute.xlu0 0
  %3467 = vperm.xlu0 %3466, %v3441
  %v3468 = vpop.permute.xlu0 %3467
  %3471 = vset.pattern.permute.xlu0 0
  %3472 = vperm.xlu0 %3471, %v3442
  %v3473 = vpop.permute.xlu0 %3472
  %3476 = vset.pattern.permute.xlu0 0
  %3477 = vperm.xlu0 %3476, %v3443
  %v3478 = vpop.permute.xlu0 %3477
  %3481 = vset.pattern.permute.xlu0 0
  %3482 = vperm.xlu0 %3481, %v3444
  %v3483 = vpop.permute.xlu0 %3482
  %v3485 = vadd.f32 %v3405, %v3448
  %v3486 = vadd.f32 %v3406, %v3448
  %v3487 = vadd.f32 %v3407, %v3448
  %v3488 = vadd.f32 %v3408, %v3448
  %v3489 = vadd.f32 %v3409, %v3453
  %v3490 = vadd.f32 %v3410, %v3453
  %v3491 = vadd.f32 %v3411, %v3453
  %v3492 = vadd.f32 %v3412, %v3453
  %v3493 = vadd.f32 %v3413, %v3458
  %v3494 = vadd.f32 %v3414, %v3458
  %v3495 = vadd.f32 %v3415, %v3458
  %v3496 = vadd.f32 %v3416, %v3458
  %v3497 = vadd.f32 %v3417, %v3463
  %v3498 = vadd.f32 %v3418, %v3463
  %v3499 = vadd.f32 %v3419, %v3463
  %v3500 = vadd.f32 %v3420, %v3463
  %v3501 = vadd.f32 %v3421, %v3468
  %v3502 = vadd.f32 %v3422, %v3468
  %v3503 = vadd.f32 %v3423, %v3468
  %v3504 = vadd.f32 %v3424, %v3468
  %v3505 = vadd.f32 %v3425, %v3473
  %v3506 = vadd.f32 %v3426, %v3473
  %v3507 = vadd.f32 %v3427, %v3473
  %v3508 = vadd.f32 %v3428, %v3473
  %v3509 = vadd.f32 %v3429, %v3478
  %v3510 = vadd.f32 %v3430, %v3478
  %v3511 = vadd.f32 %v3431, %v3478
  %v3512 = vadd.f32 %v3432, %v3478
  %v3513 = vadd.f32 %v3433, %v3483
  %v3514 = vadd.f32 %v3434, %v3483
  %v3515 = vadd.f32 %v3435, %v3483
  %v3516 = vadd.f32 %v3436, %v3483
  %v3517 = vpack.c.bf16 %v3489, %v3485
  %v3518 = vpack.c.bf16 %v3490, %v3486
  %v3519 = vpack.c.bf16 %v3491, %v3487
  %v3520 = vpack.c.bf16 %v3492, %v3488
  %v3521 = vpack.c.bf16 %v3497, %v3493
  %v3522 = vpack.c.bf16 %v3498, %v3494
  %v3523 = vpack.c.bf16 %v3499, %v3495
  %v3524 = vpack.c.bf16 %v3500, %v3496
  %v3525 = vpack.c.bf16 %v3505, %v3501
  %v3526 = vpack.c.bf16 %v3506, %v3502
  %v3527 = vpack.c.bf16 %v3507, %v3503
  %v3528 = vpack.c.bf16 %v3508, %v3504
  %v3529 = vpack.c.bf16 %v3513, %v3509
  %v3530 = vpack.c.bf16 %v3514, %v3510
  %v3531 = vpack.c.bf16 %v3515, %v3511
  %v3532 = vpack.c.bf16 %v3516, %v3512
  %v3549 = vunpack.c.l.b16 %v3517
  %v3550 = vunpack.c.l.b16 %v3518
  %v3551 = vunpack.c.l.b16 %v3519
  %v3552 = vunpack.c.l.b16 %v3520
  %v3553 = vunpack.c.h.b16 %v3517
  %v3554 = vunpack.c.h.b16 %v3518
  %v3555 = vunpack.c.h.b16 %v3519
  %v3556 = vunpack.c.h.b16 %v3520
  %v3557 = vunpack.c.l.b16 %v3521
  %v3558 = vunpack.c.l.b16 %v3522
  %v3559 = vunpack.c.l.b16 %v3523
  %v3560 = vunpack.c.l.b16 %v3524
  %v3561 = vunpack.c.h.b16 %v3521
  %v3562 = vunpack.c.h.b16 %v3522
  %v3563 = vunpack.c.h.b16 %v3523
  %v3564 = vunpack.c.h.b16 %v3524
  %v3565 = vunpack.c.l.b16 %v3525
  %v3566 = vunpack.c.l.b16 %v3526
  %v3567 = vunpack.c.l.b16 %v3527
  %v3568 = vunpack.c.l.b16 %v3528
  %v3569 = vunpack.c.h.b16 %v3525
  %v3570 = vunpack.c.h.b16 %v3526
  %v3571 = vunpack.c.h.b16 %v3527
  %v3572 = vunpack.c.h.b16 %v3528
  %v3573 = vunpack.c.l.b16 %v3529
  %v3574 = vunpack.c.l.b16 %v3530
  %v3575 = vunpack.c.l.b16 %v3531
  %v3576 = vunpack.c.l.b16 %v3532
  %v3577 = vunpack.c.h.b16 %v3529
  %v3578 = vunpack.c.h.b16 %v3530
  %v3579 = vunpack.c.h.b16 %v3531
  %v3580 = vunpack.c.h.b16 %v3532
  %v3581 = vpack.c.b16 %v3550, %v3549
  %v3582 = vpack.c.b16 %v3552, %v3551
  %v3583 = vpack.c.b16 %v3554, %v3553
  %v3584 = vpack.c.b16 %v3556, %v3555
  %v3585 = vpack.c.b16 %v3558, %v3557
  %v3586 = vpack.c.b16 %v3560, %v3559
  %v3587 = vpack.c.b16 %v3562, %v3561
  %v3588 = vpack.c.b16 %v3564, %v3563
  %v3589 = vpack.c.b16 %v3566, %v3565
  %v3590 = vpack.c.b16 %v3568, %v3567
  %v3591 = vpack.c.b16 %v3570, %v3569
  %v3592 = vpack.c.b16 %v3572, %v3571
  %v3593 = vpack.c.b16 %v3574, %v3573
  %v3594 = vpack.c.b16 %v3576, %v3575
  %v3595 = vpack.c.b16 %v3578, %v3577
  %v3596 = vpack.c.b16 %v3580, %v3579
  %3613 = vst [vmem:[%s12] sm:$0xff] %v3581
  %3614 = vst [vmem:[%s12 + $0x8] sm:$0xff] %v3582
  %3615 = vst [vmem:[%s12 + $0x10] sm:$0xff] %v3583
  %3616 = vst [vmem:[%s12 + $0x18] sm:$0xff] %v3584
  %3617 = vst [vmem:[%s12 + $0x20] sm:$0xff] %v3585
  %3618 = vst [vmem:[%s12 + $0x28] sm:$0xff] %v3586
  %3619 = vst [vmem:[%s12 + $0x30] sm:$0xff] %v3587
  %3620 = vst [vmem:[%s12 + $0x38] sm:$0xff] %v3588
  %3621 = vst [vmem:[%s12 + $0x40] sm:$0xff] %v3589
  %3622 = vst [vmem:[%s12 + $0x48] sm:$0xff] %v3590
  %3623 = vst [vmem:[%s12 + $0x50] sm:$0xff] %v3591
  %3624 = vst [vmem:[%s12 + $0x58] sm:$0xff] %v3592
  %3625 = vst [vmem:[%s12 + $0x60] sm:$0xff] %v3593
  %3626 = vst [vmem:[%s12 + $0x68] sm:$0xff] %v3594
  %3627 = vst [vmem:[%s12 + $0x70] sm:$0x33] %v3595
  %3628 = vst [vmem:[%s12 + $0x78] sm:$0x33] %v3596
  %v3629 = vunpack.c.l.bf16 %v3517
  %v3630 = vunpack.c.l.bf16 %v3518
  %v3631 = vunpack.c.l.bf16 %v3519
  %v3632 = vunpack.c.l.bf16 %v3520
  %v3633 = vunpack.c.h.bf16 %v3517
  %v3634 = vunpack.c.h.bf16 %v3518
  %v3635 = vunpack.c.h.bf16 %v3519
  %v3636 = vunpack.c.h.bf16 %v3520
  %v3637 = vunpack.c.l.bf16 %v3521
  %v3638 = vunpack.c.l.bf16 %v3522
  %v3639 = vunpack.c.l.bf16 %v3523
  %v3640 = vunpack.c.l.bf16 %v3524
  %v3641 = vunpack.c.h.bf16 %v3521
  %v3642 = vunpack.c.h.bf16 %v3522
  %v3643 = vunpack.c.h.bf16 %v3523
  %v3644 = vunpack.c.h.bf16 %v3524
  %v3645 = vunpack.c.l.bf16 %v3525
  %v3646 = vunpack.c.l.bf16 %v3526
  %v3647 = vunpack.c.l.bf16 %v3527
  %v3648 = vunpack.c.l.bf16 %v3528
  %v3649 = vunpack.c.h.bf16 %v3525
  %v3650 = vunpack.c.h.bf16 %v3526
  %v3651 = vunpack.c.h.bf16 %v3527
  %v3652 = vunpack.c.h.bf16 %v3528
  %v3653 = vunpack.c.l.bf16 %v3529
  %v3654 = vunpack.c.l.bf16 %v3530
  %v3655 = vunpack.c.l.bf16 %v3531
  %v3656 = vunpack.c.l.bf16 %v3532
  %v3657 = vunpack.c.h.bf16 %v3529
  %v3658 = vunpack.c.h.bf16 %v3530
  %v3659 = vunpack.c.h.bf16 %v3531
  %v3660 = vunpack.c.h.bf16 %v3532
  %v3661 = vadd.f32 %v3629, %v3630
  %v3662 = vadd.f32 %v3633, %v3634
  %v3663 = vadd.f32 %v3637, %v3638
  %v3664 = vadd.f32 %v3641, %v3642
  %v3665 = vadd.f32 %v3645, %v3646
  %v3666 = vadd.f32 %v3649, %v3650
  %v3667 = vadd.f32 %v3653, %v3654
  %v3668 = vadd.f32 %v3657, %v3658
  %v3669 = vadd.f32 %v3661, %v3631
  %v3670 = vadd.f32 %v3662, %v3635
  %v3671 = vadd.f32 %v3663, %v3639
  %v3672 = vadd.f32 %v3664, %v3643
  %v3673 = vadd.f32 %v3665, %v3647
  %v3674 = vadd.f32 %v3666, %v3651
  %v3675 = vadd.f32 %v3667, %v3655
  %v3676 = vadd.f32 %v3668, %v3659
  %v3677 = vadd.f32 %v3669, %v3632
  %v3678 = vadd.f32 %v3670, %v3636
  %v3679 = vadd.f32 %v3671, %v3640
  %v3680 = vadd.f32 %v3672, %v3644
  %v3681 = vadd.f32 %v3673, %v3648
  %v3682 = vadd.f32 %v3674, %v3652
  %v3683 = vadd.f32 %v3675, %v3656
  %v3684 = vadd.f32 %v3676, %v3660
  %v3685 = vmul.f32 %v3629, %v3629
  %v3686 = vmul.f32 %v3630, %v3630
  %v3687 = vmul.f32 %v3631, %v3631
  %v3688 = vmul.f32 %v3632, %v3632
  %v3689 = vmul.f32 %v3633, %v3633
  %v3690 = vmul.f32 %v3634, %v3634
  %v3691 = vmul.f32 %v3635, %v3635
  %v3692 = vmul.f32 %v3636, %v3636
  %v3693 = vmul.f32 %v3637, %v3637
  %v3694 = vmul.f32 %v3638, %v3638
  %v3695 = vmul.f32 %v3639, %v3639
  %v3696 = vmul.f32 %v3640, %v3640
  %v3697 = vmul.f32 %v3641, %v3641
  %v3698 = vmul.f32 %v3642, %v3642
  %v3699 = vmul.f32 %v3643, %v3643
  %v3700 = vmul.f32 %v3644, %v3644
  %v3701 = vmul.f32 %v3645, %v3645
  %v3702 = vmul.f32 %v3646, %v3646
  %v3703 = vmul.f32 %v3647, %v3647
  %v3704 = vmul.f32 %v3648, %v3648
  %v3705 = vmul.f32 %v3649, %v3649
  %v3706 = vmul.f32 %v3650, %v3650
  %v3707 = vmul.f32 %v3651, %v3651
  %v3708 = vmul.f32 %v3652, %v3652
  %v3709 = vmul.f32 %v3653, %v3653
  %v3710 = vmul.f32 %v3654, %v3654
  %v3711 = vmul.f32 %v3655, %v3655
  %v3712 = vmul.f32 %v3656, %v3656
  %v3713 = vmul.f32 %v3657, %v3657
  %v3714 = vmul.f32 %v3658, %v3658
  %v3715 = vmul.f32 %v3659, %v3659
  %v3716 = vmul.f32 %v3660, %v3660
  %v3717 = vadd.f32 %v3685, %v3686
  %v3718 = vadd.f32 %v3689, %v3690
  %v3719 = vadd.f32 %v3693, %v3694
  %v3720 = vadd.f32 %v3697, %v3698
  %v3721 = vadd.f32 %v3701, %v3702
  %v3722 = vadd.f32 %v3705, %v3706
  %v3723 = vadd.f32 %v3709, %v3710
  %v3724 = vadd.f32 %v3713, %v3714
  %v3725 = vadd.f32 %v3717, %v3687
  %v3726 = vadd.f32 %v3718, %v3691
  %v3727 = vadd.f32 %v3719, %v3695
  %v3728 = vadd.f32 %v3720, %v3699
  %v3729 = vadd.f32 %v3721, %v3703
  %v3730 = vadd.f32 %v3722, %v3707
  %v3731 = vadd.f32 %v3723, %v3711
  %v3732 = vadd.f32 %v3724, %v3715
  %v3733 = vadd.f32 %v3725, %v3688
  %v3734 = vadd.f32 %v3726, %v3692
  %v3735 = vadd.f32 %v3727, %v3696
  %v3736 = vadd.f32 %v3728, %v3700
  %v3737 = vadd.f32 %v3729, %v3704
  %v3738 = vadd.f32 %v3730, %v3708
  %v3739 = vadd.f32 %v3731, %v3712
  %v3740 = vadd.f32 %v3732, %v3716
  %3741 = vst [vmem:[%s13] sm:$0xff] %v3677
  %3742 = vst [vmem:[%s13 + $0x8] sm:$0xff] %v3678
  %3743 = vst [vmem:[%s13 + $0x10] sm:$0xff] %v3679
  %3744 = vst [vmem:[%s13 + $0x18] sm:$0xff] %v3680
  %3745 = vst [vmem:[%s13 + $0x20] sm:$0xff] %v3681
  %3746 = vst [vmem:[%s13 + $0x28] sm:$0xff] %v3682
  %3747 = vst [vmem:[%s13 + $0x30] sm:$0xff] %v3683
  %3748 = vst [vmem:[%s13 + $0x38] sm:$0xf] %v3684
  %3749 = vst [vmem:[%s14] sm:$0xff] %v3733
  %3750 = vst [vmem:[%s14 + $0x8] sm:$0xff] %v3734
  %3751 = vst [vmem:[%s14 + $0x10] sm:$0xff] %v3735
  %3752 = vst [vmem:[%s14 + $0x18] sm:$0xff] %v3736
  %3753 = vst [vmem:[%s14 + $0x20] sm:$0xff] %v3737
  %3754 = vst [vmem:[%s14 + $0x28] sm:$0xff] %v3738
  %3755 = vst [vmem:[%s14 + $0x30] sm:$0xff] %v3739
  %3756 = vst [vmem:[%s14 + $0x38] sm:$0xf] %v3740
  // Predicated region
  $region50: #{m_resblock1_forward.8} parent=0 // pred_check
    _
  $region51: #{m_resblock1_forward.8} parent=0 // pred_check_branch
    %3758 = sbr.rel (0) target = $region53
  $region52: #{m_resblock1_forward.8} parent=0 // pred_region
    _
  $region53: #{m_resblock1_forward.8} parent=0 // pred_fallthru
    _
  // Predicated region
  $region54: #{m_resblock1_forward.8} parent=0 // pred_check
    _
  $region55: #{m_resblock1_forward.8} parent=0 // pred_check_branch
    %3760 = sbr.rel (0) target = $region57
  $region56: #{m_resblock1_forward.8} parent=0 // pred_region
    _
  $region57: #{m_resblock1_forward.8} parent=0 // pred_fallthru
    _
  // Predicated region
  $region58: #{m_resblock1_forward.8} parent=0 // pred_check
    _
  $region59: #{m_resblock1_forward.8} parent=0 // pred_check_branch
    %3762 = sbr.rel (0) target = $region61
  $region60: #{m_resblock1_forward.8} parent=0 // pred_region
    _
  $region61: #{m_resblock1_forward.8} parent=0 // pred_fallthru
    _
  // Predicated region
  $region62: #{m_resblock1_forward.8} parent=0 // pred_check
    _
  $region63: #{m_resblock1_forward.8} parent=0 // pred_check_branch
    %3764 = sbr.rel (0) target = $region65
  $region64: #{m_resblock1_forward.8} parent=0 // pred_region
    _
  $region65: #{m_resblock1_forward.8} parent=0 // pred_fallthru
    _
  // Predicated region
  $region66: #{m_resblock1_forward.8} parent=0 // pred_check
    _
  $region67: #{m_resblock1_forward.8} parent=0 // pred_check_branch
    %3766 = sbr.rel (0) target = $region69
  $region68: #{m_resblock1_forward.8} parent=0 // pred_region
    _
  $region69: #{m_resblock1_forward.8} parent=0 // pred_fallthru
    _
  // Predicated region
  $region70: #{m_resblock1_forward.8} parent=0 // pred_check
    _
  $region71: #{m_resblock1_forward.8} parent=0 // pred_check_branch
    %3768 = sbr.rel (0) target = $region73
  $region72: #{m_resblock1_forward.8} parent=0 // pred_region
    _
  $region73: #{m_resblock1_forward.8} parent=0 // pred_fallthru
    _

// kernel: m_resblock1_forward.9
$region0: #{m_resblock1_forward.9}
  #allocation0 [shape = 'u32[]', space=smem, size = 0x4, offset = 0x4, fixed_abs, tag = 'smem constant byte address 0x4 - core index']
  #allocation1 [shape = 'u32[144,128]{1,0:T(1,128)}', space=vmem, size = 0x12000, scoped, tag = 'internal scratch']
  %s0 = inlined_call_operand.vmem [shape: bf16[120,512], index: 0, kind: input, shape index: {}]
  %s1 = inlined_call_operand.vmem [shape: bf16[60,512], index: 1, kind: input, shape index: {}]
  %s2 = inlined_call_operand.vmem [shape: bf16[60,512], index: 2, kind: input, shape index: {}]
  %s3 = inlined_call_operand.vmem [shape: bf16[60,512], index: 3, kind: input, shape index: {}]
  %s4 = inlined_call_operand.vmem [shape: f32[120,1], index: 4, kind: input, shape index: {}]
  %s5 = inlined_call_operand.vmem [shape: f32[120,1], index: 5, kind: input, shape index: {}]
  %s6 = inlined_call_operand.vmem [shape: f32[420,1], index: 6, kind: input, shape index: {}]
  %s7 = inlined_call_operand.vmem [shape: f32[420,1], index: 7, kind: input, shape index: {}]
  %s8 = inlined_call_operand.vmem [shape: bf16[16,120], index: 8, kind: input, shape index: {}]
  %s9 = inlined_call_operand.vmem [shape: bf16[16,120], index: 9, kind: input, shape index: {}]
  %s10 = inlined_call_operand.vmem [shape: bf16[16,60], index: 10, kind: input, shape index: {}]
  %s11 = inlined_call_operand.vmem [shape: bf16[16,60], index: 11, kind: input, shape index: {}]
  %s12 = inlined_call_operand.vmem [shape: bf16[16,60], index: 12, kind: input, shape index: {}]
  %s13 = inlined_call_operand.vmem [shape: f32[16,1], index: 13, kind: input, shape index: {}]
  %s14 = inlined_call_operand.vmem [shape: f32[16,512], index: 14, kind: output, shape index: {}]
  %s15 = sld [smem:[#allocation0]]
  $region66: #{m_resblock1_forward.9} parent=0
    _
  %s17 = ssub.s32 1, %s15
  %s18 = scalar_select 0, %s17, %s15
  // Predicated region
  $region2: #{m_resblock1_forward.9} parent=0 // pred_check
    _
  $region3: #{m_resblock1_forward.9} parent=0 // pred_check_branch
    %20 = sbr.rel (0) target = $region5
  $region4: #{m_resblock1_forward.9} parent=0 // pred_region
    _
  $region5: #{m_resblock1_forward.9} parent=0 // pred_fallthru
    _
  // Predicated region
  $region6: #{m_resblock1_forward.9} parent=0 // pred_check
    _
  $region7: #{m_resblock1_forward.9} parent=0 // pred_check_branch
    %22 = sbr.rel (0) target = $region9
  $region8: #{m_resblock1_forward.9} parent=0 // pred_region
    _
  $region9: #{m_resblock1_forward.9} parent=0 // pred_fallthru
    _
  // Predicated region
  $region10: #{m_resblock1_forward.9} parent=0 // pred_check
    _
  $region11: #{m_resblock1_forward.9} parent=0 // pred_check_branch
    %24 = sbr.rel (0) target = $region13
  $region12: #{m_resblock1_forward.9} parent=0 // pred_region
    _
  $region13: #{m_resblock1_forward.9} parent=0 // pred_fallthru
    _
  // Predicated region
  $region14: #{m_resblock1_forward.9} parent=0 // pred_check
    _
  $region15: #{m_resblock1_forward.9} parent=0 // pred_check_branch
    %26 = sbr.rel (0) target = $region17
  $region16: #{m_resblock1_forward.9} parent=0 // pred_region
    _
  $region17: #{m_resblock1_forward.9} parent=0 // pred_fallthru
    _
  // Predicated region
  $region18: #{m_resblock1_forward.9} parent=0 // pred_check
    _
  $region19: #{m_resblock1_forward.9} parent=0 // pred_check_branch
    %28 = sbr.rel (0) target = $region21
  $region20: #{m_resblock1_forward.9} parent=0 // pred_region
    _
  $region21: #{m_resblock1_forward.9} parent=0 // pred_fallthru
    _
  // Predicated region
  $region22: #{m_resblock1_forward.9} parent=0 // pred_check
    _
  $region23: #{m_resblock1_forward.9} parent=0 // pred_check_branch
    %30 = sbr.rel (0) target = $region25
  $region24: #{m_resblock1_forward.9} parent=0 // pred_region
    _
  $region25: #{m_resblock1_forward.9} parent=0 // pred_fallthru
    _
  // Predicated region
  $region26: #{m_resblock1_forward.9} parent=0 // pred_check
    _
  $region27: #{m_resblock1_forward.9} parent=0 // pred_check_branch
    %32 = sbr.rel (0) target = $region29
  $region28: #{m_resblock1_forward.9} parent=0 // pred_region
    _
  $region29: #{m_resblock1_forward.9} parent=0 // pred_fallthru
    _
  // Predicated region
  $region30: #{m_resblock1_forward.9} parent=0 // pred_check
    _
  $region31: #{m_resblock1_forward.9} parent=0 // pred_check_branch
    %34 = sbr.rel (0) target = $region33
  $region32: #{m_resblock1_forward.9} parent=0 // pred_region
    _
  $region33: #{m_resblock1_forward.9} parent=0 // pred_fallthru
    _
  // Predicated region
  $region34: #{m_resblock1_forward.9} parent=0 // pred_check
    _
  $region35: #{m_resblock1_forward.9} parent=0 // pred_check_branch
    %36 = sbr.rel (0) target = $region37
  $region36: #{m_resblock1_forward.9} parent=0 // pred_region
    _
  $region37: #{m_resblock1_forward.9} parent=0 // pred_fallthru
    _
  // Predicated region
  $region38: #{m_resblock1_forward.9} parent=0 // pred_check
    _
  $region39: #{m_resblock1_forward.9} parent=0 // pred_check_branch
    %38 = sbr.rel (0) target = $region41
  $region40: #{m_resblock1_forward.9} parent=0 // pred_region
    _
  $region41: #{m_resblock1_forward.9} parent=0 // pred_fallthru
    _
  // Predicated region
  $region42: #{m_resblock1_forward.9} parent=0 // pred_check
    _
  $region43: #{m_resblock1_forward.9} parent=0 // pred_check_branch
    %40 = sbr.rel (0) target = $region45
  $region44: #{m_resblock1_forward.9} parent=0 // pred_region
    _
  $region45: #{m_resblock1_forward.9} parent=0 // pred_fallthru
    _
  // Predicated region
  $region46: #{m_resblock1_forward.9} parent=0 // pred_check
    _
  $region47: #{m_resblock1_forward.9} parent=0 // pred_check_branch
    %42 = sbr.rel (0) target = $region49
  $region48: #{m_resblock1_forward.9} parent=0 // pred_region
    _
  $region49: #{m_resblock1_forward.9} parent=0 // pred_fallthru
    _
  // Predicated region
  $region50: #{m_resblock1_forward.9} parent=0 // pred_check
    _
  $region51: #{m_resblock1_forward.9} parent=0 // pred_check_branch
    %44 = sbr.rel (0) target = $region53
  $region52: #{m_resblock1_forward.9} parent=0 // pred_region
    _
  $region53: #{m_resblock1_forward.9} parent=0 // pred_fallthru
    _
  // Predicated region
  $region54: #{m_resblock1_forward.9} parent=0 // pred_check
    _
  $region55: #{m_resblock1_forward.9} parent=0 // pred_check_branch
    %46 = sbr.rel (0) target = $region57
  $region56: #{m_resblock1_forward.9} parent=0 // pred_region
    _
  $region57: #{m_resblock1_forward.9} parent=0 // pred_fallthru
    _
  %v49 = vld [vmem:[%s0] sm:$0xff]
  %v50 = vld [vmem:[%s0 + $0x8] sm:$0xff]
  %v51 = vld [vmem:[%s0 + $0x10] sm:$0xff]
  %v52 = vld [vmem:[%s0 + $0x18] sm:$0xff]
  %v53 = vld [vmem:[%s0 + $0x20] sm:$0xff]
  %v54 = vld [vmem:[%s0 + $0x28] sm:$0xff]
  %v55 = vld [vmem:[%s0 + $0x30] sm:$0xff]
  %v56 = vld [vmem:[%s0 + $0x38] sm:$0xff]
  %v57 = vld [vmem:[%s0 + $0x40] sm:$0xff]
  %v58 = vld [vmem:[%s0 + $0x48] sm:$0xff]
  %v59 = vld [vmem:[%s0 + $0x50] sm:$0xff]
  %v60 = vld [vmem:[%s0 + $0x58] sm:$0xff]
  %v61 = vld [vmem:[%s0 + $0x60] sm:$0xff]
  %v62 = vld [vmem:[%s0 + $0x68] sm:$0xff]
  %v63 = vld [vmem:[%s0 + $0x70] sm:$0xff]
  %v64 = vld [vmem:[%s0 + $0x78] sm:$0xff]
  %v65 = vld [vmem:[%s0 + $0x80] sm:$0xff]
  %v66 = vld [vmem:[%s0 + $0x88] sm:$0xff]
  %v67 = vld [vmem:[%s0 + $0x90] sm:$0xff]
  %v68 = vld [vmem:[%s0 + $0x98] sm:$0xff]
  %v69 = vld [vmem:[%s0 + $0xa0] sm:$0xff]
  %v70 = vld [vmem:[%s0 + $0xa8] sm:$0xff]
  %v71 = vld [vmem:[%s0 + $0xb0] sm:$0xff]
  %v72 = vld [vmem:[%s0 + $0xb8] sm:$0xff]
  %v73 = vld [vmem:[%s0 + $0xc0] sm:$0xff]
  %v74 = vld [vmem:[%s0 + $0xc8] sm:$0xff]
  %v75 = vld [vmem:[%s0 + $0xd0] sm:$0xff]
  %v76 = vld [vmem:[%s0 + $0xd8] sm:$0xff]
  %v77 = vld [vmem:[%s0 + $0xe0] sm:$0xff]
  %v78 = vld [vmem:[%s0 + $0xe8] sm:$0xff]
  %v79 = vld [vmem:[%s4] sm:$0xff]
  %v80 = vld [vmem:[%s4 + $0x8] sm:$0xff]
  %v81 = vld [vmem:[%s4 + $0x10] sm:$0xff]
  %v82 = vld [vmem:[%s4 + $0x18] sm:$0xff]
  %v83 = vld [vmem:[%s4 + $0x20] sm:$0xff]
  %v84 = vld [vmem:[%s4 + $0x28] sm:$0xff]
  %v85 = vld [vmem:[%s4 + $0x30] sm:$0xff]
  %v86 = vld [vmem:[%s4 + $0x38] sm:$0xff]
  %v87 = vld [vmem:[%s4 + $0x40] sm:$0xff]
  %v88 = vld [vmem:[%s4 + $0x48] sm:$0xff]
  %v89 = vld [vmem:[%s4 + $0x50] sm:$0xff]
  %v90 = vld [vmem:[%s4 + $0x58] sm:$0xff]
  %v91 = vld [vmem:[%s4 + $0x60] sm:$0xff]
  %v92 = vld [vmem:[%s4 + $0x68] sm:$0xff]
  %v93 = vld [vmem:[%s4 + $0x70] sm:$0xff]
  %v94 = vpack.c.bf16 %v80, %v79
  %v95 = vpack.c.bf16 %v82, %v81
  %v96 = vpack.c.bf16 %v84, %v83
  %v97 = vpack.c.bf16 %v86, %v85
  %v98 = vpack.c.bf16 %v88, %v87
  %v99 = vpack.c.bf16 %v90, %v89
  %v100 = vpack.c.bf16 %v92, %v91
  %v101 = vpack.c.bf16 %v93, %v93
  %103 = vset.pattern.permute.xlu0 0
  %104 = vperm.xlu0 %103, %v94
  %v105 = vpop.permute.xlu0 %104
  %107 = vset.pattern.permute.xlu0 0
  %108 = vperm.xlu0 %107, %v95
  %v109 = vpop.permute.xlu0 %108
  %111 = vset.pattern.permute.xlu0 0
  %112 = vperm.xlu0 %111, %v96
  %v113 = vpop.permute.xlu0 %112
  %115 = vset.pattern.permute.xlu0 0
  %116 = vperm.xlu0 %115, %v97
  %v117 = vpop.permute.xlu0 %116
  %119 = vset.pattern.permute.xlu0 0
  %120 = vperm.xlu0 %119, %v98
  %v121 = vpop.permute.xlu0 %120
  %123 = vset.pattern.permute.xlu0 0
  %124 = vperm.xlu0 %123, %v99
  %v125 = vpop.permute.xlu0 %124
  %127 = vset.pattern.permute.xlu0 0
  %128 = vperm.xlu0 %127, %v100
  %v129 = vpop.permute.xlu0 %128
  %131 = vset.pattern.permute.xlu0 0
  %132 = vperm.xlu0 %131, %v101
  %v133 = vpop.permute.xlu0 %132
  %v143 = vunpack.c.l.s4 839922192
  %v144 = vunpack.c.0.s8 %v143
  %v145 = vlaneseq
  %v146 = vshrl.u32 %v145, 7
  %v147 = vsub.s32 %v144, %v146
  %v148 = vrot.slane %v105, %v147
  %v150 = vunpack.c.l.s4 1985246804
  %v151 = vunpack.c.0.s8 %v150
  %v152 = vlaneseq
  %v153 = vshrl.u32 %v152, 7
  %v154 = vsub.s32 %v151, %v153
  %v155 = vrot.slane %v105, %v154
  %v157 = vunpack.c.l.s4 839922192
  %v158 = vunpack.c.0.s8 %v157
  %v159 = vlaneseq
  %v160 = vshrl.u32 %v159, 7
  %v161 = vsub.s32 %v158, %v160
  %v162 = vrot.slane %v109, %v161
  %v164 = vunpack.c.l.s4 1985246804
  %v165 = vunpack.c.0.s8 %v164
  %v166 = vlaneseq
  %v167 = vshrl.u32 %v166, 7
  %v168 = vsub.s32 %v165, %v167
  %v169 = vrot.slane %v109, %v168
  %v171 = vunpack.c.l.s4 839922192
  %v172 = vunpack.c.0.s8 %v171
  %v173 = vlaneseq
  %v174 = vshrl.u32 %v173, 7
  %v175 = vsub.s32 %v172, %v174
  %v176 = vrot.slane %v113, %v175
  %v178 = vunpack.c.l.s4 1985246804
  %v179 = vunpack.c.0.s8 %v178
  %v180 = vlaneseq
  %v181 = vshrl.u32 %v180, 7
  %v182 = vsub.s32 %v179, %v181
  %v183 = vrot.slane %v113, %v182
  %v185 = vunpack.c.l.s4 839922192
  %v186 = vunpack.c.0.s8 %v185
  %v187 = vlaneseq
  %v188 = vshrl.u32 %v187, 7
  %v189 = vsub.s32 %v186, %v188
  %v190 = vrot.slane %v117, %v189
  %v192 = vunpack.c.l.s4 1985246804
  %v193 = vunpack.c.0.s8 %v192
  %v194 = vlaneseq
  %v195 = vshrl.u32 %v194, 7
  %v196 = vsub.s32 %v193, %v195
  %v197 = vrot.slane %v117, %v196
  %v199 = vunpack.c.l.s4 839922192
  %v200 = vunpack.c.0.s8 %v199
  %v201 = vlaneseq
  %v202 = vshrl.u32 %v201, 7
  %v203 = vsub.s32 %v200, %v202
  %v204 = vrot.slane %v121, %v203
  %v206 = vunpack.c.l.s4 1985246804
  %v207 = vunpack.c.0.s8 %v206
  %v208 = vlaneseq
  %v209 = vshrl.u32 %v208, 7
  %v210 = vsub.s32 %v207, %v209
  %v211 = vrot.slane %v121, %v210
  %v213 = vunpack.c.l.s4 839922192
  %v214 = vunpack.c.0.s8 %v213
  %v215 = vlaneseq
  %v216 = vshrl.u32 %v215, 7
  %v217 = vsub.s32 %v214, %v216
  %v218 = vrot.slane %v125, %v217
  %v220 = vunpack.c.l.s4 1985246804
  %v221 = vunpack.c.0.s8 %v220
  %v222 = vlaneseq
  %v223 = vshrl.u32 %v222, 7
  %v224 = vsub.s32 %v221, %v223
  %v225 = vrot.slane %v125, %v224
  %v227 = vunpack.c.l.s4 839922192
  %v228 = vunpack.c.0.s8 %v227
  %v229 = vlaneseq
  %v230 = vshrl.u32 %v229, 7
  %v231 = vsub.s32 %v228, %v230
  %v232 = vrot.slane %v129, %v231
  %v234 = vunpack.c.l.s4 1985246804
  %v235 = vunpack.c.0.s8 %v234
  %v236 = vlaneseq
  %v237 = vshrl.u32 %v236, 7
  %v238 = vsub.s32 %v235, %v237
  %v239 = vrot.slane %v129, %v238
  %v241 = vunpack.c.l.s4 839922192
  %v242 = vunpack.c.0.s8 %v241
  %v243 = vlaneseq
  %v244 = vshrl.u32 %v243, 7
  %v245 = vsub.s32 %v242, %v244
  %v246 = vrot.slane %v133, %v245
  %v262 = vmul.bf16 %v49, %v148
  %v263 = vmul.bf16 %v50, %v148
  %v264 = vmul.bf16 %v51, %v155
  %v265 = vmul.bf16 %v52, %v155
  %v266 = vmul.bf16 %v53, %v162
  %v267 = vmul.bf16 %v54, %v162
  %v268 = vmul.bf16 %v55, %v169
  %v269 = vmul.bf16 %v56, %v169
  %v270 = vmul.bf16 %v57, %v176
  %v271 = vmul.bf16 %v58, %v176
  %v272 = vmul.bf16 %v59, %v183
  %v273 = vmul.bf16 %v60, %v183
  %v274 = vmul.bf16 %v61, %v190
  %v275 = vmul.bf16 %v62, %v190
  %v276 = vmul.bf16 %v63, %v197
  %v277 = vmul.bf16 %v64, %v197
  %v278 = vmul.bf16 %v65, %v204
  %v279 = vmul.bf16 %v66, %v204
  %v280 = vmul.bf16 %v67, %v211
  %v281 = vmul.bf16 %v68, %v211
  %v282 = vmul.bf16 %v69, %v218
  %v283 = vmul.bf16 %v70, %v218
  %v284 = vmul.bf16 %v71, %v225
  %v285 = vmul.bf16 %v72, %v225
  %v286 = vmul.bf16 %v73, %v232
  %v287 = vmul.bf16 %v74, %v232
  %v288 = vmul.bf16 %v75, %v239
  %v289 = vmul.bf16 %v76, %v239
  %v290 = vmul.bf16 %v77, %v246
  %v291 = vmul.bf16 %v78, %v246
  %v292 = vld [vmem:[%s5] sm:$0xff]
  %v293 = vld [vmem:[%s5 + $0x8] sm:$0xff]
  %v294 = vld [vmem:[%s5 + $0x10] sm:$0xff]
  %v295 = vld [vmem:[%s5 + $0x18] sm:$0xff]
  %v296 = vld [vmem:[%s5 + $0x20] sm:$0xff]
  %v297 = vld [vmem:[%s5 + $0x28] sm:$0xff]
  %v298 = vld [vmem:[%s5 + $0x30] sm:$0xff]
  %v299 = vld [vmem:[%s5 + $0x38] sm:$0xff]
  %v300 = vld [vmem:[%s5 + $0x40] sm:$0xff]
  %v301 = vld [vmem:[%s5 + $0x48] sm:$0xff]
  %v302 = vld [vmem:[%s5 + $0x50] sm:$0xff]
  %v303 = vld [vmem:[%s5 + $0x58] sm:$0xff]
  %v304 = vld [vmem:[%s5 + $0x60] sm:$0xff]
  %v305 = vld [vmem:[%s5 + $0x68] sm:$0xff]
  %v306 = vld [vmem:[%s5 + $0x70] sm:$0xff]
  %v307 = vpack.c.bf16 %v293, %v292
  %v308 = vpack.c.bf16 %v295, %v294
  %v309 = vpack.c.bf16 %v297, %v296
  %v310 = vpack.c.bf16 %v299, %v298
  %v311 = vpack.c.bf16 %v301, %v300
  %v312 = vpack.c.bf16 %v303, %v302
  %v313 = vpack.c.bf16 %v305, %v304
  %v314 = vpack.c.bf16 %v306, %v306
  %316 = vset.pattern.permute.xlu0 0
  %317 = vperm.xlu0 %316, %v307
  %v318 = vpop.permute.xlu0 %317
  %320 = vset.pattern.permute.xlu0 0
  %321 = vperm.xlu0 %320, %v308
  %v322 = vpop.permute.xlu0 %321
  %324 = vset.pattern.permute.xlu0 0
  %325 = vperm.xlu0 %324, %v309
  %v326 = vpop.permute.xlu0 %325
  %328 = vset.pattern.permute.xlu0 0
  %329 = vperm.xlu0 %328, %v310
  %v330 = vpop.permute.xlu0 %329
  %332 = vset.pattern.permute.xlu0 0
  %333 = vperm.xlu0 %332, %v311
  %v334 = vpop.permute.xlu0 %333
  %336 = vset.pattern.permute.xlu0 0
  %337 = vperm.xlu0 %336, %v312
  %v338 = vpop.permute.xlu0 %337
  %340 = vset.pattern.permute.xlu0 0
  %341 = vperm.xlu0 %340, %v313
  %v342 = vpop.permute.xlu0 %341
  %344 = vset.pattern.permute.xlu0 0
  %345 = vperm.xlu0 %344, %v314
  %v346 = vpop.permute.xlu0 %345
  %v356 = vunpack.c.l.s4 839922192
  %v357 = vunpack.c.0.s8 %v356
  %v358 = vlaneseq
  %v359 = vshrl.u32 %v358, 7
  %v360 = vsub.s32 %v357, %v359
  %v361 = vrot.slane %v318, %v360
  %v363 = vunpack.c.l.s4 1985246804
  %v364 = vunpack.c.0.s8 %v363
  %v365 = vlaneseq
  %v366 = vshrl.u32 %v365, 7
  %v367 = vsub.s32 %v364, %v366
  %v368 = vrot.slane %v318, %v367
  %v370 = vunpack.c.l.s4 839922192
  %v371 = vunpack.c.0.s8 %v370
  %v372 = vlaneseq
  %v373 = vshrl.u32 %v372, 7
  %v374 = vsub.s32 %v371, %v373
  %v375 = vrot.slane %v322, %v374
  %v377 = vunpack.c.l.s4 1985246804
  %v378 = vunpack.c.0.s8 %v377
  %v379 = vlaneseq
  %v380 = vshrl.u32 %v379, 7
  %v381 = vsub.s32 %v378, %v380
  %v382 = vrot.slane %v322, %v381
  %v384 = vunpack.c.l.s4 839922192
  %v385 = vunpack.c.0.s8 %v384
  %v386 = vlaneseq
  %v387 = vshrl.u32 %v386, 7
  %v388 = vsub.s32 %v385, %v387
  %v389 = vrot.slane %v326, %v388
  %v391 = vunpack.c.l.s4 1985246804
  %v392 = vunpack.c.0.s8 %v391
  %v393 = vlaneseq
  %v394 = vshrl.u32 %v393, 7
  %v395 = vsub.s32 %v392, %v394
  %v396 = vrot.slane %v326, %v395
  %v398 = vunpack.c.l.s4 839922192
  %v399 = vunpack.c.0.s8 %v398
  %v400 = vlaneseq
  %v401 = vshrl.u32 %v400, 7
  %v402 = vsub.s32 %v399, %v401
  %v403 = vrot.slane %v330, %v402
  %v405 = vunpack.c.l.s4 1985246804
  %v406 = vunpack.c.0.s8 %v405
  %v407 = vlaneseq
  %v408 = vshrl.u32 %v407, 7
  %v409 = vsub.s32 %v406, %v408
  %v410 = vrot.slane %v330, %v409
  %v412 = vunpack.c.l.s4 839922192
  %v413 = vunpack.c.0.s8 %v412
  %v414 = vlaneseq
  %v415 = vshrl.u32 %v414, 7
  %v416 = vsub.s32 %v413, %v415
  %v417 = vrot.slane %v334, %v416
  %v419 = vunpack.c.l.s4 1985246804
  %v420 = vunpack.c.0.s8 %v419
  %v421 = vlaneseq
  %v422 = vshrl.u32 %v421, 7
  %v423 = vsub.s32 %v420, %v422
  %v424 = vrot.slane %v334, %v423
  %v426 = vunpack.c.l.s4 839922192
  %v427 = vunpack.c.0.s8 %v426
  %v428 = vlaneseq
  %v429 = vshrl.u32 %v428, 7
  %v430 = vsub.s32 %v427, %v429
  %v431 = vrot.slane %v338, %v430
  %v433 = vunpack.c.l.s4 1985246804
  %v434 = vunpack.c.0.s8 %v433
  %v435 = vlaneseq
  %v436 = vshrl.u32 %v435, 7
  %v437 = vsub.s32 %v434, %v436
  %v438 = vrot.slane %v338, %v437
  %v440 = vunpack.c.l.s4 839922192
  %v441 = vunpack.c.0.s8 %v440
  %v442 = vlaneseq
  %v443 = vshrl.u32 %v442, 7
  %v444 = vsub.s32 %v441, %v443
  %v445 = vrot.slane %v342, %v444
  %v447 = vunpack.c.l.s4 1985246804
  %v448 = vunpack.c.0.s8 %v447
  %v449 = vlaneseq
  %v450 = vshrl.u32 %v449, 7
  %v451 = vsub.s32 %v448, %v450
  %v452 = vrot.slane %v342, %v451
  %v454 = vunpack.c.l.s4 839922192
  %v455 = vunpack.c.0.s8 %v454
  %v456 = vlaneseq
  %v457 = vshrl.u32 %v456, 7
  %v458 = vsub.s32 %v455, %v457
  %v459 = vrot.slane %v346, %v458
  %v475 = vadd.bf16 %v262, %v361
  %v476 = vadd.bf16 %v263, %v361
  %v477 = vadd.bf16 %v264, %v368
  %v478 = vadd.bf16 %v265, %v368
  %v479 = vadd.bf16 %v266, %v375
  %v480 = vadd.bf16 %v267, %v375
  %v481 = vadd.bf16 %v268, %v382
  %v482 = vadd.bf16 %v269, %v382
  %v483 = vadd.bf16 %v270, %v389
  %v484 = vadd.bf16 %v271, %v389
  %v485 = vadd.bf16 %v272, %v396
  %v486 = vadd.bf16 %v273, %v396
  %v487 = vadd.bf16 %v274, %v403
  %v488 = vadd.bf16 %v275, %v403
  %v489 = vadd.bf16 %v276, %v410
  %v490 = vadd.bf16 %v277, %v410
  %v491 = vadd.bf16 %v278, %v417
  %v492 = vadd.bf16 %v279, %v417
  %v493 = vadd.bf16 %v280, %v424
  %v494 = vadd.bf16 %v281, %v424
  %v495 = vadd.bf16 %v282, %v431
  %v496 = vadd.bf16 %v283, %v431
  %v497 = vadd.bf16 %v284, %v438
  %v498 = vadd.bf16 %v285, %v438
  %v499 = vadd.bf16 %v286, %v445
  %v500 = vadd.bf16 %v287, %v445
  %v501 = vadd.bf16 %v288, %v452
  %v502 = vadd.bf16 %v289, %v452
  %v503 = vadd.bf16 %v290, %v459
  %v504 = vadd.bf16 %v291, %v459
  %v505 = vmul.bf16 %v475, 1009007652
  %v506 = vmul.bf16 %v476, 1009007652
  %v507 = vmul.bf16 %v477, 1009007652
  %v508 = vmul.bf16 %v478, 1009007652
  %v509 = vmul.bf16 %v479, 1009007652
  %v510 = vmul.bf16 %v480, 1009007652
  %v511 = vmul.bf16 %v481, 1009007652
  %v512 = vmul.bf16 %v482, 1009007652
  %v513 = vmul.bf16 %v483, 1009007652
  %v514 = vmul.bf16 %v484, 1009007652
  %v515 = vmul.bf16 %v485, 1009007652
  %v516 = vmul.bf16 %v486, 1009007652
  %v517 = vmul.bf16 %v487, 1009007652
  %v518 = vmul.bf16 %v488, 1009007652
  %v519 = vmul.bf16 %v489, 1009007652
  %v520 = vmul.bf16 %v490, 1009007652
  %v521 = vmul.bf16 %v491, 1009007652
  %v522 = vmul.bf16 %v492, 1009007652
  %v523 = vmul.bf16 %v493, 1009007652
  %v524 = vmul.bf16 %v494, 1009007652
  %v525 = vmul.bf16 %v495, 1009007652
  %v526 = vmul.bf16 %v496, 1009007652
  %v527 = vmul.bf16 %v497, 1009007652
  %v528 = vmul.bf16 %v498, 1009007652
  %v529 = vmul.bf16 %v499, 1009007652
  %v530 = vmul.bf16 %v500, 1009007652
  %v531 = vmul.bf16 %v501, 1009007652
  %v532 = vmul.bf16 %v502, 1009007652
  %v533 = vmul.bf16 %v503, 1009007652
  %v534 = vmul.bf16 %v504, 1009007652
  %v535 = vmax.bf16 %v475, %v505
  %v536 = vmax.bf16 %v476, %v506
  %v537 = vmax.bf16 %v477, %v507
  %v538 = vmax.bf16 %v478, %v508
  %v539 = vmax.bf16 %v479, %v509
  %v540 = vmax.bf16 %v480, %v510
  %v541 = vmax.bf16 %v481, %v511
  %v542 = vmax.bf16 %v482, %v512
  %v543 = vmax.bf16 %v483, %v513
  %v544 = vmax.bf16 %v484, %v514
  %v545 = vmax.bf16 %v485, %v515
  %v546 = vmax.bf16 %v486, %v516
  %v547 = vmax.bf16 %v487, %v517
  %v548 = vmax.bf16 %v488, %v518
  %v549 = vmax.bf16 %v489, %v519
  %v550 = vmax.bf16 %v490, %v520
  %v551 = vmax.bf16 %v491, %v521
  %v552 = vmax.bf16 %v492, %v522
  %v553 = vmax.bf16 %v493, %v523
  %v554 = vmax.bf16 %v494, %v524
  %v555 = vmax.bf16 %v495, %v525
  %v556 = vmax.bf16 %v496, %v526
  %v557 = vmax.bf16 %v497, %v527
  %v558 = vmax.bf16 %v498, %v528
  %v559 = vmax.bf16 %v499, %v529
  %v560 = vmax.bf16 %v500, %v530
  %v561 = vmax.bf16 %v501, %v531
  %v562 = vmax.bf16 %v502, %v532
  %v563 = vmax.bf16 %v503, %v533
  %v564 = vmax.bf16 %v504, %v534
  %v565 = vld [vmem:[%s1] sm:$0xff]
  %v566 = vld [vmem:[%s1 + $0x8] sm:$0xff]
  %v567 = vld [vmem:[%s1 + $0x10] sm:$0xff]
  %v568 = vld [vmem:[%s1 + $0x18] sm:$0xff]
  %v569 = vld [vmem:[%s1 + $0x20] sm:$0xff]
  %v570 = vld [vmem:[%s1 + $0x28] sm:$0xff]
  %v571 = vld [vmem:[%s1 + $0x30] sm:$0xff]
  %v572 = vld [vmem:[%s1 + $0x38] sm:$0xff]
  %v573 = vld [vmem:[%s1 + $0x40] sm:$0xff]
  %v574 = vld [vmem:[%s1 + $0x48] sm:$0xff]
  %v575 = vld [vmem:[%s1 + $0x50] sm:$0xff]
  %v576 = vld [vmem:[%s1 + $0x58] sm:$0xff]
  %v577 = vld [vmem:[%s1 + $0x60] sm:$0xff]
  %v578 = vld [vmem:[%s1 + $0x68] sm:$0xff]
  %v579 = vld [vmem:[%s1 + $0x70] sm:$0x33]
  %v580 = vld [vmem:[%s1 + $0x78] sm:$0x33]
  %v581 = vld [vmem:[%s2] sm:$0xff]
  %v582 = vld [vmem:[%s2 + $0x8] sm:$0xff]
  %v583 = vld [vmem:[%s2 + $0x10] sm:$0xff]
  %v584 = vld [vmem:[%s2 + $0x18] sm:$0xff]
  %v585 = vld [vmem:[%s2 + $0x20] sm:$0xff]
  %v586 = vld [vmem:[%s2 + $0x28] sm:$0xff]
  %v587 = vld [vmem:[%s2 + $0x30] sm:$0xff]
  %v588 = vld [vmem:[%s2 + $0x38] sm:$0xff]
  %v589 = vld [vmem:[%s2 + $0x40] sm:$0xff]
  %v590 = vld [vmem:[%s2 + $0x48] sm:$0xff]
  %v591 = vld [vmem:[%s2 + $0x50] sm:$0xff]
  %v592 = vld [vmem:[%s2 + $0x58] sm:$0xff]
  %v593 = vld [vmem:[%s2 + $0x60] sm:$0xff]
  %v594 = vld [vmem:[%s2 + $0x68] sm:$0xff]
  %v595 = vld [vmem:[%s2 + $0x70] sm:$0x33]
  %v596 = vld [vmem:[%s2 + $0x78] sm:$0x33]
  %v597 = vld [vmem:[%s3] sm:$0xff]
  %v598 = vld [vmem:[%s3 + $0x8] sm:$0xff]
  %v599 = vld [vmem:[%s3 + $0x10] sm:$0xff]
  %v600 = vld [vmem:[%s3 + $0x18] sm:$0xff]
  %v601 = vld [vmem:[%s3 + $0x20] sm:$0xff]
  %v602 = vld [vmem:[%s3 + $0x28] sm:$0xff]
  %v603 = vld [vmem:[%s3 + $0x30] sm:$0xff]
  %v604 = vld [vmem:[%s3 + $0x38] sm:$0xff]
  %v605 = vld [vmem:[%s3 + $0x40] sm:$0xff]
  %v606 = vld [vmem:[%s3 + $0x48] sm:$0xff]
  %v607 = vld [vmem:[%s3 + $0x50] sm:$0xff]
  %v608 = vld [vmem:[%s3 + $0x58] sm:$0xff]
  %v609 = vld [vmem:[%s3 + $0x60] sm:$0xff]
  %v610 = vld [vmem:[%s3 + $0x68] sm:$0xff]
  %v611 = vld [vmem:[%s3 + $0x70] sm:$0x33]
  %v612 = vld [vmem:[%s3 + $0x78] sm:$0x33]
  %v613 = vld [vmem:[%s6] sm:$0xff]
  %v614 = vld [vmem:[%s6 + $0x8] sm:$0xff]
  %v615 = vld [vmem:[%s6 + $0x10] sm:$0xff]
  %v616 = vld [vmem:[%s6 + $0x18] sm:$0xff]
  %v617 = vld [vmem:[%s6 + $0x20] sm:$0xff]
  %v618 = vld [vmem:[%s6 + $0x28] sm:$0xff]
  %v619 = vld [vmem:[%s6 + $0x30] sm:$0xff]
  %v620 = vld [vmem:[%s6 + $0x38] sm:$0xff]
  %v621 = vld [vmem:[%s6 + $0x40] sm:$0xff]
  %v622 = vld [vmem:[%s6 + $0x48] sm:$0xff]
  %v623 = vld [vmem:[%s6 + $0x50] sm:$0xff]
  %v624 = vld [vmem:[%s6 + $0x58] sm:$0xff]
  %v625 = vld [vmem:[%s6 + $0x60] sm:$0xff]
  %v626 = vld [vmem:[%s6 + $0x68] sm:$0xff]
  %v627 = vld [vmem:[%s6 + $0x70] sm:$0xff]
  %v628 = vld [vmem:[%s6 + $0x78] sm:$0xff]
  %v629 = vld [vmem:[%s6 + $0x80] sm:$0xff]
  %v630 = vld [vmem:[%s6 + $0x88] sm:$0xff]
  %v631 = vld [vmem:[%s6 + $0x90] sm:$0xff]
  %v632 = vld [vmem:[%s6 + $0x98] sm:$0xff]
  %v633 = vld [vmem:[%s6 + $0xa0] sm:$0xff]
  %v634 = vld [vmem:[%s6 + $0xa8] sm:$0xff]
  %v635 = vld [vmem:[%s6 + $0xb0] sm:$0xff]
  %v636 = vld [vmem:[%s6 + $0xb8] sm:$0xff]
  %v637 = vld [vmem:[%s6 + $0xc0] sm:$0xff]
  %v638 = vld [vmem:[%s6 + $0xc8] sm:$0xff]
  %v639 = vld [vmem:[%s6 + $0xd0] sm:$0xff]
  %v640 = vld [vmem:[%s6 + $0xd8] sm:$0xff]
  %v641 = vld [vmem:[%s6 + $0xe0] sm:$0xff]
  %v642 = vld [vmem:[%s6 + $0xe8] sm:$0xff]
  %v643 = vld [vmem:[%s6 + $0xf0] sm:$0xff]
  %v644 = vld [vmem:[%s6 + $0xf8] sm:$0xff]
  %v645 = vld [vmem:[%s6 + $0x100] sm:$0xff]
  %v646 = vld [vmem:[%s6 + $0x108] sm:$0xff]
  %v647 = vld [vmem:[%s6 + $0x110] sm:$0xff]
  %v648 = vld [vmem:[%s6 + $0x118] sm:$0xff]
  %v649 = vld [vmem:[%s6 + $0x120] sm:$0xff]
  %v650 = vld [vmem:[%s6 + $0x128] sm:$0xff]
  %v651 = vld [vmem:[%s6 + $0x130] sm:$0xff]
  %v652 = vld [vmem:[%s6 + $0x138] sm:$0xff]
  %v653 = vld [vmem:[%s6 + $0x140] sm:$0xff]
  %v654 = vld [vmem:[%s6 + $0x148] sm:$0xff]
  %v655 = vld [vmem:[%s6 + $0x150] sm:$0xff]
  %v656 = vld [vmem:[%s6 + $0x158] sm:$0xff]
  %v657 = vld [vmem:[%s6 + $0x160] sm:$0xff]
  %v658 = vld [vmem:[%s6 + $0x168] sm:$0xff]
  %v659 = vld [vmem:[%s6 + $0x170] sm:$0xff]
  %v660 = vld [vmem:[%s6 + $0x178] sm:$0xff]
  %v661 = vld [vmem:[%s6 + $0x180] sm:$0xff]
  %v662 = vld [vmem:[%s6 + $0x188] sm:$0xff]
  %v663 = vld [vmem:[%s6 + $0x190] sm:$0xff]
  %v664 = vld [vmem:[%s6 + $0x198] sm:$0xff]
  %v665 = vld [vmem:[%s6 + $0x1a0] sm:$0xf]
  %v666 = vld [vmem:[%s7] sm:$0xff]
  %v667 = vld [vmem:[%s7 + $0x8] sm:$0xff]
  %v668 = vld [vmem:[%s7 + $0x10] sm:$0xff]
  %v669 = vld [vmem:[%s7 + $0x18] sm:$0xff]
  %v670 = vld [vmem:[%s7 + $0x20] sm:$0xff]
  %v671 = vld [vmem:[%s7 + $0x28] sm:$0xff]
  %v672 = vld [vmem:[%s7 + $0x30] sm:$0xff]
  %v673 = vld [vmem:[%s7 + $0x38] sm:$0xff]
  %v674 = vld [vmem:[%s7 + $0x40] sm:$0xff]
  %v675 = vld [vmem:[%s7 + $0x48] sm:$0xff]
  %v676 = vld [vmem:[%s7 + $0x50] sm:$0xff]
  %v677 = vld [vmem:[%s7 + $0x58] sm:$0xff]
  %v678 = vld [vmem:[%s7 + $0x60] sm:$0xff]
  %v679 = vld [vmem:[%s7 + $0x68] sm:$0xff]
  %v680 = vld [vmem:[%s7 + $0x70] sm:$0xff]
  %v681 = vld [vmem:[%s7 + $0x78] sm:$0xff]
  %v682 = vld [vmem:[%s7 + $0x80] sm:$0xff]
  %v683 = vld [vmem:[%s7 + $0x88] sm:$0xff]
  %v684 = vld [vmem:[%s7 + $0x90] sm:$0xff]
  %v685 = vld [vmem:[%s7 + $0x98] sm:$0xff]
  %v686 = vld [vmem:[%s7 + $0xa0] sm:$0xff]
  %v687 = vld [vmem:[%s7 + $0xa8] sm:$0xff]
  %v688 = vld [vmem:[%s7 + $0xb0] sm:$0xff]
  %v689 = vld [vmem:[%s7 + $0xb8] sm:$0xff]
  %v690 = vld [vmem:[%s7 + $0xc0] sm:$0xff]
  %v691 = vld [vmem:[%s7 + $0xc8] sm:$0xff]
  %v692 = vld [vmem:[%s7 + $0xd0] sm:$0xff]
  %v693 = vld [vmem:[%s7 + $0xd8] sm:$0xff]
  %v694 = vld [vmem:[%s7 + $0xe0] sm:$0xff]
  %v695 = vld [vmem:[%s7 + $0xe8] sm:$0xff]
  %v696 = vld [vmem:[%s7 + $0xf0] sm:$0xff]
  %v697 = vld [vmem:[%s7 + $0xf8] sm:$0xff]
  %v698 = vld [vmem:[%s7 + $0x100] sm:$0xff]
  %v699 = vld [vmem:[%s7 + $0x108] sm:$0xff]
  %v700 = vld [vmem:[%s7 + $0x110] sm:$0xff]
  %v701 = vld [vmem:[%s7 + $0x118] sm:$0xff]
  %v702 = vld [vmem:[%s7 + $0x120] sm:$0xff]
  %v703 = vld [vmem:[%s7 + $0x128] sm:$0xff]
  %v704 = vld [vmem:[%s7 + $0x130] sm:$0xff]
  %v705 = vld [vmem:[%s7 + $0x138] sm:$0xff]
  %v706 = vld [vmem:[%s7 + $0x140] sm:$0xff]
  %v707 = vld [vmem:[%s7 + $0x148] sm:$0xff]
  %v708 = vld [vmem:[%s7 + $0x150] sm:$0xff]
  %v709 = vld [vmem:[%s7 + $0x158] sm:$0xff]
  %v710 = vld [vmem:[%s7 + $0x160] sm:$0xff]
  %v711 = vld [vmem:[%s7 + $0x168] sm:$0xff]
  %v712 = vld [vmem:[%s7 + $0x170] sm:$0xff]
  %v713 = vld [vmem:[%s7 + $0x178] sm:$0xff]
  %v714 = vld [vmem:[%s7 + $0x180] sm:$0xff]
  %v715 = vld [vmem:[%s7 + $0x188] sm:$0xff]
  %v716 = vld [vmem:[%s7 + $0x190] sm:$0xff]
  %v717 = vld [vmem:[%s7 + $0x198] sm:$0xff]
  %v718 = vld [vmem:[%s7 + $0x1a0] sm:$0xf]
  %v719 = vpack.c.bf16 %v614, %v613
  %v720 = vpack.c.bf16 %v616, %v615
  %v721 = vpack.c.bf16 %v618, %v617
  %v722 = vpack.c.bf16 %v620, %v619
  %v723 = vpack.c.bf16 %v622, %v621
  %v724 = vpack.c.bf16 %v624, %v623
  %v725 = vpack.c.bf16 %v626, %v625
  %v726 = vpack.c.bf16 %v627, %v627
  %v727 = vpack.c.bf16 %v667, %v666
  %v728 = vpack.c.bf16 %v669, %v668
  %v729 = vpack.c.bf16 %v671, %v670
  %v730 = vpack.c.bf16 %v673, %v672
  %v731 = vpack.c.bf16 %v675, %v674
  %v732 = vpack.c.bf16 %v677, %v676
  %v733 = vpack.c.bf16 %v679, %v678
  %v734 = vpack.c.bf16 %v680, %v680
  %736 = vset.pattern.permute.xlu0 0
  %737 = vperm.xlu0 %736, %v719
  %v738 = vpop.permute.xlu0 %737
  %740 = vset.pattern.permute.xlu0 0
  %741 = vperm.xlu0 %740, %v720
  %v742 = vpop.permute.xlu0 %741
  %744 = vset.pattern.permute.xlu0 0
  %745 = vperm.xlu0 %744, %v721
  %v746 = vpop.permute.xlu0 %745
  %748 = vset.pattern.permute.xlu0 0
  %749 = vperm.xlu0 %748, %v722
  %v750 = vpop.permute.xlu0 %749
  %752 = vset.pattern.permute.xlu0 0
  %753 = vperm.xlu0 %752, %v723
  %v754 = vpop.permute.xlu0 %753
  %756 = vset.pattern.permute.xlu0 0
  %757 = vperm.xlu0 %756, %v724
  %v758 = vpop.permute.xlu0 %757
  %760 = vset.pattern.permute.xlu0 0
  %761 = vperm.xlu0 %760, %v725
  %v762 = vpop.permute.xlu0 %761
  %764 = vset.pattern.permute.xlu0 0
  %765 = vperm.xlu0 %764, %v726
  %v766 = vpop.permute.xlu0 %765
  %v776 = vunpack.c.l.s4 839922192
  %v777 = vunpack.c.0.s8 %v776
  %v778 = vlaneseq
  %v779 = vshrl.u32 %v778, 7
  %v780 = vsub.s32 %v777, %v779
  %v781 = vrot.slane %v738, %v780
  %v783 = vunpack.c.l.s4 1985246804
  %v784 = vunpack.c.0.s8 %v783
  %v785 = vlaneseq
  %v786 = vshrl.u32 %v785, 7
  %v787 = vsub.s32 %v784, %v786
  %v788 = vrot.slane %v738, %v787
  %v790 = vunpack.c.l.s4 839922192
  %v791 = vunpack.c.0.s8 %v790
  %v792 = vlaneseq
  %v793 = vshrl.u32 %v792, 7
  %v794 = vsub.s32 %v791, %v793
  %v795 = vrot.slane %v742, %v794
  %v797 = vunpack.c.l.s4 1985246804
  %v798 = vunpack.c.0.s8 %v797
  %v799 = vlaneseq
  %v800 = vshrl.u32 %v799, 7
  %v801 = vsub.s32 %v798, %v800
  %v802 = vrot.slane %v742, %v801
  %v804 = vunpack.c.l.s4 839922192
  %v805 = vunpack.c.0.s8 %v804
  %v806 = vlaneseq
  %v807 = vshrl.u32 %v806, 7
  %v808 = vsub.s32 %v805, %v807
  %v809 = vrot.slane %v746, %v808
  %v811 = vunpack.c.l.s4 1985246804
  %v812 = vunpack.c.0.s8 %v811
  %v813 = vlaneseq
  %v814 = vshrl.u32 %v813, 7
  %v815 = vsub.s32 %v812, %v814
  %v816 = vrot.slane %v746, %v815
  %v818 = vunpack.c.l.s4 839922192
  %v819 = vunpack.c.0.s8 %v818
  %v820 = vlaneseq
  %v821 = vshrl.u32 %v820, 7
  %v822 = vsub.s32 %v819, %v821
  %v823 = vrot.slane %v750, %v822
  %v825 = vunpack.c.l.s4 1985246804
  %v826 = vunpack.c.0.s8 %v825
  %v827 = vlaneseq
  %v828 = vshrl.u32 %v827, 7
  %v829 = vsub.s32 %v826, %v828
  %v830 = vrot.slane %v750, %v829
  %v832 = vunpack.c.l.s4 839922192
  %v833 = vunpack.c.0.s8 %v832
  %v834 = vlaneseq
  %v835 = vshrl.u32 %v834, 7
  %v836 = vsub.s32 %v833, %v835
  %v837 = vrot.slane %v754, %v836
  %v839 = vunpack.c.l.s4 1985246804
  %v840 = vunpack.c.0.s8 %v839
  %v841 = vlaneseq
  %v842 = vshrl.u32 %v841, 7
  %v843 = vsub.s32 %v840, %v842
  %v844 = vrot.slane %v754, %v843
  %v846 = vunpack.c.l.s4 839922192
  %v847 = vunpack.c.0.s8 %v846
  %v848 = vlaneseq
  %v849 = vshrl.u32 %v848, 7
  %v850 = vsub.s32 %v847, %v849
  %v851 = vrot.slane %v758, %v850
  %v853 = vunpack.c.l.s4 1985246804
  %v854 = vunpack.c.0.s8 %v853
  %v855 = vlaneseq
  %v856 = vshrl.u32 %v855, 7
  %v857 = vsub.s32 %v854, %v856
  %v858 = vrot.slane %v758, %v857
  %v860 = vunpack.c.l.s4 839922192
  %v861 = vunpack.c.0.s8 %v860
  %v862 = vlaneseq
  %v863 = vshrl.u32 %v862, 7
  %v864 = vsub.s32 %v861, %v863
  %v865 = vrot.slane %v762, %v864
  %v867 = vunpack.c.l.s4 1985246804
  %v868 = vunpack.c.0.s8 %v867
  %v869 = vlaneseq
  %v870 = vshrl.u32 %v869, 7
  %v871 = vsub.s32 %v868, %v870
  %v872 = vrot.slane %v762, %v871
  %v874 = vunpack.c.l.s4 839922192
  %v875 = vunpack.c.0.s8 %v874
  %v876 = vlaneseq
  %v877 = vshrl.u32 %v876, 7
  %v878 = vsub.s32 %v875, %v877
  %v879 = vrot.slane %v766, %v878
  %v895 = vmul.bf16 %v49, %v781
  %v896 = vmul.bf16 %v50, %v781
  %v897 = vmul.bf16 %v51, %v788
  %v898 = vmul.bf16 %v52, %v788
  %v899 = vmul.bf16 %v53, %v795
  %v900 = vmul.bf16 %v54, %v795
  %v901 = vmul.bf16 %v55, %v802
  %v902 = vmul.bf16 %v56, %v802
  %v903 = vmul.bf16 %v57, %v809
  %v904 = vmul.bf16 %v58, %v809
  %v905 = vmul.bf16 %v59, %v816
  %v906 = vmul.bf16 %v60, %v816
  %v907 = vmul.bf16 %v61, %v823
  %v908 = vmul.bf16 %v62, %v823
  %v909 = vmul.bf16 %v63, %v830
  %v910 = vmul.bf16 %v64, %v830
  %v911 = vmul.bf16 %v65, %v837
  %v912 = vmul.bf16 %v66, %v837
  %v913 = vmul.bf16 %v67, %v844
  %v914 = vmul.bf16 %v68, %v844
  %v915 = vmul.bf16 %v69, %v851
  %v916 = vmul.bf16 %v70, %v851
  %v917 = vmul.bf16 %v71, %v858
  %v918 = vmul.bf16 %v72, %v858
  %v919 = vmul.bf16 %v73, %v865
  %v920 = vmul.bf16 %v74, %v865
  %v921 = vmul.bf16 %v75, %v872
  %v922 = vmul.bf16 %v76, %v872
  %v923 = vmul.bf16 %v77, %v879
  %v924 = vmul.bf16 %v78, %v879
  %926 = vset.pattern.permute.xlu0 0
  %927 = vperm.xlu0 %926, %v727
  %v928 = vpop.permute.xlu0 %927
  %930 = vset.pattern.permute.xlu0 0
  %931 = vperm.xlu0 %930, %v728
  %v932 = vpop.permute.xlu0 %931
  %934 = vset.pattern.permute.xlu0 0
  %935 = vperm.xlu0 %934, %v729
  %v936 = vpop.permute.xlu0 %935
  %938 = vset.pattern.permute.xlu0 0
  %939 = vperm.xlu0 %938, %v730
  %v940 = vpop.permute.xlu0 %939
  %942 = vset.pattern.permute.xlu0 0
  %943 = vperm.xlu0 %942, %v731
  %v944 = vpop.permute.xlu0 %943
  %946 = vset.pattern.permute.xlu0 0
  %947 = vperm.xlu0 %946, %v732
  %v948 = vpop.permute.xlu0 %947
  %950 = vset.pattern.permute.xlu0 0
  %951 = vperm.xlu0 %950, %v733
  %v952 = vpop.permute.xlu0 %951
  %954 = vset.pattern.permute.xlu0 0
  %955 = vperm.xlu0 %954, %v734
  %v956 = vpop.permute.xlu0 %955
  %v966 = vunpack.c.l.s4 839922192
  %v967 = vunpack.c.0.s8 %v966
  %v968 = vlaneseq
  %v969 = vshrl.u32 %v968, 7
  %v970 = vsub.s32 %v967, %v969
  %v971 = vrot.slane %v928, %v970
  %v973 = vunpack.c.l.s4 1985246804
  %v974 = vunpack.c.0.s8 %v973
  %v975 = vlaneseq
  %v976 = vshrl.u32 %v975, 7
  %v977 = vsub.s32 %v974, %v976
  %v978 = vrot.slane %v928, %v977
  %v980 = vunpack.c.l.s4 839922192
  %v981 = vunpack.c.0.s8 %v980
  %v982 = vlaneseq
  %v983 = vshrl.u32 %v982, 7
  %v984 = vsub.s32 %v981, %v983
  %v985 = vrot.slane %v932, %v984
  %v987 = vunpack.c.l.s4 1985246804
  %v988 = vunpack.c.0.s8 %v987
  %v989 = vlaneseq
  %v990 = vshrl.u32 %v989, 7
  %v991 = vsub.s32 %v988, %v990
  %v992 = vrot.slane %v932, %v991
  %v994 = vunpack.c.l.s4 839922192
  %v995 = vunpack.c.0.s8 %v994
  %v996 = vlaneseq
  %v997 = vshrl.u32 %v996, 7
  %v998 = vsub.s32 %v995, %v997
  %v999 = vrot.slane %v936, %v998
  %v1001 = vunpack.c.l.s4 1985246804
  %v1002 = vunpack.c.0.s8 %v1001
  %v1003 = vlaneseq
  %v1004 = vshrl.u32 %v1003, 7
  %v1005 = vsub.s32 %v1002, %v1004
  %v1006 = vrot.slane %v936, %v1005
  %v1008 = vunpack.c.l.s4 839922192
  %v1009 = vunpack.c.0.s8 %v1008
  %v1010 = vlaneseq
  %v1011 = vshrl.u32 %v1010, 7
  %v1012 = vsub.s32 %v1009, %v1011
  %v1013 = vrot.slane %v940, %v1012
  %v1015 = vunpack.c.l.s4 1985246804
  %v1016 = vunpack.c.0.s8 %v1015
  %v1017 = vlaneseq
  %v1018 = vshrl.u32 %v1017, 7
  %v1019 = vsub.s32 %v1016, %v1018
  %v1020 = vrot.slane %v940, %v1019
  %v1022 = vunpack.c.l.s4 839922192
  %v1023 = vunpack.c.0.s8 %v1022
  %v1024 = vlaneseq
  %v1025 = vshrl.u32 %v1024, 7
  %v1026 = vsub.s32 %v1023, %v1025
  %v1027 = vrot.slane %v944, %v1026
  %v1029 = vunpack.c.l.s4 1985246804
  %v1030 = vunpack.c.0.s8 %v1029
  %v1031 = vlaneseq
  %v1032 = vshrl.u32 %v1031, 7
  %v1033 = vsub.s32 %v1030, %v1032
  %v1034 = vrot.slane %v944, %v1033
  %v1036 = vunpack.c.l.s4 839922192
  %v1037 = vunpack.c.0.s8 %v1036
  %v1038 = vlaneseq
  %v1039 = vshrl.u32 %v1038, 7
  %v1040 = vsub.s32 %v1037, %v1039
  %v1041 = vrot.slane %v948, %v1040
  %v1043 = vunpack.c.l.s4 1985246804
  %v1044 = vunpack.c.0.s8 %v1043
  %v1045 = vlaneseq
  %v1046 = vshrl.u32 %v1045, 7
  %v1047 = vsub.s32 %v1044, %v1046
  %v1048 = vrot.slane %v948, %v1047
  %v1050 = vunpack.c.l.s4 839922192
  %v1051 = vunpack.c.0.s8 %v1050
  %v1052 = vlaneseq
  %v1053 = vshrl.u32 %v1052, 7
  %v1054 = vsub.s32 %v1051, %v1053
  %v1055 = vrot.slane %v952, %v1054
  %v1057 = vunpack.c.l.s4 1985246804
  %v1058 = vunpack.c.0.s8 %v1057
  %v1059 = vlaneseq
  %v1060 = vshrl.u32 %v1059, 7
  %v1061 = vsub.s32 %v1058, %v1060
  %v1062 = vrot.slane %v952, %v1061
  %v1064 = vunpack.c.l.s4 839922192
  %v1065 = vunpack.c.0.s8 %v1064
  %v1066 = vlaneseq
  %v1067 = vshrl.u32 %v1066, 7
  %v1068 = vsub.s32 %v1065, %v1067
  %v1069 = vrot.slane %v956, %v1068
  %v1085 = vadd.bf16 %v895, %v971
  %v1086 = vadd.bf16 %v896, %v971
  %v1087 = vadd.bf16 %v897, %v978
  %v1088 = vadd.bf16 %v898, %v978
  %v1089 = vadd.bf16 %v899, %v985
  %v1090 = vadd.bf16 %v900, %v985
  %v1091 = vadd.bf16 %v901, %v992
  %v1092 = vadd.bf16 %v902, %v992
  %v1093 = vadd.bf16 %v903, %v999
  %v1094 = vadd.bf16 %v904, %v999
  %v1095 = vadd.bf16 %v905, %v1006
  %v1096 = vadd.bf16 %v906, %v1006
  %v1097 = vadd.bf16 %v907, %v1013
  %v1098 = vadd.bf16 %v908, %v1013
  %v1099 = vadd.bf16 %v909, %v1020
  %v1100 = vadd.bf16 %v910, %v1020
  %v1101 = vadd.bf16 %v911, %v1027
  %v1102 = vadd.bf16 %v912, %v1027
  %v1103 = vadd.bf16 %v913, %v1034
  %v1104 = vadd.bf16 %v914, %v1034
  %v1105 = vadd.bf16 %v915, %v1041
  %v1106 = vadd.bf16 %v916, %v1041
  %v1107 = vadd.bf16 %v917, %v1048
  %v1108 = vadd.bf16 %v918, %v1048
  %v1109 = vadd.bf16 %v919, %v1055
  %v1110 = vadd.bf16 %v920, %v1055
  %v1111 = vadd.bf16 %v921, %v1062
  %v1112 = vadd.bf16 %v922, %v1062
  %v1113 = vadd.bf16 %v923, %v1069
  %v1114 = vadd.bf16 %v924, %v1069
  %v1115 = vmul.bf16 %v1085, 1009007652
  %v1116 = vmul.bf16 %v1086, 1009007652
  %v1117 = vmul.bf16 %v1087, 1009007652
  %v1118 = vmul.bf16 %v1088, 1009007652
  %v1119 = vmul.bf16 %v1089, 1009007652
  %v1120 = vmul.bf16 %v1090, 1009007652
  %v1121 = vmul.bf16 %v1091, 1009007652
  %v1122 = vmul.bf16 %v1092, 1009007652
  %v1123 = vmul.bf16 %v1093, 1009007652
  %v1124 = vmul.bf16 %v1094, 1009007652
  %v1125 = vmul.bf16 %v1095, 1009007652
  %v1126 = vmul.bf16 %v1096, 1009007652
  %v1127 = vmul.bf16 %v1097, 1009007652
  %v1128 = vmul.bf16 %v1098, 1009007652
  %v1129 = vmul.bf16 %v1099, 1009007652
  %v1130 = vmul.bf16 %v1100, 1009007652
  %v1131 = vmul.bf16 %v1101, 1009007652
  %v1132 = vmul.bf16 %v1102, 1009007652
  %v1133 = vmul.bf16 %v1103, 1009007652
  %v1134 = vmul.bf16 %v1104, 1009007652
  %v1135 = vmul.bf16 %v1105, 1009007652
  %v1136 = vmul.bf16 %v1106, 1009007652
  %v1137 = vmul.bf16 %v1107, 1009007652
  %v1138 = vmul.bf16 %v1108, 1009007652
  %v1139 = vmul.bf16 %v1109, 1009007652
  %v1140 = vmul.bf16 %v1110, 1009007652
  %v1141 = vmul.bf16 %v1111, 1009007652
  %v1142 = vmul.bf16 %v1112, 1009007652
  %v1143 = vmul.bf16 %v1113, 1009007652
  %v1144 = vmul.bf16 %v1114, 1009007652
  %v1145 = vmax.bf16 %v1085, %v1115
  %v1146 = vmax.bf16 %v1086, %v1116
  %v1147 = vmax.bf16 %v1087, %v1117
  %v1148 = vmax.bf16 %v1088, %v1118
  %v1149 = vmax.bf16 %v1089, %v1119
  %v1150 = vmax.bf16 %v1090, %v1120
  %v1151 = vmax.bf16 %v1091, %v1121
  %v1152 = vmax.bf16 %v1092, %v1122
  %v1153 = vmax.bf16 %v1093, %v1123
  %v1154 = vmax.bf16 %v1094, %v1124
  %v1155 = vmax.bf16 %v1095, %v1125
  %v1156 = vmax.bf16 %v1096, %v1126
  %v1157 = vmax.bf16 %v1097, %v1127
  %v1158 = vmax.bf16 %v1098, %v1128
  %v1159 = vmax.bf16 %v1099, %v1129
  %v1160 = vmax.bf16 %v1100, %v1130
  %v1161 = vmax.bf16 %v1101, %v1131
  %v1162 = vmax.bf16 %v1102, %v1132
  %v1163 = vmax.bf16 %v1103, %v1133
  %v1164 = vmax.bf16 %v1104, %v1134
  %v1165 = vmax.bf16 %v1105, %v1135
  %v1166 = vmax.bf16 %v1106, %v1136
  %v1167 = vmax.bf16 %v1107, %v1137
  %v1168 = vmax.bf16 %v1108, %v1138
  %v1169 = vmax.bf16 %v1109, %v1139
  %v1170 = vmax.bf16 %v1110, %v1140
  %v1171 = vmax.bf16 %v1111, %v1141
  %v1172 = vmax.bf16 %v1112, %v1142
  %v1173 = vmax.bf16 %v1113, %v1143
  %v1174 = vmax.bf16 %v1114, %v1144
  %v1175 = vld [vmem:[%s8] sm:$0xf]
  %v1176 = vld [vmem:[%s8 + $0x4] sm:$0xf]
  %v1177 = vpack.c.bf16 %v629, %v628
  %v1178 = vpack.c.bf16 %v631, %v630
  %v1179 = vpack.c.bf16 %v633, %v632
  %v1180 = vpack.c.bf16 %v635, %v634
  %v1181 = vpack.c.bf16 %v637, %v636
  %v1182 = vpack.c.bf16 %v639, %v638
  %v1183 = vpack.c.bf16 %v641, %v640
  %v1184 = vpack.c.bf16 %v642, %v642
  %v1185 = vpack.c.bf16 %v682, %v681
  %v1186 = vpack.c.bf16 %v684, %v683
  %v1187 = vpack.c.bf16 %v686, %v685
  %v1188 = vpack.c.bf16 %v688, %v687
  %v1189 = vpack.c.bf16 %v690, %v689
  %v1190 = vpack.c.bf16 %v692, %v691
  %v1191 = vpack.c.bf16 %v694, %v693
  %v1192 = vpack.c.bf16 %v695, %v695
  %1194 = vset.pattern.permute.xlu0 0
  %1195 = vperm.xlu0 %1194, %v1177
  %v1196 = vpop.permute.xlu0 %1195
  %1198 = vset.pattern.permute.xlu0 0
  %1199 = vperm.xlu0 %1198, %v1178
  %v1200 = vpop.permute.xlu0 %1199
  %1202 = vset.pattern.permute.xlu0 0
  %1203 = vperm.xlu0 %1202, %v1179
  %v1204 = vpop.permute.xlu0 %1203
  %1206 = vset.pattern.permute.xlu0 0
  %1207 = vperm.xlu0 %1206, %v1180
  %v1208 = vpop.permute.xlu0 %1207
  %1210 = vset.pattern.permute.xlu0 0
  %1211 = vperm.xlu0 %1210, %v1181
  %v1212 = vpop.permute.xlu0 %1211
  %1214 = vset.pattern.permute.xlu0 0
  %1215 = vperm.xlu0 %1214, %v1182
  %v1216 = vpop.permute.xlu0 %1215
  %1218 = vset.pattern.permute.xlu0 0
  %1219 = vperm.xlu0 %1218, %v1183
  %v1220 = vpop.permute.xlu0 %1219
  %1222 = vset.pattern.permute.xlu0 0
  %1223 = vperm.xlu0 %1222, %v1184
  %v1224 = vpop.permute.xlu0 %1223
  %v1234 = vunpack.c.l.s4 839922192
  %v1235 = vunpack.c.0.s8 %v1234
  %v1236 = vlaneseq
  %v1237 = vshrl.u32 %v1236, 7
  %v1238 = vsub.s32 %v1235, %v1237
  %v1239 = vrot.slane %v1196, %v1238
  %v1241 = vunpack.c.l.s4 1985246804
  %v1242 = vunpack.c.0.s8 %v1241
  %v1243 = vlaneseq
  %v1244 = vshrl.u32 %v1243, 7
  %v1245 = vsub.s32 %v1242, %v1244
  %v1246 = vrot.slane %v1196, %v1245
  %v1248 = vunpack.c.l.s4 839922192
  %v1249 = vunpack.c.0.s8 %v1248
  %v1250 = vlaneseq
  %v1251 = vshrl.u32 %v1250, 7
  %v1252 = vsub.s32 %v1249, %v1251
  %v1253 = vrot.slane %v1200, %v1252
  %v1255 = vunpack.c.l.s4 1985246804
  %v1256 = vunpack.c.0.s8 %v1255
  %v1257 = vlaneseq
  %v1258 = vshrl.u32 %v1257, 7
  %v1259 = vsub.s32 %v1256, %v1258
  %v1260 = vrot.slane %v1200, %v1259
  %v1262 = vunpack.c.l.s4 839922192
  %v1263 = vunpack.c.0.s8 %v1262
  %v1264 = vlaneseq
  %v1265 = vshrl.u32 %v1264, 7
  %v1266 = vsub.s32 %v1263, %v1265
  %v1267 = vrot.slane %v1204, %v1266
  %v1269 = vunpack.c.l.s4 1985246804
  %v1270 = vunpack.c.0.s8 %v1269
  %v1271 = vlaneseq
  %v1272 = vshrl.u32 %v1271, 7
  %v1273 = vsub.s32 %v1270, %v1272
  %v1274 = vrot.slane %v1204, %v1273
  %v1276 = vunpack.c.l.s4 839922192
  %v1277 = vunpack.c.0.s8 %v1276
  %v1278 = vlaneseq
  %v1279 = vshrl.u32 %v1278, 7
  %v1280 = vsub.s32 %v1277, %v1279
  %v1281 = vrot.slane %v1208, %v1280
  %v1283 = vunpack.c.l.s4 1985246804
  %v1284 = vunpack.c.0.s8 %v1283
  %v1285 = vlaneseq
  %v1286 = vshrl.u32 %v1285, 7
  %v1287 = vsub.s32 %v1284, %v1286
  %v1288 = vrot.slane %v1208, %v1287
  %v1290 = vunpack.c.l.s4 839922192
  %v1291 = vunpack.c.0.s8 %v1290
  %v1292 = vlaneseq
  %v1293 = vshrl.u32 %v1292, 7
  %v1294 = vsub.s32 %v1291, %v1293
  %v1295 = vrot.slane %v1212, %v1294
  %v1297 = vunpack.c.l.s4 1985246804
  %v1298 = vunpack.c.0.s8 %v1297
  %v1299 = vlaneseq
  %v1300 = vshrl.u32 %v1299, 7
  %v1301 = vsub.s32 %v1298, %v1300
  %v1302 = vrot.slane %v1212, %v1301
  %v1304 = vunpack.c.l.s4 839922192
  %v1305 = vunpack.c.0.s8 %v1304
  %v1306 = vlaneseq
  %v1307 = vshrl.u32 %v1306, 7
  %v1308 = vsub.s32 %v1305, %v1307
  %v1309 = vrot.slane %v1216, %v1308
  %v1311 = vunpack.c.l.s4 1985246804
  %v1312 = vunpack.c.0.s8 %v1311
  %v1313 = vlaneseq
  %v1314 = vshrl.u32 %v1313, 7
  %v1315 = vsub.s32 %v1312, %v1314
  %v1316 = vrot.slane %v1216, %v1315
  %v1318 = vunpack.c.l.s4 839922192
  %v1319 = vunpack.c.0.s8 %v1318
  %v1320 = vlaneseq
  %v1321 = vshrl.u32 %v1320, 7
  %v1322 = vsub.s32 %v1319, %v1321
  %v1323 = vrot.slane %v1220, %v1322
  %v1325 = vunpack.c.l.s4 1985246804
  %v1326 = vunpack.c.0.s8 %v1325
  %v1327 = vlaneseq
  %v1328 = vshrl.u32 %v1327, 7
  %v1329 = vsub.s32 %v1326, %v1328
  %v1330 = vrot.slane %v1220, %v1329
  %v1332 = vunpack.c.l.s4 839922192
  %v1333 = vunpack.c.0.s8 %v1332
  %v1334 = vlaneseq
  %v1335 = vshrl.u32 %v1334, 7
  %v1336 = vsub.s32 %v1333, %v1335
  %v1337 = vrot.slane %v1224, %v1336
  %v1353 = vmul.bf16 %v535, %v1239
  %v1354 = vmul.bf16 %v536, %v1239
  %v1355 = vmul.bf16 %v537, %v1246
  %v1356 = vmul.bf16 %v538, %v1246
  %v1357 = vmul.bf16 %v539, %v1253
  %v1358 = vmul.bf16 %v540, %v1253
  %v1359 = vmul.bf16 %v541, %v1260
  %v1360 = vmul.bf16 %v542, %v1260
  %v1361 = vmul.bf16 %v543, %v1267
  %v1362 = vmul.bf16 %v544, %v1267
  %v1363 = vmul.bf16 %v545, %v1274
  %v1364 = vmul.bf16 %v546, %v1274
  %v1365 = vmul.bf16 %v547, %v1281
  %v1366 = vmul.bf16 %v548, %v1281
  %v1367 = vmul.bf16 %v549, %v1288
  %v1368 = vmul.bf16 %v550, %v1288
  %v1369 = vmul.bf16 %v551, %v1295
  %v1370 = vmul.bf16 %v552, %v1295
  %v1371 = vmul.bf16 %v553, %v1302
  %v1372 = vmul.bf16 %v554, %v1302
  %v1373 = vmul.bf16 %v555, %v1309
  %v1374 = vmul.bf16 %v556, %v1309
  %v1375 = vmul.bf16 %v557, %v1316
  %v1376 = vmul.bf16 %v558, %v1316
  %v1377 = vmul.bf16 %v559, %v1323
  %v1378 = vmul.bf16 %v560, %v1323
  %v1379 = vmul.bf16 %v561, %v1330
  %v1380 = vmul.bf16 %v562, %v1330
  %v1381 = vmul.bf16 %v563, %v1337
  %v1382 = vmul.bf16 %v564, %v1337
  %1384 = vset.pattern.permute.xlu0 0
  %1385 = vperm.xlu0 %1384, %v1185
  %v1386 = vpop.permute.xlu0 %1385
  %1388 = vset.pattern.permute.xlu0 0
  %1389 = vperm.xlu0 %1388, %v1186
  %v1390 = vpop.permute.xlu0 %1389
  %1392 = vset.pattern.permute.xlu0 0
  %1393 = vperm.xlu0 %1392, %v1187
  %v1394 = vpop.permute.xlu0 %1393
  %1396 = vset.pattern.permute.xlu0 0
  %1397 = vperm.xlu0 %1396, %v1188
  %v1398 = vpop.permute.xlu0 %1397
  %1400 = vset.pattern.permute.xlu0 0
  %1401 = vperm.xlu0 %1400, %v1189
  %v1402 = vpop.permute.xlu0 %1401
  %1404 = vset.pattern.permute.xlu0 0
  %1405 = vperm.xlu0 %1404, %v1190
  %v1406 = vpop.permute.xlu0 %1405
  %1408 = vset.pattern.permute.xlu0 0
  %1409 = vperm.xlu0 %1408, %v1191
  %v1410 = vpop.permute.xlu0 %1409
  %1412 = vset.pattern.permute.xlu0 0
  %1413 = vperm.xlu0 %1412, %v1192
  %v1414 = vpop.permute.xlu0 %1413
  %v1424 = vunpack.c.l.s4 839922192
  %v1425 = vunpack.c.0.s8 %v1424
  %v1426 = vlaneseq
  %v1427 = vshrl.u32 %v1426, 7
  %v1428 = vsub.s32 %v1425, %v1427
  %v1429 = vrot.slane %v1386, %v1428
  %v1431 = vunpack.c.l.s4 1985246804
  %v1432 = vunpack.c.0.s8 %v1431
  %v1433 = vlaneseq
  %v1434 = vshrl.u32 %v1433, 7
  %v1435 = vsub.s32 %v1432, %v1434
  %v1436 = vrot.slane %v1386, %v1435
  %v1438 = vunpack.c.l.s4 839922192
  %v1439 = vunpack.c.0.s8 %v1438
  %v1440 = vlaneseq
  %v1441 = vshrl.u32 %v1440, 7
  %v1442 = vsub.s32 %v1439, %v1441
  %v1443 = vrot.slane %v1390, %v1442
  %v1445 = vunpack.c.l.s4 1985246804
  %v1446 = vunpack.c.0.s8 %v1445
  %v1447 = vlaneseq
  %v1448 = vshrl.u32 %v1447, 7
  %v1449 = vsub.s32 %v1446, %v1448
  %v1450 = vrot.slane %v1390, %v1449
  %v1452 = vunpack.c.l.s4 839922192
  %v1453 = vunpack.c.0.s8 %v1452
  %v1454 = vlaneseq
  %v1455 = vshrl.u32 %v1454, 7
  %v1456 = vsub.s32 %v1453, %v1455
  %v1457 = vrot.slane %v1394, %v1456
  %v1459 = vunpack.c.l.s4 1985246804
  %v1460 = vunpack.c.0.s8 %v1459
  %v1461 = vlaneseq
  %v1462 = vshrl.u32 %v1461, 7
  %v1463 = vsub.s32 %v1460, %v1462
  %v1464 = vrot.slane %v1394, %v1463
  %v1466 = vunpack.c.l.s4 839922192
  %v1467 = vunpack.c.0.s8 %v1466
  %v1468 = vlaneseq
  %v1469 = vshrl.u32 %v1468, 7
  %v1470 = vsub.s32 %v1467, %v1469
  %v1471 = vrot.slane %v1398, %v1470
  %v1473 = vunpack.c.l.s4 1985246804
  %v1474 = vunpack.c.0.s8 %v1473
  %v1475 = vlaneseq
  %v1476 = vshrl.u32 %v1475, 7
  %v1477 = vsub.s32 %v1474, %v1476
  %v1478 = vrot.slane %v1398, %v1477
  %v1480 = vunpack.c.l.s4 839922192
  %v1481 = vunpack.c.0.s8 %v1480
  %v1482 = vlaneseq
  %v1483 = vshrl.u32 %v1482, 7
  %v1484 = vsub.s32 %v1481, %v1483
  %v1485 = vrot.slane %v1402, %v1484
  %v1487 = vunpack.c.l.s4 1985246804
  %v1488 = vunpack.c.0.s8 %v1487
  %v1489 = vlaneseq
  %v1490 = vshrl.u32 %v1489, 7
  %v1491 = vsub.s32 %v1488, %v1490
  %v1492 = vrot.slane %v1402, %v1491
  %v1494 = vunpack.c.l.s4 839922192
  %v1495 = vunpack.c.0.s8 %v1494
  %v1496 = vlaneseq
  %v1497 = vshrl.u32 %v1496, 7
  %v1498 = vsub.s32 %v1495, %v1497
  %v1499 = vrot.slane %v1406, %v1498
  %v1501 = vunpack.c.l.s4 1985246804
  %v1502 = vunpack.c.0.s8 %v1501
  %v1503 = vlaneseq
  %v1504 = vshrl.u32 %v1503, 7
  %v1505 = vsub.s32 %v1502, %v1504
  %v1506 = vrot.slane %v1406, %v1505
  %v1508 = vunpack.c.l.s4 839922192
  %v1509 = vunpack.c.0.s8 %v1508
  %v1510 = vlaneseq
  %v1511 = vshrl.u32 %v1510, 7
  %v1512 = vsub.s32 %v1509, %v1511
  %v1513 = vrot.slane %v1410, %v1512
  %v1515 = vunpack.c.l.s4 1985246804
  %v1516 = vunpack.c.0.s8 %v1515
  %v1517 = vlaneseq
  %v1518 = vshrl.u32 %v1517, 7
  %v1519 = vsub.s32 %v1516, %v1518
  %v1520 = vrot.slane %v1410, %v1519
  %v1522 = vunpack.c.l.s4 839922192
  %v1523 = vunpack.c.0.s8 %v1522
  %v1524 = vlaneseq
  %v1525 = vshrl.u32 %v1524, 7
  %v1526 = vsub.s32 %v1523, %v1525
  %v1527 = vrot.slane %v1414, %v1526
  %v1543 = vadd.bf16 %v1353, %v1429
  %v1544 = vadd.bf16 %v1354, %v1429
  %v1545 = vadd.bf16 %v1355, %v1436
  %v1546 = vadd.bf16 %v1356, %v1436
  %v1547 = vadd.bf16 %v1357, %v1443
  %v1548 = vadd.bf16 %v1358, %v1443
  %v1549 = vadd.bf16 %v1359, %v1450
  %v1550 = vadd.bf16 %v1360, %v1450
  %v1551 = vadd.bf16 %v1361, %v1457
  %v1552 = vadd.bf16 %v1362, %v1457
  %v1553 = vadd.bf16 %v1363, %v1464
  %v1554 = vadd.bf16 %v1364, %v1464
  %v1555 = vadd.bf16 %v1365, %v1471
  %v1556 = vadd.bf16 %v1366, %v1471
  %v1557 = vadd.bf16 %v1367, %v1478
  %v1558 = vadd.bf16 %v1368, %v1478
  %v1559 = vadd.bf16 %v1369, %v1485
  %v1560 = vadd.bf16 %v1370, %v1485
  %v1561 = vadd.bf16 %v1371, %v1492
  %v1562 = vadd.bf16 %v1372, %v1492
  %v1563 = vadd.bf16 %v1373, %v1499
  %v1564 = vadd.bf16 %v1374, %v1499
  %v1565 = vadd.bf16 %v1375, %v1506
  %v1566 = vadd.bf16 %v1376, %v1506
  %v1567 = vadd.bf16 %v1377, %v1513
  %v1568 = vadd.bf16 %v1378, %v1513
  %v1569 = vadd.bf16 %v1379, %v1520
  %v1570 = vadd.bf16 %v1380, %v1520
  %v1571 = vadd.bf16 %v1381, %v1527
  %v1572 = vadd.bf16 %v1382, %v1527
  %v1573 = vmul.bf16 %v1543, 1009007652
  %v1574 = vmul.bf16 %v1544, 1009007652
  %v1575 = vmul.bf16 %v1545, 1009007652
  %v1576 = vmul.bf16 %v1546, 1009007652
  %v1577 = vmul.bf16 %v1547, 1009007652
  %v1578 = vmul.bf16 %v1548, 1009007652
  %v1579 = vmul.bf16 %v1549, 1009007652
  %v1580 = vmul.bf16 %v1550, 1009007652
  %v1581 = vmul.bf16 %v1551, 1009007652
  %v1582 = vmul.bf16 %v1552, 1009007652
  %v1583 = vmul.bf16 %v1553, 1009007652
  %v1584 = vmul.bf16 %v1554, 1009007652
  %v1585 = vmul.bf16 %v1555, 1009007652
  %v1586 = vmul.bf16 %v1556, 1009007652
  %v1587 = vmul.bf16 %v1557, 1009007652
  %v1588 = vmul.bf16 %v1558, 1009007652
  %v1589 = vmul.bf16 %v1559, 1009007652
  %v1590 = vmul.bf16 %v1560, 1009007652
  %v1591 = vmul.bf16 %v1561, 1009007652
  %v1592 = vmul.bf16 %v1562, 1009007652
  %v1593 = vmul.bf16 %v1563, 1009007652
  %v1594 = vmul.bf16 %v1564, 1009007652
  %v1595 = vmul.bf16 %v1565, 1009007652
  %v1596 = vmul.bf16 %v1566, 1009007652
  %v1597 = vmul.bf16 %v1567, 1009007652
  %v1598 = vmul.bf16 %v1568, 1009007652
  %v1599 = vmul.bf16 %v1569, 1009007652
  %v1600 = vmul.bf16 %v1570, 1009007652
  %v1601 = vmul.bf16 %v1571, 1009007652
  %v1602 = vmul.bf16 %v1572, 1009007652
  %v1603 = vmax.bf16 %v1543, %v1573
  %v1604 = vmax.bf16 %v1544, %v1574
  %v1605 = vmax.bf16 %v1545, %v1575
  %v1606 = vmax.bf16 %v1546, %v1576
  %v1607 = vmax.bf16 %v1547, %v1577
  %v1608 = vmax.bf16 %v1548, %v1578
  %v1609 = vmax.bf16 %v1549, %v1579
  %v1610 = vmax.bf16 %v1550, %v1580
  %v1611 = vmax.bf16 %v1551, %v1581
  %v1612 = vmax.bf16 %v1552, %v1582
  %v1613 = vmax.bf16 %v1553, %v1583
  %v1614 = vmax.bf16 %v1554, %v1584
  %v1615 = vmax.bf16 %v1555, %v1585
  %v1616 = vmax.bf16 %v1556, %v1586
  %v1617 = vmax.bf16 %v1557, %v1587
  %v1618 = vmax.bf16 %v1558, %v1588
  %v1619 = vmax.bf16 %v1559, %v1589
  %v1620 = vmax.bf16 %v1560, %v1590
  %v1621 = vmax.bf16 %v1561, %v1591
  %v1622 = vmax.bf16 %v1562, %v1592
  %v1623 = vmax.bf16 %v1563, %v1593
  %v1624 = vmax.bf16 %v1564, %v1594
  %v1625 = vmax.bf16 %v1565, %v1595
  %v1626 = vmax.bf16 %v1566, %v1596
  %v1627 = vmax.bf16 %v1567, %v1597
  %v1628 = vmax.bf16 %v1568, %v1598
  %v1629 = vmax.bf16 %v1569, %v1599
  %v1630 = vmax.bf16 %v1570, %v1600
  %v1631 = vmax.bf16 %v1571, %v1601
  %v1632 = vmax.bf16 %v1572, %v1602
  %v1633 = vld [vmem:[%s9] sm:$0xf]
  %v1634 = vld [vmem:[%s9 + $0x4] sm:$0xf]
  %v1637 = vunpack.c.l.b16 %v1633
  %v1638 = vunpack.c.l.b16 %v1634
  %v1639 = vpack.c.b16 %v1638, %v1637
  %v1670 = vunpack.c.l.b16 %v1603
  %v1671 = vunpack.c.h.b16 %v1603
  %v1672 = vunpack.c.l.b16 %v1604
  %v1673 = vunpack.c.h.b16 %v1604
  %v1674 = vunpack.c.l.b16 %v1605
  %v1675 = vunpack.c.h.b16 %v1605
  %v1676 = vunpack.c.l.b16 %v1606
  %v1677 = vunpack.c.h.b16 %v1606
  %v1678 = vunpack.c.l.b16 %v1607
  %v1679 = vunpack.c.h.b16 %v1607
  %v1680 = vunpack.c.l.b16 %v1608
  %v1681 = vunpack.c.h.b16 %v1608
  %v1682 = vunpack.c.l.b16 %v1609
  %v1683 = vunpack.c.h.b16 %v1609
  %v1684 = vunpack.c.l.b16 %v1610
  %v1685 = vunpack.c.h.b16 %v1610
  %v1686 = vunpack.c.l.b16 %v1611
  %v1687 = vunpack.c.h.b16 %v1611
  %v1688 = vunpack.c.l.b16 %v1612
  %v1689 = vunpack.c.h.b16 %v1612
  %v1690 = vunpack.c.l.b16 %v1613
  %v1691 = vunpack.c.h.b16 %v1613
  %v1692 = vunpack.c.l.b16 %v1614
  %v1693 = vunpack.c.h.b16 %v1614
  %v1694 = vunpack.c.l.b16 %v1615
  %v1695 = vunpack.c.h.b16 %v1615
  %v1696 = vunpack.c.l.b16 %v1616
  %v1697 = vunpack.c.h.b16 %v1616
  %v1698 = vunpack.c.l.b16 %v1617
  %v1699 = vunpack.c.h.b16 %v1617
  %v1700 = vunpack.c.l.b16 %v1618
  %v1701 = vunpack.c.h.b16 %v1618
  %v1702 = vunpack.c.l.b16 %v1619
  %v1703 = vunpack.c.h.b16 %v1619
  %v1704 = vunpack.c.l.b16 %v1620
  %v1705 = vunpack.c.h.b16 %v1620
  %v1706 = vunpack.c.l.b16 %v1621
  %v1707 = vunpack.c.h.b16 %v1621
  %v1708 = vunpack.c.l.b16 %v1622
  %v1709 = vunpack.c.h.b16 %v1622
  %v1710 = vunpack.c.l.b16 %v1623
  %v1711 = vunpack.c.h.b16 %v1623
  %v1712 = vunpack.c.l.b16 %v1624
  %v1713 = vunpack.c.h.b16 %v1624
  %v1714 = vunpack.c.l.b16 %v1625
  %v1715 = vunpack.c.h.b16 %v1625
  %v1716 = vunpack.c.l.b16 %v1626
  %v1717 = vunpack.c.h.b16 %v1626
  %v1718 = vunpack.c.l.b16 %v1627
  %v1719 = vunpack.c.h.b16 %v1627
  %v1720 = vunpack.c.l.b16 %v1628
  %v1721 = vunpack.c.h.b16 %v1628
  %v1722 = vunpack.c.l.b16 %v1629
  %v1723 = vunpack.c.h.b16 %v1629
  %v1724 = vunpack.c.l.b16 %v1630
  %v1725 = vunpack.c.h.b16 %v1630
  %v1726 = vunpack.c.l.b16 %v1631
  %v1727 = vunpack.c.h.b16 %v1631
  %v1728 = vunpack.c.l.b16 %v1632
  %v1729 = vunpack.c.h.b16 %v1632
  %v1730 = vpack.c.b16 %v1674, %v1670
  %v1731 = vpack.c.b16 %v1675, %v1671
  %v1732 = vpack.c.b16 %v1676, %v1672
  %v1733 = vpack.c.b16 %v1677, %v1673
  %v1734 = vpack.c.b16 %v1682, %v1678
  %v1735 = vpack.c.b16 %v1683, %v1679
  %v1736 = vpack.c.b16 %v1684, %v1680
  %v1737 = vpack.c.b16 %v1685, %v1681
  %v1738 = vpack.c.b16 %v1690, %v1686
  %v1739 = vpack.c.b16 %v1691, %v1687
  %v1740 = vpack.c.b16 %v1692, %v1688
  %v1741 = vpack.c.b16 %v1693, %v1689
  %v1742 = vpack.c.b16 %v1698, %v1694
  %v1743 = vpack.c.b16 %v1699, %v1695
  %v1744 = vpack.c.b16 %v1700, %v1696
  %v1745 = vpack.c.b16 %v1701, %v1697
  %v1746 = vpack.c.b16 %v1706, %v1702
  %v1747 = vpack.c.b16 %v1707, %v1703
  %v1748 = vpack.c.b16 %v1708, %v1704
  %v1749 = vpack.c.b16 %v1709, %v1705
  %v1750 = vpack.c.b16 %v1714, %v1710
  %v1751 = vpack.c.b16 %v1715, %v1711
  %v1752 = vpack.c.b16 %v1716, %v1712
  %v1753 = vpack.c.b16 %v1717, %v1713
  %v1754 = vpack.c.b16 %v1722, %v1718
  %v1755 = vpack.c.b16 %v1723, %v1719
  %v1756 = vpack.c.b16 %v1724, %v1720
  %v1757 = vpack.c.b16 %v1725, %v1721
  %v1758 = vpack.c.b16 %v1726, %v1726
  %v1759 = vpack.c.b16 %v1727, %v1727
  %v1760 = vpack.c.b16 %v1728, %v1728
  %v1761 = vpack.c.b16 %v1729, %v1729
  %vm1790 = vcmask 982016
  %v1792 = vsel %vm1790, %v1639, 0
  %vm1794 = vcmask 1043456
  %v1796 = vsel %vm1794, %v1758, 0
  %v1799 = vsel %vm1794, %v1759, 0
  %v1802 = vsel %vm1794, %v1760, 0
  %v1805 = vsel %vm1794, %v1761, 0
  %1807 = vmatprep.subr.bf16.mxu0 %v1799
  %1808 = vmatpush1.bf16.msra.mxu0 %v1796
  %1809 = vmatprep.subr.bf16.mxu0 %v1755
  %1810 = vmatpush1.bf16.msra.mxu0 %v1754
  %1811 = vmatprep.subr.bf16.mxu0 %v1751
  %1812 = vmatpush1.bf16.msra.mxu0 %v1750
  %1813 = vmatprep.subr.bf16.mxu0 %v1747
  %1814 = vmatpush1.bf16.msra.mxu0 %v1746
  %1815 = vmatprep.subr.bf16.mxu0 %v1743
  %1816 = vmatpush1.bf16.msra.mxu0 %v1742
  %1817 = vmatprep.subr.bf16.mxu0 %v1739
  %1818 = vmatpush1.bf16.msra.mxu0 %v1738
  %1819 = vmatprep.subr.bf16.mxu0 %v1735
  %1820 = vmatpush1.bf16.msra.mxu0 %v1734
  %1821 = vmatprep.subr.bf16.mxu0 %v1731
  %1822 = vmatpush1.bf16.msra.mxu0 %v1730
  %1823 = vmatprep.subr.bf16.mxu0 0
  %1824 = vmatpush2.bf16.msra.mxu0 0
  %1825 = vmatprep.subr.bf16.mxu0 0
  %1826 = vmatpush2.bf16.msra.mxu0 0
  %1827 = vmatprep.subr.bf16.mxu0 0
  %1828 = vmatpush2.bf16.msra.mxu0 0
  %1829 = vmatprep.subr.bf16.mxu0 0
  %1830 = vmatpush2.bf16.msra.mxu0 0
  %1831 = vmatprep.subr.bf16.mxu0 0
  %1832 = vmatpush2.bf16.msra.mxu0 0
  %1833 = vmatprep.subr.bf16.mxu0 0
  %1834 = vmatpush2.bf16.msra.mxu0 0
  %1835 = vmatprep.subr.bf16.mxu0 0
  %1836 = vmatpush2.bf16.msra.mxu0 0
  %1837 = vmatprep.subr.bf16.mxu0 0
  %1838 = vmatpush2.bf16.msra.mxu0 0
  %1839 = vmatprep.mubr.bf16.mxu0 0
  %1840 = vmatmul.mubr.bf16.gmra.mxu0 %v1792
  %v1841 = vpop.f32.mrf.mxu0
  %v1842 = vadd.f32 0.0, %v1841
  %v1843 = vpop.f32.mrf.mxu0
  %v1844 = vadd.f32 0.0, %v1843
  %v1845 = vpop.f32.mrf.mxu0
  %v1846 = vadd.f32 0.0, %v1845
  %v1847 = vpop.f32.mrf.mxu0
  %v1848 = vadd.f32 0.0, %v1847
  %1849 = vdwg.mxu0
  %1850 = vmatprep.subr.bf16.mxu0 %v1805
  %1851 = vmatpush1.bf16.msra.mxu0 %v1802
  %1852 = vmatprep.subr.bf16.mxu0 %v1757
  %1853 = vmatpush1.bf16.msra.mxu0 %v1756
  %1854 = vmatprep.subr.bf16.mxu0 %v1753
  %1855 = vmatpush1.bf16.msra.mxu0 %v1752
  %1856 = vmatprep.subr.bf16.mxu0 %v1749
  %1857 = vmatpush1.bf16.msra.mxu0 %v1748
  %1858 = vmatprep.subr.bf16.mxu0 %v1745
  %1859 = vmatpush1.bf16.msra.mxu0 %v1744
  %1860 = vmatprep.subr.bf16.mxu0 %v1741
  %1861 = vmatpush1.bf16.msra.mxu0 %v1740
  %1862 = vmatprep.subr.bf16.mxu0 %v1737
  %1863 = vmatpush1.bf16.msra.mxu0 %v1736
  %1864 = vmatprep.subr.bf16.mxu0 %v1733
  %1865 = vmatpush1.bf16.msra.mxu0 %v1732
  %1866 = vmatprep.subr.bf16.mxu0 0
  %1867 = vmatpush2.bf16.msra.mxu0 0
  %1868 = vmatprep.subr.bf16.mxu0 0
  %1869 = vmatpush2.bf16.msra.mxu0 0
  %1870 = vmatprep.subr.bf16.mxu0 0
  %1871 = vmatpush2.bf16.msra.mxu0 0
  %1872 = vmatprep.subr.bf16.mxu0 0
  %1873 = vmatpush2.bf16.msra.mxu0 0
  %1874 = vmatprep.subr.bf16.mxu0 0
  %1875 = vmatpush2.bf16.msra.mxu0 0
  %1876 = vmatprep.subr.bf16.mxu0 0
  %1877 = vmatpush2.bf16.msra.mxu0 0
  %1878 = vmatprep.subr.bf16.mxu0 0
  %1879 = vmatpush2.bf16.msra.mxu0 0
  %1880 = vmatprep.subr.bf16.mxu0 0
  %1881 = vmatpush2.bf16.msra.mxu0 0
  %1882 = vmatprep.mubr.bf16.mxu0 0
  %1883 = vmatmul.mubr.bf16.gmra.mxu0 %v1792
  %v1884 = vpop.f32.mrf.mxu0
  %v1885 = vadd.f32 0.0, %v1884
  %v1886 = vpop.f32.mrf.mxu0
  %v1887 = vadd.f32 0.0, %v1886
  %v1888 = vpop.f32.mrf.mxu0
  %v1889 = vadd.f32 0.0, %v1888
  %v1890 = vpop.f32.mrf.mxu0
  %v1891 = vadd.f32 0.0, %v1890
  %1892 = vdwg.mxu0
  %v1895 = vunpack.c.l.b16 %v1175
  %v1896 = vunpack.c.l.b16 %v1176
  %v1897 = vpack.c.b16 %v1896, %v1895
  %v1928 = vunpack.c.l.b16 %v1145
  %v1929 = vunpack.c.h.b16 %v1145
  %v1930 = vunpack.c.l.b16 %v1146
  %v1931 = vunpack.c.h.b16 %v1146
  %v1932 = vunpack.c.l.b16 %v1147
  %v1933 = vunpack.c.h.b16 %v1147
  %v1934 = vunpack.c.l.b16 %v1148
  %v1935 = vunpack.c.h.b16 %v1148
  %v1936 = vunpack.c.l.b16 %v1149
  %v1937 = vunpack.c.h.b16 %v1149
  %v1938 = vunpack.c.l.b16 %v1150
  %v1939 = vunpack.c.h.b16 %v1150
  %v1940 = vunpack.c.l.b16 %v1151
  %v1941 = vunpack.c.h.b16 %v1151
  %v1942 = vunpack.c.l.b16 %v1152
  %v1943 = vunpack.c.h.b16 %v1152
  %v1944 = vunpack.c.l.b16 %v1153
  %v1945 = vunpack.c.h.b16 %v1153
  %v1946 = vunpack.c.l.b16 %v1154
  %v1947 = vunpack.c.h.b16 %v1154
  %v1948 = vunpack.c.l.b16 %v1155
  %v1949 = vunpack.c.h.b16 %v1155
  %v1950 = vunpack.c.l.b16 %v1156
  %v1951 = vunpack.c.h.b16 %v1156
  %v1952 = vunpack.c.l.b16 %v1157
  %v1953 = vunpack.c.h.b16 %v1157
  %v1954 = vunpack.c.l.b16 %v1158
  %v1955 = vunpack.c.h.b16 %v1158
  %v1956 = vunpack.c.l.b16 %v1159
  %v1957 = vunpack.c.h.b16 %v1159
  %v1958 = vunpack.c.l.b16 %v1160
  %v1959 = vunpack.c.h.b16 %v1160
  %v1960 = vunpack.c.l.b16 %v1161
  %v1961 = vunpack.c.h.b16 %v1161
  %v1962 = vunpack.c.l.b16 %v1162
  %v1963 = vunpack.c.h.b16 %v1162
  %v1964 = vunpack.c.l.b16 %v1163
  %v1965 = vunpack.c.h.b16 %v1163
  %v1966 = vunpack.c.l.b16 %v1164
  %v1967 = vunpack.c.h.b16 %v1164
  %v1968 = vunpack.c.l.b16 %v1165
  %v1969 = vunpack.c.h.b16 %v1165
  %v1970 = vunpack.c.l.b16 %v1166
  %v1971 = vunpack.c.h.b16 %v1166
  %v1972 = vunpack.c.l.b16 %v1167
  %v1973 = vunpack.c.h.b16 %v1167
  %v1974 = vunpack.c.l.b16 %v1168
  %v1975 = vunpack.c.h.b16 %v1168
  %v1976 = vunpack.c.l.b16 %v1169
  %v1977 = vunpack.c.h.b16 %v1169
  %v1978 = vunpack.c.l.b16 %v1170
  %v1979 = vunpack.c.h.b16 %v1170
  %v1980 = vunpack.c.l.b16 %v1171
  %v1981 = vunpack.c.h.b16 %v1171
  %v1982 = vunpack.c.l.b16 %v1172
  %v1983 = vunpack.c.h.b16 %v1172
  %v1984 = vunpack.c.l.b16 %v1173
  %v1985 = vunpack.c.h.b16 %v1173
  %v1986 = vunpack.c.l.b16 %v1174
  %v1987 = vunpack.c.h.b16 %v1174
  %v1988 = vpack.c.b16 %v1932, %v1928
  %v1989 = vpack.c.b16 %v1933, %v1929
  %v1990 = vpack.c.b16 %v1934, %v1930
  %v1991 = vpack.c.b16 %v1935, %v1931
  %v1992 = vpack.c.b16 %v1940, %v1936
  %v1993 = vpack.c.b16 %v1941, %v1937
  %v1994 = vpack.c.b16 %v1942, %v1938
  %v1995 = vpack.c.b16 %v1943, %v1939
  %v1996 = vpack.c.b16 %v1948, %v1944
  %v1997 = vpack.c.b16 %v1949, %v1945
  %v1998 = vpack.c.b16 %v1950, %v1946
  %v1999 = vpack.c.b16 %v1951, %v1947
  %v2000 = vpack.c.b16 %v1956, %v1952
  %v2001 = vpack.c.b16 %v1957, %v1953
  %v2002 = vpack.c.b16 %v1958, %v1954
  %v2003 = vpack.c.b16 %v1959, %v1955
  %v2004 = vpack.c.b16 %v1964, %v1960
  %v2005 = vpack.c.b16 %v1965, %v1961
  %v2006 = vpack.c.b16 %v1966, %v1962
  %v2007 = vpack.c.b16 %v1967, %v1963
  %v2008 = vpack.c.b16 %v1972, %v1968
  %v2009 = vpack.c.b16 %v1973, %v1969
  %v2010 = vpack.c.b16 %v1974, %v1970
  %v2011 = vpack.c.b16 %v1975, %v1971
  %v2012 = vpack.c.b16 %v1980, %v1976
  %v2013 = vpack.c.b16 %v1981, %v1977
  %v2014 = vpack.c.b16 %v1982, %v1978
  %v2015 = vpack.c.b16 %v1983, %v1979
  %v2016 = vpack.c.b16 %v1984, %v1984
  %v2017 = vpack.c.b16 %v1985, %v1985
  %v2018 = vpack.c.b16 %v1986, %v1986
  %v2019 = vpack.c.b16 %v1987, %v1987
  %v2049 = vsel %vm1790, %v1897, 0
  %v2052 = vsel %vm1794, %v2016, 0
  %v2055 = vsel %vm1794, %v2017, 0
  %v2058 = vsel %vm1794, %v2018, 0
  %v2061 = vsel %vm1794, %v2019, 0
  %2063 = vmatprep.subr.bf16.mxu0 %v2055
  %2064 = vmatpush1.bf16.msra.mxu0 %v2052
  %2065 = vmatprep.subr.bf16.mxu0 %v2013
  %2066 = vmatpush1.bf16.msra.mxu0 %v2012
  %2067 = vmatprep.subr.bf16.mxu0 %v2009
  %2068 = vmatpush1.bf16.msra.mxu0 %v2008
  %2069 = vmatprep.subr.bf16.mxu0 %v2005
  %2070 = vmatpush1.bf16.msra.mxu0 %v2004
  %2071 = vmatprep.subr.bf16.mxu0 %v2001
  %2072 = vmatpush1.bf16.msra.mxu0 %v2000
  %2073 = vmatprep.subr.bf16.mxu0 %v1997
  %2074 = vmatpush1.bf16.msra.mxu0 %v1996
  %2075 = vmatprep.subr.bf16.mxu0 %v1993
  %2076 = vmatpush1.bf16.msra.mxu0 %v1992
  %2077 = vmatprep.subr.bf16.mxu0 %v1989
  %2078 = vmatpush1.bf16.msra.mxu0 %v1988
  %2079 = vmatprep.subr.bf16.mxu0 0
  %2080 = vmatpush2.bf16.msra.mxu0 0
  %2081 = vmatprep.subr.bf16.mxu0 0
  %2082 = vmatpush2.bf16.msra.mxu0 0
  %2083 = vmatprep.subr.bf16.mxu0 0
  %2084 = vmatpush2.bf16.msra.mxu0 0
  %2085 = vmatprep.subr.bf16.mxu0 0
  %2086 = vmatpush2.bf16.msra.mxu0 0
  %2087 = vmatprep.subr.bf16.mxu0 0
  %2088 = vmatpush2.bf16.msra.mxu0 0
  %2089 = vmatprep.subr.bf16.mxu0 0
  %2090 = vmatpush2.bf16.msra.mxu0 0
  %2091 = vmatprep.subr.bf16.mxu0 0
  %2092 = vmatpush2.bf16.msra.mxu0 0
  %2093 = vmatprep.subr.bf16.mxu0 0
  %2094 = vmatpush2.bf16.msra.mxu0 0
  %2095 = vmatprep.mubr.bf16.mxu0 0
  %2096 = vmatmul.mubr.bf16.gmra.mxu0 %v2049
  %v2097 = vpop.f32.mrf.mxu0
  %v2098 = vadd.f32 %v1842, %v2097
  %v2099 = vpop.f32.mrf.mxu0
  %v2100 = vadd.f32 %v1844, %v2099
  %v2101 = vpop.f32.mrf.mxu0
  %v2102 = vadd.f32 %v1846, %v2101
  %v2103 = vpop.f32.mrf.mxu0
  %v2104 = vadd.f32 %v1848, %v2103
  %2105 = vdwg.mxu0
  %2106 = vmatprep.subr.bf16.mxu0 %v2061
  %2107 = vmatpush1.bf16.msra.mxu0 %v2058
  %2108 = vmatprep.subr.bf16.mxu0 %v2015
  %2109 = vmatpush1.bf16.msra.mxu0 %v2014
  %2110 = vmatprep.subr.bf16.mxu0 %v2011
  %2111 = vmatpush1.bf16.msra.mxu0 %v2010
  %2112 = vmatprep.subr.bf16.mxu0 %v2007
  %2113 = vmatpush1.bf16.msra.mxu0 %v2006
  %2114 = vmatprep.subr.bf16.mxu0 %v2003
  %2115 = vmatpush1.bf16.msra.mxu0 %v2002
  %2116 = vmatprep.subr.bf16.mxu0 %v1999
  %2117 = vmatpush1.bf16.msra.mxu0 %v1998
  %2118 = vmatprep.subr.bf16.mxu0 %v1995
  %2119 = vmatpush1.bf16.msra.mxu0 %v1994
  %2120 = vmatprep.subr.bf16.mxu0 %v1991
  %2121 = vmatpush1.bf16.msra.mxu0 %v1990
  %2122 = vmatprep.subr.bf16.mxu0 0
  %2123 = vmatpush2.bf16.msra.mxu0 0
  %2124 = vmatprep.subr.bf16.mxu0 0
  %2125 = vmatpush2.bf16.msra.mxu0 0
  %2126 = vmatprep.subr.bf16.mxu0 0
  %2127 = vmatpush2.bf16.msra.mxu0 0
  %2128 = vmatprep.subr.bf16.mxu0 0
  %2129 = vmatpush2.bf16.msra.mxu0 0
  %2130 = vmatprep.subr.bf16.mxu0 0
  %2131 = vmatpush2.bf16.msra.mxu0 0
  %2132 = vmatprep.subr.bf16.mxu0 0
  %2133 = vmatpush2.bf16.msra.mxu0 0
  %2134 = vmatprep.subr.bf16.mxu0 0
  %2135 = vmatpush2.bf16.msra.mxu0 0
  %2136 = vmatprep.subr.bf16.mxu0 0
  %2137 = vmatpush2.bf16.msra.mxu0 0
  %2138 = vmatprep.mubr.bf16.mxu0 0
  %2139 = vmatmul.mubr.bf16.gmra.mxu0 %v2049
  %v2140 = vpop.f32.mrf.mxu0
  %v2141 = vadd.f32 %v1885, %v2140
  %v2142 = vpop.f32.mrf.mxu0
  %v2143 = vadd.f32 %v1887, %v2142
  %v2144 = vpop.f32.mrf.mxu0
  %v2145 = vadd.f32 %v1889, %v2144
  %v2146 = vpop.f32.mrf.mxu0
  %v2147 = vadd.f32 %v1891, %v2146
  %2148 = vdwg.mxu0
  %v2149 = vpack.c.bf16 %v644, %v643
  %v2150 = vpack.c.bf16 %v646, %v645
  %v2151 = vpack.c.bf16 %v648, %v647
  %v2152 = vpack.c.bf16 %v650, %v649
  %v2153 = vpack.c.bf16 %v697, %v696
  %v2154 = vpack.c.bf16 %v699, %v698
  %v2155 = vpack.c.bf16 %v701, %v700
  %v2156 = vpack.c.bf16 %v703, %v702
  %2158 = vset.pattern.permute.xlu0 0
  %2159 = vperm.xlu0 %2158, %v2149
  %v2160 = vpop.permute.xlu0 %2159
  %2162 = vset.pattern.permute.xlu0 0
  %2163 = vperm.xlu0 %2162, %v2150
  %v2164 = vpop.permute.xlu0 %2163
  %2166 = vset.pattern.permute.xlu0 0
  %2167 = vperm.xlu0 %2166, %v2151
  %v2168 = vpop.permute.xlu0 %2167
  %2170 = vset.pattern.permute.xlu0 0
  %2171 = vperm.xlu0 %2170, %v2152
  %v2172 = vpop.permute.xlu0 %2171
  %v2178 = vunpack.c.l.s4 839922192
  %v2179 = vunpack.c.0.s8 %v2178
  %v2180 = vlaneseq
  %v2181 = vshrl.u32 %v2180, 7
  %v2182 = vsub.s32 %v2179, %v2181
  %v2183 = vrot.slane %v2160, %v2182
  %v2185 = vunpack.c.l.s4 1985246804
  %v2186 = vunpack.c.0.s8 %v2185
  %v2187 = vlaneseq
  %v2188 = vshrl.u32 %v2187, 7
  %v2189 = vsub.s32 %v2186, %v2188
  %v2190 = vrot.slane %v2160, %v2189
  %v2192 = vunpack.c.l.s4 839922192
  %v2193 = vunpack.c.0.s8 %v2192
  %v2194 = vlaneseq
  %v2195 = vshrl.u32 %v2194, 7
  %v2196 = vsub.s32 %v2193, %v2195
  %v2197 = vrot.slane %v2164, %v2196
  %v2199 = vunpack.c.l.s4 1985246804
  %v2200 = vunpack.c.0.s8 %v2199
  %v2201 = vlaneseq
  %v2202 = vshrl.u32 %v2201, 7
  %v2203 = vsub.s32 %v2200, %v2202
  %v2204 = vrot.slane %v2164, %v2203
  %v2206 = vunpack.c.l.s4 839922192
  %v2207 = vunpack.c.0.s8 %v2206
  %v2208 = vlaneseq
  %v2209 = vshrl.u32 %v2208, 7
  %v2210 = vsub.s32 %v2207, %v2209
  %v2211 = vrot.slane %v2168, %v2210
  %v2213 = vunpack.c.l.s4 1985246804
  %v2214 = vunpack.c.0.s8 %v2213
  %v2215 = vlaneseq
  %v2216 = vshrl.u32 %v2215, 7
  %v2217 = vsub.s32 %v2214, %v2216
  %v2218 = vrot.slane %v2168, %v2217
  %v2220 = vunpack.c.l.s4 839922192
  %v2221 = vunpack.c.0.s8 %v2220
  %v2222 = vlaneseq
  %v2223 = vshrl.u32 %v2222, 7
  %v2224 = vsub.s32 %v2221, %v2223
  %v2225 = vrot.slane %v2172, %v2224
  %v2227 = vunpack.c.l.s4 1985246804
  %v2228 = vunpack.c.0.s8 %v2227
  %v2229 = vlaneseq
  %v2230 = vshrl.u32 %v2229, 7
  %v2231 = vsub.s32 %v2228, %v2230
  %v2232 = vrot.slane %v2172, %v2231
  %v2241 = vmul.bf16 %v565, %v2183
  %v2242 = vmul.bf16 %v566, %v2183
  %v2243 = vmul.bf16 %v567, %v2190
  %v2244 = vmul.bf16 %v568, %v2190
  %v2245 = vmul.bf16 %v569, %v2197
  %v2246 = vmul.bf16 %v570, %v2197
  %v2247 = vmul.bf16 %v571, %v2204
  %v2248 = vmul.bf16 %v572, %v2204
  %v2249 = vmul.bf16 %v573, %v2211
  %v2250 = vmul.bf16 %v574, %v2211
  %v2251 = vmul.bf16 %v575, %v2218
  %v2252 = vmul.bf16 %v576, %v2218
  %v2253 = vmul.bf16 %v577, %v2225
  %v2254 = vmul.bf16 %v578, %v2225
  %v2255 = vmul.bf16 %v579, %v2232
  %v2256 = vmul.bf16 %v580, %v2232
  %2258 = vset.pattern.permute.xlu0 0
  %2259 = vperm.xlu0 %2258, %v2153
  %v2260 = vpop.permute.xlu0 %2259
  %2262 = vset.pattern.permute.xlu0 0
  %2263 = vperm.xlu0 %2262, %v2154
  %v2264 = vpop.permute.xlu0 %2263
  %2266 = vset.pattern.permute.xlu0 0
  %2267 = vperm.xlu0 %2266, %v2155
  %v2268 = vpop.permute.xlu0 %2267
  %2270 = vset.pattern.permute.xlu0 0
  %2271 = vperm.xlu0 %2270, %v2156
  %v2272 = vpop.permute.xlu0 %2271
  %v2278 = vunpack.c.l.s4 839922192
  %v2279 = vunpack.c.0.s8 %v2278
  %v2280 = vlaneseq
  %v2281 = vshrl.u32 %v2280, 7
  %v2282 = vsub.s32 %v2279, %v2281
  %v2283 = vrot.slane %v2260, %v2282
  %v2285 = vunpack.c.l.s4 1985246804
  %v2286 = vunpack.c.0.s8 %v2285
  %v2287 = vlaneseq
  %v2288 = vshrl.u32 %v2287, 7
  %v2289 = vsub.s32 %v2286, %v2288
  %v2290 = vrot.slane %v2260, %v2289
  %v2292 = vunpack.c.l.s4 839922192
  %v2293 = vunpack.c.0.s8 %v2292
  %v2294 = vlaneseq
  %v2295 = vshrl.u32 %v2294, 7
  %v2296 = vsub.s32 %v2293, %v2295
  %v2297 = vrot.slane %v2264, %v2296
  %v2299 = vunpack.c.l.s4 1985246804
  %v2300 = vunpack.c.0.s8 %v2299
  %v2301 = vlaneseq
  %v2302 = vshrl.u32 %v2301, 7
  %v2303 = vsub.s32 %v2300, %v2302
  %v2304 = vrot.slane %v2264, %v2303
  %v2306 = vunpack.c.l.s4 839922192
  %v2307 = vunpack.c.0.s8 %v2306
  %v2308 = vlaneseq
  %v2309 = vshrl.u32 %v2308, 7
  %v2310 = vsub.s32 %v2307, %v2309
  %v2311 = vrot.slane %v2268, %v2310
  %v2313 = vunpack.c.l.s4 1985246804
  %v2314 = vunpack.c.0.s8 %v2313
  %v2315 = vlaneseq
  %v2316 = vshrl.u32 %v2315, 7
  %v2317 = vsub.s32 %v2314, %v2316
  %v2318 = vrot.slane %v2268, %v2317
  %v2320 = vunpack.c.l.s4 839922192
  %v2321 = vunpack.c.0.s8 %v2320
  %v2322 = vlaneseq
  %v2323 = vshrl.u32 %v2322, 7
  %v2324 = vsub.s32 %v2321, %v2323
  %v2325 = vrot.slane %v2272, %v2324
  %v2327 = vunpack.c.l.s4 1985246804
  %v2328 = vunpack.c.0.s8 %v2327
  %v2329 = vlaneseq
  %v2330 = vshrl.u32 %v2329, 7
  %v2331 = vsub.s32 %v2328, %v2330
  %v2332 = vrot.slane %v2272, %v2331
  %v2341 = vadd.bf16 %v2241, %v2283
  %v2342 = vadd.bf16 %v2242, %v2283
  %v2343 = vadd.bf16 %v2243, %v2290
  %v2344 = vadd.bf16 %v2244, %v2290
  %v2345 = vadd.bf16 %v2245, %v2297
  %v2346 = vadd.bf16 %v2246, %v2297
  %v2347 = vadd.bf16 %v2247, %v2304
  %v2348 = vadd.bf16 %v2248, %v2304
  %v2349 = vadd.bf16 %v2249, %v2311
  %v2350 = vadd.bf16 %v2250, %v2311
  %v2351 = vadd.bf16 %v2251, %v2318
  %v2352 = vadd.bf16 %v2252, %v2318
  %v2353 = vadd.bf16 %v2253, %v2325
  %v2354 = vadd.bf16 %v2254, %v2325
  %v2355 = vadd.bf16 %v2255, %v2332
  %v2356 = vadd.bf16 %v2256, %v2332
  %v2357 = vmul.bf16 %v2341, 1009007652
  %v2358 = vmul.bf16 %v2342, 1009007652
  %v2359 = vmul.bf16 %v2343, 1009007652
  %v2360 = vmul.bf16 %v2344, 1009007652
  %v2361 = vmul.bf16 %v2345, 1009007652
  %v2362 = vmul.bf16 %v2346, 1009007652
  %v2363 = vmul.bf16 %v2347, 1009007652
  %v2364 = vmul.bf16 %v2348, 1009007652
  %v2365 = vmul.bf16 %v2349, 1009007652
  %v2366 = vmul.bf16 %v2350, 1009007652
  %v2367 = vmul.bf16 %v2351, 1009007652
  %v2368 = vmul.bf16 %v2352, 1009007652
  %v2369 = vmul.bf16 %v2353, 1009007652
  %v2370 = vmul.bf16 %v2354, 1009007652
  %v2371 = vmul.bf16 %v2355, 1009007652
  %v2372 = vmul.bf16 %v2356, 1009007652
  %v2373 = vmax.bf16 %v2341, %v2357
  %v2374 = vmax.bf16 %v2342, %v2358
  %v2375 = vmax.bf16 %v2343, %v2359
  %v2376 = vmax.bf16 %v2344, %v2360
  %v2377 = vmax.bf16 %v2345, %v2361
  %v2378 = vmax.bf16 %v2346, %v2362
  %v2379 = vmax.bf16 %v2347, %v2363
  %v2380 = vmax.bf16 %v2348, %v2364
  %v2381 = vmax.bf16 %v2349, %v2365
  %v2382 = vmax.bf16 %v2350, %v2366
  %v2383 = vmax.bf16 %v2351, %v2367
  %v2384 = vmax.bf16 %v2352, %v2368
  %v2385 = vmax.bf16 %v2353, %v2369
  %v2386 = vmax.bf16 %v2354, %v2370
  %v2387 = vmax.bf16 %v2355, %v2371
  %v2388 = vmax.bf16 %v2356, %v2372
  %v2389 = vld [vmem:[%s10] sm:$0xf]
  %v2390 = vld [vmem:[%s10 + $0x4] sm:$0xf]
  %v2393 = vunpack.c.l.b16 %v2389
  %v2394 = vunpack.c.l.b16 %v2390
  %v2395 = vpack.c.b16 %v2394, %v2393
  %v2412 = vunpack.c.l.b16 %v2373
  %v2413 = vunpack.c.h.b16 %v2373
  %v2414 = vunpack.c.l.b16 %v2374
  %v2415 = vunpack.c.h.b16 %v2374
  %v2416 = vunpack.c.l.b16 %v2375
  %v2417 = vunpack.c.h.b16 %v2375
  %v2418 = vunpack.c.l.b16 %v2376
  %v2419 = vunpack.c.h.b16 %v2376
  %v2420 = vunpack.c.l.b16 %v2377
  %v2421 = vunpack.c.h.b16 %v2377
  %v2422 = vunpack.c.l.b16 %v2378
  %v2423 = vunpack.c.h.b16 %v2378
  %v2424 = vunpack.c.l.b16 %v2379
  %v2425 = vunpack.c.h.b16 %v2379
  %v2426 = vunpack.c.l.b16 %v2380
  %v2427 = vunpack.c.h.b16 %v2380
  %v2428 = vunpack.c.l.b16 %v2381
  %v2429 = vunpack.c.h.b16 %v2381
  %v2430 = vunpack.c.l.b16 %v2382
  %v2431 = vunpack.c.h.b16 %v2382
  %v2432 = vunpack.c.l.b16 %v2383
  %v2433 = vunpack.c.h.b16 %v2383
  %v2434 = vunpack.c.l.b16 %v2384
  %v2435 = vunpack.c.h.b16 %v2384
  %v2436 = vunpack.c.l.b16 %v2385
  %v2437 = vunpack.c.h.b16 %v2385
  %v2438 = vunpack.c.l.b16 %v2386
  %v2439 = vunpack.c.h.b16 %v2386
  %v2440 = vunpack.c.l.b16 %v2387
  %v2441 = vunpack.c.h.b16 %v2387
  %v2442 = vunpack.c.l.b16 %v2388
  %v2443 = vunpack.c.h.b16 %v2388
  %v2444 = vpack.c.b16 %v2416, %v2412
  %v2445 = vpack.c.b16 %v2417, %v2413
  %v2446 = vpack.c.b16 %v2418, %v2414
  %v2447 = vpack.c.b16 %v2419, %v2415
  %v2448 = vpack.c.b16 %v2424, %v2420
  %v2449 = vpack.c.b16 %v2425, %v2421
  %v2450 = vpack.c.b16 %v2426, %v2422
  %v2451 = vpack.c.b16 %v2427, %v2423
  %v2452 = vpack.c.b16 %v2432, %v2428
  %v2453 = vpack.c.b16 %v2433, %v2429
  %v2454 = vpack.c.b16 %v2434, %v2430
  %v2455 = vpack.c.b16 %v2435, %v2431
  %v2456 = vpack.c.b16 %v2440, %v2436
  %v2457 = vpack.c.b16 %v2441, %v2437
  %v2458 = vpack.c.b16 %v2442, %v2438
  %v2459 = vpack.c.b16 %v2443, %v2439
  %vm2472 = vcmask 490496
  %v2474 = vsel %vm2472, %v2395, 0
  %vm2476 = vcmask 1045504
  %v2478 = vsel %vm2476, %v2456, 0
  %v2481 = vsel %vm2476, %v2457, 0
  %v2484 = vsel %vm2476, %v2458, 0
  %v2487 = vsel %vm2476, %v2459, 0
  %2489 = vmatprep.subr.bf16.mxu0 0
  %2490 = vmatpush1.bf16.msra.mxu0 0
  %2491 = vmatprep.subr.bf16.mxu0 0
  %2492 = vmatpush1.bf16.msra.mxu0 0
  %2493 = vmatprep.subr.bf16.mxu0 0
  %2494 = vmatpush1.bf16.msra.mxu0 0
  %2495 = vmatprep.subr.bf16.mxu0 0
  %2496 = vmatpush1.bf16.msra.mxu0 0
  %2497 = vmatprep.subr.bf16.mxu0 %v2481
  %2498 = vmatpush1.bf16.msra.mxu0 %v2478
  %2499 = vmatprep.subr.bf16.mxu0 %v2453
  %2500 = vmatpush1.bf16.msra.mxu0 %v2452
  %2501 = vmatprep.subr.bf16.mxu0 %v2449
  %2502 = vmatpush1.bf16.msra.mxu0 %v2448
  %2503 = vmatprep.subr.bf16.mxu0 %v2445
  %2504 = vmatpush1.bf16.msra.mxu0 %v2444
  %2505 = vmatprep.subr.bf16.mxu0 0
  %2506 = vmatpush2.bf16.msra.mxu0 0
  %2507 = vmatprep.subr.bf16.mxu0 0
  %2508 = vmatpush2.bf16.msra.mxu0 0
  %2509 = vmatprep.subr.bf16.mxu0 0
  %2510 = vmatpush2.bf16.msra.mxu0 0
  %2511 = vmatprep.subr.bf16.mxu0 0
  %2512 = vmatpush2.bf16.msra.mxu0 0
  %2513 = vmatprep.subr.bf16.mxu0 0
  %2514 = vmatpush2.bf16.msra.mxu0 0
  %2515 = vmatprep.subr.bf16.mxu0 0
  %2516 = vmatpush2.bf16.msra.mxu0 0
  %2517 = vmatprep.subr.bf16.mxu0 0
  %2518 = vmatpush2.bf16.msra.mxu0 0
  %2519 = vmatprep.subr.bf16.mxu0 0
  %2520 = vmatpush2.bf16.msra.mxu0 0
  %2521 = vmatprep.mubr.bf16.mxu0 0
  %2522 = vmatmul.mubr.bf16.gmra.mxu0 %v2474
  %v2523 = vpop.f32.mrf.mxu0
  %v2524 = vadd.f32 0.0, %v2523
  %v2525 = vpop.f32.mrf.mxu0
  %v2526 = vadd.f32 0.0, %v2525
  %v2527 = vpop.f32.mrf.mxu0
  %v2528 = vadd.f32 0.0, %v2527
  %v2529 = vpop.f32.mrf.mxu0
  %v2530 = vadd.f32 0.0, %v2529
  %2531 = vdwg.mxu0
  %2532 = vmatprep.subr.bf16.mxu0 0
  %2533 = vmatpush1.bf16.msra.mxu0 0
  %2534 = vmatprep.subr.bf16.mxu0 0
  %2535 = vmatpush1.bf16.msra.mxu0 0
  %2536 = vmatprep.subr.bf16.mxu0 0
  %2537 = vmatpush1.bf16.msra.mxu0 0
  %2538 = vmatprep.subr.bf16.mxu0 0
  %2539 = vmatpush1.bf16.msra.mxu0 0
  %2540 = vmatprep.subr.bf16.mxu0 %v2487
  %2541 = vmatpush1.bf16.msra.mxu0 %v2484
  %2542 = vmatprep.subr.bf16.mxu0 %v2455
  %2543 = vmatpush1.bf16.msra.mxu0 %v2454
  %2544 = vmatprep.subr.bf16.mxu0 %v2451
  %2545 = vmatpush1.bf16.msra.mxu0 %v2450
  %2546 = vmatprep.subr.bf16.mxu0 %v2447
  %2547 = vmatpush1.bf16.msra.mxu0 %v2446
  %2548 = vmatprep.subr.bf16.mxu0 0
  %2549 = vmatpush2.bf16.msra.mxu0 0
  %2550 = vmatprep.subr.bf16.mxu0 0
  %2551 = vmatpush2.bf16.msra.mxu0 0
  %2552 = vmatprep.subr.bf16.mxu0 0
  %2553 = vmatpush2.bf16.msra.mxu0 0
  %2554 = vmatprep.subr.bf16.mxu0 0
  %2555 = vmatpush2.bf16.msra.mxu0 0
  %2556 = vmatprep.subr.bf16.mxu0 0
  %2557 = vmatpush2.bf16.msra.mxu0 0
  %2558 = vmatprep.subr.bf16.mxu0 0
  %2559 = vmatpush2.bf16.msra.mxu0 0
  %2560 = vmatprep.subr.bf16.mxu0 0
  %2561 = vmatpush2.bf16.msra.mxu0 0
  %2562 = vmatprep.subr.bf16.mxu0 0
  %2563 = vmatpush2.bf16.msra.mxu0 0
  %2564 = vmatprep.mubr.bf16.mxu0 0
  %2565 = vmatmul.mubr.bf16.gmra.mxu0 %v2474
  %v2566 = vpop.f32.mrf.mxu0
  %v2567 = vadd.f32 0.0, %v2566
  %v2568 = vpop.f32.mrf.mxu0
  %v2569 = vadd.f32 0.0, %v2568
  %v2570 = vpop.f32.mrf.mxu0
  %v2571 = vadd.f32 0.0, %v2570
  %v2572 = vpop.f32.mrf.mxu0
  %v2573 = vadd.f32 0.0, %v2572
  %2574 = vdwg.mxu0
  %v2575 = vadd.f32 %v2098, %v2524
  %v2576 = vadd.f32 %v2100, %v2526
  %v2577 = vadd.f32 %v2141, %v2567
  %v2578 = vadd.f32 %v2143, %v2569
  %v2579 = vadd.f32 %v2102, %v2528
  %v2580 = vadd.f32 %v2104, %v2530
  %v2581 = vadd.f32 %v2145, %v2571
  %v2582 = vadd.f32 %v2147, %v2573
  %v2583 = vpack.c.bf16 %v651, %v650
  %v2584 = vpack.c.bf16 %v653, %v652
  %v2585 = vpack.c.bf16 %v655, %v654
  %v2586 = vpack.c.bf16 %v657, %v656
  %v2587 = vpack.c.bf16 %v704, %v703
  %v2588 = vpack.c.bf16 %v706, %v705
  %v2589 = vpack.c.bf16 %v708, %v707
  %v2590 = vpack.c.bf16 %v710, %v709
  %2592 = vset.pattern.permute.xlu0 0
  %2593 = vperm.xlu0 %2592, %v2583
  %v2594 = vpop.permute.xlu0 %2593
  %2596 = vset.pattern.permute.xlu0 0
  %2597 = vperm.xlu0 %2596, %v2584
  %v2598 = vpop.permute.xlu0 %2597
  %2600 = vset.pattern.permute.xlu0 0
  %2601 = vperm.xlu0 %2600, %v2585
  %v2602 = vpop.permute.xlu0 %2601
  %2604 = vset.pattern.permute.xlu0 0
  %2605 = vperm.xlu0 %2604, %v2586
  %v2606 = vpop.permute.xlu0 %2605
  %v2612 = vunpack.c.l.s4 839922192
  %v2613 = vunpack.c.0.s8 %v2612
  %v2614 = vlaneseq
  %v2615 = vshrl.u32 %v2614, 7
  %v2616 = vsub.s32 %v2613, %v2615
  %v2617 = vrot.slane %v2594, %v2616
  %v2619 = vunpack.c.l.s4 1985246804
  %v2620 = vunpack.c.0.s8 %v2619
  %v2621 = vlaneseq
  %v2622 = vshrl.u32 %v2621, 7
  %v2623 = vsub.s32 %v2620, %v2622
  %v2624 = vrot.slane %v2594, %v2623
  %v2626 = vunpack.c.l.s4 839922192
  %v2627 = vunpack.c.0.s8 %v2626
  %v2628 = vlaneseq
  %v2629 = vshrl.u32 %v2628, 7
  %v2630 = vsub.s32 %v2627, %v2629
  %v2631 = vrot.slane %v2598, %v2630
  %v2633 = vunpack.c.l.s4 1985246804
  %v2634 = vunpack.c.0.s8 %v2633
  %v2635 = vlaneseq
  %v2636 = vshrl.u32 %v2635, 7
  %v2637 = vsub.s32 %v2634, %v2636
  %v2638 = vrot.slane %v2598, %v2637
  %v2640 = vunpack.c.l.s4 839922192
  %v2641 = vunpack.c.0.s8 %v2640
  %v2642 = vlaneseq
  %v2643 = vshrl.u32 %v2642, 7
  %v2644 = vsub.s32 %v2641, %v2643
  %v2645 = vrot.slane %v2602, %v2644
  %v2647 = vunpack.c.l.s4 1985246804
  %v2648 = vunpack.c.0.s8 %v2647
  %v2649 = vlaneseq
  %v2650 = vshrl.u32 %v2649, 7
  %v2651 = vsub.s32 %v2648, %v2650
  %v2652 = vrot.slane %v2602, %v2651
  %v2654 = vunpack.c.l.s4 839922192
  %v2655 = vunpack.c.0.s8 %v2654
  %v2656 = vlaneseq
  %v2657 = vshrl.u32 %v2656, 7
  %v2658 = vsub.s32 %v2655, %v2657
  %v2659 = vrot.slane %v2606, %v2658
  %v2661 = vunpack.c.l.s4 1985246804
  %v2662 = vunpack.c.0.s8 %v2661
  %v2663 = vlaneseq
  %v2664 = vshrl.u32 %v2663, 7
  %v2665 = vsub.s32 %v2662, %v2664
  %v2666 = vrot.slane %v2606, %v2665
  %vm2667 = vcmask 1041408
  %vm2668 = vcmask 1045508
  %vm2669 = vmor %vm2667, %vm2668
  %v2670 = vrot.slane %v2617, 6
  %v2671 = vrot.slane %v2670, 4
  %v2672 = vrot.slane %v2624, 6
  %v2673 = vsel %vm2669, %v2671, %v2672
  %v2674 = vrot.slane %v2672, 4
  %v2675 = vrot.slane %v2631, 6
  %v2676 = vsel %vm2669, %v2674, %v2675
  %v2677 = vrot.slane %v2675, 4
  %v2678 = vrot.slane %v2638, 6
  %v2679 = vsel %vm2669, %v2677, %v2678
  %v2680 = vrot.slane %v2678, 4
  %v2681 = vrot.slane %v2645, 6
  %v2682 = vsel %vm2669, %v2680, %v2681
  %v2683 = vrot.slane %v2681, 4
  %v2684 = vrot.slane %v2652, 6
  %v2685 = vsel %vm2669, %v2683, %v2684
  %v2686 = vrot.slane %v2684, 4
  %v2687 = vrot.slane %v2659, 6
  %v2688 = vsel %vm2669, %v2686, %v2687
  %v2689 = vrot.slane %v2687, 4
  %v2690 = vrot.slane %v2666, 6
  %v2691 = vsel %vm2669, %v2689, %v2690
  %v2692 = vrot.slane %v2690, 4
  %v2701 = vmul.bf16 %v581, %v2673
  %v2702 = vmul.bf16 %v582, %v2673
  %v2703 = vmul.bf16 %v583, %v2676
  %v2704 = vmul.bf16 %v584, %v2676
  %v2705 = vmul.bf16 %v585, %v2679
  %v2706 = vmul.bf16 %v586, %v2679
  %v2707 = vmul.bf16 %v587, %v2682
  %v2708 = vmul.bf16 %v588, %v2682
  %v2709 = vmul.bf16 %v589, %v2685
  %v2710 = vmul.bf16 %v590, %v2685
  %v2711 = vmul.bf16 %v591, %v2688
  %v2712 = vmul.bf16 %v592, %v2688
  %v2713 = vmul.bf16 %v593, %v2691
  %v2714 = vmul.bf16 %v594, %v2691
  %v2715 = vmul.bf16 %v595, %v2692
  %v2716 = vmul.bf16 %v596, %v2692
  %2718 = vset.pattern.permute.xlu0 0
  %2719 = vperm.xlu0 %2718, %v2587
  %v2720 = vpop.permute.xlu0 %2719
  %2722 = vset.pattern.permute.xlu0 0
  %2723 = vperm.xlu0 %2722, %v2588
  %v2724 = vpop.permute.xlu0 %2723
  %2726 = vset.pattern.permute.xlu0 0
  %2727 = vperm.xlu0 %2726, %v2589
  %v2728 = vpop.permute.xlu0 %2727
  %2730 = vset.pattern.permute.xlu0 0
  %2731 = vperm.xlu0 %2730, %v2590
  %v2732 = vpop.permute.xlu0 %2731
  %v2738 = vunpack.c.l.s4 839922192
  %v2739 = vunpack.c.0.s8 %v2738
  %v2740 = vlaneseq
  %v2741 = vshrl.u32 %v2740, 7
  %v2742 = vsub.s32 %v2739, %v2741
  %v2743 = vrot.slane %v2720, %v2742
  %v2745 = vunpack.c.l.s4 1985246804
  %v2746 = vunpack.c.0.s8 %v2745
  %v2747 = vlaneseq
  %v2748 = vshrl.u32 %v2747, 7
  %v2749 = vsub.s32 %v2746, %v2748
  %v2750 = vrot.slane %v2720, %v2749
  %v2752 = vunpack.c.l.s4 839922192
  %v2753 = vunpack.c.0.s8 %v2752
  %v2754 = vlaneseq
  %v2755 = vshrl.u32 %v2754, 7
  %v2756 = vsub.s32 %v2753, %v2755
  %v2757 = vrot.slane %v2724, %v2756
  %v2759 = vunpack.c.l.s4 1985246804
  %v2760 = vunpack.c.0.s8 %v2759
  %v2761 = vlaneseq
  %v2762 = vshrl.u32 %v2761, 7
  %v2763 = vsub.s32 %v2760, %v2762
  %v2764 = vrot.slane %v2724, %v2763
  %v2766 = vunpack.c.l.s4 839922192
  %v2767 = vunpack.c.0.s8 %v2766
  %v2768 = vlaneseq
  %v2769 = vshrl.u32 %v2768, 7
  %v2770 = vsub.s32 %v2767, %v2769
  %v2771 = vrot.slane %v2728, %v2770
  %v2773 = vunpack.c.l.s4 1985246804
  %v2774 = vunpack.c.0.s8 %v2773
  %v2775 = vlaneseq
  %v2776 = vshrl.u32 %v2775, 7
  %v2777 = vsub.s32 %v2774, %v2776
  %v2778 = vrot.slane %v2728, %v2777
  %v2780 = vunpack.c.l.s4 839922192
  %v2781 = vunpack.c.0.s8 %v2780
  %v2782 = vlaneseq
  %v2783 = vshrl.u32 %v2782, 7
  %v2784 = vsub.s32 %v2781, %v2783
  %v2785 = vrot.slane %v2732, %v2784
  %v2787 = vunpack.c.l.s4 1985246804
  %v2788 = vunpack.c.0.s8 %v2787
  %v2789 = vlaneseq
  %v2790 = vshrl.u32 %v2789, 7
  %v2791 = vsub.s32 %v2788, %v2790
  %v2792 = vrot.slane %v2732, %v2791
  %v2793 = vrot.slane %v2743, 6
  %v2794 = vrot.slane %v2793, 4
  %v2795 = vrot.slane %v2750, 6
  %v2796 = vsel %vm2669, %v2794, %v2795
  %v2797 = vrot.slane %v2795, 4
  %v2798 = vrot.slane %v2757, 6
  %v2799 = vsel %vm2669, %v2797, %v2798
  %v2800 = vrot.slane %v2798, 4
  %v2801 = vrot.slane %v2764, 6
  %v2802 = vsel %vm2669, %v2800, %v2801
  %v2803 = vrot.slane %v2801, 4
  %v2804 = vrot.slane %v2771, 6
  %v2805 = vsel %vm2669, %v2803, %v2804
  %v2806 = vrot.slane %v2804, 4
  %v2807 = vrot.slane %v2778, 6
  %v2808 = vsel %vm2669, %v2806, %v2807
  %v2809 = vrot.slane %v2807, 4
  %v2810 = vrot.slane %v2785, 6
  %v2811 = vsel %vm2669, %v2809, %v2810
  %v2812 = vrot.slane %v2810, 4
  %v2813 = vrot.slane %v2792, 6
  %v2814 = vsel %vm2669, %v2812, %v2813
  %v2815 = vrot.slane %v2813, 4
  %v2824 = vadd.bf16 %v2701, %v2796
  %v2825 = vadd.bf16 %v2702, %v2796
  %v2826 = vadd.bf16 %v2703, %v2799
  %v2827 = vadd.bf16 %v2704, %v2799
  %v2828 = vadd.bf16 %v2705, %v2802
  %v2829 = vadd.bf16 %v2706, %v2802
  %v2830 = vadd.bf16 %v2707, %v2805
  %v2831 = vadd.bf16 %v2708, %v2805
  %v2832 = vadd.bf16 %v2709, %v2808
  %v2833 = vadd.bf16 %v2710, %v2808
  %v2834 = vadd.bf16 %v2711, %v2811
  %v2835 = vadd.bf16 %v2712, %v2811
  %v2836 = vadd.bf16 %v2713, %v2814
  %v2837 = vadd.bf16 %v2714, %v2814
  %v2838 = vadd.bf16 %v2715, %v2815
  %v2839 = vadd.bf16 %v2716, %v2815
  %v2840 = vmul.bf16 %v2824, 1009007652
  %v2841 = vmul.bf16 %v2825, 1009007652
  %v2842 = vmul.bf16 %v2826, 1009007652
  %v2843 = vmul.bf16 %v2827, 1009007652
  %v2844 = vmul.bf16 %v2828, 1009007652
  %v2845 = vmul.bf16 %v2829, 1009007652
  %v2846 = vmul.bf16 %v2830, 1009007652
  %v2847 = vmul.bf16 %v2831, 1009007652
  %v2848 = vmul.bf16 %v2832, 1009007652
  %v2849 = vmul.bf16 %v2833, 1009007652
  %v2850 = vmul.bf16 %v2834, 1009007652
  %v2851 = vmul.bf16 %v2835, 1009007652
  %v2852 = vmul.bf16 %v2836, 1009007652
  %v2853 = vmul.bf16 %v2837, 1009007652
  %v2854 = vmul.bf16 %v2838, 1009007652
  %v2855 = vmul.bf16 %v2839, 1009007652
  %v2856 = vmax.bf16 %v2824, %v2840
  %v2857 = vmax.bf16 %v2825, %v2841
  %v2858 = vmax.bf16 %v2826, %v2842
  %v2859 = vmax.bf16 %v2827, %v2843
  %v2860 = vmax.bf16 %v2828, %v2844
  %v2861 = vmax.bf16 %v2829, %v2845
  %v2862 = vmax.bf16 %v2830, %v2846
  %v2863 = vmax.bf16 %v2831, %v2847
  %v2864 = vmax.bf16 %v2832, %v2848
  %v2865 = vmax.bf16 %v2833, %v2849
  %v2866 = vmax.bf16 %v2834, %v2850
  %v2867 = vmax.bf16 %v2835, %v2851
  %v2868 = vmax.bf16 %v2836, %v2852
  %v2869 = vmax.bf16 %v2837, %v2853
  %v2870 = vmax.bf16 %v2838, %v2854
  %v2871 = vmax.bf16 %v2839, %v2855
  %v2872 = vld [vmem:[%s11] sm:$0xf]
  %v2873 = vld [vmem:[%s11 + $0x4] sm:$0xf]
  %v2876 = vunpack.c.l.b16 %v2872
  %v2877 = vunpack.c.l.b16 %v2873
  %v2878 = vpack.c.b16 %v2877, %v2876
  %v2895 = vunpack.c.l.b16 %v2856
  %v2896 = vunpack.c.h.b16 %v2856
  %v2897 = vunpack.c.l.b16 %v2857
  %v2898 = vunpack.c.h.b16 %v2857
  %v2899 = vunpack.c.l.b16 %v2858
  %v2900 = vunpack.c.h.b16 %v2858
  %v2901 = vunpack.c.l.b16 %v2859
  %v2902 = vunpack.c.h.b16 %v2859
  %v2903 = vunpack.c.l.b16 %v2860
  %v2904 = vunpack.c.h.b16 %v2860
  %v2905 = vunpack.c.l.b16 %v2861
  %v2906 = vunpack.c.h.b16 %v2861
  %v2907 = vunpack.c.l.b16 %v2862
  %v2908 = vunpack.c.h.b16 %v2862
  %v2909 = vunpack.c.l.b16 %v2863
  %v2910 = vunpack.c.h.b16 %v2863
  %v2911 = vunpack.c.l.b16 %v2864
  %v2912 = vunpack.c.h.b16 %v2864
  %v2913 = vunpack.c.l.b16 %v2865
  %v2914 = vunpack.c.h.b16 %v2865
  %v2915 = vunpack.c.l.b16 %v2866
  %v2916 = vunpack.c.h.b16 %v2866
  %v2917 = vunpack.c.l.b16 %v2867
  %v2918 = vunpack.c.h.b16 %v2867
  %v2919 = vunpack.c.l.b16 %v2868
  %v2920 = vunpack.c.h.b16 %v2868
  %v2921 = vunpack.c.l.b16 %v2869
  %v2922 = vunpack.c.h.b16 %v2869
  %v2923 = vunpack.c.l.b16 %v2870
  %v2924 = vunpack.c.h.b16 %v2870
  %v2925 = vunpack.c.l.b16 %v2871
  %v2926 = vunpack.c.h.b16 %v2871
  %v2927 = vpack.c.b16 %v2899, %v2895
  %v2928 = vpack.c.b16 %v2900, %v2896
  %v2929 = vpack.c.b16 %v2901, %v2897
  %v2930 = vpack.c.b16 %v2902, %v2898
  %v2931 = vpack.c.b16 %v2907, %v2903
  %v2932 = vpack.c.b16 %v2908, %v2904
  %v2933 = vpack.c.b16 %v2909, %v2905
  %v2934 = vpack.c.b16 %v2910, %v2906
  %v2935 = vpack.c.b16 %v2915, %v2911
  %v2936 = vpack.c.b16 %v2916, %v2912
  %v2937 = vpack.c.b16 %v2917, %v2913
  %v2938 = vpack.c.b16 %v2918, %v2914
  %v2939 = vpack.c.b16 %v2923, %v2919
  %v2940 = vpack.c.b16 %v2924, %v2920
  %v2941 = vpack.c.b16 %v2925, %v2921
  %v2942 = vpack.c.b16 %v2926, %v2922
  %v2956 = vsel %vm2472, %v2878, 0
  %v2959 = vsel %vm2476, %v2939, 0
  %v2962 = vsel %vm2476, %v2940, 0
  %v2965 = vsel %vm2476, %v2941, 0
  %v2968 = vsel %vm2476, %v2942, 0
  %2970 = vmatprep.subr.bf16.mxu0 0
  %2971 = vmatpush1.bf16.msra.mxu0 0
  %2972 = vmatprep.subr.bf16.mxu0 0
  %2973 = vmatpush1.bf16.msra.mxu0 0
  %2974 = vmatprep.subr.bf16.mxu0 0
  %2975 = vmatpush1.bf16.msra.mxu0 0
  %2976 = vmatprep.subr.bf16.mxu0 0
  %2977 = vmatpush1.bf16.msra.mxu0 0
  %2978 = vmatprep.subr.bf16.mxu0 %v2962
  %2979 = vmatpush1.bf16.msra.mxu0 %v2959
  %2980 = vmatprep.subr.bf16.mxu0 %v2936
  %2981 = vmatpush1.bf16.msra.mxu0 %v2935
  %2982 = vmatprep.subr.bf16.mxu0 %v2932
  %2983 = vmatpush1.bf16.msra.mxu0 %v2931
  %2984 = vmatprep.subr.bf16.mxu0 %v2928
  %2985 = vmatpush1.bf16.msra.mxu0 %v2927
  %2986 = vmatprep.subr.bf16.mxu0 0
  %2987 = vmatpush2.bf16.msra.mxu0 0
  %2988 = vmatprep.subr.bf16.mxu0 0
  %2989 = vmatpush2.bf16.msra.mxu0 0
  %2990 = vmatprep.subr.bf16.mxu0 0
  %2991 = vmatpush2.bf16.msra.mxu0 0
  %2992 = vmatprep.subr.bf16.mxu0 0
  %2993 = vmatpush2.bf16.msra.mxu0 0
  %2994 = vmatprep.subr.bf16.mxu0 0
  %2995 = vmatpush2.bf16.msra.mxu0 0
  %2996 = vmatprep.subr.bf16.mxu0 0
  %2997 = vmatpush2.bf16.msra.mxu0 0
  %2998 = vmatprep.subr.bf16.mxu0 0
  %2999 = vmatpush2.bf16.msra.mxu0 0
  %3000 = vmatprep.subr.bf16.mxu0 0
  %3001 = vmatpush2.bf16.msra.mxu0 0
  %3002 = vmatprep.mubr.bf16.mxu0 0
  %3003 = vmatmul.mubr.bf16.gmra.mxu0 %v2956
  %v3004 = vpop.f32.mrf.mxu0
  %v3005 = vadd.f32 0.0, %v3004
  %v3006 = vpop.f32.mrf.mxu0
  %v3007 = vadd.f32 0.0, %v3006
  %v3008 = vpop.f32.mrf.mxu0
  %v3009 = vadd.f32 0.0, %v3008
  %v3010 = vpop.f32.mrf.mxu0
  %v3011 = vadd.f32 0.0, %v3010
  %3012 = vdwg.mxu0
  %3013 = vmatprep.subr.bf16.mxu0 0
  %3014 = vmatpush1.bf16.msra.mxu0 0
  %3015 = vmatprep.subr.bf16.mxu0 0
  %3016 = vmatpush1.bf16.msra.mxu0 0
  %3017 = vmatprep.subr.bf16.mxu0 0
  %3018 = vmatpush1.bf16.msra.mxu0 0
  %3019 = vmatprep.subr.bf16.mxu0 0
  %3020 = vmatpush1.bf16.msra.mxu0 0
  %3021 = vmatprep.subr.bf16.mxu0 %v2968
  %3022 = vmatpush1.bf16.msra.mxu0 %v2965
  %3023 = vmatprep.subr.bf16.mxu0 %v2938
  %3024 = vmatpush1.bf16.msra.mxu0 %v2937
  %3025 = vmatprep.subr.bf16.mxu0 %v2934
  %3026 = vmatpush1.bf16.msra.mxu0 %v2933
  %3027 = vmatprep.subr.bf16.mxu0 %v2930
  %3028 = vmatpush1.bf16.msra.mxu0 %v2929
  %3029 = vmatprep.subr.bf16.mxu0 0
  %3030 = vmatpush2.bf16.msra.mxu0 0
  %3031 = vmatprep.subr.bf16.mxu0 0
  %3032 = vmatpush2.bf16.msra.mxu0 0
  %3033 = vmatprep.subr.bf16.mxu0 0
  %3034 = vmatpush2.bf16.msra.mxu0 0
  %3035 = vmatprep.subr.bf16.mxu0 0
  %3036 = vmatpush2.bf16.msra.mxu0 0
  %3037 = vmatprep.subr.bf16.mxu0 0
  %3038 = vmatpush2.bf16.msra.mxu0 0
  %3039 = vmatprep.subr.bf16.mxu0 0
  %3040 = vmatpush2.bf16.msra.mxu0 0
  %3041 = vmatprep.subr.bf16.mxu0 0
  %3042 = vmatpush2.bf16.msra.mxu0 0
  %3043 = vmatprep.subr.bf16.mxu0 0
  %3044 = vmatpush2.bf16.msra.mxu0 0
  %3045 = vmatprep.mubr.bf16.mxu0 0
  %3046 = vmatmul.mubr.bf16.gmra.mxu0 %v2956
  %v3047 = vpop.f32.mrf.mxu0
  %v3048 = vadd.f32 0.0, %v3047
  %v3049 = vpop.f32.mrf.mxu0
  %v3050 = vadd.f32 0.0, %v3049
  %v3051 = vpop.f32.mrf.mxu0
  %v3052 = vadd.f32 0.0, %v3051
  %v3053 = vpop.f32.mrf.mxu0
  %v3054 = vadd.f32 0.0, %v3053
  %3055 = vdwg.mxu0
  %v3056 = vadd.f32 %v2575, %v3005
  %v3057 = vadd.f32 %v2576, %v3007
  %v3058 = vadd.f32 %v2577, %v3048
  %v3059 = vadd.f32 %v2578, %v3050
  %v3060 = vadd.f32 %v2579, %v3009
  %v3061 = vadd.f32 %v2580, %v3011
  %v3062 = vadd.f32 %v2581, %v3052
  %v3063 = vadd.f32 %v2582, %v3054
  %v3064 = vpack.c.bf16 %v659, %v658
  %v3065 = vpack.c.bf16 %v661, %v660
  %v3066 = vpack.c.bf16 %v663, %v662
  %v3067 = vpack.c.bf16 %v665, %v664
  %v3068 = vpack.c.bf16 %v712, %v711
  %v3069 = vpack.c.bf16 %v714, %v713
  %v3070 = vpack.c.bf16 %v716, %v715
  %v3071 = vpack.c.bf16 %v718, %v717
  %3073 = vset.pattern.permute.xlu0 0
  %3074 = vperm.xlu0 %3073, %v3064
  %v3075 = vpop.permute.xlu0 %3074
  %3077 = vset.pattern.permute.xlu0 0
  %3078 = vperm.xlu0 %3077, %v3065
  %v3079 = vpop.permute.xlu0 %3078
  %3081 = vset.pattern.permute.xlu0 0
  %3082 = vperm.xlu0 %3081, %v3066
  %v3083 = vpop.permute.xlu0 %3082
  %3085 = vset.pattern.permute.xlu0 0
  %3086 = vperm.xlu0 %3085, %v3067
  %v3087 = vpop.permute.xlu0 %3086
  %v3093 = vunpack.c.l.s4 839922192
  %v3094 = vunpack.c.0.s8 %v3093
  %v3095 = vlaneseq
  %v3096 = vshrl.u32 %v3095, 7
  %v3097 = vsub.s32 %v3094, %v3096
  %v3098 = vrot.slane %v3075, %v3097
  %v3100 = vunpack.c.l.s4 1985246804
  %v3101 = vunpack.c.0.s8 %v3100
  %v3102 = vlaneseq
  %v3103 = vshrl.u32 %v3102, 7
  %v3104 = vsub.s32 %v3101, %v3103
  %v3105 = vrot.slane %v3075, %v3104
  %v3107 = vunpack.c.l.s4 839922192
  %v3108 = vunpack.c.0.s8 %v3107
  %v3109 = vlaneseq
  %v3110 = vshrl.u32 %v3109, 7
  %v3111 = vsub.s32 %v3108, %v3110
  %v3112 = vrot.slane %v3079, %v3111
  %v3114 = vunpack.c.l.s4 1985246804
  %v3115 = vunpack.c.0.s8 %v3114
  %v3116 = vlaneseq
  %v3117 = vshrl.u32 %v3116, 7
  %v3118 = vsub.s32 %v3115, %v3117
  %v3119 = vrot.slane %v3079, %v3118
  %v3121 = vunpack.c.l.s4 839922192
  %v3122 = vunpack.c.0.s8 %v3121
  %v3123 = vlaneseq
  %v3124 = vshrl.u32 %v3123, 7
  %v3125 = vsub.s32 %v3122, %v3124
  %v3126 = vrot.slane %v3083, %v3125
  %v3128 = vunpack.c.l.s4 1985246804
  %v3129 = vunpack.c.0.s8 %v3128
  %v3130 = vlaneseq
  %v3131 = vshrl.u32 %v3130, 7
  %v3132 = vsub.s32 %v3129, %v3131
  %v3133 = vrot.slane %v3083, %v3132
  %v3135 = vunpack.c.l.s4 839922192
  %v3136 = vunpack.c.0.s8 %v3135
  %v3137 = vlaneseq
  %v3138 = vshrl.u32 %v3137, 7
  %v3139 = vsub.s32 %v3136, %v3138
  %v3140 = vrot.slane %v3087, %v3139
  %v3142 = vunpack.c.l.s4 1985246804
  %v3143 = vunpack.c.0.s8 %v3142
  %v3144 = vlaneseq
  %v3145 = vshrl.u32 %v3144, 7
  %v3146 = vsub.s32 %v3143, %v3145
  %v3147 = vrot.slane %v3087, %v3146
  %v3156 = vmul.bf16 %v597, %v3098
  %v3157 = vmul.bf16 %v598, %v3098
  %v3158 = vmul.bf16 %v599, %v3105
  %v3159 = vmul.bf16 %v600, %v3105
  %v3160 = vmul.bf16 %v601, %v3112
  %v3161 = vmul.bf16 %v602, %v3112
  %v3162 = vmul.bf16 %v603, %v3119
  %v3163 = vmul.bf16 %v604, %v3119
  %v3164 = vmul.bf16 %v605, %v3126
  %v3165 = vmul.bf16 %v606, %v3126
  %v3166 = vmul.bf16 %v607, %v3133
  %v3167 = vmul.bf16 %v608, %v3133
  %v3168 = vmul.bf16 %v609, %v3140
  %v3169 = vmul.bf16 %v610, %v3140
  %v3170 = vmul.bf16 %v611, %v3147
  %v3171 = vmul.bf16 %v612, %v3147
  %3173 = vset.pattern.permute.xlu0 0
  %3174 = vperm.xlu0 %3173, %v3068
  %v3175 = vpop.permute.xlu0 %3174
  %3177 = vset.pattern.permute.xlu0 0
  %3178 = vperm.xlu0 %3177, %v3069
  %v3179 = vpop.permute.xlu0 %3178
  %3181 = vset.pattern.permute.xlu0 0
  %3182 = vperm.xlu0 %3181, %v3070
  %v3183 = vpop.permute.xlu0 %3182
  %3185 = vset.pattern.permute.xlu0 0
  %3186 = vperm.xlu0 %3185, %v3071
  %v3187 = vpop.permute.xlu0 %3186
  %v3193 = vunpack.c.l.s4 839922192
  %v3194 = vunpack.c.0.s8 %v3193
  %v3195 = vlaneseq
  %v3196 = vshrl.u32 %v3195, 7
  %v3197 = vsub.s32 %v3194, %v3196
  %v3198 = vrot.slane %v3175, %v3197
  %v3200 = vunpack.c.l.s4 1985246804
  %v3201 = vunpack.c.0.s8 %v3200
  %v3202 = vlaneseq
  %v3203 = vshrl.u32 %v3202, 7
  %v3204 = vsub.s32 %v3201, %v3203
  %v3205 = vrot.slane %v3175, %v3204
  %v3207 = vunpack.c.l.s4 839922192
  %v3208 = vunpack.c.0.s8 %v3207
  %v3209 = vlaneseq
  %v3210 = vshrl.u32 %v3209, 7
  %v3211 = vsub.s32 %v3208, %v3210
  %v3212 = vrot.slane %v3179, %v3211
  %v3214 = vunpack.c.l.s4 1985246804
  %v3215 = vunpack.c.0.s8 %v3214
  %v3216 = vlaneseq
  %v3217 = vshrl.u32 %v3216, 7
  %v3218 = vsub.s32 %v3215, %v3217
  %v3219 = vrot.slane %v3179, %v3218
  %v3221 = vunpack.c.l.s4 839922192
  %v3222 = vunpack.c.0.s8 %v3221
  %v3223 = vlaneseq
  %v3224 = vshrl.u32 %v3223, 7
  %v3225 = vsub.s32 %v3222, %v3224
  %v3226 = vrot.slane %v3183, %v3225
  %v3228 = vunpack.c.l.s4 1985246804
  %v3229 = vunpack.c.0.s8 %v3228
  %v3230 = vlaneseq
  %v3231 = vshrl.u32 %v3230, 7
  %v3232 = vsub.s32 %v3229, %v3231
  %v3233 = vrot.slane %v3183, %v3232
  %v3235 = vunpack.c.l.s4 839922192
  %v3236 = vunpack.c.0.s8 %v3235
  %v3237 = vlaneseq
  %v3238 = vshrl.u32 %v3237, 7
  %v3239 = vsub.s32 %v3236, %v3238
  %v3240 = vrot.slane %v3187, %v3239
  %v3242 = vunpack.c.l.s4 1985246804
  %v3243 = vunpack.c.0.s8 %v3242
  %v3244 = vlaneseq
  %v3245 = vshrl.u32 %v3244, 7
  %v3246 = vsub.s32 %v3243, %v3245
  %v3247 = vrot.slane %v3187, %v3246
  %v3256 = vadd.bf16 %v3156, %v3198
  %v3257 = vadd.bf16 %v3157, %v3198
  %v3258 = vadd.bf16 %v3158, %v3205
  %v3259 = vadd.bf16 %v3159, %v3205
  %v3260 = vadd.bf16 %v3160, %v3212
  %v3261 = vadd.bf16 %v3161, %v3212
  %v3262 = vadd.bf16 %v3162, %v3219
  %v3263 = vadd.bf16 %v3163, %v3219
  %v3264 = vadd.bf16 %v3164, %v3226
  %v3265 = vadd.bf16 %v3165, %v3226
  %v3266 = vadd.bf16 %v3166, %v3233
  %v3267 = vadd.bf16 %v3167, %v3233
  %v3268 = vadd.bf16 %v3168, %v3240
  %v3269 = vadd.bf16 %v3169, %v3240
  %v3270 = vadd.bf16 %v3170, %v3247
  %v3271 = vadd.bf16 %v3171, %v3247
  %v3272 = vmul.bf16 %v3256, 1009007652
  %v3273 = vmul.bf16 %v3257, 1009007652
  %v3274 = vmul.bf16 %v3258, 1009007652
  %v3275 = vmul.bf16 %v3259, 1009007652
  %v3276 = vmul.bf16 %v3260, 1009007652
  %v3277 = vmul.bf16 %v3261, 1009007652
  %v3278 = vmul.bf16 %v3262, 1009007652
  %v3279 = vmul.bf16 %v3263, 1009007652
  %v3280 = vmul.bf16 %v3264, 1009007652
  %v3281 = vmul.bf16 %v3265, 1009007652
  %v3282 = vmul.bf16 %v3266, 1009007652
  %v3283 = vmul.bf16 %v3267, 1009007652
  %v3284 = vmul.bf16 %v3268, 1009007652
  %v3285 = vmul.bf16 %v3269, 1009007652
  %v3286 = vmul.bf16 %v3270, 1009007652
  %v3287 = vmul.bf16 %v3271, 1009007652
  %v3288 = vmax.bf16 %v3256, %v3272
  %v3289 = vmax.bf16 %v3257, %v3273
  %v3290 = vmax.bf16 %v3258, %v3274
  %v3291 = vmax.bf16 %v3259, %v3275
  %v3292 = vmax.bf16 %v3260, %v3276
  %v3293 = vmax.bf16 %v3261, %v3277
  %v3294 = vmax.bf16 %v3262, %v3278
  %v3295 = vmax.bf16 %v3263, %v3279
  %v3296 = vmax.bf16 %v3264, %v3280
  %v3297 = vmax.bf16 %v3265, %v3281
  %v3298 = vmax.bf16 %v3266, %v3282
  %v3299 = vmax.bf16 %v3267, %v3283
  %v3300 = vmax.bf16 %v3268, %v3284
  %v3301 = vmax.bf16 %v3269, %v3285
  %v3302 = vmax.bf16 %v3270, %v3286
  %v3303 = vmax.bf16 %v3271, %v3287
  %v3304 = vld [vmem:[%s12] sm:$0xf]
  %v3305 = vld [vmem:[%s12 + $0x4] sm:$0xf]
  %v3308 = vunpack.c.l.b16 %v3304
  %v3309 = vunpack.c.l.b16 %v3305
  %v3310 = vpack.c.b16 %v3309, %v3308
  %v3327 = vunpack.c.l.b16 %v3288
  %v3328 = vunpack.c.h.b16 %v3288
  %v3329 = vunpack.c.l.b16 %v3289
  %v3330 = vunpack.c.h.b16 %v3289
  %v3331 = vunpack.c.l.b16 %v3290
  %v3332 = vunpack.c.h.b16 %v3290
  %v3333 = vunpack.c.l.b16 %v3291
  %v3334 = vunpack.c.h.b16 %v3291
  %v3335 = vunpack.c.l.b16 %v3292
  %v3336 = vunpack.c.h.b16 %v3292
  %v3337 = vunpack.c.l.b16 %v3293
  %v3338 = vunpack.c.h.b16 %v3293
  %v3339 = vunpack.c.l.b16 %v3294
  %v3340 = vunpack.c.h.b16 %v3294
  %v3341 = vunpack.c.l.b16 %v3295
  %v3342 = vunpack.c.h.b16 %v3295
  %v3343 = vunpack.c.l.b16 %v3296
  %v3344 = vunpack.c.h.b16 %v3296
  %v3345 = vunpack.c.l.b16 %v3297
  %v3346 = vunpack.c.h.b16 %v3297
  %v3347 = vunpack.c.l.b16 %v3298
  %v3348 = vunpack.c.h.b16 %v3298
  %v3349 = vunpack.c.l.b16 %v3299
  %v3350 = vunpack.c.h.b16 %v3299
  %v3351 = vunpack.c.l.b16 %v3300
  %v3352 = vunpack.c.h.b16 %v3300
  %v3353 = vunpack.c.l.b16 %v3301
  %v3354 = vunpack.c.h.b16 %v3301
  %v3355 = vunpack.c.l.b16 %v3302
  %v3356 = vunpack.c.h.b16 %v3302
  %v3357 = vunpack.c.l.b16 %v3303
  %v3358 = vunpack.c.h.b16 %v3303
  %v3359 = vpack.c.b16 %v3331, %v3327
  %v3360 = vpack.c.b16 %v3332, %v3328
  %v3361 = vpack.c.b16 %v3333, %v3329
  %v3362 = vpack.c.b16 %v3334, %v3330
  %v3363 = vpack.c.b16 %v3339, %v3335
  %v3364 = vpack.c.b16 %v3340, %v3336
  %v3365 = vpack.c.b16 %v3341, %v3337
  %v3366 = vpack.c.b16 %v3342, %v3338
  %v3367 = vpack.c.b16 %v3347, %v3343
  %v3368 = vpack.c.b16 %v3348, %v3344
  %v3369 = vpack.c.b16 %v3349, %v3345
  %v3370 = vpack.c.b16 %v3350, %v3346
  %v3371 = vpack.c.b16 %v3355, %v3351
  %v3372 = vpack.c.b16 %v3356, %v3352
  %v3373 = vpack.c.b16 %v3357, %v3353
  %v3374 = vpack.c.b16 %v3358, %v3354
  %v3388 = vsel %vm2472, %v3310, 0
  %v3391 = vsel %vm2476, %v3371, 0
  %v3394 = vsel %vm2476, %v3372, 0
  %v3397 = vsel %vm2476, %v3373, 0
  %v3400 = vsel %vm2476, %v3374, 0
  %3402 = vmatprep.subr.bf16.mxu0 0
  %3403 = vmatpush1.bf16.msra.mxu0 0
  %3404 = vmatprep.subr.bf16.mxu0 0
  %3405 = vmatpush1.bf16.msra.mxu0 0
  %3406 = vmatprep.subr.bf16.mxu0 0
  %3407 = vmatpush1.bf16.msra.mxu0 0
  %3408 = vmatprep.subr.bf16.mxu0 0
  %3409 = vmatpush1.bf16.msra.mxu0 0
  %3410 = vmatprep.subr.bf16.mxu0 %v3394
  %3411 = vmatpush1.bf16.msra.mxu0 %v3391
  %3412 = vmatprep.subr.bf16.mxu0 %v3368
  %3413 = vmatpush1.bf16.msra.mxu0 %v3367
  %3414 = vmatprep.subr.bf16.mxu0 %v3364
  %3415 = vmatpush1.bf16.msra.mxu0 %v3363
  %3416 = vmatprep.subr.bf16.mxu0 %v3360
  %3417 = vmatpush1.bf16.msra.mxu0 %v3359
  %3418 = vmatprep.subr.bf16.mxu0 0
  %3419 = vmatpush2.bf16.msra.mxu0 0
  %3420 = vmatprep.subr.bf16.mxu0 0
  %3421 = vmatpush2.bf16.msra.mxu0 0
  %3422 = vmatprep.subr.bf16.mxu0 0
  %3423 = vmatpush2.bf16.msra.mxu0 0
  %3424 = vmatprep.subr.bf16.mxu0 0
  %3425 = vmatpush2.bf16.msra.mxu0 0
  %3426 = vmatprep.subr.bf16.mxu0 0
  %3427 = vmatpush2.bf16.msra.mxu0 0
  %3428 = vmatprep.subr.bf16.mxu0 0
  %3429 = vmatpush2.bf16.msra.mxu0 0
  %3430 = vmatprep.subr.bf16.mxu0 0
  %3431 = vmatpush2.bf16.msra.mxu0 0
  %3432 = vmatprep.subr.bf16.mxu0 0
  %3433 = vmatpush2.bf16.msra.mxu0 0
  %3434 = vmatprep.mubr.bf16.mxu0 0
  %3435 = vmatmul.mubr.bf16.gmra.mxu0 %v3388
  %v3436 = vpop.f32.mrf.mxu0
  %v3437 = vadd.f32 0.0, %v3436
  %v3438 = vpop.f32.mrf.mxu0
  %v3439 = vadd.f32 0.0, %v3438
  %v3440 = vpop.f32.mrf.mxu0
  %v3441 = vadd.f32 0.0, %v3440
  %v3442 = vpop.f32.mrf.mxu0
  %v3443 = vadd.f32 0.0, %v3442
  %3444 = vdwg.mxu0
  %3445 = vmatprep.subr.bf16.mxu0 0
  %3446 = vmatpush1.bf16.msra.mxu0 0
  %3447 = vmatprep.subr.bf16.mxu0 0
  %3448 = vmatpush1.bf16.msra.mxu0 0
  %3449 = vmatprep.subr.bf16.mxu0 0
  %3450 = vmatpush1.bf16.msra.mxu0 0
  %3451 = vmatprep.subr.bf16.mxu0 0
  %3452 = vmatpush1.bf16.msra.mxu0 0
  %3453 = vmatprep.subr.bf16.mxu0 %v3400
  %3454 = vmatpush1.bf16.msra.mxu0 %v3397
  %3455 = vmatprep.subr.bf16.mxu0 %v3370
  %3456 = vmatpush1.bf16.msra.mxu0 %v3369
  %3457 = vmatprep.subr.bf16.mxu0 %v3366
  %3458 = vmatpush1.bf16.msra.mxu0 %v3365
  %3459 = vmatprep.subr.bf16.mxu0 %v3362
  %3460 = vmatpush1.bf16.msra.mxu0 %v3361
  %3461 = vmatprep.subr.bf16.mxu0 0
  %3462 = vmatpush2.bf16.msra.mxu0 0
  %3463 = vmatprep.subr.bf16.mxu0 0
  %3464 = vmatpush2.bf16.msra.mxu0 0
  %3465 = vmatprep.subr.bf16.mxu0 0
  %3466 = vmatpush2.bf16.msra.mxu0 0
  %3467 = vmatprep.subr.bf16.mxu0 0
  %3468 = vmatpush2.bf16.msra.mxu0 0
  %3469 = vmatprep.subr.bf16.mxu0 0
  %3470 = vmatpush2.bf16.msra.mxu0 0
  %3471 = vmatprep.subr.bf16.mxu0 0
  %3472 = vmatpush2.bf16.msra.mxu0 0
  %3473 = vmatprep.subr.bf16.mxu0 0
  %3474 = vmatpush2.bf16.msra.mxu0 0
  %3475 = vmatprep.subr.bf16.mxu0 0
  %3476 = vmatpush2.bf16.msra.mxu0 0
  %3477 = vmatprep.mubr.bf16.mxu0 0
  %3478 = vmatmul.mubr.bf16.gmra.mxu0 %v3388
  %v3479 = vpop.f32.mrf.mxu0
  %v3480 = vadd.f32 0.0, %v3479
  %v3481 = vpop.f32.mrf.mxu0
  %v3482 = vadd.f32 0.0, %v3481
  %v3483 = vpop.f32.mrf.mxu0
  %v3484 = vadd.f32 0.0, %v3483
  %v3485 = vpop.f32.mrf.mxu0
  %v3486 = vadd.f32 0.0, %v3485
  %3487 = vdwg.mxu0
  %v3488 = vadd.f32 %v3056, %v3437
  %v3489 = vadd.f32 %v3057, %v3439
  %v3490 = vadd.f32 %v3058, %v3480
  %v3491 = vadd.f32 %v3059, %v3482
  %v3492 = vadd.f32 %v3060, %v3441
  %v3493 = vadd.f32 %v3061, %v3443
  %v3494 = vadd.f32 %v3062, %v3484
  %v3495 = vadd.f32 %v3063, %v3486
  %v3496 = vld [vmem:[%s13] sm:$0xff]
  %v3497 = vld [vmem:[%s13 + $0x8] sm:$0xff]
  %3499 = vset.pattern.permute.xlu0 0
  %3500 = vperm.xlu0 %3499, %v3496
  %v3501 = vpop.permute.xlu0 %3500
  %3504 = vset.pattern.permute.xlu0 0
  %3505 = vperm.xlu0 %3504, %v3497
  %v3506 = vpop.permute.xlu0 %3505
  %v3508 = vadd.f32 %v3488, %v3501
  %v3509 = vadd.f32 %v3489, %v3501
  %v3510 = vadd.f32 %v3490, %v3501
  %v3511 = vadd.f32 %v3491, %v3501
  %v3512 = vadd.f32 %v3492, %v3506
  %v3513 = vadd.f32 %v3493, %v3506
  %v3514 = vadd.f32 %v3494, %v3506
  %v3515 = vadd.f32 %v3495, %v3506
  %3516 = vst [vmem:[%s14] sm:$0xff] %v3508
  %3517 = vst [vmem:[%s14 + $0x8] sm:$0xff] %v3509
  %3518 = vst [vmem:[%s14 + $0x10] sm:$0xff] %v3510
  %3519 = vst [vmem:[%s14 + $0x18] sm:$0xff] %v3511
  %3520 = vst [vmem:[%s14 + $0x20] sm:$0xff] %v3512
  %3521 = vst [vmem:[%s14 + $0x28] sm:$0xff] %v3513
  %3522 = vst [vmem:[%s14 + $0x30] sm:$0xff] %v3514
  %3523 = vst [vmem:[%s14 + $0x38] sm:$0xff] %v3515
  // Predicated region
  $region58: #{m_resblock1_forward.9} parent=0 // pred_check
    _
  $region59: #{m_resblock1_forward.9} parent=0 // pred_check_branch
    %3525 = sbr.rel (0) target = $region61
  $region60: #{m_resblock1_forward.9} parent=0 // pred_region
    _
  $region61: #{m_resblock1_forward.9} parent=0 // pred_fallthru
    _
  // Predicated region
  $region62: #{m_resblock1_forward.9} parent=0 // pred_check
    _
  $region63: #{m_resblock1_forward.9} parent=0 // pred_check_branch
    %3527 = sbr.rel (0) target = $region65
  $region64: #{m_resblock1_forward.9} parent=0 // pred_region
    _
  $region65: #{m_resblock1_forward.9} parent=0 // pred_fallthru
    _

</llo_original>
